<compile_context>
chip_gen: v5e
topology: v5e:2x2
jax: 0.10.0
libtpu: 0.0.40
codegen_flags: <defaults>
</compile_context>

<pallas_src>
import functools

import numpy as np
import jax
import jax.numpy as jnp
from jax.experimental import pallas as pl
from jax.experimental.pallas import tpu as pltpu

NEG_SLOPE = 0.01  # F.leaky_relu default negative_slope


# ----------------------------- fused Pallas kernel --------------------------
def qgnn_batched_kernel(h_ref, s_ref, a_ref, w1h_ref, eb_ref, w2c_ref, b2_ref,
                        out_ref, hcat_ref, *, num_layers):
    """One grid step = one block of B_TILE graphs; all 5 layers stay in VMEM."""
    width = h_ref.shape[-1]
    h = h_ref[...].astype(jnp.float32)      # (M, W)   node activations (f32)
    S = s_ref[...]                          # (Eb, M)  block-diag source gather
    A = a_ref[...]                          # (M, Eb)  block-diag 1/deg mean
    mm = S.dtype                            # MXU input dtype (f32 or bf16)

    for l in range(num_layers):             # static unroll: 5 layers
        # hoist per-layer operands once (no re-indexing inside expressions)
        w1h = w1h_ref[l]                    # (W, W)    mm dtype
        eb = eb_ref[l]                      # (Eb, W)   f32 edge bias (pre-tiled)
        w2c = w2c_ref[l]                    # (2W, W)   mm dtype, fused [w2h; w2n]
        b2 = b2_ref[l]                      # (1, W)    f32

        # message_func + linear1 (reassociated):
        #   linear1(concat(h_src, w_edge)) == S @ (h @ W1_h) + (w_edge @ W1_w)
        hp = jnp.dot(h.astype(mm), w1h,
                     preferred_element_type=jnp.float32)                  # (M, W)
        tmp = jnp.dot(S, hp.astype(mm),
                      preferred_element_type=jnp.float32) + eb            # (Eb, W)
        tmp = jnp.where(tmp >= 0, tmp, NEG_SLOPE * tmp)                   # leaky_relu (f32)

        # reduce_func: mean over incoming edges == A @ tmp
        h_n = jnp.dot(A, tmp.astype(mm),
                      preferred_element_type=jnp.float32)                 # (M, W)

        # linear2 on concat([h, h_N]) as ONE fused matmul (K = 2W); the concat
        # is assembled in a VMEM scratch slab via two static lane stores.
        hcat_ref[:, :width] = h
        hcat_ref[:, width:] = h_n
        out = jnp.dot(hcat_ref[...].astype(mm), w2c,
                      preferred_element_type=jnp.float32) + b2            # (M, W)
        if l < num_layers - 1:              # F.relu between layers only
            out = jnp.maximum(out, 0.0)
        h = out

    out_ref[...] = h.astype(out_ref.dtype)


def qgnn_forward(h0_bat, s_bd, a_bd, w1h_s, eb_s, w2c_s, b2_s, *,
                 n_nodes, b_tile):
    total_rows, width = h0_bat.shape
    m_tile = b_tile * n_nodes
    assert total_rows % m_tile == 0
    num_blocks = total_rows // m_tile
    num_layers = w1h_s.shape[0]

    act_spec = pl.BlockSpec((m_tile, width), lambda b: (b, 0))
    const2 = lambda shape: pl.BlockSpec(shape, lambda b: (0, 0))
    const3 = lambda shape: pl.BlockSpec(shape, lambda b: (0, 0, 0))

    return pl.pallas_call(
        functools.partial(qgnn_batched_kernel, num_layers=num_layers),
        out_shape=jax.ShapeDtypeStruct((total_rows, width), jnp.float32),
        grid=(num_blocks,),
        in_specs=[
            act_spec,                 # h0, blocked over graphs
            const2(s_bd.shape),       # block-diag gather   (VMEM-resident)
            const2(a_bd.shape),       # block-diag mean     (VMEM-resident)
            const3(w1h_s.shape),      # stacked linear1 node weights
            const3(eb_s.shape),       # stacked, pre-tiled edge biases
            const3(w2c_s.shape),      # stacked fused linear2 weights
            const3(b2_s.shape),       # stacked linear2 biases
        ],
        out_specs=act_spec,           # one contiguous slab per block
        scratch_shapes=[pltpu.VMEM((m_tile, 2 * width), jnp.float32)],
        compiler_params=pltpu.CompilerParams(
            dimension_semantics=("parallel",)),   # shard blocks across TCs (v7x)
    )(h0_bat, s_bd, a_bd, w1h_s, eb_s, w2c_s, b2_s)


# ----------------------------- parameter setup ------------------------------
def xavier_normal(key, shape, gain):
    # torch Linear weight shape is (out_features, in_features)
    fan_out, fan_in = shape
    std = gain * np.sqrt(2.0 / (fan_in + fan_out))
    return std * jax.random.normal(key, shape, dtype=jnp.float32)


def make_qconv_params(key, in_feat, inter_dim, out_feat):
    gain = np.sqrt(2.0)  # nn.init.calculate_gain('relu')
    k1, k2, k3 = jax.random.split(key, 3)
    w1 = xavier_normal(k1, (inter_dim, in_feat + 3), gain)         # linear1 (no bias)
    w2 = xavier_normal(k2, (out_feat, in_feat + inter_dim), gain)  # linear2
    bound = 1.0 / np.sqrt(in_feat + inter_dim)
    b2 = jax.random.uniform(k3, (out_feat,), jnp.float32, -bound, bound)
    w1h = jnp.transpose(w1[:, :in_feat])          # (in_feat, inter)
    w1w = jnp.transpose(w1[:, in_feat:])          # (3, inter)
    w2h = jnp.transpose(w2[:, :in_feat])          # (in_feat, out)
    w2n = jnp.transpose(w2[:, in_feat:])          # (inter, out)
    return (w1h, w1w, w2h, w2n, b2.reshape(1, out_feat))


def _pad_to(x, shape):
    return jnp.pad(x, [(0, t - s) for s, t in zip(x.shape, shape)])


def stack_padded_params(params_list, w_edge, width, b_tile, mm_dtype):
    """Zero-pad to a uniform width, fuse linear2's two halves into one (2W, W)
    weight, precompute + pre-tile the per-edge bias for a B_TILE block, stack
    over layers, and pre-cast the matmul operands to mm_dtype (f32 or bf16)."""
    w1h_s, eb_s, w2c_s, b2_s = [], [], [], []
    for (w1h, w1w, w2h, w2n, b2) in params_list:
        w1h_s.append(_pad_to(w1h, (width, width)))
        eb = w_edge @ w1w                                   # (E, inter) f32
        eb_s.append(jnp.tile(_pad_to(eb, (eb.shape[0], width)), (b_tile, 1)))
        w2c = jnp.concatenate([_pad_to(w2h, (width, width)),
                               _pad_to(w2n, (width, width))], axis=0)   # (2W, W)
        w2c_s.append(w2c)
        b2_s.append(_pad_to(b2, (1, width)))
    return (jnp.stack(w1h_s).astype(mm_dtype),
            jnp.stack(eb_s).astype(jnp.float32),
            jnp.stack(w2c_s).astype(mm_dtype),
            jnp.stack(b2_s).astype(jnp.float32))


# ----------------------------- pure-JAX reference ---------------------------
def qconv_ref(h, w_edge, src_ids, dst_ids, deg, params, apply_relu):
    w1h, w1w, w2h, w2n, b2 = params
    n_nodes = h.shape[0]
    tmp = h[src_ids] @ w1h + w_edge @ w1w
    tmp = jnp.where(tmp >= 0, tmp, NEG_SLOPE * tmp)
    h_n = jax.ops.segment_sum(tmp, dst_ids, num_segments=n_nodes)
    h_n = h_n / jnp.maximum(deg, 1.0)[:, None]
    out = h @ w2h + h_n @ w2n + b2
    return jnp.maximum(out, 0.0) if apply_relu else out


def qgnn_ref(h, params, w_edge, src_ids, dst_ids, deg):
    for li, p in enumerate(params):
        h = qconv_ref(h, w_edge, src_ids, dst_ids, deg, p,
                      apply_relu=(li < len(params) - 1))
    return h


# ---------------------------------- main ------------------------------------
if __name__ == "__main__":
    # Fixed graph from the module:
    dst_id = [1, 1, 2, 4, 0]
    src_id = [0, 3, 1, 1, 5]
    dst2 = np.array(dst_id + src_id, dtype=np.int32)     # 10 edges
    src2 = np.array(src_id + dst_id, dtype=np.int32)
    N = int(max(dst2.max(), src2.max())) + 1              # 6 nodes
    E = len(dst2)                                         # 10 edges

    # per-graph message-passing matrices
    S = np.zeros((E, N), dtype=np.float32)
    S[np.arange(E), src2] = 1.0
    deg = np.bincount(dst2, minlength=N).astype(np.float32)
    A = np.zeros((N, E), dtype=np.float32)
    A[dst2, np.arange(E)] = 1.0 / np.maximum(deg[dst2], 1.0)

    # batching: B_TOTAL independent graphs, B_TILE graphs per grid block
    B_TOTAL, B_TILE = 128, 32        # grid (4,), 192-row activation blocks
    S_bd = np.kron(np.eye(B_TILE, dtype=np.float32), S)   # (B_TILE*E, B_TILE*N)
    A_bd = np.kron(np.eye(B_TILE, dtype=np.float32), A)   # (B_TILE*N, B_TILE*E)

    # model sizes (in_feats fixed at 5 by nn.Embedding(5, 5))
    in_feats, h_feats, num_classes, inter_dim = 5, 32, 8, 32
    WIDTH = 32  # uniform padded feature width inside the fused kernel

    key = jax.random.PRNGKey(0)
    k_emb, k_gate, *k_layers = jax.random.split(key, 2 + 5)

    # embedding table + per-graph node inputs; edge features are graph-fixed
    emb_table = jax.random.normal(k_emb, (5, 5), dtype=jnp.float32)
    gate_type = jax.random.randint(k_gate, (B_TOTAL, N), 0, 5)
    h0_all = emb_table[gate_type]                                  # (B, N, 5)
    w_edge = jnp.stack(
        [jnp.asarray(src2, jnp.float32),
         jnp.asarray(dst2, jnp.float32),
         jnp.concatenate([jnp.zeros(5), jnp.ones(5)]).astype(jnp.float32)],
        axis=1)                                                    # (E, 3)

    layer_dims = ([(in_feats, inter_dim, h_feats)]
                  + [(h_feats, inter_dim, h_feats)] * 3
                  + [(h_feats, inter_dim, num_classes)])
    params = [make_qconv_params(k, fi, di, fo)
              for k, (fi, di, fo) in zip(k_layers, layer_dims)]

    # batched, zero-padded node features: (B*N, WIDTH)
    h0_bat = _pad_to(h0_all.reshape(B_TOTAL * N, in_feats), (B_TOTAL * N, WIDTH))

    # ---- pure-JAX reference (per graph, unpadded) ----
    src2_j, dst2_j, deg_j = map(jnp.asarray, (src2, dst2, deg))
    ref = jax.vmap(lambda h: qgnn_ref(h, params, w_edge, src2_j, dst2_j, deg_j))(h0_all)
    ref = np.asarray(jax.block_until_ready(ref))           # (B, N, num_classes)

    # ---- Pallas fused + batched forward, f32 MXU inputs (all generations) ----
    ops_f32 = stack_padded_params(params, w_edge, WIDTH, B_TILE, jnp.float32)
    out_f32 = qgnn_forward(h0_bat, jnp.asarray(S_bd), jnp.asarray(A_bd), *ops_f32,
                           n_nodes=N, b_tile=B_TILE)
    out_f32 = jax.block_until_ready(out_f32)
    out_f32 = np.asarray(out_f32).reshape(B_TOTAL, N, WIDTH)[:, :, :num_classes]
    np.testing.assert_allclose(out_f32, ref, rtol=5e-5, atol=5e-5)

    # ---- same kernel with bf16 MXU inputs (v6e/v7x lever), f32 epilogue ----
    ops_bf16 = stack_padded_params(params, w_edge, WIDTH, B_TILE, jnp.bfloat16)
    out_bf16 = qgnn_forward(h0_bat,
                            jnp.asarray(S_bd, jnp.bfloat16),
                            jnp.asarray(A_bd, jnp.bfloat16), *ops_bf16,
                            n_nodes=N, b_tile=B_TILE)
    out_bf16 = jax.block_until_ready(out_bf16)
    out_bf16 = np.asarray(out_bf16).reshape(B_TOTAL, N, WIDTH)[:, :, :num_classes]
    rel = np.linalg.norm(out_bf16 - ref) / max(np.linalg.norm(ref), 1e-6)
    assert rel < 5e-2, f"bf16 relative error too large: {rel}"

    print("KERNEL_OK")
</pallas_src>

<mosaic_0001>
module attributes {stable_mosaic.version = 11 : i64} {
  func.func @qgnn_batched_kernel(%arg0: i32, %arg1: memref<192x32xf32, #tpu.memory_space<vmem>>, %arg2: memref<320x192xf32, #tpu.memory_space<vmem>>, %arg3: memref<192x320xf32, #tpu.memory_space<vmem>>, %arg4: memref<5x32x32xf32, #tpu.memory_space<vmem>>, %arg5: memref<5x320x32xf32, #tpu.memory_space<vmem>>, %arg6: memref<5x64x32xf32, #tpu.memory_space<vmem>>, %arg7: memref<5x1x32xf32, #tpu.memory_space<vmem>>, %arg8: memref<192x32xf32, #tpu.memory_space<vmem>>, %arg9: memref<192x64xf32, #tpu.memory_space<vmem>>) attributes {dimension_semantics = [#tpu.dimension_semantics<parallel>], iteration_bounds = array<i64: 4>, scalar_prefetch = 0 : i64, scratch_operands = 1 : i64, tpu.core_type = #tpu.core_type<tc>, window_params = [{transform_indices = @transform_0, window_bounds = array<i64: 192, 32>}, {pipeline_mode = #tpu.pipeline_mode<synchronous>, transform_indices = @transform_1, window_bounds = array<i64: 320, 192>}, {pipeline_mode = #tpu.pipeline_mode<synchronous>, transform_indices = @transform_2, window_bounds = array<i64: 192, 320>}, {pipeline_mode = #tpu.pipeline_mode<synchronous>, transform_indices = @transform_3, window_bounds = array<i64: 5, 32, 32>}, {pipeline_mode = #tpu.pipeline_mode<synchronous>, transform_indices = @transform_4, window_bounds = array<i64: 5, 320, 32>}, {pipeline_mode = #tpu.pipeline_mode<synchronous>, transform_indices = @transform_5, window_bounds = array<i64: 5, 64, 32>}, {pipeline_mode = #tpu.pipeline_mode<synchronous>, transform_indices = @transform_6, window_bounds = array<i64: 5, 1, 32>}, {transform_indices = @transform_7, window_bounds = array<i64: 192, 32>}]} {
    %c0 = arith.constant 0 : index
    %c0_0 = arith.constant 0 : index
    %0 = vector.load %arg1[%c0, %c0_0] : memref<192x32xf32, #tpu.memory_space<vmem>>, vector<192x32xf32>
    %c0_1 = arith.constant 0 : index
    %c0_2 = arith.constant 0 : index
    %1 = vector.load %arg2[%c0_1, %c0_2] : memref<320x192xf32, #tpu.memory_space<vmem>>, vector<320x192xf32>
    %c0_3 = arith.constant 0 : index
    %c0_4 = arith.constant 0 : index
    %2 = vector.load %arg3[%c0_3, %c0_4] : memref<192x320xf32, #tpu.memory_space<vmem>>, vector<192x320xf32>
    %c0_5 = arith.constant 0 : index
    %c0_6 = arith.constant 0 : index
    %c0_7 = arith.constant 0 : index
    %3 = vector.load %arg4[%c0_5, %c0_6, %c0_7] : memref<5x32x32xf32, #tpu.memory_space<vmem>>, vector<1x32x32xf32>
    %4 = vector.shape_cast %3 : vector<1x32x32xf32> to vector<32x32xf32>
    %c0_8 = arith.constant 0 : index
    %c0_9 = arith.constant 0 : index
    %c0_10 = arith.constant 0 : index
    %5 = vector.load %arg5[%c0_8, %c0_9, %c0_10] : memref<5x320x32xf32, #tpu.memory_space<vmem>>, vector<1x320x32xf32>
    %6 = vector.shape_cast %5 : vector<1x320x32xf32> to vector<320x32xf32>
    %c0_11 = arith.constant 0 : index
    %c0_12 = arith.constant 0 : index
    %c0_13 = arith.constant 0 : index
    %7 = vector.load %arg6[%c0_11, %c0_12, %c0_13] : memref<5x64x32xf32, #tpu.memory_space<vmem>>, vector<1x64x32xf32>
    %8 = vector.shape_cast %7 : vector<1x64x32xf32> to vector<64x32xf32>
    %c0_14 = arith.constant 0 : index
    %c0_15 = arith.constant 0 : index
    %c0_16 = arith.constant 0 : index
    %9 = vector.load %arg7[%c0_14, %c0_15, %c0_16] : memref<5x1x32xf32, #tpu.memory_space<vmem>>, vector<1x1x32xf32>
    %10 = vector.shape_cast %9 : vector<1x1x32xf32> to vector<1x32xf32>
    %cst = arith.constant dense<0.000000e+00> : vector<192x32xf32>
    %11 = tpu.matmul %0, %4, %cst {dimension_numbers = #tpu.dot_dimension_numbers<[1], [0], [0], [1], [0, 0, 1, 1], [], []>} : vector<192x32xf32>, vector<32x32xf32>, vector<192x32xf32> -> vector<192x32xf32>
    %cst_17 = arith.constant dense<0.000000e+00> : vector<320x32xf32>
    %12 = tpu.matmul %1, %11, %cst_17 {dimension_numbers = #tpu.dot_dimension_numbers<[1], [0], [0], [1], [0, 0, 1, 1], [], []>} : vector<320x192xf32>, vector<192x32xf32>, vector<320x32xf32> -> vector<320x32xf32>
    %13 = arith.addf %12, %6 : vector<320x32xf32>
    %cst_18 = arith.constant 0.000000e+00 : f32
    %14 = vector.broadcast %cst_18 : f32 to vector<320x32xf32>
    %15 = arith.cmpf oge, %13, %14 : vector<320x32xf32>
    %cst_19 = arith.constant 0.00999999977 : f32
    %16 = vector.broadcast %cst_19 : f32 to vector<320x32xf32>
    %17 = arith.mulf %16, %13 : vector<320x32xf32>
    %18 = arith.select %15, %13, %17 : vector<320x32xi1>, vector<320x32xf32>
    %cst_20 = arith.constant dense<0.000000e+00> : vector<192x32xf32>
    %19 = tpu.matmul %2, %18, %cst_20 {dimension_numbers = #tpu.dot_dimension_numbers<[1], [0], [0], [1], [0, 0, 1, 1], [], []>} : vector<192x320xf32>, vector<320x32xf32>, vector<192x32xf32> -> vector<192x32xf32>
    %c0_21 = arith.constant 0 : index
    %c0_22 = arith.constant 0 : index
    %20 = vector.load %arg9[%c0_21, %c0_22] : memref<192x64xf32, #tpu.memory_space<vmem>>, vector<192x32xf32>
    tpu.vector_store %arg9[%c0_21, %c0_22], %0 {strides = array<i32>} : memref<192x64xf32, #tpu.memory_space<vmem>>, vector<192x32xf32>,
    %c0_23 = arith.constant 0 : index
    %c32 = arith.constant 32 : index
    %21 = vector.load %arg9[%c0_23, %c32] : memref<192x64xf32, #tpu.memory_space<vmem>>, vector<192x32xf32>
    tpu.vector_store %arg9[%c0_23, %c32], %19 {strides = array<i32>} : memref<192x64xf32, #tpu.memory_space<vmem>>, vector<192x32xf32>,
    %c0_24 = arith.constant 0 : index
    %c0_25 = arith.constant 0 : index
    %22 = vector.load %arg9[%c0_24, %c0_25] : memref<192x64xf32, #tpu.memory_space<vmem>>, vector<192x64xf32>
    %cst_26 = arith.constant dense<0.000000e+00> : vector<192x32xf32>
    %23 = tpu.matmul %22, %8, %cst_26 {dimension_numbers = #tpu.dot_dimension_numbers<[1], [0], [0], [1], [0, 0, 1, 1], [], []>} : vector<192x64xf32>, vector<64x32xf32>, vector<192x32xf32> -> vector<192x32xf32>
    %24 = vector.broadcast %10 : vector<1x32xf32> to vector<192x32xf32>
    %25 = arith.addf %23, %24 : vector<192x32xf32>
    %cst_27 = arith.constant 0.000000e+00 : f32
    %26 = vector.broadcast %cst_27 : f32 to vector<192x32xf32>
    %27 = arith.maximumf %25, %26 : vector<192x32xf32>
    %c1 = arith.constant 1 : index
    %c0_28 = arith.constant 0 : index
    %c0_29 = arith.constant 0 : index
    %28 = vector.load %arg4[%c1, %c0_28, %c0_29] : memref<5x32x32xf32, #tpu.memory_space<vmem>>, vector<1x32x32xf32>
    %29 = vector.shape_cast %28 : vector<1x32x32xf32> to vector<32x32xf32>
    %c1_30 = arith.constant 1 : index
    %c0_31 = arith.constant 0 : index
    %c0_32 = arith.constant 0 : index
    %30 = vector.load %arg5[%c1_30, %c0_31, %c0_32] : memref<5x320x32xf32, #tpu.memory_space<vmem>>, vector<1x320x32xf32>
    %31 = vector.shape_cast %30 : vector<1x320x32xf32> to vector<320x32xf32>
    %c1_33 = arith.constant 1 : index
    %c0_34 = arith.constant 0 : index
    %c0_35 = arith.constant 0 : index
    %32 = vector.load %arg6[%c1_33, %c0_34, %c0_35] : memref<5x64x32xf32, #tpu.memory_space<vmem>>, vector<1x64x32xf32>
    %33 = vector.shape_cast %32 : vector<1x64x32xf32> to vector<64x32xf32>
    %c1_36 = arith.constant 1 : index
    %c0_37 = arith.constant 0 : index
    %c0_38 = arith.constant 0 : index
    %34 = vector.load %arg7[%c1_36, %c0_37, %c0_38] : memref<5x1x32xf32, #tpu.memory_space<vmem>>, vector<1x1x32xf32>
    %35 = vector.shape_cast %34 : vector<1x1x32xf32> to vector<1x32xf32>
    %cst_39 = arith.constant dense<0.000000e+00> : vector<192x32xf32>
    %36 = tpu.matmul %27, %29, %cst_39 {dimension_numbers = #tpu.dot_dimension_numbers<[1], [0], [0], [1], [0, 0, 1, 1], [], []>} : vector<192x32xf32>, vector<32x32xf32>, vector<192x32xf32> -> vector<192x32xf32>
    %cst_40 = arith.constant dense<0.000000e+00> : vector<320x32xf32>
    %37 = tpu.matmul %1, %36, %cst_40 {dimension_numbers = #tpu.dot_dimension_numbers<[1], [0], [0], [1], [0, 0, 1, 1], [], []>} : vector<320x192xf32>, vector<192x32xf32>, vector<320x32xf32> -> vector<320x32xf32>
    %38 = arith.addf %37, %31 : vector<320x32xf32>
    %cst_41 = arith.constant 0.000000e+00 : f32
    %39 = vector.broadcast %cst_41 : f32 to vector<320x32xf32>
    %40 = arith.cmpf oge, %38, %39 : vector<320x32xf32>
    %cst_42 = arith.constant 0.00999999977 : f32
    %41 = vector.broadcast %cst_42 : f32 to vector<320x32xf32>
    %42 = arith.mulf %41, %38 : vector<320x32xf32>
    %43 = arith.select %40, %38, %42 : vector<320x32xi1>, vector<320x32xf32>
    %cst_43 = arith.constant dense<0.000000e+00> : vector<192x32xf32>
    %44 = tpu.matmul %2, %43, %cst_43 {dimension_numbers = #tpu.dot_dimension_numbers<[1], [0], [0], [1], [0, 0, 1, 1], [], []>} : vector<192x320xf32>, vector<320x32xf32>, vector<192x32xf32> -> vector<192x32xf32>
    %c0_44 = arith.constant 0 : index
    %c0_45 = arith.constant 0 : index
    %45 = vector.load %arg9[%c0_44, %c0_45] : memref<192x64xf32, #tpu.memory_space<vmem>>, vector<192x32xf32>
    tpu.vector_store %arg9[%c0_44, %c0_45], %27 {strides = array<i32>} : memref<192x64xf32, #tpu.memory_space<vmem>>, vector<192x32xf32>,
    %c0_46 = arith.constant 0 : index
    %c32_47 = arith.constant 32 : index
    %46 = vector.load %arg9[%c0_46, %c32_47] : memref<192x64xf32, #tpu.memory_space<vmem>>, vector<192x32xf32>
    tpu.vector_store %arg9[%c0_46, %c32_47], %44 {strides = array<i32>} : memref<192x64xf32, #tpu.memory_space<vmem>>, vector<192x32xf32>,
    %c0_48 = arith.constant 0 : index
    %c0_49 = arith.constant 0 : index
    %47 = vector.load %arg9[%c0_48, %c0_49] : memref<192x64xf32, #tpu.memory_space<vmem>>, vector<192x64xf32>
    %cst_50 = arith.constant dense<0.000000e+00> : vector<192x32xf32>
    %48 = tpu.matmul %47, %33, %cst_50 {dimension_numbers = #tpu.dot_dimension_numbers<[1], [0], [0], [1], [0, 0, 1, 1], [], []>} : vector<192x64xf32>, vector<64x32xf32>, vector<192x32xf32> -> vector<192x32xf32>
    %49 = vector.broadcast %35 : vector<1x32xf32> to vector<192x32xf32>
    %50 = arith.addf %48, %49 : vector<192x32xf32>
    %cst_51 = arith.constant 0.000000e+00 : f32
    %51 = vector.broadcast %cst_51 : f32 to vector<192x32xf32>
    %52 = arith.maximumf %50, %51 : vector<192x32xf32>
    %c2 = arith.constant 2 : index
    %c0_52 = arith.constant 0 : index
    %c0_53 = arith.constant 0 : index
    %53 = vector.load %arg4[%c2, %c0_52, %c0_53] : memref<5x32x32xf32, #tpu.memory_space<vmem>>, vector<1x32x32xf32>
    %54 = vector.shape_cast %53 : vector<1x32x32xf32> to vector<32x32xf32>
    %c2_54 = arith.constant 2 : index
    %c0_55 = arith.constant 0 : index
    %c0_56 = arith.constant 0 : index
    %55 = vector.load %arg5[%c2_54, %c0_55, %c0_56] : memref<5x320x32xf32, #tpu.memory_space<vmem>>, vector<1x320x32xf32>
    %56 = vector.shape_cast %55 : vector<1x320x32xf32> to vector<320x32xf32>
    %c2_57 = arith.constant 2 : index
    %c0_58 = arith.constant 0 : index
    %c0_59 = arith.constant 0 : index
    %57 = vector.load %arg6[%c2_57, %c0_58, %c0_59] : memref<5x64x32xf32, #tpu.memory_space<vmem>>, vector<1x64x32xf32>
    %58 = vector.shape_cast %57 : vector<1x64x32xf32> to vector<64x32xf32>
    %c2_60 = arith.constant 2 : index
    %c0_61 = arith.constant 0 : index
    %c0_62 = arith.constant 0 : index
    %59 = vector.load %arg7[%c2_60, %c0_61, %c0_62] : memref<5x1x32xf32, #tpu.memory_space<vmem>>, vector<1x1x32xf32>
    %60 = vector.shape_cast %59 : vector<1x1x32xf32> to vector<1x32xf32>
    %cst_63 = arith.constant dense<0.000000e+00> : vector<192x32xf32>
    %61 = tpu.matmul %52, %54, %cst_63 {dimension_numbers = #tpu.dot_dimension_numbers<[1], [0], [0], [1], [0, 0, 1, 1], [], []>} : vector<192x32xf32>, vector<32x32xf32>, vector<192x32xf32> -> vector<192x32xf32>
    %cst_64 = arith.constant dense<0.000000e+00> : vector<320x32xf32>
    %62 = tpu.matmul %1, %61, %cst_64 {dimension_numbers = #tpu.dot_dimension_numbers<[1], [0], [0], [1], [0, 0, 1, 1], [], []>} : vector<320x192xf32>, vector<192x32xf32>, vector<320x32xf32> -> vector<320x32xf32>
    %63 = arith.addf %62, %56 : vector<320x32xf32>
    %cst_65 = arith.constant 0.000000e+00 : f32
    %64 = vector.broadcast %cst_65 : f32 to vector<320x32xf32>
    %65 = arith.cmpf oge, %63, %64 : vector<320x32xf32>
    %cst_66 = arith.constant 0.00999999977 : f32
    %66 = vector.broadcast %cst_66 : f32 to vector<320x32xf32>
    %67 = arith.mulf %66, %63 : vector<320x32xf32>
    %68 = arith.select %65, %63, %67 : vector<320x32xi1>, vector<320x32xf32>
    %cst_67 = arith.constant dense<0.000000e+00> : vector<192x32xf32>
    %69 = tpu.matmul %2, %68, %cst_67 {dimension_numbers = #tpu.dot_dimension_numbers<[1], [0], [0], [1], [0, 0, 1, 1], [], []>} : vector<192x320xf32>, vector<320x32xf32>, vector<192x32xf32> -> vector<192x32xf32>
    %c0_68 = arith.constant 0 : index
    %c0_69 = arith.constant 0 : index
    %70 = vector.load %arg9[%c0_68, %c0_69] : memref<192x64xf32, #tpu.memory_space<vmem>>, vector<192x32xf32>
    tpu.vector_store %arg9[%c0_68, %c0_69], %52 {strides = array<i32>} : memref<192x64xf32, #tpu.memory_space<vmem>>, vector<192x32xf32>,
    %c0_70 = arith.constant 0 : index
    %c32_71 = arith.constant 32 : index
    %71 = vector.load %arg9[%c0_70, %c32_71] : memref<192x64xf32, #tpu.memory_space<vmem>>, vector<192x32xf32>
    tpu.vector_store %arg9[%c0_70, %c32_71], %69 {strides = array<i32>} : memref<192x64xf32, #tpu.memory_space<vmem>>, vector<192x32xf32>,
    %c0_72 = arith.constant 0 : index
    %c0_73 = arith.constant 0 : index
    %72 = vector.load %arg9[%c0_72, %c0_73] : memref<192x64xf32, #tpu.memory_space<vmem>>, vector<192x64xf32>
    %cst_74 = arith.constant dense<0.000000e+00> : vector<192x32xf32>
    %73 = tpu.matmul %72, %58, %cst_74 {dimension_numbers = #tpu.dot_dimension_numbers<[1], [0], [0], [1], [0, 0, 1, 1], [], []>} : vector<192x64xf32>, vector<64x32xf32>, vector<192x32xf32> -> vector<192x32xf32>
    %74 = vector.broadcast %60 : vector<1x32xf32> to vector<192x32xf32>
    %75 = arith.addf %73, %74 : vector<192x32xf32>
    %cst_75 = arith.constant 0.000000e+00 : f32
    %76 = vector.broadcast %cst_75 : f32 to vector<192x32xf32>
    %77 = arith.maximumf %75, %76 : vector<192x32xf32>
    %c3 = arith.constant 3 : index
    %c0_76 = arith.constant 0 : index
    %c0_77 = arith.constant 0 : index
    %78 = vector.load %arg4[%c3, %c0_76, %c0_77] : memref<5x32x32xf32, #tpu.memory_space<vmem>>, vector<1x32x32xf32>
    %79 = vector.shape_cast %78 : vector<1x32x32xf32> to vector<32x32xf32>
    %c3_78 = arith.constant 3 : index
    %c0_79 = arith.constant 0 : index
    %c0_80 = arith.constant 0 : index
    %80 = vector.load %arg5[%c3_78, %c0_79, %c0_80] : memref<5x320x32xf32, #tpu.memory_space<vmem>>, vector<1x320x32xf32>
    %81 = vector.shape_cast %80 : vector<1x320x32xf32> to vector<320x32xf32>
    %c3_81 = arith.constant 3 : index
    %c0_82 = arith.constant 0 : index
    %c0_83 = arith.constant 0 : index
    %82 = vector.load %arg6[%c3_81, %c0_82, %c0_83] : memref<5x64x32xf32, #tpu.memory_space<vmem>>, vector<1x64x32xf32>
    %83 = vector.shape_cast %82 : vector<1x64x32xf32> to vector<64x32xf32>
    %c3_84 = arith.constant 3 : index
    %c0_85 = arith.constant 0 : index
    %c0_86 = arith.constant 0 : index
    %84 = vector.load %arg7[%c3_84, %c0_85, %c0_86] : memref<5x1x32xf32, #tpu.memory_space<vmem>>, vector<1x1x32xf32>
    %85 = vector.shape_cast %84 : vector<1x1x32xf32> to vector<1x32xf32>
    %cst_87 = arith.constant dense<0.000000e+00> : vector<192x32xf32>
    %86 = tpu.matmul %77, %79, %cst_87 {dimension_numbers = #tpu.dot_dimension_numbers<[1], [0], [0], [1], [0, 0, 1, 1], [], []>} : vector<192x32xf32>, vector<32x32xf32>, vector<192x32xf32> -> vector<192x32xf32>
    %cst_88 = arith.constant dense<0.000000e+00> : vector<320x32xf32>
    %87 = tpu.matmul %1, %86, %cst_88 {dimension_numbers = #tpu.dot_dimension_numbers<[1], [0], [0], [1], [0, 0, 1, 1], [], []>} : vector<320x192xf32>, vector<192x32xf32>, vector<320x32xf32> -> vector<320x32xf32>
    %88 = arith.addf %87, %81 : vector<320x32xf32>
    %cst_89 = arith.constant 0.000000e+00 : f32
    %89 = vector.broadcast %cst_89 : f32 to vector<320x32xf32>
    %90 = arith.cmpf oge, %88, %89 : vector<320x32xf32>
    %cst_90 = arith.constant 0.00999999977 : f32
    %91 = vector.broadcast %cst_90 : f32 to vector<320x32xf32>
    %92 = arith.mulf %91, %88 : vector<320x32xf32>
    %93 = arith.select %90, %88, %92 : vector<320x32xi1>, vector<320x32xf32>
    %cst_91 = arith.constant dense<0.000000e+00> : vector<192x32xf32>
    %94 = tpu.matmul %2, %93, %cst_91 {dimension_numbers = #tpu.dot_dimension_numbers<[1], [0], [0], [1], [0, 0, 1, 1], [], []>} : vector<192x320xf32>, vector<320x32xf32>, vector<192x32xf32> -> vector<192x32xf32>
    %c0_92 = arith.constant 0 : index
    %c0_93 = arith.constant 0 : index
    %95 = vector.load %arg9[%c0_92, %c0_93] : memref<192x64xf32, #tpu.memory_space<vmem>>, vector<192x32xf32>
    tpu.vector_store %arg9[%c0_92, %c0_93], %77 {strides = array<i32>} : memref<192x64xf32, #tpu.memory_space<vmem>>, vector<192x32xf32>,
    %c0_94 = arith.constant 0 : index
    %c32_95 = arith.constant 32 : index
    %96 = vector.load %arg9[%c0_94, %c32_95] : memref<192x64xf32, #tpu.memory_space<vmem>>, vector<192x32xf32>
    tpu.vector_store %arg9[%c0_94, %c32_95], %94 {strides = array<i32>} : memref<192x64xf32, #tpu.memory_space<vmem>>, vector<192x32xf32>,
    %c0_96 = arith.constant 0 : index
    %c0_97 = arith.constant 0 : index
    %97 = vector.load %arg9[%c0_96, %c0_97] : memref<192x64xf32, #tpu.memory_space<vmem>>, vector<192x64xf32>
    %cst_98 = arith.constant dense<0.000000e+00> : vector<192x32xf32>
    %98 = tpu.matmul %97, %83, %cst_98 {dimension_numbers = #tpu.dot_dimension_numbers<[1], [0], [0], [1], [0, 0, 1, 1], [], []>} : vector<192x64xf32>, vector<64x32xf32>, vector<192x32xf32> -> vector<192x32xf32>
    %99 = vector.broadcast %85 : vector<1x32xf32> to vector<192x32xf32>
    %100 = arith.addf %98, %99 : vector<192x32xf32>
    %cst_99 = arith.constant 0.000000e+00 : f32
    %101 = vector.broadcast %cst_99 : f32 to vector<192x32xf32>
    %102 = arith.maximumf %100, %101 : vector<192x32xf32>
    %c4 = arith.constant 4 : index
    %c0_100 = arith.constant 0 : index
    %c0_101 = arith.constant 0 : index
    %103 = vector.load %arg4[%c4, %c0_100, %c0_101] : memref<5x32x32xf32, #tpu.memory_space<vmem>>, vector<1x32x32xf32>
    %104 = vector.shape_cast %103 : vector<1x32x32xf32> to vector<32x32xf32>
    %c4_102 = arith.constant 4 : index
    %c0_103 = arith.constant 0 : index
    %c0_104 = arith.constant 0 : index
    %105 = vector.load %arg5[%c4_102, %c0_103, %c0_104] : memref<5x320x32xf32, #tpu.memory_space<vmem>>, vector<1x320x32xf32>
    %106 = vector.shape_cast %105 : vector<1x320x32xf32> to vector<320x32xf32>
    %c4_105 = arith.constant 4 : index
    %c0_106 = arith.constant 0 : index
    %c0_107 = arith.constant 0 : index
    %107 = vector.load %arg6[%c4_105, %c0_106, %c0_107] : memref<5x64x32xf32, #tpu.memory_space<vmem>>, vector<1x64x32xf32>
    %108 = vector.shape_cast %107 : vector<1x64x32xf32> to vector<64x32xf32>
    %c4_108 = arith.constant 4 : index
    %c0_109 = arith.constant 0 : index
    %c0_110 = arith.constant 0 : index
    %109 = vector.load %arg7[%c4_108, %c0_109, %c0_110] : memref<5x1x32xf32, #tpu.memory_space<vmem>>, vector<1x1x32xf32>
    %110 = vector.shape_cast %109 : vector<1x1x32xf32> to vector<1x32xf32>
    %cst_111 = arith.constant dense<0.000000e+00> : vector<192x32xf32>
    %111 = tpu.matmul %102, %104, %cst_111 {dimension_numbers = #tpu.dot_dimension_numbers<[1], [0], [0], [1], [0, 0, 1, 1], [], []>} : vector<192x32xf32>, vector<32x32xf32>, vector<192x32xf32> -> vector<192x32xf32>
    %cst_112 = arith.constant dense<0.000000e+00> : vector<320x32xf32>
    %112 = tpu.matmul %1, %111, %cst_112 {dimension_numbers = #tpu.dot_dimension_numbers<[1], [0], [0], [1], [0, 0, 1, 1], [], []>} : vector<320x192xf32>, vector<192x32xf32>, vector<320x32xf32> -> vector<320x32xf32>
    %113 = arith.addf %112, %106 : vector<320x32xf32>
    %cst_113 = arith.constant 0.000000e+00 : f32
    %114 = vector.broadcast %cst_113 : f32 to vector<320x32xf32>
    %115 = arith.cmpf oge, %113, %114 : vector<320x32xf32>
    %cst_114 = arith.constant 0.00999999977 : f32
    %116 = vector.broadcast %cst_114 : f32 to vector<320x32xf32>
    %117 = arith.mulf %116, %113 : vector<320x32xf32>
    %118 = arith.select %115, %113, %117 : vector<320x32xi1>, vector<320x32xf32>
    %cst_115 = arith.constant dense<0.000000e+00> : vector<192x32xf32>
    %119 = tpu.matmul %2, %118, %cst_115 {dimension_numbers = #tpu.dot_dimension_numbers<[1], [0], [0], [1], [0, 0, 1, 1], [], []>} : vector<192x320xf32>, vector<320x32xf32>, vector<192x32xf32> -> vector<192x32xf32>
    %c0_116 = arith.constant 0 : index
    %c0_117 = arith.constant 0 : index
    %120 = vector.load %arg9[%c0_116, %c0_117] : memref<192x64xf32, #tpu.memory_space<vmem>>, vector<192x32xf32>
    tpu.vector_store %arg9[%c0_116, %c0_117], %102 {strides = array<i32>} : memref<192x64xf32, #tpu.memory_space<vmem>>, vector<192x32xf32>,
    %c0_118 = arith.constant 0 : index
    %c32_119 = arith.constant 32 : index
    %121 = vector.load %arg9[%c0_118, %c32_119] : memref<192x64xf32, #tpu.memory_space<vmem>>, vector<192x32xf32>
    tpu.vector_store %arg9[%c0_118, %c32_119], %119 {strides = array<i32>} : memref<192x64xf32, #tpu.memory_space<vmem>>, vector<192x32xf32>,
    %c0_120 = arith.constant 0 : index
    %c0_121 = arith.constant 0 : index
    %122 = vector.load %arg9[%c0_120, %c0_121] : memref<192x64xf32, #tpu.memory_space<vmem>>, vector<192x64xf32>
    %cst_122 = arith.constant dense<0.000000e+00> : vector<192x32xf32>
    %123 = tpu.matmul %122, %108, %cst_122 {dimension_numbers = #tpu.dot_dimension_numbers<[1], [0], [0], [1], [0, 0, 1, 1], [], []>} : vector<192x64xf32>, vector<64x32xf32>, vector<192x32xf32> -> vector<192x32xf32>
    %124 = vector.broadcast %110 : vector<1x32xf32> to vector<192x32xf32>
    %125 = arith.addf %123, %124 : vector<192x32xf32>
    %c0_123 = arith.constant 0 : index
    %c0_124 = arith.constant 0 : index
    %126 = vector.load %arg8[%c0_123, %c0_124] : memref<192x32xf32, #tpu.memory_space<vmem>>, vector<192x32xf32>
    tpu.vector_store %arg8[%c0_123, %c0_124], %125 {strides = array<i32>} : memref<192x32xf32, #tpu.memory_space<vmem>>, vector<192x32xf32>,
    return
  }
  func.func @transform_0(%arg0: i32) -> (i32, i32) {
    %c0_i32 = arith.constant 0 : i32
    %c0_i32_0 = arith.constant 0 : i32
    return %arg0, %c0_i32 : i32, i32
  }
  func.func @transform_1(%arg0: i32) -> (i32, i32) {
    %c0_i32 = arith.constant 0 : i32
    %c0_i32_0 = arith.constant 0 : i32
    %c0_i32_1 = arith.constant 0 : i32
    return %c0_i32, %c0_i32_0 : i32, i32
  }
  func.func @transform_2(%arg0: i32) -> (i32, i32) {
    %c0_i32 = arith.constant 0 : i32
    %c0_i32_0 = arith.constant 0 : i32
    %c0_i32_1 = arith.constant 0 : i32
    return %c0_i32, %c0_i32_0 : i32, i32
  }
  func.func @transform_3(%arg0: i32) -> (i32, i32, i32) {
    %c0_i32 = arith.constant 0 : i32
    %c0_i32_0 = arith.constant 0 : i32
    %c0_i32_1 = arith.constant 0 : i32
    %c0_i32_2 = arith.constant 0 : i32
    return %c0_i32, %c0_i32_0, %c0_i32_1 : i32, i32, i32
  }
  func.func @transform_4(%arg0: i32) -> (i32, i32, i32) {
    %c0_i32 = arith.constant 0 : i32
    %c0_i32_0 = arith.constant 0 : i32
    %c0_i32_1 = arith.constant 0 : i32
    %c0_i32_2 = arith.constant 0 : i32
    return %c0_i32, %c0_i32_0, %c0_i32_1 : i32, i32, i32
  }
  func.func @transform_5(%arg0: i32) -> (i32, i32, i32) {
    %c0_i32 = arith.constant 0 : i32
    %c0_i32_0 = arith.constant 0 : i32
    %c0_i32_1 = arith.constant 0 : i32
    %c0_i32_2 = arith.constant 0 : i32
    return %c0_i32, %c0_i32_0, %c0_i32_1 : i32, i32, i32
  }
  func.func @transform_6(%arg0: i32) -> (i32, i32, i32) {
    %c0_i32 = arith.constant 0 : i32
    %c0_i32_0 = arith.constant 0 : i32
    %c0_i32_1 = arith.constant 0 : i32
    %c0_i32_2 = arith.constant 0 : i32
    return %c0_i32, %c0_i32_0, %c0_i32_1 : i32, i32, i32
  }
  func.func @transform_7(%arg0: i32) -> (i32, i32) {
    %c0_i32 = arith.constant 0 : i32
    %c0_i32_0 = arith.constant 0 : i32
    return %arg0, %c0_i32 : i32, i32
  }
}

</mosaic_0001>

<llo_original>
// kernel: tpu_custom_call.1
$region0: #{tpu_custom_call.1}
  #allocation0 [shape = 'u32[]', space=smem, size = 0x4, offset = 0x4, fixed_abs, tag = 'smem constant byte address 0x4 - core index']
  #allocation1 [shape = 'u32[72,128]{1,0:T(1,128)}', space=vmem, size = 0x9000, scoped, tag = 'internal scratch']
  #allocation2 [shape = 'f32[192,64]{1,0:T(8,128)}', space=vmem, size = 0x18000, scoped, tag = 'scratch operand']
  %s0 = inlined_call_operand.vmem [shape: f32[768,32], index: 0, kind: input, shape index: {}]
  %s1 = inlined_call_operand.vmem [shape: f32[320,192], index: 1, kind: input, shape index: {}]
  %s2 = inlined_call_operand.vmem [shape: f32[192,320], index: 2, kind: input, shape index: {}]
  %s3 = inlined_call_operand.vmem [shape: f32[5,32,32], index: 3, kind: input, shape index: {}]
  %s4 = inlined_call_operand.vmem [shape: f32[5,320,32], index: 4, kind: input, shape index: {}]
  %s5 = inlined_call_operand.vmem [shape: f32[5,64,32], index: 5, kind: input, shape index: {}]
  %s6 = inlined_call_operand.vmem [shape: f32[5,1,32], index: 6, kind: input, shape index: {}]
  %s7 = inlined_call_operand.vmem [shape: f32[768,32], index: 7, kind: output, shape index: {}]
  %s8 = sld [smem:[#allocation0]]
  $region61: #{tpu_custom_call.1} parent=0
    _
  %s10 = ssub.s32 1, %s8
  %s11 = scalar_select 0, %s10, %s8
  loop: start=0, step=1, limit=6
  $region2: #{tpu_custom_call.1} parent=0 // loop_pre_header
    _
  $region3: #{tpu_custom_call.1} parent=0 // loop_header
    %s13 = sphi 0, %s17
    %p14 = scmp.ge.s32.totalorder %s13, 6
    %s23 = sphi 0, %s25
    %s26 = sphi 0, %s23
    %s27 = sphi 0, %s26
    %s43 = sphi 0, %s27
    %s47 = sphi 0, %s47
    %s49 = sphi 0, %s47
    %s50 = sphi 0, %s49
    %s64 = sphi 0, %s50
    %s68 = sphi 0, %s68
    %s70 = sphi 0, %s68
    %s71 = sphi 0, %s70
    %s85 = sphi 0, %s71
    %s89 = sphi 0, %s89
    %s91 = sphi 0, %s89
    %s92 = sphi 0, %s91
    %s106 = sphi 0, %s92
    %s110 = sphi 0, %s110
    %s112 = sphi 0, %s110
    %s113 = sphi 0, %s112
    %s127 = sphi 0, %s113
    %s131 = sphi 0, %s131
    %s133 = sphi 0, %s131
    %s134 = sphi 0, %s133
    %s148 = sphi 0, %s134
    %s152 = sphi 0, %s152
    %s154 = sphi 0, %s152
    %s155 = sphi 0, %s154
    %s169 = sphi 0, %s155
    %s175 = sphi 0, %s177
    %s178 = sphi 0, %s175
    %s179 = sphi 0, %s178
    %s195 = sphi 0, %s179
  $region4: #{tpu_custom_call.1} parent=0 // loop_header_branch
    %16 = sbr.rel (%p14) target = $region8
  $region5: #{tpu_custom_call.1} parent=0 // loop_body
    %s18 = ssub.s32 %s13, 1
    %s19 = ssub.s32 %s13, 2
    %s20 = sadd.s32 %s13, 1
    %s21 = ssub.s32 %s13, %s20
    %p22 = scmp.eq.s32.totalorder %s21, 0
    %s24 = sadd.s32 %s23, 1
    %s25 = scalar_select %p22, %s23, %s24
    %p28 = pneg %p22
    %p29 = scmp.eq.s32.totalorder %s13, 3
    %p30 = por %p28, %p29
    %p31 = scmp.ne.s32.totalorder %s23, %s26
    %p32 = scmp.eq.s32.totalorder %s13, 0
    %p33 = por %p31, %p32
    %p34 = scmp.ne.s32.totalorder %s23, %s26
    %p35 = scmp.eq.s32.totalorder %s18, 3
    %p36 = por %p34, %p35
    %p37 = scmp.ne.s32.totalorder %s26, %s27
    %p38 = scmp.eq.s32.totalorder %s18, 0
    %p39 = por %p37, %p38
    %p40 = scmp.ne.s32.totalorder %s26, %s27
    %p41 = scmp.eq.s32.totalorder %s19, 3
    %p42 = por %p40, %p41
    %p44 = scmp.ne.s32.totalorder %s27, %s43
    %p45 = scmp.eq.s32.totalorder %s19, 0
    %p46 = por %p44, %p45
    %s48 = sadd.s32 %s47, 1
    %p51 = scmp.eq.s32.totalorder %s13, 3
    %p52 = scmp.ne.s32.totalorder %s47, %s49
    %p53 = scmp.eq.s32.totalorder %s13, 0
    %p54 = por %p52, %p53
    %p55 = scmp.ne.s32.totalorder %s47, %s49
    %p56 = scmp.eq.s32.totalorder %s18, 3
    %p57 = por %p55, %p56
    %p58 = scmp.ne.s32.totalorder %s49, %s50
    %p59 = scmp.eq.s32.totalorder %s18, 0
    %p60 = por %p58, %p59
    %p61 = scmp.ne.s32.totalorder %s49, %s50
    %p62 = scmp.eq.s32.totalorder %s19, 3
    %p63 = por %p61, %p62
    %p65 = scmp.ne.s32.totalorder %s50, %s64
    %p66 = scmp.eq.s32.totalorder %s19, 0
    %p67 = por %p65, %p66
    %s69 = sadd.s32 %s68, 1
    %p72 = scmp.eq.s32.totalorder %s13, 3
    %p73 = scmp.ne.s32.totalorder %s68, %s70
    %p74 = scmp.eq.s32.totalorder %s13, 0
    %p75 = por %p73, %p74
    %p76 = scmp.ne.s32.totalorder %s68, %s70
    %p77 = scmp.eq.s32.totalorder %s18, 3
    %p78 = por %p76, %p77
    %p79 = scmp.ne.s32.totalorder %s70, %s71
    %p80 = scmp.eq.s32.totalorder %s18, 0
    %p81 = por %p79, %p80
    %p82 = scmp.ne.s32.totalorder %s70, %s71
    %p83 = scmp.eq.s32.totalorder %s19, 3
    %p84 = por %p82, %p83
    %p86 = scmp.ne.s32.totalorder %s71, %s85
    %p87 = scmp.eq.s32.totalorder %s19, 0
    %p88 = por %p86, %p87
    %s90 = sadd.s32 %s89, 1
    %p93 = scmp.eq.s32.totalorder %s13, 3
    %p94 = scmp.ne.s32.totalorder %s89, %s91
    %p95 = scmp.eq.s32.totalorder %s13, 0
    %p96 = por %p94, %p95
    %p97 = scmp.ne.s32.totalorder %s89, %s91
    %p98 = scmp.eq.s32.totalorder %s18, 3
    %p99 = por %p97, %p98
    %p100 = scmp.ne.s32.totalorder %s91, %s92
    %p101 = scmp.eq.s32.totalorder %s18, 0
    %p102 = por %p100, %p101
    %p103 = scmp.ne.s32.totalorder %s91, %s92
    %p104 = scmp.eq.s32.totalorder %s19, 3
    %p105 = por %p103, %p104
    %p107 = scmp.ne.s32.totalorder %s92, %s106
    %p108 = scmp.eq.s32.totalorder %s19, 0
    %p109 = por %p107, %p108
    %s111 = sadd.s32 %s110, 1
    %p114 = scmp.eq.s32.totalorder %s13, 3
    %p115 = scmp.ne.s32.totalorder %s110, %s112
    %p116 = scmp.eq.s32.totalorder %s13, 0
    %p117 = por %p115, %p116
    %p118 = scmp.ne.s32.totalorder %s110, %s112
    %p119 = scmp.eq.s32.totalorder %s18, 3
    %p120 = por %p118, %p119
    %p121 = scmp.ne.s32.totalorder %s112, %s113
    %p122 = scmp.eq.s32.totalorder %s18, 0
    %p123 = por %p121, %p122
    %p124 = scmp.ne.s32.totalorder %s112, %s113
    %p125 = scmp.eq.s32.totalorder %s19, 3
    %p126 = por %p124, %p125
    %p128 = scmp.ne.s32.totalorder %s113, %s127
    %p129 = scmp.eq.s32.totalorder %s19, 0
    %p130 = por %p128, %p129
    %s132 = sadd.s32 %s131, 1
    %p135 = scmp.eq.s32.totalorder %s13, 3
    %p136 = scmp.ne.s32.totalorder %s131, %s133
    %p137 = scmp.eq.s32.totalorder %s13, 0
    %p138 = por %p136, %p137
    %p139 = scmp.ne.s32.totalorder %s131, %s133
    %p140 = scmp.eq.s32.totalorder %s18, 3
    %p141 = por %p139, %p140
    %p142 = scmp.ne.s32.totalorder %s133, %s134
    %p143 = scmp.eq.s32.totalorder %s18, 0
    %p144 = por %p142, %p143
    %p145 = scmp.ne.s32.totalorder %s133, %s134
    %p146 = scmp.eq.s32.totalorder %s19, 3
    %p147 = por %p145, %p146
    %p149 = scmp.ne.s32.totalorder %s134, %s148
    %p150 = scmp.eq.s32.totalorder %s19, 0
    %p151 = por %p149, %p150
    %s153 = sadd.s32 %s152, 1
    %p156 = scmp.eq.s32.totalorder %s13, 3
    %p157 = scmp.ne.s32.totalorder %s152, %s154
    %p158 = scmp.eq.s32.totalorder %s13, 0
    %p159 = por %p157, %p158
    %p160 = scmp.ne.s32.totalorder %s152, %s154
    %p161 = scmp.eq.s32.totalorder %s18, 3
    %p162 = por %p160, %p161
    %p163 = scmp.ne.s32.totalorder %s154, %s155
    %p164 = scmp.eq.s32.totalorder %s18, 0
    %p165 = por %p163, %p164
    %p166 = scmp.ne.s32.totalorder %s154, %s155
    %p167 = scmp.eq.s32.totalorder %s19, 3
    %p168 = por %p166, %p167
    %p170 = scmp.ne.s32.totalorder %s155, %s169
    %p171 = scmp.eq.s32.totalorder %s19, 0
    %p172 = por %p170, %p171
    %s173 = ssub.s32 %s13, %s20
    %p174 = scmp.eq.s32.totalorder %s173, 0
    %s176 = sadd.s32 %s175, 1
    %s177 = scalar_select %p174, %s175, %s176
    %p180 = pneg %p174
    %p181 = scmp.eq.s32.totalorder %s13, 3
    %p182 = por %p180, %p181
    %p183 = scmp.ne.s32.totalorder %s175, %s178
    %p184 = scmp.eq.s32.totalorder %s13, 0
    %p185 = por %p183, %p184
    %p186 = scmp.ne.s32.totalorder %s175, %s178
    %p187 = scmp.eq.s32.totalorder %s18, 3
    %p188 = por %p186, %p187
    %p189 = scmp.ne.s32.totalorder %s178, %s179
    %p190 = scmp.eq.s32.totalorder %s18, 0
    %p191 = por %p189, %p190
    %p192 = scmp.ne.s32.totalorder %s178, %s179
    %p193 = scmp.eq.s32.totalorder %s19, 3
    %p194 = por %p192, %p193
    %p196 = scmp.ne.s32.totalorder %s179, %s195
    %p197 = scmp.eq.s32.totalorder %s19, 0
    %p198 = por %p196, %p197
    %p199 = scmp.le.s32.totalorder 1, %s13
    %p200 = scmp.lt.s32.totalorder %s13, 5
    %p201 = pnand %p199, %p200
    %p202 = pneg %p201
    // Predicated region
    $region9: #{tpu_custom_call.1} parent=5 // pred_check
      _
    $region10: #{tpu_custom_call.1} parent=5 // pred_check_branch
      %204 = sbr.rel (%p201) target = $region12
    $region11: #{tpu_custom_call.1} parent=5 // pred_region
      %s205 = ssub.s32 %s13, 1
      // Predicated region
      $region13: #{tpu_custom_call.1} parent=11 // pred_check
        %p206 = pneg %p60
      $region14: #{tpu_custom_call.1} parent=11 // pred_check_branch
        %208 = sbr.rel (%p206) target = $region16
      $region15: #{tpu_custom_call.1} parent=11 // pred_region
        _
      $region16: #{tpu_custom_call.1} parent=11 // pred_fallthru
        _
      // Predicated region
      $region17: #{tpu_custom_call.1} parent=11 // pred_check
        %p209 = pneg %p81
      $region18: #{tpu_custom_call.1} parent=11 // pred_check_branch
        %211 = sbr.rel (%p209) target = $region20
      $region19: #{tpu_custom_call.1} parent=11 // pred_region
        _
      $region20: #{tpu_custom_call.1} parent=11 // pred_fallthru
        _
      // Predicated region
      $region21: #{tpu_custom_call.1} parent=11 // pred_check
        %p212 = pneg %p102
      $region22: #{tpu_custom_call.1} parent=11 // pred_check_branch
        %214 = sbr.rel (%p212) target = $region24
      $region23: #{tpu_custom_call.1} parent=11 // pred_region
        _
      $region24: #{tpu_custom_call.1} parent=11 // pred_fallthru
        _
      // Predicated region
      $region25: #{tpu_custom_call.1} parent=11 // pred_check
        %p215 = pneg %p123
      $region26: #{tpu_custom_call.1} parent=11 // pred_check_branch
        %217 = sbr.rel (%p215) target = $region28
      $region27: #{tpu_custom_call.1} parent=11 // pred_region
        _
      $region28: #{tpu_custom_call.1} parent=11 // pred_fallthru
        _
      // Predicated region
      $region29: #{tpu_custom_call.1} parent=11 // pred_check
        %p218 = pneg %p144
      $region30: #{tpu_custom_call.1} parent=11 // pred_check_branch
        %220 = sbr.rel (%p218) target = $region32
      $region31: #{tpu_custom_call.1} parent=11 // pred_region
        _
      $region32: #{tpu_custom_call.1} parent=11 // pred_fallthru
        _
      // Predicated region
      $region33: #{tpu_custom_call.1} parent=11 // pred_check
        %p221 = pneg %p165
      $region34: #{tpu_custom_call.1} parent=11 // pred_check_branch
        %223 = sbr.rel (%p221) target = $region36
      $region35: #{tpu_custom_call.1} parent=11 // pred_region
        _
      $region36: #{tpu_custom_call.1} parent=11 // pred_fallthru
        _
    $region12: #{tpu_custom_call.1} parent=5 // pred_fallthru
      _
    %p224 = scmp.lt.s32.totalorder %s13, 4
    // Predicated region
    $region37: #{tpu_custom_call.1} parent=5 // pred_check
      %p225 = pneg %p224
    $region38: #{tpu_custom_call.1} parent=5 // pred_check_branch
      %227 = sbr.rel (%p225) target = $region40
    $region39: #{tpu_custom_call.1} parent=5 // pred_region
      // Predicated region
      $region41: #{tpu_custom_call.1} parent=39 // pred_check
        %p228 = pneg %p33
      $region42: #{tpu_custom_call.1} parent=39 // pred_check_branch
        %230 = sbr.rel (%p228) target = $region44
      $region43: #{tpu_custom_call.1} parent=39 // pred_region
        %s231 = smul.u32 24, %s13
        %p232 = scmp.lt.s32.totalorder %s231, 95
        %s233 = scalar_select %p232, %s231, 95
        %s234 = smul.addr %s233, 8
        %s235 = scalar_lea.vmem %s0, %s234
        %s236 = smul.u32 24, %s13
      $region44: #{tpu_custom_call.1} parent=39 // pred_fallthru
        _
    $region40: #{tpu_custom_call.1} parent=5 // pred_fallthru
      _
    %p237 = scmp.le.s32.totalorder 1, %s13
    %p238 = scmp.lt.s32.totalorder %s13, 5
    %p239 = pnand %p237, %p238
    %p240 = pneg %p239
    // Predicated region
    $region45: #{tpu_custom_call.1} parent=5 // pred_check
      _
    $region46: #{tpu_custom_call.1} parent=5 // pred_check_branch
      %242 = sbr.rel (%p239) target = $region48
    $region47: #{tpu_custom_call.1} parent=5 // pred_region
      %s243 = ssub.s32 %s13, 1
      %s244 = smul.u32 24, %s18
      %p245 = scmp.lt.s32.totalorder %s244, 95
      %s246 = scalar_select %p245, %s244, 95
      %s247 = smul.addr %s246, 8
      %s248 = scalar_lea.vmem %s0, %s247
      %p249 = pneg %p39
      %p250 = pneg %p36
      %p251 = pneg %p60
      %p252 = pneg %p57
      %p253 = pneg %p81
      %p254 = pneg %p78
      %p255 = pneg %p102
      %p256 = pneg %p99
      %p257 = pneg %p123
      %p258 = pneg %p120
      %p259 = pneg %p144
      %p260 = pneg %p141
      %p261 = pneg %p165
      %p262 = pneg %p162
      %p263 = pneg %p191
      %p264 = pneg %p188
      %s265 = smul.u32 24, %s18
      %p266 = scmp.lt.s32.totalorder %s265, 95
      %s267 = scalar_select %p266, %s265, 95
      %s268 = smul.addr %s267, 8
      %s269 = scalar_lea.vmem %s7, %s268
      %s270 = smul.u32 24, %s18
      %p271 = scmp.lt.s32.totalorder %s270, 95
      %s272 = scalar_select %p271, %s270, 95
      %s273 = smul.addr %s272, 8
      %s274 = scalar_lea.vmem %s0, %s273
      %s275 = smul.u32 24, %s18
      %s276 = smul.u32 24, %s18
      %p277 = scmp.lt.s32.totalorder %s276, 95
      %s278 = scalar_select %p277, %s276, 95
      %s279 = smul.addr %s278, 8
      %s280 = scalar_lea.vmem %s7, %s279
      %s281 = smul.u32 24, %s18
      %v282 = vld [vmem:[%s274] sm:$0xff]
      %v283 = vld [vmem:[%s274 + $0x8] sm:$0xff]
      %v284 = vld [vmem:[%s274 + $0x10] sm:$0xff]
      %v285 = vld [vmem:[%s274 + $0x18] sm:$0xff]
      %v286 = vld [vmem:[%s274 + $0x20] sm:$0xff]
      %v287 = vld [vmem:[%s274 + $0x28] sm:$0xff]
      %v288 = vld [vmem:[%s274 + $0x30] sm:$0xff]
      %v289 = vld [vmem:[%s274 + $0x38] sm:$0xff]
      %v290 = vld [vmem:[%s274 + $0x40] sm:$0xff]
      %v291 = vld [vmem:[%s274 + $0x48] sm:$0xff]
      %v292 = vld [vmem:[%s274 + $0x50] sm:$0xff]
      %v293 = vld [vmem:[%s274 + $0x58] sm:$0xff]
      %v294 = vld [vmem:[%s274 + $0x60] sm:$0xff]
      %v295 = vld [vmem:[%s274 + $0x68] sm:$0xff]
      %v296 = vld [vmem:[%s274 + $0x70] sm:$0xff]
      %v297 = vld [vmem:[%s274 + $0x78] sm:$0xff]
      %v298 = vld [vmem:[%s274 + $0x80] sm:$0xff]
      %v299 = vld [vmem:[%s274 + $0x88] sm:$0xff]
      %v300 = vld [vmem:[%s274 + $0x90] sm:$0xff]
      %v301 = vld [vmem:[%s274 + $0x98] sm:$0xff]
      %v302 = vld [vmem:[%s274 + $0xa0] sm:$0xff]
      %v303 = vld [vmem:[%s274 + $0xa8] sm:$0xff]
      %v304 = vld [vmem:[%s274 + $0xb0] sm:$0xff]
      %v305 = vld [vmem:[%s274 + $0xb8] sm:$0xff]
      %v306 = vld [vmem:[%s1] sm:$0xff]
      %v307 = vld [vmem:[%s1 + $0x8] sm:$0xff]
      %v308 = vld [vmem:[%s1 + $0x10] sm:$0xff]
      %v309 = vld [vmem:[%s1 + $0x18] sm:$0xff]
      %v310 = vld [vmem:[%s1 + $0x20] sm:$0xff]
      %v311 = vld [vmem:[%s1 + $0x28] sm:$0xff]
      %v312 = vld [vmem:[%s1 + $0x30] sm:$0xff]
      %v313 = vld [vmem:[%s1 + $0x38] sm:$0xff]
      %v314 = vld [vmem:[%s1 + $0x40] sm:$0xff]
      %v315 = vld [vmem:[%s1 + $0x48] sm:$0xff]
      %v316 = vld [vmem:[%s1 + $0x50] sm:$0xff]
      %v317 = vld [vmem:[%s1 + $0x58] sm:$0xff]
      %v318 = vld [vmem:[%s1 + $0x60] sm:$0xff]
      %v319 = vld [vmem:[%s1 + $0x68] sm:$0xff]
      %v320 = vld [vmem:[%s1 + $0x70] sm:$0xff]
      %v321 = vld [vmem:[%s1 + $0x78] sm:$0xff]
      %v322 = vld [vmem:[%s1 + $0x80] sm:$0xff]
      %v323 = vld [vmem:[%s1 + $0x88] sm:$0xff]
      %v324 = vld [vmem:[%s1 + $0x90] sm:$0xff]
      %v325 = vld [vmem:[%s1 + $0x98] sm:$0xff]
      %v326 = vld [vmem:[%s1 + $0xa0] sm:$0xff]
      %v327 = vld [vmem:[%s1 + $0xa8] sm:$0xff]
      %v328 = vld [vmem:[%s1 + $0xb0] sm:$0xff]
      %v329 = vld [vmem:[%s1 + $0xb8] sm:$0xff]
      %v330 = vld [vmem:[%s1 + $0xc0] sm:$0xff]
      %v331 = vld [vmem:[%s1 + $0xc8] sm:$0xff]
      %v332 = vld [vmem:[%s1 + $0xd0] sm:$0xff]
      %v333 = vld [vmem:[%s1 + $0xd8] sm:$0xff]
      %v334 = vld [vmem:[%s1 + $0xe0] sm:$0xff]
      %v335 = vld [vmem:[%s1 + $0xe8] sm:$0xff]
      %v336 = vld [vmem:[%s1 + $0xf0] sm:$0xff]
      %v337 = vld [vmem:[%s1 + $0xf8] sm:$0xff]
      %v338 = vld [vmem:[%s1 + $0x100] sm:$0xff]
      %v339 = vld [vmem:[%s1 + $0x108] sm:$0xff]
      %v340 = vld [vmem:[%s1 + $0x110] sm:$0xff]
      %v341 = vld [vmem:[%s1 + $0x118] sm:$0xff]
      %v342 = vld [vmem:[%s1 + $0x120] sm:$0xff]
      %v343 = vld [vmem:[%s1 + $0x128] sm:$0xff]
      %v344 = vld [vmem:[%s1 + $0x130] sm:$0xff]
      %v345 = vld [vmem:[%s1 + $0x138] sm:$0xff]
      %v346 = vld [vmem:[%s1 + $0x140] sm:$0xff]
      %v347 = vld [vmem:[%s1 + $0x148] sm:$0xff]
      %v348 = vld [vmem:[%s1 + $0x150] sm:$0xff]
      %v349 = vld [vmem:[%s1 + $0x158] sm:$0xff]
      %v350 = vld [vmem:[%s1 + $0x160] sm:$0xff]
      %v351 = vld [vmem:[%s1 + $0x168] sm:$0xff]
      %v352 = vld [vmem:[%s1 + $0x170] sm:$0xff]
      %v353 = vld [vmem:[%s1 + $0x178] sm:$0xff]
      %v354 = vld [vmem:[%s1 + $0x180] sm:$0xff]
      %v355 = vld [vmem:[%s1 + $0x188] sm:$0xff]
      %v356 = vld [vmem:[%s1 + $0x190] sm:$0xff]
      %v357 = vld [vmem:[%s1 + $0x198] sm:$0xff]
      %v358 = vld [vmem:[%s1 + $0x1a0] sm:$0xff]
      %v359 = vld [vmem:[%s1 + $0x1a8] sm:$0xff]
      %v360 = vld [vmem:[%s1 + $0x1b0] sm:$0xff]
      %v361 = vld [vmem:[%s1 + $0x1b8] sm:$0xff]
      %v362 = vld [vmem:[%s1 + $0x1c0] sm:$0xff]
      %v363 = vld [vmem:[%s1 + $0x1c8] sm:$0xff]
      %v364 = vld [vmem:[%s1 + $0x1d0] sm:$0xff]
      %v365 = vld [vmem:[%s1 + $0x1d8] sm:$0xff]
      %v366 = vld [vmem:[%s1 + $0x1e0] sm:$0xff]
      %v367 = vld [vmem:[%s1 + $0x1e8] sm:$0xff]
      %v368 = vld [vmem:[%s1 + $0x1f0] sm:$0xff]
      %v369 = vld [vmem:[%s1 + $0x1f8] sm:$0xff]
      %v370 = vld [vmem:[%s1 + $0x200] sm:$0xff]
      %v371 = vld [vmem:[%s1 + $0x208] sm:$0xff]
      %v372 = vld [vmem:[%s1 + $0x210] sm:$0xff]
      %v373 = vld [vmem:[%s1 + $0x218] sm:$0xff]
      %v374 = vld [vmem:[%s1 + $0x220] sm:$0xff]
      %v375 = vld [vmem:[%s1 + $0x228] sm:$0xff]
      %v376 = vld [vmem:[%s1 + $0x230] sm:$0xff]
      %v377 = vld [vmem:[%s1 + $0x238] sm:$0xff]
      %v378 = vld [vmem:[%s1 + $0x240] sm:$0xff]
      %v379 = vld [vmem:[%s1 + $0x248] sm:$0xff]
      %v380 = vld [vmem:[%s1 + $0x250] sm:$0xff]
      %v381 = vld [vmem:[%s1 + $0x258] sm:$0xff]
      %v382 = vld [vmem:[%s1 + $0x260] sm:$0xff]
      %v383 = vld [vmem:[%s1 + $0x268] sm:$0xff]
      %v384 = vld [vmem:[%s1 + $0x270] sm:$0xff]
      %v385 = vld [vmem:[%s1 + $0x278] sm:$0xff]
      %v386 = vld [vmem:[%s2] sm:$0xff]
      %v387 = vld [vmem:[%s2 + $0x8] sm:$0xff]
      %v388 = vld [vmem:[%s2 + $0x10] sm:$0xff]
      %v389 = vld [vmem:[%s2 + $0x18] sm:$0xff]
      %v390 = vld [vmem:[%s2 + $0x20] sm:$0xff]
      %v391 = vld [vmem:[%s2 + $0x28] sm:$0xff]
      %v392 = vld [vmem:[%s2 + $0x30] sm:$0xff]
      %v393 = vld [vmem:[%s2 + $0x38] sm:$0xff]
      %v394 = vld [vmem:[%s2 + $0x40] sm:$0xff]
      %v395 = vld [vmem:[%s2 + $0x48] sm:$0xff]
      %v396 = vld [vmem:[%s2 + $0x50] sm:$0xff]
      %v397 = vld [vmem:[%s2 + $0x58] sm:$0xff]
      %v398 = vld [vmem:[%s2 + $0x60] sm:$0xff]
      %v399 = vld [vmem:[%s2 + $0x68] sm:$0xff]
      %v400 = vld [vmem:[%s2 + $0x70] sm:$0xff]
      %v401 = vld [vmem:[%s2 + $0x78] sm:$0xff]
      %v402 = vld [vmem:[%s2 + $0x80] sm:$0xff]
      %v403 = vld [vmem:[%s2 + $0x88] sm:$0xff]
      %v404 = vld [vmem:[%s2 + $0x90] sm:$0xff]
      %v405 = vld [vmem:[%s2 + $0x98] sm:$0xff]
      %v406 = vld [vmem:[%s2 + $0xa0] sm:$0xff]
      %v407 = vld [vmem:[%s2 + $0xa8] sm:$0xff]
      %v408 = vld [vmem:[%s2 + $0xb0] sm:$0xff]
      %v409 = vld [vmem:[%s2 + $0xb8] sm:$0xff]
      %v410 = vld [vmem:[%s2 + $0xc0] sm:$0xff]
      %v411 = vld [vmem:[%s2 + $0xc8] sm:$0xff]
      %v412 = vld [vmem:[%s2 + $0xd0] sm:$0xff]
      %v413 = vld [vmem:[%s2 + $0xd8] sm:$0xff]
      %v414 = vld [vmem:[%s2 + $0xe0] sm:$0xff]
      %v415 = vld [vmem:[%s2 + $0xe8] sm:$0xff]
      %v416 = vld [vmem:[%s2 + $0xf0] sm:$0xff]
      %v417 = vld [vmem:[%s2 + $0xf8] sm:$0xff]
      %v418 = vld [vmem:[%s2 + $0x100] sm:$0xff]
      %v419 = vld [vmem:[%s2 + $0x108] sm:$0xff]
      %v420 = vld [vmem:[%s2 + $0x110] sm:$0xff]
      %v421 = vld [vmem:[%s2 + $0x118] sm:$0xff]
      %v422 = vld [vmem:[%s2 + $0x120] sm:$0xff]
      %v423 = vld [vmem:[%s2 + $0x128] sm:$0xff]
      %v424 = vld [vmem:[%s2 + $0x130] sm:$0xff]
      %v425 = vld [vmem:[%s2 + $0x138] sm:$0xff]
      %v426 = vld [vmem:[%s2 + $0x140] sm:$0xff]
      %v427 = vld [vmem:[%s2 + $0x148] sm:$0xff]
      %v428 = vld [vmem:[%s2 + $0x150] sm:$0xff]
      %v429 = vld [vmem:[%s2 + $0x158] sm:$0xff]
      %v430 = vld [vmem:[%s2 + $0x160] sm:$0xff]
      %v431 = vld [vmem:[%s2 + $0x168] sm:$0xff]
      %v432 = vld [vmem:[%s2 + $0x170] sm:$0xff]
      %v433 = vld [vmem:[%s2 + $0x178] sm:$0xff]
      %v434 = vld [vmem:[%s2 + $0x180] sm:$0xff]
      %v435 = vld [vmem:[%s2 + $0x188] sm:$0xff]
      %v436 = vld [vmem:[%s2 + $0x190] sm:$0xff]
      %v437 = vld [vmem:[%s2 + $0x198] sm:$0xff]
      %v438 = vld [vmem:[%s2 + $0x1a0] sm:$0xff]
      %v439 = vld [vmem:[%s2 + $0x1a8] sm:$0xff]
      %v440 = vld [vmem:[%s2 + $0x1b0] sm:$0xff]
      %v441 = vld [vmem:[%s2 + $0x1b8] sm:$0xff]
      %v442 = vld [vmem:[%s2 + $0x1c0] sm:$0xff]
      %v443 = vld [vmem:[%s2 + $0x1c8] sm:$0xff]
      %v444 = vld [vmem:[%s2 + $0x1d0] sm:$0xff]
      %v445 = vld [vmem:[%s2 + $0x1d8] sm:$0xff]
      %v446 = vld [vmem:[%s2 + $0x1e0] sm:$0xff]
      %v447 = vld [vmem:[%s2 + $0x1e8] sm:$0xff]
      %v448 = vld [vmem:[%s2 + $0x1f0] sm:$0xff]
      %v449 = vld [vmem:[%s2 + $0x1f8] sm:$0xff]
      %v450 = vld [vmem:[%s2 + $0x200] sm:$0xff]
      %v451 = vld [vmem:[%s2 + $0x208] sm:$0xff]
      %v452 = vld [vmem:[%s2 + $0x210] sm:$0xff]
      %v453 = vld [vmem:[%s2 + $0x218] sm:$0xff]
      %v454 = vld [vmem:[%s2 + $0x220] sm:$0xff]
      %v455 = vld [vmem:[%s2 + $0x228] sm:$0xff]
      %v456 = vld [vmem:[%s2 + $0x230] sm:$0xff]
      %v457 = vld [vmem:[%s2 + $0x238] sm:$0xff]
      %v458 = vld [vmem:[%s3] sm:$0xff]
      %v459 = vld [vmem:[%s3 + $0x8] sm:$0xff]
      %v460 = vld [vmem:[%s3 + $0x10] sm:$0xff]
      %v461 = vld [vmem:[%s3 + $0x18] sm:$0xff]
      %v462 = vld [vmem:[%s4] sm:$0xff]
      %v463 = vld [vmem:[%s4 + $0x8] sm:$0xff]
      %v464 = vld [vmem:[%s4 + $0x10] sm:$0xff]
      %v465 = vld [vmem:[%s4 + $0x18] sm:$0xff]
      %v466 = vld [vmem:[%s4 + $0x20] sm:$0xff]
      %v467 = vld [vmem:[%s4 + $0x28] sm:$0xff]
      %v468 = vld [vmem:[%s4 + $0x30] sm:$0xff]
      %v469 = vld [vmem:[%s4 + $0x38] sm:$0xff]
      %v470 = vld [vmem:[%s4 + $0x40] sm:$0xff]
      %v471 = vld [vmem:[%s4 + $0x48] sm:$0xff]
      %v472 = vld [vmem:[%s4 + $0x50] sm:$0xff]
      %v473 = vld [vmem:[%s4 + $0x58] sm:$0xff]
      %v474 = vld [vmem:[%s4 + $0x60] sm:$0xff]
      %v475 = vld [vmem:[%s4 + $0x68] sm:$0xff]
      %v476 = vld [vmem:[%s4 + $0x70] sm:$0xff]
      %v477 = vld [vmem:[%s4 + $0x78] sm:$0xff]
      %v478 = vld [vmem:[%s4 + $0x80] sm:$0xff]
      %v479 = vld [vmem:[%s4 + $0x88] sm:$0xff]
      %v480 = vld [vmem:[%s4 + $0x90] sm:$0xff]
      %v481 = vld [vmem:[%s4 + $0x98] sm:$0xff]
      %v482 = vld [vmem:[%s4 + $0xa0] sm:$0xff]
      %v483 = vld [vmem:[%s4 + $0xa8] sm:$0xff]
      %v484 = vld [vmem:[%s4 + $0xb0] sm:$0xff]
      %v485 = vld [vmem:[%s4 + $0xb8] sm:$0xff]
      %v486 = vld [vmem:[%s4 + $0xc0] sm:$0xff]
      %v487 = vld [vmem:[%s4 + $0xc8] sm:$0xff]
      %v488 = vld [vmem:[%s4 + $0xd0] sm:$0xff]
      %v489 = vld [vmem:[%s4 + $0xd8] sm:$0xff]
      %v490 = vld [vmem:[%s4 + $0xe0] sm:$0xff]
      %v491 = vld [vmem:[%s4 + $0xe8] sm:$0xff]
      %v492 = vld [vmem:[%s4 + $0xf0] sm:$0xff]
      %v493 = vld [vmem:[%s4 + $0xf8] sm:$0xff]
      %v494 = vld [vmem:[%s4 + $0x100] sm:$0xff]
      %v495 = vld [vmem:[%s4 + $0x108] sm:$0xff]
      %v496 = vld [vmem:[%s4 + $0x110] sm:$0xff]
      %v497 = vld [vmem:[%s4 + $0x118] sm:$0xff]
      %v498 = vld [vmem:[%s4 + $0x120] sm:$0xff]
      %v499 = vld [vmem:[%s4 + $0x128] sm:$0xff]
      %v500 = vld [vmem:[%s4 + $0x130] sm:$0xff]
      %v501 = vld [vmem:[%s4 + $0x138] sm:$0xff]
      %v502 = vld [vmem:[%s5] sm:$0xff]
      %v503 = vld [vmem:[%s5 + $0x8] sm:$0xff]
      %v504 = vld [vmem:[%s5 + $0x10] sm:$0xff]
      %v505 = vld [vmem:[%s5 + $0x18] sm:$0xff]
      %v506 = vld [vmem:[%s5 + $0x20] sm:$0xff]
      %v507 = vld [vmem:[%s5 + $0x28] sm:$0xff]
      %v508 = vld [vmem:[%s5 + $0x30] sm:$0xff]
      %v509 = vld [vmem:[%s5 + $0x38] sm:$0xff]
      %v510 = vld [vmem:[%s6] sm:$0x1]
      %vm511 = vcmask 261120
      %v513 = vsel %vm511, %v282, 0
      %v516 = vsel %vm511, %v283, 0
      %v519 = vsel %vm511, %v284, 0
      %v522 = vsel %vm511, %v285, 0
      %v525 = vsel %vm511, %v286, 0
      %v528 = vsel %vm511, %v287, 0
      %v531 = vsel %vm511, %v288, 0
      %v534 = vsel %vm511, %v289, 0
      %v537 = vsel %vm511, %v290, 0
      %v540 = vsel %vm511, %v291, 0
      %v543 = vsel %vm511, %v292, 0
      %v546 = vsel %vm511, %v293, 0
      %v549 = vsel %vm511, %v294, 0
      %v552 = vsel %vm511, %v295, 0
      %v555 = vsel %vm511, %v296, 0
      %v558 = vsel %vm511, %v297, 0
      %v561 = vsel %vm511, %v298, 0
      %v564 = vsel %vm511, %v299, 0
      %v567 = vsel %vm511, %v300, 0
      %v570 = vsel %vm511, %v301, 0
      %v573 = vsel %vm511, %v302, 0
      %v576 = vsel %vm511, %v303, 0
      %v579 = vsel %vm511, %v304, 0
      %v582 = vsel %vm511, %v305, 0
      %584 = vmatpush.msra.mxu0 0.0
      %585 = vmatpush.msra.mxu0 0.0
      %586 = vmatpush.msra.mxu0 0.0
      %587 = vmatpush.msra.mxu0 0.0
      %588 = vmatpush.msra.mxu0 0.0
      %589 = vmatpush.msra.mxu0 0.0
      %590 = vmatpush.msra.mxu0 0.0
      %591 = vmatpush.msra.mxu0 0.0
      %592 = vmatpush.msra.mxu0 0.0
      %593 = vmatpush.msra.mxu0 0.0
      %594 = vmatpush.msra.mxu0 0.0
      %595 = vmatpush.msra.mxu0 0.0
      %596 = vmatpush.msra.mxu0 %v461
      %597 = vmatpush.msra.mxu0 %v460
      %598 = vmatpush.msra.mxu0 %v459
      %599 = vmatpush.msra.mxu0 %v458
      %600 = vmatmul.f32.gmra.mxu0 %v513
      %v601 = vpop.f32.mrf.mxu0
      %v602 = vadd.f32 0.0, %v601
      %603 = vmatmul.f32.gmra.mxu0 %v516
      %v604 = vpop.f32.mrf.mxu0
      %v605 = vadd.f32 0.0, %v604
      %606 = vmatmul.f32.gmra.mxu0 %v519
      %v607 = vpop.f32.mrf.mxu0
      %v608 = vadd.f32 0.0, %v607
      %609 = vmatmul.f32.gmra.mxu0 %v522
      %v610 = vpop.f32.mrf.mxu0
      %v611 = vadd.f32 0.0, %v610
      %612 = vmatmul.f32.gmra.mxu0 %v525
      %v613 = vpop.f32.mrf.mxu0
      %v614 = vadd.f32 0.0, %v613
      %615 = vmatmul.f32.gmra.mxu0 %v528
      %v616 = vpop.f32.mrf.mxu0
      %v617 = vadd.f32 0.0, %v616
      %618 = vmatmul.f32.gmra.mxu0 %v531
      %v619 = vpop.f32.mrf.mxu0
      %v620 = vadd.f32 0.0, %v619
      %621 = vmatmul.f32.gmra.mxu0 %v534
      %v622 = vpop.f32.mrf.mxu0
      %v623 = vadd.f32 0.0, %v622
      %624 = vmatmul.f32.gmra.mxu0 %v537
      %v625 = vpop.f32.mrf.mxu0
      %v626 = vadd.f32 0.0, %v625
      %627 = vmatmul.f32.gmra.mxu0 %v540
      %v628 = vpop.f32.mrf.mxu0
      %v629 = vadd.f32 0.0, %v628
      %630 = vmatmul.f32.gmra.mxu0 %v543
      %v631 = vpop.f32.mrf.mxu0
      %v632 = vadd.f32 0.0, %v631
      %633 = vmatmul.f32.gmra.mxu0 %v546
      %v634 = vpop.f32.mrf.mxu0
      %v635 = vadd.f32 0.0, %v634
      %636 = vmatmul.f32.gmra.mxu0 %v549
      %v637 = vpop.f32.mrf.mxu0
      %v638 = vadd.f32 0.0, %v637
      %639 = vmatmul.f32.gmra.mxu0 %v552
      %v640 = vpop.f32.mrf.mxu0
      %v641 = vadd.f32 0.0, %v640
      %642 = vmatmul.f32.gmra.mxu0 %v555
      %v643 = vpop.f32.mrf.mxu0
      %v644 = vadd.f32 0.0, %v643
      %645 = vmatmul.f32.gmra.mxu0 %v558
      %v646 = vpop.f32.mrf.mxu0
      %v647 = vadd.f32 0.0, %v646
      %648 = vmatmul.f32.gmra.mxu0 %v561
      %v649 = vpop.f32.mrf.mxu0
      %v650 = vadd.f32 0.0, %v649
      %651 = vmatmul.f32.gmra.mxu0 %v564
      %v652 = vpop.f32.mrf.mxu0
      %v653 = vadd.f32 0.0, %v652
      %654 = vmatmul.f32.gmra.mxu0 %v567
      %v655 = vpop.f32.mrf.mxu0
      %v656 = vadd.f32 0.0, %v655
      %657 = vmatmul.f32.gmra.mxu0 %v570
      %v658 = vpop.f32.mrf.mxu0
      %v659 = vadd.f32 0.0, %v658
      %660 = vmatmul.f32.gmra.mxu0 %v573
      %v661 = vpop.f32.mrf.mxu0
      %v662 = vadd.f32 0.0, %v661
      %663 = vmatmul.f32.gmra.mxu0 %v576
      %v664 = vpop.f32.mrf.mxu0
      %v665 = vadd.f32 0.0, %v664
      %666 = vmatmul.f32.gmra.mxu0 %v579
      %v667 = vpop.f32.mrf.mxu0
      %v668 = vadd.f32 0.0, %v667
      %669 = vmatmul.f32.gmra.mxu0 %v582
      %v670 = vpop.f32.mrf.mxu0
      %v671 = vadd.f32 0.0, %v670
      %672 = vdwg.mxu0
      %vm673 = vcmask 523264
      %v675 = vsel %vm673, %v307, 0
      %v678 = vsel %vm673, %v309, 0
      %v681 = vsel %vm673, %v311, 0
      %v684 = vsel %vm673, %v313, 0
      %v687 = vsel %vm673, %v315, 0
      %v690 = vsel %vm673, %v317, 0
      %v693 = vsel %vm673, %v319, 0
      %v696 = vsel %vm673, %v321, 0
      %v699 = vsel %vm673, %v323, 0
      %v702 = vsel %vm673, %v325, 0
      %v705 = vsel %vm673, %v327, 0
      %v708 = vsel %vm673, %v329, 0
      %v711 = vsel %vm673, %v331, 0
      %v714 = vsel %vm673, %v333, 0
      %v717 = vsel %vm673, %v335, 0
      %v720 = vsel %vm673, %v337, 0
      %v723 = vsel %vm673, %v339, 0
      %v726 = vsel %vm673, %v341, 0
      %v729 = vsel %vm673, %v343, 0
      %v732 = vsel %vm673, %v345, 0
      %v735 = vsel %vm673, %v347, 0
      %v738 = vsel %vm673, %v349, 0
      %v741 = vsel %vm673, %v351, 0
      %v744 = vsel %vm673, %v353, 0
      %v747 = vsel %vm673, %v355, 0
      %v750 = vsel %vm673, %v357, 0
      %v753 = vsel %vm673, %v359, 0
      %v756 = vsel %vm673, %v361, 0
      %v759 = vsel %vm673, %v363, 0
      %v762 = vsel %vm673, %v365, 0
      %v765 = vsel %vm673, %v367, 0
      %v768 = vsel %vm673, %v369, 0
      %v771 = vsel %vm673, %v371, 0
      %v774 = vsel %vm673, %v373, 0
      %v777 = vsel %vm673, %v375, 0
      %v780 = vsel %vm673, %v377, 0
      %v783 = vsel %vm673, %v379, 0
      %v786 = vsel %vm673, %v381, 0
      %v789 = vsel %vm673, %v383, 0
      %v792 = vsel %vm673, %v385, 0
      %794 = vmatpush.msra.mxu0 %v647
      %795 = vmatpush.msra.mxu0 %v644
      %796 = vmatpush.msra.mxu0 %v641
      %797 = vmatpush.msra.mxu0 %v638
      %798 = vmatpush.msra.mxu0 %v635
      %799 = vmatpush.msra.mxu0 %v632
      %800 = vmatpush.msra.mxu0 %v629
      %801 = vmatpush.msra.mxu0 %v626
      %802 = vmatpush.msra.mxu0 %v623
      %803 = vmatpush.msra.mxu0 %v620
      %804 = vmatpush.msra.mxu0 %v617
      %805 = vmatpush.msra.mxu0 %v614
      %806 = vmatpush.msra.mxu0 %v611
      %807 = vmatpush.msra.mxu0 %v608
      %808 = vmatpush.msra.mxu0 %v605
      %809 = vmatpush.msra.mxu0 %v602
      %810 = vmatmul.f32.gmra.mxu0 %v306
      %v811 = vpop.f32.mrf.mxu0
      %v812 = vadd.f32 %v462, %v811
      %813 = vmatmul.f32.gmra.mxu0 %v308
      %v814 = vpop.f32.mrf.mxu0
      %v815 = vadd.f32 %v463, %v814
      %816 = vmatmul.f32.gmra.mxu0 %v310
      %v817 = vpop.f32.mrf.mxu0
      %v818 = vadd.f32 %v464, %v817
      %819 = vmatmul.f32.gmra.mxu0 %v312
      %v820 = vpop.f32.mrf.mxu0
      %v821 = vadd.f32 %v465, %v820
      %822 = vmatmul.f32.gmra.mxu0 %v314
      %v823 = vpop.f32.mrf.mxu0
      %v824 = vadd.f32 %v466, %v823
      %825 = vmatmul.f32.gmra.mxu0 %v316
      %v826 = vpop.f32.mrf.mxu0
      %v827 = vadd.f32 %v467, %v826
      %828 = vmatmul.f32.gmra.mxu0 %v318
      %v829 = vpop.f32.mrf.mxu0
      %v830 = vadd.f32 %v468, %v829
      %831 = vmatmul.f32.gmra.mxu0 %v320
      %v832 = vpop.f32.mrf.mxu0
      %v833 = vadd.f32 %v469, %v832
      %834 = vmatmul.f32.gmra.mxu0 %v322
      %v835 = vpop.f32.mrf.mxu0
      %v836 = vadd.f32 %v470, %v835
      %837 = vmatmul.f32.gmra.mxu0 %v324
      %v838 = vpop.f32.mrf.mxu0
      %v839 = vadd.f32 %v471, %v838
      %840 = vmatmul.f32.gmra.mxu0 %v326
      %v841 = vpop.f32.mrf.mxu0
      %v842 = vadd.f32 %v472, %v841
      %843 = vmatmul.f32.gmra.mxu0 %v328
      %v844 = vpop.f32.mrf.mxu0
      %v845 = vadd.f32 %v473, %v844
      %846 = vmatmul.f32.gmra.mxu0 %v330
      %v847 = vpop.f32.mrf.mxu0
      %v848 = vadd.f32 %v474, %v847
      %849 = vmatmul.f32.gmra.mxu0 %v332
      %v850 = vpop.f32.mrf.mxu0
      %v851 = vadd.f32 %v475, %v850
      %852 = vmatmul.f32.gmra.mxu0 %v334
      %v853 = vpop.f32.mrf.mxu0
      %v854 = vadd.f32 %v476, %v853
      %855 = vmatmul.f32.gmra.mxu0 %v336
      %v856 = vpop.f32.mrf.mxu0
      %v857 = vadd.f32 %v477, %v856
      %858 = vmatmul.f32.gmra.mxu0 %v338
      %v859 = vpop.f32.mrf.mxu0
      %v860 = vadd.f32 %v478, %v859
      %861 = vmatmul.f32.gmra.mxu0 %v340
      %v862 = vpop.f32.mrf.mxu0
      %v863 = vadd.f32 %v479, %v862
      %864 = vmatmul.f32.gmra.mxu0 %v342
      %v865 = vpop.f32.mrf.mxu0
      %v866 = vadd.f32 %v480, %v865
      %867 = vmatmul.f32.gmra.mxu0 %v344
      %v868 = vpop.f32.mrf.mxu0
      %v869 = vadd.f32 %v481, %v868
      %870 = vmatmul.f32.gmra.mxu0 %v346
      %v871 = vpop.f32.mrf.mxu0
      %v872 = vadd.f32 %v482, %v871
      %873 = vmatmul.f32.gmra.mxu0 %v348
      %v874 = vpop.f32.mrf.mxu0
      %v875 = vadd.f32 %v483, %v874
      %876 = vmatmul.f32.gmra.mxu0 %v350
      %v877 = vpop.f32.mrf.mxu0
      %v878 = vadd.f32 %v484, %v877
      %879 = vmatmul.f32.gmra.mxu0 %v352
      %v880 = vpop.f32.mrf.mxu0
      %v881 = vadd.f32 %v485, %v880
      %882 = vmatmul.f32.gmra.mxu0 %v354
      %v883 = vpop.f32.mrf.mxu0
      %v884 = vadd.f32 %v486, %v883
      %885 = vmatmul.f32.gmra.mxu0 %v356
      %v886 = vpop.f32.mrf.mxu0
      %v887 = vadd.f32 %v487, %v886
      %888 = vmatmul.f32.gmra.mxu0 %v358
      %v889 = vpop.f32.mrf.mxu0
      %v890 = vadd.f32 %v488, %v889
      %891 = vmatmul.f32.gmra.mxu0 %v360
      %v892 = vpop.f32.mrf.mxu0
      %v893 = vadd.f32 %v489, %v892
      %894 = vmatmul.f32.gmra.mxu0 %v362
      %v895 = vpop.f32.mrf.mxu0
      %v896 = vadd.f32 %v490, %v895
      %897 = vmatmul.f32.gmra.mxu0 %v364
      %v898 = vpop.f32.mrf.mxu0
      %v899 = vadd.f32 %v491, %v898
      %900 = vmatmul.f32.gmra.mxu0 %v366
      %v901 = vpop.f32.mrf.mxu0
      %v902 = vadd.f32 %v492, %v901
      %903 = vmatmul.f32.gmra.mxu0 %v368
      %v904 = vpop.f32.mrf.mxu0
      %v905 = vadd.f32 %v493, %v904
      %906 = vmatmul.f32.gmra.mxu0 %v370
      %v907 = vpop.f32.mrf.mxu0
      %v908 = vadd.f32 %v494, %v907
      %909 = vmatmul.f32.gmra.mxu0 %v372
      %v910 = vpop.f32.mrf.mxu0
      %v911 = vadd.f32 %v495, %v910
      %912 = vmatmul.f32.gmra.mxu0 %v374
      %v913 = vpop.f32.mrf.mxu0
      %v914 = vadd.f32 %v496, %v913
      %915 = vmatmul.f32.gmra.mxu0 %v376
      %v916 = vpop.f32.mrf.mxu0
      %v917 = vadd.f32 %v497, %v916
      %918 = vmatmul.f32.gmra.mxu0 %v378
      %v919 = vpop.f32.mrf.mxu0
      %v920 = vadd.f32 %v498, %v919
      %921 = vmatmul.f32.gmra.mxu0 %v380
      %v922 = vpop.f32.mrf.mxu0
      %v923 = vadd.f32 %v499, %v922
      %924 = vmatmul.f32.gmra.mxu0 %v382
      %v925 = vpop.f32.mrf.mxu0
      %v926 = vadd.f32 %v500, %v925
      %927 = vmatmul.f32.gmra.mxu0 %v384
      %v928 = vpop.f32.mrf.mxu0
      %v929 = vadd.f32 %v501, %v928
      %930 = vdwg.mxu0
      %931 = vmatpush.msra.mxu0 0.0
      %932 = vmatpush.msra.mxu0 0.0
      %933 = vmatpush.msra.mxu0 0.0
      %934 = vmatpush.msra.mxu0 0.0
      %935 = vmatpush.msra.mxu0 0.0
      %936 = vmatpush.msra.mxu0 0.0
      %937 = vmatpush.msra.mxu0 0.0
      %938 = vmatpush.msra.mxu0 0.0
      %939 = vmatpush.msra.mxu0 %v671
      %940 = vmatpush.msra.mxu0 %v668
      %941 = vmatpush.msra.mxu0 %v665
      %942 = vmatpush.msra.mxu0 %v662
      %943 = vmatpush.msra.mxu0 %v659
      %944 = vmatpush.msra.mxu0 %v656
      %945 = vmatpush.msra.mxu0 %v653
      %946 = vmatpush.msra.mxu0 %v650
      %947 = vmatmul.f32.gmra.mxu0 %v675
      %v948 = vpop.f32.mrf.mxu0
      %v949 = vadd.f32 %v812, %v948
      %950 = vmatmul.f32.gmra.mxu0 %v678
      %v951 = vpop.f32.mrf.mxu0
      %v952 = vadd.f32 %v815, %v951
      %953 = vmatmul.f32.gmra.mxu0 %v681
      %v954 = vpop.f32.mrf.mxu0
      %v955 = vadd.f32 %v818, %v954
      %956 = vmatmul.f32.gmra.mxu0 %v684
      %v957 = vpop.f32.mrf.mxu0
      %v958 = vadd.f32 %v821, %v957
      %959 = vmatmul.f32.gmra.mxu0 %v687
      %v960 = vpop.f32.mrf.mxu0
      %v961 = vadd.f32 %v824, %v960
      %962 = vmatmul.f32.gmra.mxu0 %v690
      %v963 = vpop.f32.mrf.mxu0
      %v964 = vadd.f32 %v827, %v963
      %965 = vmatmul.f32.gmra.mxu0 %v693
      %v966 = vpop.f32.mrf.mxu0
      %v967 = vadd.f32 %v830, %v966
      %968 = vmatmul.f32.gmra.mxu0 %v696
      %v969 = vpop.f32.mrf.mxu0
      %v970 = vadd.f32 %v833, %v969
      %971 = vmatmul.f32.gmra.mxu0 %v699
      %v972 = vpop.f32.mrf.mxu0
      %v973 = vadd.f32 %v836, %v972
      %974 = vmatmul.f32.gmra.mxu0 %v702
      %v975 = vpop.f32.mrf.mxu0
      %v976 = vadd.f32 %v839, %v975
      %977 = vmatmul.f32.gmra.mxu0 %v705
      %v978 = vpop.f32.mrf.mxu0
      %v979 = vadd.f32 %v842, %v978
      %980 = vmatmul.f32.gmra.mxu0 %v708
      %v981 = vpop.f32.mrf.mxu0
      %v982 = vadd.f32 %v845, %v981
      %983 = vmatmul.f32.gmra.mxu0 %v711
      %v984 = vpop.f32.mrf.mxu0
      %v985 = vadd.f32 %v848, %v984
      %986 = vmatmul.f32.gmra.mxu0 %v714
      %v987 = vpop.f32.mrf.mxu0
      %v988 = vadd.f32 %v851, %v987
      %989 = vmatmul.f32.gmra.mxu0 %v717
      %v990 = vpop.f32.mrf.mxu0
      %v991 = vadd.f32 %v854, %v990
      %992 = vmatmul.f32.gmra.mxu0 %v720
      %v993 = vpop.f32.mrf.mxu0
      %v994 = vadd.f32 %v857, %v993
      %995 = vmatmul.f32.gmra.mxu0 %v723
      %v996 = vpop.f32.mrf.mxu0
      %v997 = vadd.f32 %v860, %v996
      %998 = vmatmul.f32.gmra.mxu0 %v726
      %v999 = vpop.f32.mrf.mxu0
      %v1000 = vadd.f32 %v863, %v999
      %1001 = vmatmul.f32.gmra.mxu0 %v729
      %v1002 = vpop.f32.mrf.mxu0
      %v1003 = vadd.f32 %v866, %v1002
      %1004 = vmatmul.f32.gmra.mxu0 %v732
      %v1005 = vpop.f32.mrf.mxu0
      %v1006 = vadd.f32 %v869, %v1005
      %1007 = vmatmul.f32.gmra.mxu0 %v735
      %v1008 = vpop.f32.mrf.mxu0
      %v1009 = vadd.f32 %v872, %v1008
      %1010 = vmatmul.f32.gmra.mxu0 %v738
      %v1011 = vpop.f32.mrf.mxu0
      %v1012 = vadd.f32 %v875, %v1011
      %1013 = vmatmul.f32.gmra.mxu0 %v741
      %v1014 = vpop.f32.mrf.mxu0
      %v1015 = vadd.f32 %v878, %v1014
      %1016 = vmatmul.f32.gmra.mxu0 %v744
      %v1017 = vpop.f32.mrf.mxu0
      %v1018 = vadd.f32 %v881, %v1017
      %1019 = vmatmul.f32.gmra.mxu0 %v747
      %v1020 = vpop.f32.mrf.mxu0
      %v1021 = vadd.f32 %v884, %v1020
      %1022 = vmatmul.f32.gmra.mxu0 %v750
      %v1023 = vpop.f32.mrf.mxu0
      %v1024 = vadd.f32 %v887, %v1023
      %1025 = vmatmul.f32.gmra.mxu0 %v753
      %v1026 = vpop.f32.mrf.mxu0
      %v1027 = vadd.f32 %v890, %v1026
      %1028 = vmatmul.f32.gmra.mxu0 %v756
      %v1029 = vpop.f32.mrf.mxu0
      %v1030 = vadd.f32 %v893, %v1029
      %1031 = vmatmul.f32.gmra.mxu0 %v759
      %v1032 = vpop.f32.mrf.mxu0
      %v1033 = vadd.f32 %v896, %v1032
      %1034 = vmatmul.f32.gmra.mxu0 %v762
      %v1035 = vpop.f32.mrf.mxu0
      %v1036 = vadd.f32 %v899, %v1035
      %1037 = vmatmul.f32.gmra.mxu0 %v765
      %v1038 = vpop.f32.mrf.mxu0
      %v1039 = vadd.f32 %v902, %v1038
      %1040 = vmatmul.f32.gmra.mxu0 %v768
      %v1041 = vpop.f32.mrf.mxu0
      %v1042 = vadd.f32 %v905, %v1041
      %1043 = vmatmul.f32.gmra.mxu0 %v771
      %v1044 = vpop.f32.mrf.mxu0
      %v1045 = vadd.f32 %v908, %v1044
      %1046 = vmatmul.f32.gmra.mxu0 %v774
      %v1047 = vpop.f32.mrf.mxu0
      %v1048 = vadd.f32 %v911, %v1047
      %1049 = vmatmul.f32.gmra.mxu0 %v777
      %v1050 = vpop.f32.mrf.mxu0
      %v1051 = vadd.f32 %v914, %v1050
      %1052 = vmatmul.f32.gmra.mxu0 %v780
      %v1053 = vpop.f32.mrf.mxu0
      %v1054 = vadd.f32 %v917, %v1053
      %1055 = vmatmul.f32.gmra.mxu0 %v783
      %v1056 = vpop.f32.mrf.mxu0
      %v1057 = vadd.f32 %v920, %v1056
      %1058 = vmatmul.f32.gmra.mxu0 %v786
      %v1059 = vpop.f32.mrf.mxu0
      %v1060 = vadd.f32 %v923, %v1059
      %1061 = vmatmul.f32.gmra.mxu0 %v789
      %v1062 = vpop.f32.mrf.mxu0
      %v1063 = vadd.f32 %v926, %v1062
      %1064 = vmatmul.f32.gmra.mxu0 %v792
      %v1065 = vpop.f32.mrf.mxu0
      %v1066 = vadd.f32 %v929, %v1065
      %1067 = vdwg.mxu0
      %vm1068 = vcmp.ge.f32.partialorder %v949, 0.0
      %vm1069 = vcmp.ge.f32.partialorder %v952, 0.0
      %vm1070 = vcmp.ge.f32.partialorder %v955, 0.0
      %vm1071 = vcmp.ge.f32.partialorder %v958, 0.0
      %vm1072 = vcmp.ge.f32.partialorder %v961, 0.0
      %vm1073 = vcmp.ge.f32.partialorder %v964, 0.0
      %vm1074 = vcmp.ge.f32.partialorder %v967, 0.0
      %vm1075 = vcmp.ge.f32.partialorder %v970, 0.0
      %vm1076 = vcmp.ge.f32.partialorder %v973, 0.0
      %vm1077 = vcmp.ge.f32.partialorder %v976, 0.0
      %vm1078 = vcmp.ge.f32.partialorder %v979, 0.0
      %vm1079 = vcmp.ge.f32.partialorder %v982, 0.0
      %vm1080 = vcmp.ge.f32.partialorder %v985, 0.0
      %vm1081 = vcmp.ge.f32.partialorder %v988, 0.0
      %vm1082 = vcmp.ge.f32.partialorder %v991, 0.0
      %vm1083 = vcmp.ge.f32.partialorder %v994, 0.0
      %vm1084 = vcmp.ge.f32.partialorder %v997, 0.0
      %vm1085 = vcmp.ge.f32.partialorder %v1000, 0.0
      %vm1086 = vcmp.ge.f32.partialorder %v1003, 0.0
      %vm1087 = vcmp.ge.f32.partialorder %v1006, 0.0
      %vm1088 = vcmp.ge.f32.partialorder %v1009, 0.0
      %vm1089 = vcmp.ge.f32.partialorder %v1012, 0.0
      %vm1090 = vcmp.ge.f32.partialorder %v1015, 0.0
      %vm1091 = vcmp.ge.f32.partialorder %v1018, 0.0
      %vm1092 = vcmp.ge.f32.partialorder %v1021, 0.0
      %vm1093 = vcmp.ge.f32.partialorder %v1024, 0.0
      %vm1094 = vcmp.ge.f32.partialorder %v1027, 0.0
      %vm1095 = vcmp.ge.f32.partialorder %v1030, 0.0
      %vm1096 = vcmp.ge.f32.partialorder %v1033, 0.0
      %vm1097 = vcmp.ge.f32.partialorder %v1036, 0.0
      %vm1098 = vcmp.ge.f32.partialorder %v1039, 0.0
      %vm1099 = vcmp.ge.f32.partialorder %v1042, 0.0
      %vm1100 = vcmp.ge.f32.partialorder %v1045, 0.0
      %vm1101 = vcmp.ge.f32.partialorder %v1048, 0.0
      %vm1102 = vcmp.ge.f32.partialorder %v1051, 0.0
      %vm1103 = vcmp.ge.f32.partialorder %v1054, 0.0
      %vm1104 = vcmp.ge.f32.partialorder %v1057, 0.0
      %vm1105 = vcmp.ge.f32.partialorder %v1060, 0.0
      %vm1106 = vcmp.ge.f32.partialorder %v1063, 0.0
      %vm1107 = vcmp.ge.f32.partialorder %v1066, 0.0
      %v1108 = vmul.f32 %v949, 0.01
      %v1109 = vmul.f32 %v952, 0.01
      %v1110 = vmul.f32 %v955, 0.01
      %v1111 = vmul.f32 %v958, 0.01
      %v1112 = vmul.f32 %v961, 0.01
      %v1113 = vmul.f32 %v964, 0.01
      %v1114 = vmul.f32 %v967, 0.01
      %v1115 = vmul.f32 %v970, 0.01
      %v1116 = vmul.f32 %v973, 0.01
      %v1117 = vmul.f32 %v976, 0.01
      %v1118 = vmul.f32 %v979, 0.01
      %v1119 = vmul.f32 %v982, 0.01
      %v1120 = vmul.f32 %v985, 0.01
      %v1121 = vmul.f32 %v988, 0.01
      %v1122 = vmul.f32 %v991, 0.01
      %v1123 = vmul.f32 %v994, 0.01
      %v1124 = vmul.f32 %v997, 0.01
      %v1125 = vmul.f32 %v1000, 0.01
      %v1126 = vmul.f32 %v1003, 0.01
      %v1127 = vmul.f32 %v1006, 0.01
      %v1128 = vmul.f32 %v1009, 0.01
      %v1129 = vmul.f32 %v1012, 0.01
      %v1130 = vmul.f32 %v1015, 0.01
      %v1131 = vmul.f32 %v1018, 0.01
      %v1132 = vmul.f32 %v1021, 0.01
      %v1133 = vmul.f32 %v1024, 0.01
      %v1134 = vmul.f32 %v1027, 0.01
      %v1135 = vmul.f32 %v1030, 0.01
      %v1136 = vmul.f32 %v1033, 0.01
      %v1137 = vmul.f32 %v1036, 0.01
      %v1138 = vmul.f32 %v1039, 0.01
      %v1139 = vmul.f32 %v1042, 0.01
      %v1140 = vmul.f32 %v1045, 0.01
      %v1141 = vmul.f32 %v1048, 0.01
      %v1142 = vmul.f32 %v1051, 0.01
      %v1143 = vmul.f32 %v1054, 0.01
      %v1144 = vmul.f32 %v1057, 0.01
      %v1145 = vmul.f32 %v1060, 0.01
      %v1146 = vmul.f32 %v1063, 0.01
      %v1147 = vmul.f32 %v1066, 0.01
      %v1148 = vsel %vm1068, %v949, %v1108
      %v1149 = vsel %vm1069, %v952, %v1109
      %v1150 = vsel %vm1070, %v955, %v1110
      %v1151 = vsel %vm1071, %v958, %v1111
      %v1152 = vsel %vm1072, %v961, %v1112
      %v1153 = vsel %vm1073, %v964, %v1113
      %v1154 = vsel %vm1074, %v967, %v1114
      %v1155 = vsel %vm1075, %v970, %v1115
      %v1156 = vsel %vm1076, %v973, %v1116
      %v1157 = vsel %vm1077, %v976, %v1117
      %v1158 = vsel %vm1078, %v979, %v1118
      %v1159 = vsel %vm1079, %v982, %v1119
      %v1160 = vsel %vm1080, %v985, %v1120
      %v1161 = vsel %vm1081, %v988, %v1121
      %v1162 = vsel %vm1082, %v991, %v1122
      %v1163 = vsel %vm1083, %v994, %v1123
      %v1164 = vsel %vm1084, %v997, %v1124
      %v1165 = vsel %vm1085, %v1000, %v1125
      %v1166 = vsel %vm1086, %v1003, %v1126
      %v1167 = vsel %vm1087, %v1006, %v1127
      %v1168 = vsel %vm1088, %v1009, %v1128
      %v1169 = vsel %vm1089, %v1012, %v1129
      %v1170 = vsel %vm1090, %v1015, %v1130
      %v1171 = vsel %vm1091, %v1018, %v1131
      %v1172 = vsel %vm1092, %v1021, %v1132
      %v1173 = vsel %vm1093, %v1024, %v1133
      %v1174 = vsel %vm1094, %v1027, %v1134
      %v1175 = vsel %vm1095, %v1030, %v1135
      %v1176 = vsel %vm1096, %v1033, %v1136
      %v1177 = vsel %vm1097, %v1036, %v1137
      %v1178 = vsel %vm1098, %v1039, %v1138
      %v1179 = vsel %vm1099, %v1042, %v1139
      %v1180 = vsel %vm1100, %v1045, %v1140
      %v1181 = vsel %vm1101, %v1048, %v1141
      %v1182 = vsel %vm1102, %v1051, %v1142
      %v1183 = vsel %vm1103, %v1054, %v1143
      %v1184 = vsel %vm1104, %v1057, %v1144
      %v1185 = vsel %vm1105, %v1060, %v1145
      %v1186 = vsel %vm1106, %v1063, %v1146
      %v1187 = vsel %vm1107, %v1066, %v1147
      %v1189 = vsel %vm673, %v388, 0
      %v1192 = vsel %vm673, %v391, 0
      %v1195 = vsel %vm673, %v394, 0
      %v1198 = vsel %vm673, %v397, 0
      %v1201 = vsel %vm673, %v400, 0
      %v1204 = vsel %vm673, %v403, 0
      %v1207 = vsel %vm673, %v406, 0
      %v1210 = vsel %vm673, %v409, 0
      %v1213 = vsel %vm673, %v412, 0
      %v1216 = vsel %vm673, %v415, 0
      %v1219 = vsel %vm673, %v418, 0
      %v1222 = vsel %vm673, %v421, 0
      %v1225 = vsel %vm673, %v424, 0
      %v1228 = vsel %vm673, %v427, 0
      %v1231 = vsel %vm673, %v430, 0
      %v1234 = vsel %vm673, %v433, 0
      %v1237 = vsel %vm673, %v436, 0
      %v1240 = vsel %vm673, %v439, 0
      %v1243 = vsel %vm673, %v442, 0
      %v1246 = vsel %vm673, %v445, 0
      %v1249 = vsel %vm673, %v448, 0
      %v1252 = vsel %vm673, %v451, 0
      %v1255 = vsel %vm673, %v454, 0
      %v1258 = vsel %vm673, %v457, 0
      %1260 = vmatpush.msra.mxu0 %v1163
      %1261 = vmatpush.msra.mxu0 %v1162
      %1262 = vmatpush.msra.mxu0 %v1161
      %1263 = vmatpush.msra.mxu0 %v1160
      %1264 = vmatpush.msra.mxu0 %v1159
      %1265 = vmatpush.msra.mxu0 %v1158
      %1266 = vmatpush.msra.mxu0 %v1157
      %1267 = vmatpush.msra.mxu0 %v1156
      %1268 = vmatpush.msra.mxu0 %v1155
      %1269 = vmatpush.msra.mxu0 %v1154
      %1270 = vmatpush.msra.mxu0 %v1153
      %1271 = vmatpush.msra.mxu0 %v1152
      %1272 = vmatpush.msra.mxu0 %v1151
      %1273 = vmatpush.msra.mxu0 %v1150
      %1274 = vmatpush.msra.mxu0 %v1149
      %1275 = vmatpush.msra.mxu0 %v1148
      %1276 = vmatmul.f32.gmra.mxu0 %v386
      %v1277 = vpop.f32.mrf.mxu0
      %v1278 = vadd.f32 0.0, %v1277
      %1279 = vmatmul.f32.gmra.mxu0 %v389
      %v1280 = vpop.f32.mrf.mxu0
      %v1281 = vadd.f32 0.0, %v1280
      %1282 = vmatmul.f32.gmra.mxu0 %v392
      %v1283 = vpop.f32.mrf.mxu0
      %v1284 = vadd.f32 0.0, %v1283
      %1285 = vmatmul.f32.gmra.mxu0 %v395
      %v1286 = vpop.f32.mrf.mxu0
      %v1287 = vadd.f32 0.0, %v1286
      %1288 = vmatmul.f32.gmra.mxu0 %v398
      %v1289 = vpop.f32.mrf.mxu0
      %v1290 = vadd.f32 0.0, %v1289
      %1291 = vmatmul.f32.gmra.mxu0 %v401
      %v1292 = vpop.f32.mrf.mxu0
      %v1293 = vadd.f32 0.0, %v1292
      %1294 = vmatmul.f32.gmra.mxu0 %v404
      %v1295 = vpop.f32.mrf.mxu0
      %v1296 = vadd.f32 0.0, %v1295
      %1297 = vmatmul.f32.gmra.mxu0 %v407
      %v1298 = vpop.f32.mrf.mxu0
      %v1299 = vadd.f32 0.0, %v1298
      %1300 = vmatmul.f32.gmra.mxu0 %v410
      %v1301 = vpop.f32.mrf.mxu0
      %v1302 = vadd.f32 0.0, %v1301
      %1303 = vmatmul.f32.gmra.mxu0 %v413
      %v1304 = vpop.f32.mrf.mxu0
      %v1305 = vadd.f32 0.0, %v1304
      %1306 = vmatmul.f32.gmra.mxu0 %v416
      %v1307 = vpop.f32.mrf.mxu0
      %v1308 = vadd.f32 0.0, %v1307
      %1309 = vmatmul.f32.gmra.mxu0 %v419
      %v1310 = vpop.f32.mrf.mxu0
      %v1311 = vadd.f32 0.0, %v1310
      %1312 = vmatmul.f32.gmra.mxu0 %v422
      %v1313 = vpop.f32.mrf.mxu0
      %v1314 = vadd.f32 0.0, %v1313
      %1315 = vmatmul.f32.gmra.mxu0 %v425
      %v1316 = vpop.f32.mrf.mxu0
      %v1317 = vadd.f32 0.0, %v1316
      %1318 = vmatmul.f32.gmra.mxu0 %v428
      %v1319 = vpop.f32.mrf.mxu0
      %v1320 = vadd.f32 0.0, %v1319
      %1321 = vmatmul.f32.gmra.mxu0 %v431
      %v1322 = vpop.f32.mrf.mxu0
      %v1323 = vadd.f32 0.0, %v1322
      %1324 = vmatmul.f32.gmra.mxu0 %v434
      %v1325 = vpop.f32.mrf.mxu0
      %v1326 = vadd.f32 0.0, %v1325
      %1327 = vmatmul.f32.gmra.mxu0 %v437
      %v1328 = vpop.f32.mrf.mxu0
      %v1329 = vadd.f32 0.0, %v1328
      %1330 = vmatmul.f32.gmra.mxu0 %v440
      %v1331 = vpop.f32.mrf.mxu0
      %v1332 = vadd.f32 0.0, %v1331
      %1333 = vmatmul.f32.gmra.mxu0 %v443
      %v1334 = vpop.f32.mrf.mxu0
      %v1335 = vadd.f32 0.0, %v1334
      %1336 = vmatmul.f32.gmra.mxu0 %v446
      %v1337 = vpop.f32.mrf.mxu0
      %v1338 = vadd.f32 0.0, %v1337
      %1339 = vmatmul.f32.gmra.mxu0 %v449
      %v1340 = vpop.f32.mrf.mxu0
      %v1341 = vadd.f32 0.0, %v1340
      %1342 = vmatmul.f32.gmra.mxu0 %v452
      %v1343 = vpop.f32.mrf.mxu0
      %v1344 = vadd.f32 0.0, %v1343
      %1345 = vmatmul.f32.gmra.mxu0 %v455
      %v1346 = vpop.f32.mrf.mxu0
      %v1347 = vadd.f32 0.0, %v1346
      %1348 = vdwg.mxu0
      %1349 = vmatpush.msra.mxu0 %v1179
      %1350 = vmatpush.msra.mxu0 %v1178
      %1351 = vmatpush.msra.mxu0 %v1177
      %1352 = vmatpush.msra.mxu0 %v1176
      %1353 = vmatpush.msra.mxu0 %v1175
      %1354 = vmatpush.msra.mxu0 %v1174
      %1355 = vmatpush.msra.mxu0 %v1173
      %1356 = vmatpush.msra.mxu0 %v1172
      %1357 = vmatpush.msra.mxu0 %v1171
      %1358 = vmatpush.msra.mxu0 %v1170
      %1359 = vmatpush.msra.mxu0 %v1169
      %1360 = vmatpush.msra.mxu0 %v1168
      %1361 = vmatpush.msra.mxu0 %v1167
      %1362 = vmatpush.msra.mxu0 %v1166
      %1363 = vmatpush.msra.mxu0 %v1165
      %1364 = vmatpush.msra.mxu0 %v1164
      %1365 = vmatmul.f32.gmra.mxu0 %v387
      %v1366 = vpop.f32.mrf.mxu0
      %v1367 = vadd.f32 %v1278, %v1366
      %1368 = vmatmul.f32.gmra.mxu0 %v390
      %v1369 = vpop.f32.mrf.mxu0
      %v1370 = vadd.f32 %v1281, %v1369
      %1371 = vmatmul.f32.gmra.mxu0 %v393
      %v1372 = vpop.f32.mrf.mxu0
      %v1373 = vadd.f32 %v1284, %v1372
      %1374 = vmatmul.f32.gmra.mxu0 %v396
      %v1375 = vpop.f32.mrf.mxu0
      %v1376 = vadd.f32 %v1287, %v1375
      %1377 = vmatmul.f32.gmra.mxu0 %v399
      %v1378 = vpop.f32.mrf.mxu0
      %v1379 = vadd.f32 %v1290, %v1378
      %1380 = vmatmul.f32.gmra.mxu0 %v402
      %v1381 = vpop.f32.mrf.mxu0
      %v1382 = vadd.f32 %v1293, %v1381
      %1383 = vmatmul.f32.gmra.mxu0 %v405
      %v1384 = vpop.f32.mrf.mxu0
      %v1385 = vadd.f32 %v1296, %v1384
      %1386 = vmatmul.f32.gmra.mxu0 %v408
      %v1387 = vpop.f32.mrf.mxu0
      %v1388 = vadd.f32 %v1299, %v1387
      %1389 = vmatmul.f32.gmra.mxu0 %v411
      %v1390 = vpop.f32.mrf.mxu0
      %v1391 = vadd.f32 %v1302, %v1390
      %1392 = vmatmul.f32.gmra.mxu0 %v414
      %v1393 = vpop.f32.mrf.mxu0
      %v1394 = vadd.f32 %v1305, %v1393
      %1395 = vmatmul.f32.gmra.mxu0 %v417
      %v1396 = vpop.f32.mrf.mxu0
      %v1397 = vadd.f32 %v1308, %v1396
      %1398 = vmatmul.f32.gmra.mxu0 %v420
      %v1399 = vpop.f32.mrf.mxu0
      %v1400 = vadd.f32 %v1311, %v1399
      %1401 = vmatmul.f32.gmra.mxu0 %v423
      %v1402 = vpop.f32.mrf.mxu0
      %v1403 = vadd.f32 %v1314, %v1402
      %1404 = vmatmul.f32.gmra.mxu0 %v426
      %v1405 = vpop.f32.mrf.mxu0
      %v1406 = vadd.f32 %v1317, %v1405
      %1407 = vmatmul.f32.gmra.mxu0 %v429
      %v1408 = vpop.f32.mrf.mxu0
      %v1409 = vadd.f32 %v1320, %v1408
      %1410 = vmatmul.f32.gmra.mxu0 %v432
      %v1411 = vpop.f32.mrf.mxu0
      %v1412 = vadd.f32 %v1323, %v1411
      %1413 = vmatmul.f32.gmra.mxu0 %v435
      %v1414 = vpop.f32.mrf.mxu0
      %v1415 = vadd.f32 %v1326, %v1414
      %1416 = vmatmul.f32.gmra.mxu0 %v438
      %v1417 = vpop.f32.mrf.mxu0
      %v1418 = vadd.f32 %v1329, %v1417
      %1419 = vmatmul.f32.gmra.mxu0 %v441
      %v1420 = vpop.f32.mrf.mxu0
      %v1421 = vadd.f32 %v1332, %v1420
      %1422 = vmatmul.f32.gmra.mxu0 %v444
      %v1423 = vpop.f32.mrf.mxu0
      %v1424 = vadd.f32 %v1335, %v1423
      %1425 = vmatmul.f32.gmra.mxu0 %v447
      %v1426 = vpop.f32.mrf.mxu0
      %v1427 = vadd.f32 %v1338, %v1426
      %1428 = vmatmul.f32.gmra.mxu0 %v450
      %v1429 = vpop.f32.mrf.mxu0
      %v1430 = vadd.f32 %v1341, %v1429
      %1431 = vmatmul.f32.gmra.mxu0 %v453
      %v1432 = vpop.f32.mrf.mxu0
      %v1433 = vadd.f32 %v1344, %v1432
      %1434 = vmatmul.f32.gmra.mxu0 %v456
      %v1435 = vpop.f32.mrf.mxu0
      %v1436 = vadd.f32 %v1347, %v1435
      %1437 = vdwg.mxu0
      %1438 = vmatpush.msra.mxu0 0.0
      %1439 = vmatpush.msra.mxu0 0.0
      %1440 = vmatpush.msra.mxu0 0.0
      %1441 = vmatpush.msra.mxu0 0.0
      %1442 = vmatpush.msra.mxu0 0.0
      %1443 = vmatpush.msra.mxu0 0.0
      %1444 = vmatpush.msra.mxu0 0.0
      %1445 = vmatpush.msra.mxu0 0.0
      %1446 = vmatpush.msra.mxu0 %v1187
      %1447 = vmatpush.msra.mxu0 %v1186
      %1448 = vmatpush.msra.mxu0 %v1185
      %1449 = vmatpush.msra.mxu0 %v1184
      %1450 = vmatpush.msra.mxu0 %v1183
      %1451 = vmatpush.msra.mxu0 %v1182
      %1452 = vmatpush.msra.mxu0 %v1181
      %1453 = vmatpush.msra.mxu0 %v1180
      %1454 = vmatmul.f32.gmra.mxu0 %v1189
      %v1455 = vpop.f32.mrf.mxu0
      %v1456 = vadd.f32 %v1367, %v1455
      %1457 = vmatmul.f32.gmra.mxu0 %v1192
      %v1458 = vpop.f32.mrf.mxu0
      %v1459 = vadd.f32 %v1370, %v1458
      %1460 = vmatmul.f32.gmra.mxu0 %v1195
      %v1461 = vpop.f32.mrf.mxu0
      %v1462 = vadd.f32 %v1373, %v1461
      %1463 = vmatmul.f32.gmra.mxu0 %v1198
      %v1464 = vpop.f32.mrf.mxu0
      %v1465 = vadd.f32 %v1376, %v1464
      %1466 = vmatmul.f32.gmra.mxu0 %v1201
      %v1467 = vpop.f32.mrf.mxu0
      %v1468 = vadd.f32 %v1379, %v1467
      %1469 = vmatmul.f32.gmra.mxu0 %v1204
      %v1470 = vpop.f32.mrf.mxu0
      %v1471 = vadd.f32 %v1382, %v1470
      %1472 = vmatmul.f32.gmra.mxu0 %v1207
      %v1473 = vpop.f32.mrf.mxu0
      %v1474 = vadd.f32 %v1385, %v1473
      %1475 = vmatmul.f32.gmra.mxu0 %v1210
      %v1476 = vpop.f32.mrf.mxu0
      %v1477 = vadd.f32 %v1388, %v1476
      %1478 = vmatmul.f32.gmra.mxu0 %v1213
      %v1479 = vpop.f32.mrf.mxu0
      %v1480 = vadd.f32 %v1391, %v1479
      %1481 = vmatmul.f32.gmra.mxu0 %v1216
      %v1482 = vpop.f32.mrf.mxu0
      %v1483 = vadd.f32 %v1394, %v1482
      %1484 = vmatmul.f32.gmra.mxu0 %v1219
      %v1485 = vpop.f32.mrf.mxu0
      %v1486 = vadd.f32 %v1397, %v1485
      %1487 = vmatmul.f32.gmra.mxu0 %v1222
      %v1488 = vpop.f32.mrf.mxu0
      %v1489 = vadd.f32 %v1400, %v1488
      %1490 = vmatmul.f32.gmra.mxu0 %v1225
      %v1491 = vpop.f32.mrf.mxu0
      %v1492 = vadd.f32 %v1403, %v1491
      %1493 = vmatmul.f32.gmra.mxu0 %v1228
      %v1494 = vpop.f32.mrf.mxu0
      %v1495 = vadd.f32 %v1406, %v1494
      %1496 = vmatmul.f32.gmra.mxu0 %v1231
      %v1497 = vpop.f32.mrf.mxu0
      %v1498 = vadd.f32 %v1409, %v1497
      %1499 = vmatmul.f32.gmra.mxu0 %v1234
      %v1500 = vpop.f32.mrf.mxu0
      %v1501 = vadd.f32 %v1412, %v1500
      %1502 = vmatmul.f32.gmra.mxu0 %v1237
      %v1503 = vpop.f32.mrf.mxu0
      %v1504 = vadd.f32 %v1415, %v1503
      %1505 = vmatmul.f32.gmra.mxu0 %v1240
      %v1506 = vpop.f32.mrf.mxu0
      %v1507 = vadd.f32 %v1418, %v1506
      %1508 = vmatmul.f32.gmra.mxu0 %v1243
      %v1509 = vpop.f32.mrf.mxu0
      %v1510 = vadd.f32 %v1421, %v1509
      %1511 = vmatmul.f32.gmra.mxu0 %v1246
      %v1512 = vpop.f32.mrf.mxu0
      %v1513 = vadd.f32 %v1424, %v1512
      %1514 = vmatmul.f32.gmra.mxu0 %v1249
      %v1515 = vpop.f32.mrf.mxu0
      %v1516 = vadd.f32 %v1427, %v1515
      %1517 = vmatmul.f32.gmra.mxu0 %v1252
      %v1518 = vpop.f32.mrf.mxu0
      %v1519 = vadd.f32 %v1430, %v1518
      %1520 = vmatmul.f32.gmra.mxu0 %v1255
      %v1521 = vpop.f32.mrf.mxu0
      %v1522 = vadd.f32 %v1433, %v1521
      %1523 = vmatmul.f32.gmra.mxu0 %v1258
      %v1524 = vpop.f32.mrf.mxu0
      %v1525 = vadd.f32 %v1436, %v1524
      %1526 = vdwg.mxu0
      %1527 = vst.msk [vmem:[#allocation2] sm:$0xff] %vm511, %v282
      %1528 = vst.msk [vmem:[#allocation2 + $0x8] sm:$0xff] %vm511, %v283
      %1529 = vst.msk [vmem:[#allocation2 + $0x10] sm:$0xff] %vm511, %v284
      %1530 = vst.msk [vmem:[#allocation2 + $0x18] sm:$0xff] %vm511, %v285
      %1531 = vst.msk [vmem:[#allocation2 + $0x20] sm:$0xff] %vm511, %v286
      %1532 = vst.msk [vmem:[#allocation2 + $0x28] sm:$0xff] %vm511, %v287
      %1533 = vst.msk [vmem:[#allocation2 + $0x30] sm:$0xff] %vm511, %v288
      %1534 = vst.msk [vmem:[#allocation2 + $0x38] sm:$0xff] %vm511, %v289
      %1535 = vst.msk [vmem:[#allocation2 + $0x40] sm:$0xff] %vm511, %v290
      %1536 = vst.msk [vmem:[#allocation2 + $0x48] sm:$0xff] %vm511, %v291
      %1537 = vst.msk [vmem:[#allocation2 + $0x50] sm:$0xff] %vm511, %v292
      %1538 = vst.msk [vmem:[#allocation2 + $0x58] sm:$0xff] %vm511, %v293
      %1539 = vst.msk [vmem:[#allocation2 + $0x60] sm:$0xff] %vm511, %v294
      %1540 = vst.msk [vmem:[#allocation2 + $0x68] sm:$0xff] %vm511, %v295
      %1541 = vst.msk [vmem:[#allocation2 + $0x70] sm:$0xff] %vm511, %v296
      %1542 = vst.msk [vmem:[#allocation2 + $0x78] sm:$0xff] %vm511, %v297
      %1543 = vst.msk [vmem:[#allocation2 + $0x80] sm:$0xff] %vm511, %v298
      %1544 = vst.msk [vmem:[#allocation2 + $0x88] sm:$0xff] %vm511, %v299
      %1545 = vst.msk [vmem:[#allocation2 + $0x90] sm:$0xff] %vm511, %v300
      %1546 = vst.msk [vmem:[#allocation2 + $0x98] sm:$0xff] %vm511, %v301
      %1547 = vst.msk [vmem:[#allocation2 + $0xa0] sm:$0xff] %vm511, %v302
      %1548 = vst.msk [vmem:[#allocation2 + $0xa8] sm:$0xff] %vm511, %v303
      %1549 = vst.msk [vmem:[#allocation2 + $0xb0] sm:$0xff] %vm511, %v304
      %1550 = vst.msk [vmem:[#allocation2 + $0xb8] sm:$0xff] %vm511, %v305
      %1575 = vrot.lane.b32.xlu0 %v1456, 32
      %v1576 = vpop.permute.xlu0 %1575
      %1577 = vrot.lane.b32.xlu0 %v1459, 32
      %v1578 = vpop.permute.xlu0 %1577
      %1579 = vrot.lane.b32.xlu0 %v1462, 32
      %v1580 = vpop.permute.xlu0 %1579
      %1581 = vrot.lane.b32.xlu0 %v1465, 32
      %v1582 = vpop.permute.xlu0 %1581
      %1583 = vrot.lane.b32.xlu0 %v1468, 32
      %v1584 = vpop.permute.xlu0 %1583
      %1585 = vrot.lane.b32.xlu0 %v1471, 32
      %v1586 = vpop.permute.xlu0 %1585
      %1587 = vrot.lane.b32.xlu0 %v1474, 32
      %v1588 = vpop.permute.xlu0 %1587
      %1589 = vrot.lane.b32.xlu0 %v1477, 32
      %v1590 = vpop.permute.xlu0 %1589
      %1591 = vrot.lane.b32.xlu0 %v1480, 32
      %v1592 = vpop.permute.xlu0 %1591
      %1593 = vrot.lane.b32.xlu0 %v1483, 32
      %v1594 = vpop.permute.xlu0 %1593
      %1595 = vrot.lane.b32.xlu0 %v1486, 32
      %v1596 = vpop.permute.xlu0 %1595
      %1597 = vrot.lane.b32.xlu0 %v1489, 32
      %v1598 = vpop.permute.xlu0 %1597
      %1599 = vrot.lane.b32.xlu0 %v1492, 32
      %v1600 = vpop.permute.xlu0 %1599
      %1601 = vrot.lane.b32.xlu0 %v1495, 32
      %v1602 = vpop.permute.xlu0 %1601
      %1603 = vrot.lane.b32.xlu0 %v1498, 32
      %v1604 = vpop.permute.xlu0 %1603
      %1605 = vrot.lane.b32.xlu0 %v1501, 32
      %v1606 = vpop.permute.xlu0 %1605
      %1607 = vrot.lane.b32.xlu0 %v1504, 32
      %v1608 = vpop.permute.xlu0 %1607
      %1609 = vrot.lane.b32.xlu0 %v1507, 32
      %v1610 = vpop.permute.xlu0 %1609
      %1611 = vrot.lane.b32.xlu0 %v1510, 32
      %v1612 = vpop.permute.xlu0 %1611
      %1613 = vrot.lane.b32.xlu0 %v1513, 32
      %v1614 = vpop.permute.xlu0 %1613
      %1615 = vrot.lane.b32.xlu0 %v1516, 32
      %v1616 = vpop.permute.xlu0 %1615
      %1617 = vrot.lane.b32.xlu0 %v1519, 32
      %v1618 = vpop.permute.xlu0 %1617
      %1619 = vrot.lane.b32.xlu0 %v1522, 32
      %v1620 = vpop.permute.xlu0 %1619
      %1621 = vrot.lane.b32.xlu0 %v1525, 32
      %v1622 = vpop.permute.xlu0 %1621
      %vm1647 = vcmask 523520
      %1648 = vst.msk [vmem:[#allocation2] sm:$0xff] %vm1647, %v1576
      %1649 = vst.msk [vmem:[#allocation2 + $0x8] sm:$0xff] %vm1647, %v1578
      %1650 = vst.msk [vmem:[#allocation2 + $0x10] sm:$0xff] %vm1647, %v1580
      %1651 = vst.msk [vmem:[#allocation2 + $0x18] sm:$0xff] %vm1647, %v1582
      %1652 = vst.msk [vmem:[#allocation2 + $0x20] sm:$0xff] %vm1647, %v1584
      %1653 = vst.msk [vmem:[#allocation2 + $0x28] sm:$0xff] %vm1647, %v1586
      %1654 = vst.msk [vmem:[#allocation2 + $0x30] sm:$0xff] %vm1647, %v1588
      %1655 = vst.msk [vmem:[#allocation2 + $0x38] sm:$0xff] %vm1647, %v1590
      %1656 = vst.msk [vmem:[#allocation2 + $0x40] sm:$0xff] %vm1647, %v1592
      %1657 = vst.msk [vmem:[#allocation2 + $0x48] sm:$0xff] %vm1647, %v1594
      %1658 = vst.msk [vmem:[#allocation2 + $0x50] sm:$0xff] %vm1647, %v1596
      %1659 = vst.msk [vmem:[#allocation2 + $0x58] sm:$0xff] %vm1647, %v1598
      %1660 = vst.msk [vmem:[#allocation2 + $0x60] sm:$0xff] %vm1647, %v1600
      %1661 = vst.msk [vmem:[#allocation2 + $0x68] sm:$0xff] %vm1647, %v1602
      %1662 = vst.msk [vmem:[#allocation2 + $0x70] sm:$0xff] %vm1647, %v1604
      %1663 = vst.msk [vmem:[#allocation2 + $0x78] sm:$0xff] %vm1647, %v1606
      %1664 = vst.msk [vmem:[#allocation2 + $0x80] sm:$0xff] %vm1647, %v1608
      %1665 = vst.msk [vmem:[#allocation2 + $0x88] sm:$0xff] %vm1647, %v1610
      %1666 = vst.msk [vmem:[#allocation2 + $0x90] sm:$0xff] %vm1647, %v1612
      %1667 = vst.msk [vmem:[#allocation2 + $0x98] sm:$0xff] %vm1647, %v1614
      %1668 = vst.msk [vmem:[#allocation2 + $0xa0] sm:$0xff] %vm1647, %v1616
      %1669 = vst.msk [vmem:[#allocation2 + $0xa8] sm:$0xff] %vm1647, %v1618
      %1670 = vst.msk [vmem:[#allocation2 + $0xb0] sm:$0xff] %vm1647, %v1620
      %1671 = vst.msk [vmem:[#allocation2 + $0xb8] sm:$0xff] %vm1647, %v1622
      %v1672 = vld [vmem:[#allocation2] sm:$0xff]
      %v1673 = vld [vmem:[#allocation2 + $0x8] sm:$0xff]
      %v1674 = vld [vmem:[#allocation2 + $0x10] sm:$0xff]
      %v1675 = vld [vmem:[#allocation2 + $0x18] sm:$0xff]
      %v1676 = vld [vmem:[#allocation2 + $0x20] sm:$0xff]
      %v1677 = vld [vmem:[#allocation2 + $0x28] sm:$0xff]
      %v1678 = vld [vmem:[#allocation2 + $0x30] sm:$0xff]
      %v1679 = vld [vmem:[#allocation2 + $0x38] sm:$0xff]
      %v1680 = vld [vmem:[#allocation2 + $0x40] sm:$0xff]
      %v1681 = vld [vmem:[#allocation2 + $0x48] sm:$0xff]
      %v1682 = vld [vmem:[#allocation2 + $0x50] sm:$0xff]
      %v1683 = vld [vmem:[#allocation2 + $0x58] sm:$0xff]
      %v1684 = vld [vmem:[#allocation2 + $0x60] sm:$0xff]
      %v1685 = vld [vmem:[#allocation2 + $0x68] sm:$0xff]
      %v1686 = vld [vmem:[#allocation2 + $0x70] sm:$0xff]
      %v1687 = vld [vmem:[#allocation2 + $0x78] sm:$0xff]
      %v1688 = vld [vmem:[#allocation2 + $0x80] sm:$0xff]
      %v1689 = vld [vmem:[#allocation2 + $0x88] sm:$0xff]
      %v1690 = vld [vmem:[#allocation2 + $0x90] sm:$0xff]
      %v1691 = vld [vmem:[#allocation2 + $0x98] sm:$0xff]
      %v1692 = vld [vmem:[#allocation2 + $0xa0] sm:$0xff]
      %v1693 = vld [vmem:[#allocation2 + $0xa8] sm:$0xff]
      %v1694 = vld [vmem:[#allocation2 + $0xb0] sm:$0xff]
      %v1695 = vld [vmem:[#allocation2 + $0xb8] sm:$0xff]
      %v1697 = vperm.slane %v510, 0
      %v1700 = vsel %vm673, %v1672, 0
      %v1703 = vsel %vm673, %v1673, 0
      %v1706 = vsel %vm673, %v1674, 0
      %v1709 = vsel %vm673, %v1675, 0
      %v1712 = vsel %vm673, %v1676, 0
      %v1715 = vsel %vm673, %v1677, 0
      %v1718 = vsel %vm673, %v1678, 0
      %v1721 = vsel %vm673, %v1679, 0
      %v1724 = vsel %vm673, %v1680, 0
      %v1727 = vsel %vm673, %v1681, 0
      %v1730 = vsel %vm673, %v1682, 0
      %v1733 = vsel %vm673, %v1683, 0
      %v1736 = vsel %vm673, %v1684, 0
      %v1739 = vsel %vm673, %v1685, 0
      %v1742 = vsel %vm673, %v1686, 0
      %v1745 = vsel %vm673, %v1687, 0
      %v1748 = vsel %vm673, %v1688, 0
      %v1751 = vsel %vm673, %v1689, 0
      %v1754 = vsel %vm673, %v1690, 0
      %v1757 = vsel %vm673, %v1691, 0
      %v1760 = vsel %vm673, %v1692, 0
      %v1763 = vsel %vm673, %v1693, 0
      %v1766 = vsel %vm673, %v1694, 0
      %v1769 = vsel %vm673, %v1695, 0
      %1771 = vmatpush.msra.mxu0 0.0
      %1772 = vmatpush.msra.mxu0 0.0
      %1773 = vmatpush.msra.mxu0 0.0
      %1774 = vmatpush.msra.mxu0 0.0
      %1775 = vmatpush.msra.mxu0 0.0
      %1776 = vmatpush.msra.mxu0 0.0
      %1777 = vmatpush.msra.mxu0 0.0
      %1778 = vmatpush.msra.mxu0 0.0
      %1779 = vmatpush.msra.mxu0 %v509
      %1780 = vmatpush.msra.mxu0 %v508
      %1781 = vmatpush.msra.mxu0 %v507
      %1782 = vmatpush.msra.mxu0 %v506
      %1783 = vmatpush.msra.mxu0 %v505
      %1784 = vmatpush.msra.mxu0 %v504
      %1785 = vmatpush.msra.mxu0 %v503
      %1786 = vmatpush.msra.mxu0 %v502
      %1787 = vmatmul.f32.gmra.mxu0 %v1700
      %v1788 = vpop.f32.mrf.mxu0
      %v1789 = vadd.f32 %v1697, %v1788
      %1790 = vmatmul.f32.gmra.mxu0 %v1703
      %v1791 = vpop.f32.mrf.mxu0
      %v1792 = vadd.f32 %v1697, %v1791
      %1793 = vmatmul.f32.gmra.mxu0 %v1706
      %v1794 = vpop.f32.mrf.mxu0
      %v1795 = vadd.f32 %v1697, %v1794
      %1796 = vmatmul.f32.gmra.mxu0 %v1709
      %v1797 = vpop.f32.mrf.mxu0
      %v1798 = vadd.f32 %v1697, %v1797
      %1799 = vmatmul.f32.gmra.mxu0 %v1712
      %v1800 = vpop.f32.mrf.mxu0
      %v1801 = vadd.f32 %v1697, %v1800
      %1802 = vmatmul.f32.gmra.mxu0 %v1715
      %v1803 = vpop.f32.mrf.mxu0
      %v1804 = vadd.f32 %v1697, %v1803
      %1805 = vmatmul.f32.gmra.mxu0 %v1718
      %v1806 = vpop.f32.mrf.mxu0
      %v1807 = vadd.f32 %v1697, %v1806
      %1808 = vmatmul.f32.gmra.mxu0 %v1721
      %v1809 = vpop.f32.mrf.mxu0
      %v1810 = vadd.f32 %v1697, %v1809
      %1811 = vmatmul.f32.gmra.mxu0 %v1724
      %v1812 = vpop.f32.mrf.mxu0
      %v1813 = vadd.f32 %v1697, %v1812
      %1814 = vmatmul.f32.gmra.mxu0 %v1727
      %v1815 = vpop.f32.mrf.mxu0
      %v1816 = vadd.f32 %v1697, %v1815
      %1817 = vmatmul.f32.gmra.mxu0 %v1730
      %v1818 = vpop.f32.mrf.mxu0
      %v1819 = vadd.f32 %v1697, %v1818
      %1820 = vmatmul.f32.gmra.mxu0 %v1733
      %v1821 = vpop.f32.mrf.mxu0
      %v1822 = vadd.f32 %v1697, %v1821
      %1823 = vmatmul.f32.gmra.mxu0 %v1736
      %v1824 = vpop.f32.mrf.mxu0
      %v1825 = vadd.f32 %v1697, %v1824
      %1826 = vmatmul.f32.gmra.mxu0 %v1739
      %v1827 = vpop.f32.mrf.mxu0
      %v1828 = vadd.f32 %v1697, %v1827
      %1829 = vmatmul.f32.gmra.mxu0 %v1742
      %v1830 = vpop.f32.mrf.mxu0
      %v1831 = vadd.f32 %v1697, %v1830
      %1832 = vmatmul.f32.gmra.mxu0 %v1745
      %v1833 = vpop.f32.mrf.mxu0
      %v1834 = vadd.f32 %v1697, %v1833
      %1835 = vmatmul.f32.gmra.mxu0 %v1748
      %v1836 = vpop.f32.mrf.mxu0
      %v1837 = vadd.f32 %v1697, %v1836
      %1838 = vmatmul.f32.gmra.mxu0 %v1751
      %v1839 = vpop.f32.mrf.mxu0
      %v1840 = vadd.f32 %v1697, %v1839
      %1841 = vmatmul.f32.gmra.mxu0 %v1754
      %v1842 = vpop.f32.mrf.mxu0
      %v1843 = vadd.f32 %v1697, %v1842
      %1844 = vmatmul.f32.gmra.mxu0 %v1757
      %v1845 = vpop.f32.mrf.mxu0
      %v1846 = vadd.f32 %v1697, %v1845
      %1847 = vmatmul.f32.gmra.mxu0 %v1760
      %v1848 = vpop.f32.mrf.mxu0
      %v1849 = vadd.f32 %v1697, %v1848
      %1850 = vmatmul.f32.gmra.mxu0 %v1763
      %v1851 = vpop.f32.mrf.mxu0
      %v1852 = vadd.f32 %v1697, %v1851
      %1853 = vmatmul.f32.gmra.mxu0 %v1766
      %v1854 = vpop.f32.mrf.mxu0
      %v1855 = vadd.f32 %v1697, %v1854
      %1856 = vmatmul.f32.gmra.mxu0 %v1769
      %v1857 = vpop.f32.mrf.mxu0
      %v1858 = vadd.f32 %v1697, %v1857
      %1859 = vdwg.mxu0
      %v1860 = vmax.f32 %v1789, 0.0
      %v1861 = vmax.f32 %v1792, 0.0
      %v1862 = vmax.f32 %v1795, 0.0
      %v1863 = vmax.f32 %v1798, 0.0
      %v1864 = vmax.f32 %v1801, 0.0
      %v1865 = vmax.f32 %v1804, 0.0
      %v1866 = vmax.f32 %v1807, 0.0
      %v1867 = vmax.f32 %v1810, 0.0
      %v1868 = vmax.f32 %v1813, 0.0
      %v1869 = vmax.f32 %v1816, 0.0
      %v1870 = vmax.f32 %v1819, 0.0
      %v1871 = vmax.f32 %v1822, 0.0
      %v1872 = vmax.f32 %v1825, 0.0
      %v1873 = vmax.f32 %v1828, 0.0
      %v1874 = vmax.f32 %v1831, 0.0
      %v1875 = vmax.f32 %v1834, 0.0
      %v1876 = vmax.f32 %v1837, 0.0
      %v1877 = vmax.f32 %v1840, 0.0
      %v1878 = vmax.f32 %v1843, 0.0
      %v1879 = vmax.f32 %v1846, 0.0
      %v1880 = vmax.f32 %v1849, 0.0
      %v1881 = vmax.f32 %v1852, 0.0
      %v1882 = vmax.f32 %v1855, 0.0
      %v1883 = vmax.f32 %v1858, 0.0
      %s1884 = scalar_lea.vmem %s3, 32
      %v1885 = vld [vmem:[%s1884] sm:$0xff]
      %v1886 = vld [vmem:[%s1884 + $0x8] sm:$0xff]
      %v1887 = vld [vmem:[%s1884 + $0x10] sm:$0xff]
      %v1888 = vld [vmem:[%s1884 + $0x18] sm:$0xff]
      %s1889 = scalar_lea.vmem %s4, 320
      %v1890 = vld [vmem:[%s1889] sm:$0xff]
      %v1891 = vld [vmem:[%s1889 + $0x8] sm:$0xff]
      %v1892 = vld [vmem:[%s1889 + $0x10] sm:$0xff]
      %v1893 = vld [vmem:[%s1889 + $0x18] sm:$0xff]
      %v1894 = vld [vmem:[%s1889 + $0x20] sm:$0xff]
      %v1895 = vld [vmem:[%s1889 + $0x28] sm:$0xff]
      %v1896 = vld [vmem:[%s1889 + $0x30] sm:$0xff]
      %v1897 = vld [vmem:[%s1889 + $0x38] sm:$0xff]
      %v1898 = vld [vmem:[%s1889 + $0x40] sm:$0xff]
      %v1899 = vld [vmem:[%s1889 + $0x48] sm:$0xff]
      %v1900 = vld [vmem:[%s1889 + $0x50] sm:$0xff]
      %v1901 = vld [vmem:[%s1889 + $0x58] sm:$0xff]
      %v1902 = vld [vmem:[%s1889 + $0x60] sm:$0xff]
      %v1903 = vld [vmem:[%s1889 + $0x68] sm:$0xff]
      %v1904 = vld [vmem:[%s1889 + $0x70] sm:$0xff]
      %v1905 = vld [vmem:[%s1889 + $0x78] sm:$0xff]
      %v1906 = vld [vmem:[%s1889 + $0x80] sm:$0xff]
      %v1907 = vld [vmem:[%s1889 + $0x88] sm:$0xff]
      %v1908 = vld [vmem:[%s1889 + $0x90] sm:$0xff]
      %v1909 = vld [vmem:[%s1889 + $0x98] sm:$0xff]
      %v1910 = vld [vmem:[%s1889 + $0xa0] sm:$0xff]
      %v1911 = vld [vmem:[%s1889 + $0xa8] sm:$0xff]
      %v1912 = vld [vmem:[%s1889 + $0xb0] sm:$0xff]
      %v1913 = vld [vmem:[%s1889 + $0xb8] sm:$0xff]
      %v1914 = vld [vmem:[%s1889 + $0xc0] sm:$0xff]
      %v1915 = vld [vmem:[%s1889 + $0xc8] sm:$0xff]
      %v1916 = vld [vmem:[%s1889 + $0xd0] sm:$0xff]
      %v1917 = vld [vmem:[%s1889 + $0xd8] sm:$0xff]
      %v1918 = vld [vmem:[%s1889 + $0xe0] sm:$0xff]
      %v1919 = vld [vmem:[%s1889 + $0xe8] sm:$0xff]
      %v1920 = vld [vmem:[%s1889 + $0xf0] sm:$0xff]
      %v1921 = vld [vmem:[%s1889 + $0xf8] sm:$0xff]
      %v1922 = vld [vmem:[%s1889 + $0x100] sm:$0xff]
      %v1923 = vld [vmem:[%s1889 + $0x108] sm:$0xff]
      %v1924 = vld [vmem:[%s1889 + $0x110] sm:$0xff]
      %v1925 = vld [vmem:[%s1889 + $0x118] sm:$0xff]
      %v1926 = vld [vmem:[%s1889 + $0x120] sm:$0xff]
      %v1927 = vld [vmem:[%s1889 + $0x128] sm:$0xff]
      %v1928 = vld [vmem:[%s1889 + $0x130] sm:$0xff]
      %v1929 = vld [vmem:[%s1889 + $0x138] sm:$0xff]
      %s1930 = scalar_lea.vmem %s5, 64
      %v1931 = vld [vmem:[%s1930] sm:$0xff]
      %v1932 = vld [vmem:[%s1930 + $0x8] sm:$0xff]
      %v1933 = vld [vmem:[%s1930 + $0x10] sm:$0xff]
      %v1934 = vld [vmem:[%s1930 + $0x18] sm:$0xff]
      %v1935 = vld [vmem:[%s1930 + $0x20] sm:$0xff]
      %v1936 = vld [vmem:[%s1930 + $0x28] sm:$0xff]
      %v1937 = vld [vmem:[%s1930 + $0x30] sm:$0xff]
      %v1938 = vld [vmem:[%s1930 + $0x38] sm:$0xff]
      %s1939 = scalar_lea.vmem %s6, 1
      %v1940 = vld [vmem:[%s1939] sm:$0x1]
      %v1942 = vsel %vm511, %v1860, 0
      %v1945 = vsel %vm511, %v1861, 0
      %v1948 = vsel %vm511, %v1862, 0
      %v1951 = vsel %vm511, %v1863, 0
      %v1954 = vsel %vm511, %v1864, 0
      %v1957 = vsel %vm511, %v1865, 0
      %v1960 = vsel %vm511, %v1866, 0
      %v1963 = vsel %vm511, %v1867, 0
      %v1966 = vsel %vm511, %v1868, 0
      %v1969 = vsel %vm511, %v1869, 0
      %v1972 = vsel %vm511, %v1870, 0
      %v1975 = vsel %vm511, %v1871, 0
      %v1978 = vsel %vm511, %v1872, 0
      %v1981 = vsel %vm511, %v1873, 0
      %v1984 = vsel %vm511, %v1874, 0
      %v1987 = vsel %vm511, %v1875, 0
      %v1990 = vsel %vm511, %v1876, 0
      %v1993 = vsel %vm511, %v1877, 0
      %v1996 = vsel %vm511, %v1878, 0
      %v1999 = vsel %vm511, %v1879, 0
      %v2002 = vsel %vm511, %v1880, 0
      %v2005 = vsel %vm511, %v1881, 0
      %v2008 = vsel %vm511, %v1882, 0
      %v2011 = vsel %vm511, %v1883, 0
      %2013 = vmatpush.msra.mxu0 0.0
      %2014 = vmatpush.msra.mxu0 0.0
      %2015 = vmatpush.msra.mxu0 0.0
      %2016 = vmatpush.msra.mxu0 0.0
      %2017 = vmatpush.msra.mxu0 0.0
      %2018 = vmatpush.msra.mxu0 0.0
      %2019 = vmatpush.msra.mxu0 0.0
      %2020 = vmatpush.msra.mxu0 0.0
      %2021 = vmatpush.msra.mxu0 0.0
      %2022 = vmatpush.msra.mxu0 0.0
      %2023 = vmatpush.msra.mxu0 0.0
      %2024 = vmatpush.msra.mxu0 0.0
      %2025 = vmatpush.msra.mxu0 %v1888
      %2026 = vmatpush.msra.mxu0 %v1887
      %2027 = vmatpush.msra.mxu0 %v1886
      %2028 = vmatpush.msra.mxu0 %v1885
      %2029 = vmatmul.f32.gmra.mxu0 %v1942
      %v2030 = vpop.f32.mrf.mxu0
      %v2031 = vadd.f32 0.0, %v2030
      %2032 = vmatmul.f32.gmra.mxu0 %v1945
      %v2033 = vpop.f32.mrf.mxu0
      %v2034 = vadd.f32 0.0, %v2033
      %2035 = vmatmul.f32.gmra.mxu0 %v1948
      %v2036 = vpop.f32.mrf.mxu0
      %v2037 = vadd.f32 0.0, %v2036
      %2038 = vmatmul.f32.gmra.mxu0 %v1951
      %v2039 = vpop.f32.mrf.mxu0
      %v2040 = vadd.f32 0.0, %v2039
      %2041 = vmatmul.f32.gmra.mxu0 %v1954
      %v2042 = vpop.f32.mrf.mxu0
      %v2043 = vadd.f32 0.0, %v2042
      %2044 = vmatmul.f32.gmra.mxu0 %v1957
      %v2045 = vpop.f32.mrf.mxu0
      %v2046 = vadd.f32 0.0, %v2045
      %2047 = vmatmul.f32.gmra.mxu0 %v1960
      %v2048 = vpop.f32.mrf.mxu0
      %v2049 = vadd.f32 0.0, %v2048
      %2050 = vmatmul.f32.gmra.mxu0 %v1963
      %v2051 = vpop.f32.mrf.mxu0
      %v2052 = vadd.f32 0.0, %v2051
      %2053 = vmatmul.f32.gmra.mxu0 %v1966
      %v2054 = vpop.f32.mrf.mxu0
      %v2055 = vadd.f32 0.0, %v2054
      %2056 = vmatmul.f32.gmra.mxu0 %v1969
      %v2057 = vpop.f32.mrf.mxu0
      %v2058 = vadd.f32 0.0, %v2057
      %2059 = vmatmul.f32.gmra.mxu0 %v1972
      %v2060 = vpop.f32.mrf.mxu0
      %v2061 = vadd.f32 0.0, %v2060
      %2062 = vmatmul.f32.gmra.mxu0 %v1975
      %v2063 = vpop.f32.mrf.mxu0
      %v2064 = vadd.f32 0.0, %v2063
      %2065 = vmatmul.f32.gmra.mxu0 %v1978
      %v2066 = vpop.f32.mrf.mxu0
      %v2067 = vadd.f32 0.0, %v2066
      %2068 = vmatmul.f32.gmra.mxu0 %v1981
      %v2069 = vpop.f32.mrf.mxu0
      %v2070 = vadd.f32 0.0, %v2069
      %2071 = vmatmul.f32.gmra.mxu0 %v1984
      %v2072 = vpop.f32.mrf.mxu0
      %v2073 = vadd.f32 0.0, %v2072
      %2074 = vmatmul.f32.gmra.mxu0 %v1987
      %v2075 = vpop.f32.mrf.mxu0
      %v2076 = vadd.f32 0.0, %v2075
      %2077 = vmatmul.f32.gmra.mxu0 %v1990
      %v2078 = vpop.f32.mrf.mxu0
      %v2079 = vadd.f32 0.0, %v2078
      %2080 = vmatmul.f32.gmra.mxu0 %v1993
      %v2081 = vpop.f32.mrf.mxu0
      %v2082 = vadd.f32 0.0, %v2081
      %2083 = vmatmul.f32.gmra.mxu0 %v1996
      %v2084 = vpop.f32.mrf.mxu0
      %v2085 = vadd.f32 0.0, %v2084
      %2086 = vmatmul.f32.gmra.mxu0 %v1999
      %v2087 = vpop.f32.mrf.mxu0
      %v2088 = vadd.f32 0.0, %v2087
      %2089 = vmatmul.f32.gmra.mxu0 %v2002
      %v2090 = vpop.f32.mrf.mxu0
      %v2091 = vadd.f32 0.0, %v2090
      %2092 = vmatmul.f32.gmra.mxu0 %v2005
      %v2093 = vpop.f32.mrf.mxu0
      %v2094 = vadd.f32 0.0, %v2093
      %2095 = vmatmul.f32.gmra.mxu0 %v2008
      %v2096 = vpop.f32.mrf.mxu0
      %v2097 = vadd.f32 0.0, %v2096
      %2098 = vmatmul.f32.gmra.mxu0 %v2011
      %v2099 = vpop.f32.mrf.mxu0
      %v2100 = vadd.f32 0.0, %v2099
      %2101 = vdwg.mxu0
      %2102 = vmatpush.msra.mxu0 %v2076
      %2103 = vmatpush.msra.mxu0 %v2073
      %2104 = vmatpush.msra.mxu0 %v2070
      %2105 = vmatpush.msra.mxu0 %v2067
      %2106 = vmatpush.msra.mxu0 %v2064
      %2107 = vmatpush.msra.mxu0 %v2061
      %2108 = vmatpush.msra.mxu0 %v2058
      %2109 = vmatpush.msra.mxu0 %v2055
      %2110 = vmatpush.msra.mxu0 %v2052
      %2111 = vmatpush.msra.mxu0 %v2049
      %2112 = vmatpush.msra.mxu0 %v2046
      %2113 = vmatpush.msra.mxu0 %v2043
      %2114 = vmatpush.msra.mxu0 %v2040
      %2115 = vmatpush.msra.mxu0 %v2037
      %2116 = vmatpush.msra.mxu0 %v2034
      %2117 = vmatpush.msra.mxu0 %v2031
      %2118 = vmatmul.f32.gmra.mxu0 %v306
      %v2119 = vpop.f32.mrf.mxu0
      %v2120 = vadd.f32 %v1890, %v2119
      %2121 = vmatmul.f32.gmra.mxu0 %v308
      %v2122 = vpop.f32.mrf.mxu0
      %v2123 = vadd.f32 %v1891, %v2122
      %2124 = vmatmul.f32.gmra.mxu0 %v310
      %v2125 = vpop.f32.mrf.mxu0
      %v2126 = vadd.f32 %v1892, %v2125
      %2127 = vmatmul.f32.gmra.mxu0 %v312
      %v2128 = vpop.f32.mrf.mxu0
      %v2129 = vadd.f32 %v1893, %v2128
      %2130 = vmatmul.f32.gmra.mxu0 %v314
      %v2131 = vpop.f32.mrf.mxu0
      %v2132 = vadd.f32 %v1894, %v2131
      %2133 = vmatmul.f32.gmra.mxu0 %v316
      %v2134 = vpop.f32.mrf.mxu0
      %v2135 = vadd.f32 %v1895, %v2134
      %2136 = vmatmul.f32.gmra.mxu0 %v318
      %v2137 = vpop.f32.mrf.mxu0
      %v2138 = vadd.f32 %v1896, %v2137
      %2139 = vmatmul.f32.gmra.mxu0 %v320
      %v2140 = vpop.f32.mrf.mxu0
      %v2141 = vadd.f32 %v1897, %v2140
      %2142 = vmatmul.f32.gmra.mxu0 %v322
      %v2143 = vpop.f32.mrf.mxu0
      %v2144 = vadd.f32 %v1898, %v2143
      %2145 = vmatmul.f32.gmra.mxu0 %v324
      %v2146 = vpop.f32.mrf.mxu0
      %v2147 = vadd.f32 %v1899, %v2146
      %2148 = vmatmul.f32.gmra.mxu0 %v326
      %v2149 = vpop.f32.mrf.mxu0
      %v2150 = vadd.f32 %v1900, %v2149
      %2151 = vmatmul.f32.gmra.mxu0 %v328
      %v2152 = vpop.f32.mrf.mxu0
      %v2153 = vadd.f32 %v1901, %v2152
      %2154 = vmatmul.f32.gmra.mxu0 %v330
      %v2155 = vpop.f32.mrf.mxu0
      %v2156 = vadd.f32 %v1902, %v2155
      %2157 = vmatmul.f32.gmra.mxu0 %v332
      %v2158 = vpop.f32.mrf.mxu0
      %v2159 = vadd.f32 %v1903, %v2158
      %2160 = vmatmul.f32.gmra.mxu0 %v334
      %v2161 = vpop.f32.mrf.mxu0
      %v2162 = vadd.f32 %v1904, %v2161
      %2163 = vmatmul.f32.gmra.mxu0 %v336
      %v2164 = vpop.f32.mrf.mxu0
      %v2165 = vadd.f32 %v1905, %v2164
      %2166 = vmatmul.f32.gmra.mxu0 %v338
      %v2167 = vpop.f32.mrf.mxu0
      %v2168 = vadd.f32 %v1906, %v2167
      %2169 = vmatmul.f32.gmra.mxu0 %v340
      %v2170 = vpop.f32.mrf.mxu0
      %v2171 = vadd.f32 %v1907, %v2170
      %2172 = vmatmul.f32.gmra.mxu0 %v342
      %v2173 = vpop.f32.mrf.mxu0
      %v2174 = vadd.f32 %v1908, %v2173
      %2175 = vmatmul.f32.gmra.mxu0 %v344
      %v2176 = vpop.f32.mrf.mxu0
      %v2177 = vadd.f32 %v1909, %v2176
      %2178 = vmatmul.f32.gmra.mxu0 %v346
      %v2179 = vpop.f32.mrf.mxu0
      %v2180 = vadd.f32 %v1910, %v2179
      %2181 = vmatmul.f32.gmra.mxu0 %v348
      %v2182 = vpop.f32.mrf.mxu0
      %v2183 = vadd.f32 %v1911, %v2182
      %2184 = vmatmul.f32.gmra.mxu0 %v350
      %v2185 = vpop.f32.mrf.mxu0
      %v2186 = vadd.f32 %v1912, %v2185
      %2187 = vmatmul.f32.gmra.mxu0 %v352
      %v2188 = vpop.f32.mrf.mxu0
      %v2189 = vadd.f32 %v1913, %v2188
      %2190 = vmatmul.f32.gmra.mxu0 %v354
      %v2191 = vpop.f32.mrf.mxu0
      %v2192 = vadd.f32 %v1914, %v2191
      %2193 = vmatmul.f32.gmra.mxu0 %v356
      %v2194 = vpop.f32.mrf.mxu0
      %v2195 = vadd.f32 %v1915, %v2194
      %2196 = vmatmul.f32.gmra.mxu0 %v358
      %v2197 = vpop.f32.mrf.mxu0
      %v2198 = vadd.f32 %v1916, %v2197
      %2199 = vmatmul.f32.gmra.mxu0 %v360
      %v2200 = vpop.f32.mrf.mxu0
      %v2201 = vadd.f32 %v1917, %v2200
      %2202 = vmatmul.f32.gmra.mxu0 %v362
      %v2203 = vpop.f32.mrf.mxu0
      %v2204 = vadd.f32 %v1918, %v2203
      %2205 = vmatmul.f32.gmra.mxu0 %v364
      %v2206 = vpop.f32.mrf.mxu0
      %v2207 = vadd.f32 %v1919, %v2206
      %2208 = vmatmul.f32.gmra.mxu0 %v366
      %v2209 = vpop.f32.mrf.mxu0
      %v2210 = vadd.f32 %v1920, %v2209
      %2211 = vmatmul.f32.gmra.mxu0 %v368
      %v2212 = vpop.f32.mrf.mxu0
      %v2213 = vadd.f32 %v1921, %v2212
      %2214 = vmatmul.f32.gmra.mxu0 %v370
      %v2215 = vpop.f32.mrf.mxu0
      %v2216 = vadd.f32 %v1922, %v2215
      %2217 = vmatmul.f32.gmra.mxu0 %v372
      %v2218 = vpop.f32.mrf.mxu0
      %v2219 = vadd.f32 %v1923, %v2218
      %2220 = vmatmul.f32.gmra.mxu0 %v374
      %v2221 = vpop.f32.mrf.mxu0
      %v2222 = vadd.f32 %v1924, %v2221
      %2223 = vmatmul.f32.gmra.mxu0 %v376
      %v2224 = vpop.f32.mrf.mxu0
      %v2225 = vadd.f32 %v1925, %v2224
      %2226 = vmatmul.f32.gmra.mxu0 %v378
      %v2227 = vpop.f32.mrf.mxu0
      %v2228 = vadd.f32 %v1926, %v2227
      %2229 = vmatmul.f32.gmra.mxu0 %v380
      %v2230 = vpop.f32.mrf.mxu0
      %v2231 = vadd.f32 %v1927, %v2230
      %2232 = vmatmul.f32.gmra.mxu0 %v382
      %v2233 = vpop.f32.mrf.mxu0
      %v2234 = vadd.f32 %v1928, %v2233
      %2235 = vmatmul.f32.gmra.mxu0 %v384
      %v2236 = vpop.f32.mrf.mxu0
      %v2237 = vadd.f32 %v1929, %v2236
      %2238 = vdwg.mxu0
      %2239 = vmatpush.msra.mxu0 0.0
      %2240 = vmatpush.msra.mxu0 0.0
      %2241 = vmatpush.msra.mxu0 0.0
      %2242 = vmatpush.msra.mxu0 0.0
      %2243 = vmatpush.msra.mxu0 0.0
      %2244 = vmatpush.msra.mxu0 0.0
      %2245 = vmatpush.msra.mxu0 0.0
      %2246 = vmatpush.msra.mxu0 0.0
      %2247 = vmatpush.msra.mxu0 %v2100
      %2248 = vmatpush.msra.mxu0 %v2097
      %2249 = vmatpush.msra.mxu0 %v2094
      %2250 = vmatpush.msra.mxu0 %v2091
      %2251 = vmatpush.msra.mxu0 %v2088
      %2252 = vmatpush.msra.mxu0 %v2085
      %2253 = vmatpush.msra.mxu0 %v2082
      %2254 = vmatpush.msra.mxu0 %v2079
      %2255 = vmatmul.f32.gmra.mxu0 %v675
      %v2256 = vpop.f32.mrf.mxu0
      %v2257 = vadd.f32 %v2120, %v2256
      %2258 = vmatmul.f32.gmra.mxu0 %v678
      %v2259 = vpop.f32.mrf.mxu0
      %v2260 = vadd.f32 %v2123, %v2259
      %2261 = vmatmul.f32.gmra.mxu0 %v681
      %v2262 = vpop.f32.mrf.mxu0
      %v2263 = vadd.f32 %v2126, %v2262
      %2264 = vmatmul.f32.gmra.mxu0 %v684
      %v2265 = vpop.f32.mrf.mxu0
      %v2266 = vadd.f32 %v2129, %v2265
      %2267 = vmatmul.f32.gmra.mxu0 %v687
      %v2268 = vpop.f32.mrf.mxu0
      %v2269 = vadd.f32 %v2132, %v2268
      %2270 = vmatmul.f32.gmra.mxu0 %v690
      %v2271 = vpop.f32.mrf.mxu0
      %v2272 = vadd.f32 %v2135, %v2271
      %2273 = vmatmul.f32.gmra.mxu0 %v693
      %v2274 = vpop.f32.mrf.mxu0
      %v2275 = vadd.f32 %v2138, %v2274
      %2276 = vmatmul.f32.gmra.mxu0 %v696
      %v2277 = vpop.f32.mrf.mxu0
      %v2278 = vadd.f32 %v2141, %v2277
      %2279 = vmatmul.f32.gmra.mxu0 %v699
      %v2280 = vpop.f32.mrf.mxu0
      %v2281 = vadd.f32 %v2144, %v2280
      %2282 = vmatmul.f32.gmra.mxu0 %v702
      %v2283 = vpop.f32.mrf.mxu0
      %v2284 = vadd.f32 %v2147, %v2283
      %2285 = vmatmul.f32.gmra.mxu0 %v705
      %v2286 = vpop.f32.mrf.mxu0
      %v2287 = vadd.f32 %v2150, %v2286
      %2288 = vmatmul.f32.gmra.mxu0 %v708
      %v2289 = vpop.f32.mrf.mxu0
      %v2290 = vadd.f32 %v2153, %v2289
      %2291 = vmatmul.f32.gmra.mxu0 %v711
      %v2292 = vpop.f32.mrf.mxu0
      %v2293 = vadd.f32 %v2156, %v2292
      %2294 = vmatmul.f32.gmra.mxu0 %v714
      %v2295 = vpop.f32.mrf.mxu0
      %v2296 = vadd.f32 %v2159, %v2295
      %2297 = vmatmul.f32.gmra.mxu0 %v717
      %v2298 = vpop.f32.mrf.mxu0
      %v2299 = vadd.f32 %v2162, %v2298
      %2300 = vmatmul.f32.gmra.mxu0 %v720
      %v2301 = vpop.f32.mrf.mxu0
      %v2302 = vadd.f32 %v2165, %v2301
      %2303 = vmatmul.f32.gmra.mxu0 %v723
      %v2304 = vpop.f32.mrf.mxu0
      %v2305 = vadd.f32 %v2168, %v2304
      %2306 = vmatmul.f32.gmra.mxu0 %v726
      %v2307 = vpop.f32.mrf.mxu0
      %v2308 = vadd.f32 %v2171, %v2307
      %2309 = vmatmul.f32.gmra.mxu0 %v729
      %v2310 = vpop.f32.mrf.mxu0
      %v2311 = vadd.f32 %v2174, %v2310
      %2312 = vmatmul.f32.gmra.mxu0 %v732
      %v2313 = vpop.f32.mrf.mxu0
      %v2314 = vadd.f32 %v2177, %v2313
      %2315 = vmatmul.f32.gmra.mxu0 %v735
      %v2316 = vpop.f32.mrf.mxu0
      %v2317 = vadd.f32 %v2180, %v2316
      %2318 = vmatmul.f32.gmra.mxu0 %v738
      %v2319 = vpop.f32.mrf.mxu0
      %v2320 = vadd.f32 %v2183, %v2319
      %2321 = vmatmul.f32.gmra.mxu0 %v741
      %v2322 = vpop.f32.mrf.mxu0
      %v2323 = vadd.f32 %v2186, %v2322
      %2324 = vmatmul.f32.gmra.mxu0 %v744
      %v2325 = vpop.f32.mrf.mxu0
      %v2326 = vadd.f32 %v2189, %v2325
      %2327 = vmatmul.f32.gmra.mxu0 %v747
      %v2328 = vpop.f32.mrf.mxu0
      %v2329 = vadd.f32 %v2192, %v2328
      %2330 = vmatmul.f32.gmra.mxu0 %v750
      %v2331 = vpop.f32.mrf.mxu0
      %v2332 = vadd.f32 %v2195, %v2331
      %2333 = vmatmul.f32.gmra.mxu0 %v753
      %v2334 = vpop.f32.mrf.mxu0
      %v2335 = vadd.f32 %v2198, %v2334
      %2336 = vmatmul.f32.gmra.mxu0 %v756
      %v2337 = vpop.f32.mrf.mxu0
      %v2338 = vadd.f32 %v2201, %v2337
      %2339 = vmatmul.f32.gmra.mxu0 %v759
      %v2340 = vpop.f32.mrf.mxu0
      %v2341 = vadd.f32 %v2204, %v2340
      %2342 = vmatmul.f32.gmra.mxu0 %v762
      %v2343 = vpop.f32.mrf.mxu0
      %v2344 = vadd.f32 %v2207, %v2343
      %2345 = vmatmul.f32.gmra.mxu0 %v765
      %v2346 = vpop.f32.mrf.mxu0
      %v2347 = vadd.f32 %v2210, %v2346
      %2348 = vmatmul.f32.gmra.mxu0 %v768
      %v2349 = vpop.f32.mrf.mxu0
      %v2350 = vadd.f32 %v2213, %v2349
      %2351 = vmatmul.f32.gmra.mxu0 %v771
      %v2352 = vpop.f32.mrf.mxu0
      %v2353 = vadd.f32 %v2216, %v2352
      %2354 = vmatmul.f32.gmra.mxu0 %v774
      %v2355 = vpop.f32.mrf.mxu0
      %v2356 = vadd.f32 %v2219, %v2355
      %2357 = vmatmul.f32.gmra.mxu0 %v777
      %v2358 = vpop.f32.mrf.mxu0
      %v2359 = vadd.f32 %v2222, %v2358
      %2360 = vmatmul.f32.gmra.mxu0 %v780
      %v2361 = vpop.f32.mrf.mxu0
      %v2362 = vadd.f32 %v2225, %v2361
      %2363 = vmatmul.f32.gmra.mxu0 %v783
      %v2364 = vpop.f32.mrf.mxu0
      %v2365 = vadd.f32 %v2228, %v2364
      %2366 = vmatmul.f32.gmra.mxu0 %v786
      %v2367 = vpop.f32.mrf.mxu0
      %v2368 = vadd.f32 %v2231, %v2367
      %2369 = vmatmul.f32.gmra.mxu0 %v789
      %v2370 = vpop.f32.mrf.mxu0
      %v2371 = vadd.f32 %v2234, %v2370
      %2372 = vmatmul.f32.gmra.mxu0 %v792
      %v2373 = vpop.f32.mrf.mxu0
      %v2374 = vadd.f32 %v2237, %v2373
      %2375 = vdwg.mxu0
      %vm2376 = vcmp.ge.f32.partialorder %v2257, 0.0
      %vm2377 = vcmp.ge.f32.partialorder %v2260, 0.0
      %vm2378 = vcmp.ge.f32.partialorder %v2263, 0.0
      %vm2379 = vcmp.ge.f32.partialorder %v2266, 0.0
      %vm2380 = vcmp.ge.f32.partialorder %v2269, 0.0
      %vm2381 = vcmp.ge.f32.partialorder %v2272, 0.0
      %vm2382 = vcmp.ge.f32.partialorder %v2275, 0.0
      %vm2383 = vcmp.ge.f32.partialorder %v2278, 0.0
      %vm2384 = vcmp.ge.f32.partialorder %v2281, 0.0
      %vm2385 = vcmp.ge.f32.partialorder %v2284, 0.0
      %vm2386 = vcmp.ge.f32.partialorder %v2287, 0.0
      %vm2387 = vcmp.ge.f32.partialorder %v2290, 0.0
      %vm2388 = vcmp.ge.f32.partialorder %v2293, 0.0
      %vm2389 = vcmp.ge.f32.partialorder %v2296, 0.0
      %vm2390 = vcmp.ge.f32.partialorder %v2299, 0.0
      %vm2391 = vcmp.ge.f32.partialorder %v2302, 0.0
      %vm2392 = vcmp.ge.f32.partialorder %v2305, 0.0
      %vm2393 = vcmp.ge.f32.partialorder %v2308, 0.0
      %vm2394 = vcmp.ge.f32.partialorder %v2311, 0.0
      %vm2395 = vcmp.ge.f32.partialorder %v2314, 0.0
      %vm2396 = vcmp.ge.f32.partialorder %v2317, 0.0
      %vm2397 = vcmp.ge.f32.partialorder %v2320, 0.0
      %vm2398 = vcmp.ge.f32.partialorder %v2323, 0.0
      %vm2399 = vcmp.ge.f32.partialorder %v2326, 0.0
      %vm2400 = vcmp.ge.f32.partialorder %v2329, 0.0
      %vm2401 = vcmp.ge.f32.partialorder %v2332, 0.0
      %vm2402 = vcmp.ge.f32.partialorder %v2335, 0.0
      %vm2403 = vcmp.ge.f32.partialorder %v2338, 0.0
      %vm2404 = vcmp.ge.f32.partialorder %v2341, 0.0
      %vm2405 = vcmp.ge.f32.partialorder %v2344, 0.0
      %vm2406 = vcmp.ge.f32.partialorder %v2347, 0.0
      %vm2407 = vcmp.ge.f32.partialorder %v2350, 0.0
      %vm2408 = vcmp.ge.f32.partialorder %v2353, 0.0
      %vm2409 = vcmp.ge.f32.partialorder %v2356, 0.0
      %vm2410 = vcmp.ge.f32.partialorder %v2359, 0.0
      %vm2411 = vcmp.ge.f32.partialorder %v2362, 0.0
      %vm2412 = vcmp.ge.f32.partialorder %v2365, 0.0
      %vm2413 = vcmp.ge.f32.partialorder %v2368, 0.0
      %vm2414 = vcmp.ge.f32.partialorder %v2371, 0.0
      %vm2415 = vcmp.ge.f32.partialorder %v2374, 0.0
      %v2416 = vmul.f32 %v2257, 0.01
      %v2417 = vmul.f32 %v2260, 0.01
      %v2418 = vmul.f32 %v2263, 0.01
      %v2419 = vmul.f32 %v2266, 0.01
      %v2420 = vmul.f32 %v2269, 0.01
      %v2421 = vmul.f32 %v2272, 0.01
      %v2422 = vmul.f32 %v2275, 0.01
      %v2423 = vmul.f32 %v2278, 0.01
      %v2424 = vmul.f32 %v2281, 0.01
      %v2425 = vmul.f32 %v2284, 0.01
      %v2426 = vmul.f32 %v2287, 0.01
      %v2427 = vmul.f32 %v2290, 0.01
      %v2428 = vmul.f32 %v2293, 0.01
      %v2429 = vmul.f32 %v2296, 0.01
      %v2430 = vmul.f32 %v2299, 0.01
      %v2431 = vmul.f32 %v2302, 0.01
      %v2432 = vmul.f32 %v2305, 0.01
      %v2433 = vmul.f32 %v2308, 0.01
      %v2434 = vmul.f32 %v2311, 0.01
      %v2435 = vmul.f32 %v2314, 0.01
      %v2436 = vmul.f32 %v2317, 0.01
      %v2437 = vmul.f32 %v2320, 0.01
      %v2438 = vmul.f32 %v2323, 0.01
      %v2439 = vmul.f32 %v2326, 0.01
      %v2440 = vmul.f32 %v2329, 0.01
      %v2441 = vmul.f32 %v2332, 0.01
      %v2442 = vmul.f32 %v2335, 0.01
      %v2443 = vmul.f32 %v2338, 0.01
      %v2444 = vmul.f32 %v2341, 0.01
      %v2445 = vmul.f32 %v2344, 0.01
      %v2446 = vmul.f32 %v2347, 0.01
      %v2447 = vmul.f32 %v2350, 0.01
      %v2448 = vmul.f32 %v2353, 0.01
      %v2449 = vmul.f32 %v2356, 0.01
      %v2450 = vmul.f32 %v2359, 0.01
      %v2451 = vmul.f32 %v2362, 0.01
      %v2452 = vmul.f32 %v2365, 0.01
      %v2453 = vmul.f32 %v2368, 0.01
      %v2454 = vmul.f32 %v2371, 0.01
      %v2455 = vmul.f32 %v2374, 0.01
      %v2456 = vsel %vm2376, %v2257, %v2416
      %v2457 = vsel %vm2377, %v2260, %v2417
      %v2458 = vsel %vm2378, %v2263, %v2418
      %v2459 = vsel %vm2379, %v2266, %v2419
      %v2460 = vsel %vm2380, %v2269, %v2420
      %v2461 = vsel %vm2381, %v2272, %v2421
      %v2462 = vsel %vm2382, %v2275, %v2422
      %v2463 = vsel %vm2383, %v2278, %v2423
      %v2464 = vsel %vm2384, %v2281, %v2424
      %v2465 = vsel %vm2385, %v2284, %v2425
      %v2466 = vsel %vm2386, %v2287, %v2426
      %v2467 = vsel %vm2387, %v2290, %v2427
      %v2468 = vsel %vm2388, %v2293, %v2428
      %v2469 = vsel %vm2389, %v2296, %v2429
      %v2470 = vsel %vm2390, %v2299, %v2430
      %v2471 = vsel %vm2391, %v2302, %v2431
      %v2472 = vsel %vm2392, %v2305, %v2432
      %v2473 = vsel %vm2393, %v2308, %v2433
      %v2474 = vsel %vm2394, %v2311, %v2434
      %v2475 = vsel %vm2395, %v2314, %v2435
      %v2476 = vsel %vm2396, %v2317, %v2436
      %v2477 = vsel %vm2397, %v2320, %v2437
      %v2478 = vsel %vm2398, %v2323, %v2438
      %v2479 = vsel %vm2399, %v2326, %v2439
      %v2480 = vsel %vm2400, %v2329, %v2440
      %v2481 = vsel %vm2401, %v2332, %v2441
      %v2482 = vsel %vm2402, %v2335, %v2442
      %v2483 = vsel %vm2403, %v2338, %v2443
      %v2484 = vsel %vm2404, %v2341, %v2444
      %v2485 = vsel %vm2405, %v2344, %v2445
      %v2486 = vsel %vm2406, %v2347, %v2446
      %v2487 = vsel %vm2407, %v2350, %v2447
      %v2488 = vsel %vm2408, %v2353, %v2448
      %v2489 = vsel %vm2409, %v2356, %v2449
      %v2490 = vsel %vm2410, %v2359, %v2450
      %v2491 = vsel %vm2411, %v2362, %v2451
      %v2492 = vsel %vm2412, %v2365, %v2452
      %v2493 = vsel %vm2413, %v2368, %v2453
      %v2494 = vsel %vm2414, %v2371, %v2454
      %v2495 = vsel %vm2415, %v2374, %v2455
      %2496 = vmatpush.msra.mxu0 %v2471
      %2497 = vmatpush.msra.mxu0 %v2470
      %2498 = vmatpush.msra.mxu0 %v2469
      %2499 = vmatpush.msra.mxu0 %v2468
      %2500 = vmatpush.msra.mxu0 %v2467
      %2501 = vmatpush.msra.mxu0 %v2466
      %2502 = vmatpush.msra.mxu0 %v2465
      %2503 = vmatpush.msra.mxu0 %v2464
      %2504 = vmatpush.msra.mxu0 %v2463
      %2505 = vmatpush.msra.mxu0 %v2462
      %2506 = vmatpush.msra.mxu0 %v2461
      %2507 = vmatpush.msra.mxu0 %v2460
      %2508 = vmatpush.msra.mxu0 %v2459
      %2509 = vmatpush.msra.mxu0 %v2458
      %2510 = vmatpush.msra.mxu0 %v2457
      %2511 = vmatpush.msra.mxu0 %v2456
      %2512 = vmatmul.f32.gmra.mxu0 %v386
      %v2513 = vpop.f32.mrf.mxu0
      %v2514 = vadd.f32 0.0, %v2513
      %2515 = vmatmul.f32.gmra.mxu0 %v389
      %v2516 = vpop.f32.mrf.mxu0
      %v2517 = vadd.f32 0.0, %v2516
      %2518 = vmatmul.f32.gmra.mxu0 %v392
      %v2519 = vpop.f32.mrf.mxu0
      %v2520 = vadd.f32 0.0, %v2519
      %2521 = vmatmul.f32.gmra.mxu0 %v395
      %v2522 = vpop.f32.mrf.mxu0
      %v2523 = vadd.f32 0.0, %v2522
      %2524 = vmatmul.f32.gmra.mxu0 %v398
      %v2525 = vpop.f32.mrf.mxu0
      %v2526 = vadd.f32 0.0, %v2525
      %2527 = vmatmul.f32.gmra.mxu0 %v401
      %v2528 = vpop.f32.mrf.mxu0
      %v2529 = vadd.f32 0.0, %v2528
      %2530 = vmatmul.f32.gmra.mxu0 %v404
      %v2531 = vpop.f32.mrf.mxu0
      %v2532 = vadd.f32 0.0, %v2531
      %2533 = vmatmul.f32.gmra.mxu0 %v407
      %v2534 = vpop.f32.mrf.mxu0
      %v2535 = vadd.f32 0.0, %v2534
      %2536 = vmatmul.f32.gmra.mxu0 %v410
      %v2537 = vpop.f32.mrf.mxu0
      %v2538 = vadd.f32 0.0, %v2537
      %2539 = vmatmul.f32.gmra.mxu0 %v413
      %v2540 = vpop.f32.mrf.mxu0
      %v2541 = vadd.f32 0.0, %v2540
      %2542 = vmatmul.f32.gmra.mxu0 %v416
      %v2543 = vpop.f32.mrf.mxu0
      %v2544 = vadd.f32 0.0, %v2543
      %2545 = vmatmul.f32.gmra.mxu0 %v419
      %v2546 = vpop.f32.mrf.mxu0
      %v2547 = vadd.f32 0.0, %v2546
      %2548 = vmatmul.f32.gmra.mxu0 %v422
      %v2549 = vpop.f32.mrf.mxu0
      %v2550 = vadd.f32 0.0, %v2549
      %2551 = vmatmul.f32.gmra.mxu0 %v425
      %v2552 = vpop.f32.mrf.mxu0
      %v2553 = vadd.f32 0.0, %v2552
      %2554 = vmatmul.f32.gmra.mxu0 %v428
      %v2555 = vpop.f32.mrf.mxu0
      %v2556 = vadd.f32 0.0, %v2555
      %2557 = vmatmul.f32.gmra.mxu0 %v431
      %v2558 = vpop.f32.mrf.mxu0
      %v2559 = vadd.f32 0.0, %v2558
      %2560 = vmatmul.f32.gmra.mxu0 %v434
      %v2561 = vpop.f32.mrf.mxu0
      %v2562 = vadd.f32 0.0, %v2561
      %2563 = vmatmul.f32.gmra.mxu0 %v437
      %v2564 = vpop.f32.mrf.mxu0
      %v2565 = vadd.f32 0.0, %v2564
      %2566 = vmatmul.f32.gmra.mxu0 %v440
      %v2567 = vpop.f32.mrf.mxu0
      %v2568 = vadd.f32 0.0, %v2567
      %2569 = vmatmul.f32.gmra.mxu0 %v443
      %v2570 = vpop.f32.mrf.mxu0
      %v2571 = vadd.f32 0.0, %v2570
      %2572 = vmatmul.f32.gmra.mxu0 %v446
      %v2573 = vpop.f32.mrf.mxu0
      %v2574 = vadd.f32 0.0, %v2573
      %2575 = vmatmul.f32.gmra.mxu0 %v449
      %v2576 = vpop.f32.mrf.mxu0
      %v2577 = vadd.f32 0.0, %v2576
      %2578 = vmatmul.f32.gmra.mxu0 %v452
      %v2579 = vpop.f32.mrf.mxu0
      %v2580 = vadd.f32 0.0, %v2579
      %2581 = vmatmul.f32.gmra.mxu0 %v455
      %v2582 = vpop.f32.mrf.mxu0
      %v2583 = vadd.f32 0.0, %v2582
      %2584 = vdwg.mxu0
      %2585 = vmatpush.msra.mxu0 %v2487
      %2586 = vmatpush.msra.mxu0 %v2486
      %2587 = vmatpush.msra.mxu0 %v2485
      %2588 = vmatpush.msra.mxu0 %v2484
      %2589 = vmatpush.msra.mxu0 %v2483
      %2590 = vmatpush.msra.mxu0 %v2482
      %2591 = vmatpush.msra.mxu0 %v2481
      %2592 = vmatpush.msra.mxu0 %v2480
      %2593 = vmatpush.msra.mxu0 %v2479
      %2594 = vmatpush.msra.mxu0 %v2478
      %2595 = vmatpush.msra.mxu0 %v2477
      %2596 = vmatpush.msra.mxu0 %v2476
      %2597 = vmatpush.msra.mxu0 %v2475
      %2598 = vmatpush.msra.mxu0 %v2474
      %2599 = vmatpush.msra.mxu0 %v2473
      %2600 = vmatpush.msra.mxu0 %v2472
      %2601 = vmatmul.f32.gmra.mxu0 %v387
      %v2602 = vpop.f32.mrf.mxu0
      %v2603 = vadd.f32 %v2514, %v2602
      %2604 = vmatmul.f32.gmra.mxu0 %v390
      %v2605 = vpop.f32.mrf.mxu0
      %v2606 = vadd.f32 %v2517, %v2605
      %2607 = vmatmul.f32.gmra.mxu0 %v393
      %v2608 = vpop.f32.mrf.mxu0
      %v2609 = vadd.f32 %v2520, %v2608
      %2610 = vmatmul.f32.gmra.mxu0 %v396
      %v2611 = vpop.f32.mrf.mxu0
      %v2612 = vadd.f32 %v2523, %v2611
      %2613 = vmatmul.f32.gmra.mxu0 %v399
      %v2614 = vpop.f32.mrf.mxu0
      %v2615 = vadd.f32 %v2526, %v2614
      %2616 = vmatmul.f32.gmra.mxu0 %v402
      %v2617 = vpop.f32.mrf.mxu0
      %v2618 = vadd.f32 %v2529, %v2617
      %2619 = vmatmul.f32.gmra.mxu0 %v405
      %v2620 = vpop.f32.mrf.mxu0
      %v2621 = vadd.f32 %v2532, %v2620
      %2622 = vmatmul.f32.gmra.mxu0 %v408
      %v2623 = vpop.f32.mrf.mxu0
      %v2624 = vadd.f32 %v2535, %v2623
      %2625 = vmatmul.f32.gmra.mxu0 %v411
      %v2626 = vpop.f32.mrf.mxu0
      %v2627 = vadd.f32 %v2538, %v2626
      %2628 = vmatmul.f32.gmra.mxu0 %v414
      %v2629 = vpop.f32.mrf.mxu0
      %v2630 = vadd.f32 %v2541, %v2629
      %2631 = vmatmul.f32.gmra.mxu0 %v417
      %v2632 = vpop.f32.mrf.mxu0
      %v2633 = vadd.f32 %v2544, %v2632
      %2634 = vmatmul.f32.gmra.mxu0 %v420
      %v2635 = vpop.f32.mrf.mxu0
      %v2636 = vadd.f32 %v2547, %v2635
      %2637 = vmatmul.f32.gmra.mxu0 %v423
      %v2638 = vpop.f32.mrf.mxu0
      %v2639 = vadd.f32 %v2550, %v2638
      %2640 = vmatmul.f32.gmra.mxu0 %v426
      %v2641 = vpop.f32.mrf.mxu0
      %v2642 = vadd.f32 %v2553, %v2641
      %2643 = vmatmul.f32.gmra.mxu0 %v429
      %v2644 = vpop.f32.mrf.mxu0
      %v2645 = vadd.f32 %v2556, %v2644
      %2646 = vmatmul.f32.gmra.mxu0 %v432
      %v2647 = vpop.f32.mrf.mxu0
      %v2648 = vadd.f32 %v2559, %v2647
      %2649 = vmatmul.f32.gmra.mxu0 %v435
      %v2650 = vpop.f32.mrf.mxu0
      %v2651 = vadd.f32 %v2562, %v2650
      %2652 = vmatmul.f32.gmra.mxu0 %v438
      %v2653 = vpop.f32.mrf.mxu0
      %v2654 = vadd.f32 %v2565, %v2653
      %2655 = vmatmul.f32.gmra.mxu0 %v441
      %v2656 = vpop.f32.mrf.mxu0
      %v2657 = vadd.f32 %v2568, %v2656
      %2658 = vmatmul.f32.gmra.mxu0 %v444
      %v2659 = vpop.f32.mrf.mxu0
      %v2660 = vadd.f32 %v2571, %v2659
      %2661 = vmatmul.f32.gmra.mxu0 %v447
      %v2662 = vpop.f32.mrf.mxu0
      %v2663 = vadd.f32 %v2574, %v2662
      %2664 = vmatmul.f32.gmra.mxu0 %v450
      %v2665 = vpop.f32.mrf.mxu0
      %v2666 = vadd.f32 %v2577, %v2665
      %2667 = vmatmul.f32.gmra.mxu0 %v453
      %v2668 = vpop.f32.mrf.mxu0
      %v2669 = vadd.f32 %v2580, %v2668
      %2670 = vmatmul.f32.gmra.mxu0 %v456
      %v2671 = vpop.f32.mrf.mxu0
      %v2672 = vadd.f32 %v2583, %v2671
      %2673 = vdwg.mxu0
      %2674 = vmatpush.msra.mxu0 0.0
      %2675 = vmatpush.msra.mxu0 0.0
      %2676 = vmatpush.msra.mxu0 0.0
      %2677 = vmatpush.msra.mxu0 0.0
      %2678 = vmatpush.msra.mxu0 0.0
      %2679 = vmatpush.msra.mxu0 0.0
      %2680 = vmatpush.msra.mxu0 0.0
      %2681 = vmatpush.msra.mxu0 0.0
      %2682 = vmatpush.msra.mxu0 %v2495
      %2683 = vmatpush.msra.mxu0 %v2494
      %2684 = vmatpush.msra.mxu0 %v2493
      %2685 = vmatpush.msra.mxu0 %v2492
      %2686 = vmatpush.msra.mxu0 %v2491
      %2687 = vmatpush.msra.mxu0 %v2490
      %2688 = vmatpush.msra.mxu0 %v2489
      %2689 = vmatpush.msra.mxu0 %v2488
      %2690 = vmatmul.f32.gmra.mxu0 %v1189
      %v2691 = vpop.f32.mrf.mxu0
      %v2692 = vadd.f32 %v2603, %v2691
      %2693 = vmatmul.f32.gmra.mxu0 %v1192
      %v2694 = vpop.f32.mrf.mxu0
      %v2695 = vadd.f32 %v2606, %v2694
      %2696 = vmatmul.f32.gmra.mxu0 %v1195
      %v2697 = vpop.f32.mrf.mxu0
      %v2698 = vadd.f32 %v2609, %v2697
      %2699 = vmatmul.f32.gmra.mxu0 %v1198
      %v2700 = vpop.f32.mrf.mxu0
      %v2701 = vadd.f32 %v2612, %v2700
      %2702 = vmatmul.f32.gmra.mxu0 %v1201
      %v2703 = vpop.f32.mrf.mxu0
      %v2704 = vadd.f32 %v2615, %v2703
      %2705 = vmatmul.f32.gmra.mxu0 %v1204
      %v2706 = vpop.f32.mrf.mxu0
      %v2707 = vadd.f32 %v2618, %v2706
      %2708 = vmatmul.f32.gmra.mxu0 %v1207
      %v2709 = vpop.f32.mrf.mxu0
      %v2710 = vadd.f32 %v2621, %v2709
      %2711 = vmatmul.f32.gmra.mxu0 %v1210
      %v2712 = vpop.f32.mrf.mxu0
      %v2713 = vadd.f32 %v2624, %v2712
      %2714 = vmatmul.f32.gmra.mxu0 %v1213
      %v2715 = vpop.f32.mrf.mxu0
      %v2716 = vadd.f32 %v2627, %v2715
      %2717 = vmatmul.f32.gmra.mxu0 %v1216
      %v2718 = vpop.f32.mrf.mxu0
      %v2719 = vadd.f32 %v2630, %v2718
      %2720 = vmatmul.f32.gmra.mxu0 %v1219
      %v2721 = vpop.f32.mrf.mxu0
      %v2722 = vadd.f32 %v2633, %v2721
      %2723 = vmatmul.f32.gmra.mxu0 %v1222
      %v2724 = vpop.f32.mrf.mxu0
      %v2725 = vadd.f32 %v2636, %v2724
      %2726 = vmatmul.f32.gmra.mxu0 %v1225
      %v2727 = vpop.f32.mrf.mxu0
      %v2728 = vadd.f32 %v2639, %v2727
      %2729 = vmatmul.f32.gmra.mxu0 %v1228
      %v2730 = vpop.f32.mrf.mxu0
      %v2731 = vadd.f32 %v2642, %v2730
      %2732 = vmatmul.f32.gmra.mxu0 %v1231
      %v2733 = vpop.f32.mrf.mxu0
      %v2734 = vadd.f32 %v2645, %v2733
      %2735 = vmatmul.f32.gmra.mxu0 %v1234
      %v2736 = vpop.f32.mrf.mxu0
      %v2737 = vadd.f32 %v2648, %v2736
      %2738 = vmatmul.f32.gmra.mxu0 %v1237
      %v2739 = vpop.f32.mrf.mxu0
      %v2740 = vadd.f32 %v2651, %v2739
      %2741 = vmatmul.f32.gmra.mxu0 %v1240
      %v2742 = vpop.f32.mrf.mxu0
      %v2743 = vadd.f32 %v2654, %v2742
      %2744 = vmatmul.f32.gmra.mxu0 %v1243
      %v2745 = vpop.f32.mrf.mxu0
      %v2746 = vadd.f32 %v2657, %v2745
      %2747 = vmatmul.f32.gmra.mxu0 %v1246
      %v2748 = vpop.f32.mrf.mxu0
      %v2749 = vadd.f32 %v2660, %v2748
      %2750 = vmatmul.f32.gmra.mxu0 %v1249
      %v2751 = vpop.f32.mrf.mxu0
      %v2752 = vadd.f32 %v2663, %v2751
      %2753 = vmatmul.f32.gmra.mxu0 %v1252
      %v2754 = vpop.f32.mrf.mxu0
      %v2755 = vadd.f32 %v2666, %v2754
      %2756 = vmatmul.f32.gmra.mxu0 %v1255
      %v2757 = vpop.f32.mrf.mxu0
      %v2758 = vadd.f32 %v2669, %v2757
      %2759 = vmatmul.f32.gmra.mxu0 %v1258
      %v2760 = vpop.f32.mrf.mxu0
      %v2761 = vadd.f32 %v2672, %v2760
      %2762 = vdwg.mxu0
      %2763 = vst.msk [vmem:[#allocation2] sm:$0xff] %vm511, %v1860
      %2764 = vst.msk [vmem:[#allocation2 + $0x8] sm:$0xff] %vm511, %v1861
      %2765 = vst.msk [vmem:[#allocation2 + $0x10] sm:$0xff] %vm511, %v1862
      %2766 = vst.msk [vmem:[#allocation2 + $0x18] sm:$0xff] %vm511, %v1863
      %2767 = vst.msk [vmem:[#allocation2 + $0x20] sm:$0xff] %vm511, %v1864
      %2768 = vst.msk [vmem:[#allocation2 + $0x28] sm:$0xff] %vm511, %v1865
      %2769 = vst.msk [vmem:[#allocation2 + $0x30] sm:$0xff] %vm511, %v1866
      %2770 = vst.msk [vmem:[#allocation2 + $0x38] sm:$0xff] %vm511, %v1867
      %2771 = vst.msk [vmem:[#allocation2 + $0x40] sm:$0xff] %vm511, %v1868
      %2772 = vst.msk [vmem:[#allocation2 + $0x48] sm:$0xff] %vm511, %v1869
      %2773 = vst.msk [vmem:[#allocation2 + $0x50] sm:$0xff] %vm511, %v1870
      %2774 = vst.msk [vmem:[#allocation2 + $0x58] sm:$0xff] %vm511, %v1871
      %2775 = vst.msk [vmem:[#allocation2 + $0x60] sm:$0xff] %vm511, %v1872
      %2776 = vst.msk [vmem:[#allocation2 + $0x68] sm:$0xff] %vm511, %v1873
      %2777 = vst.msk [vmem:[#allocation2 + $0x70] sm:$0xff] %vm511, %v1874
      %2778 = vst.msk [vmem:[#allocation2 + $0x78] sm:$0xff] %vm511, %v1875
      %2779 = vst.msk [vmem:[#allocation2 + $0x80] sm:$0xff] %vm511, %v1876
      %2780 = vst.msk [vmem:[#allocation2 + $0x88] sm:$0xff] %vm511, %v1877
      %2781 = vst.msk [vmem:[#allocation2 + $0x90] sm:$0xff] %vm511, %v1878
      %2782 = vst.msk [vmem:[#allocation2 + $0x98] sm:$0xff] %vm511, %v1879
      %2783 = vst.msk [vmem:[#allocation2 + $0xa0] sm:$0xff] %vm511, %v1880
      %2784 = vst.msk [vmem:[#allocation2 + $0xa8] sm:$0xff] %vm511, %v1881
      %2785 = vst.msk [vmem:[#allocation2 + $0xb0] sm:$0xff] %vm511, %v1882
      %2786 = vst.msk [vmem:[#allocation2 + $0xb8] sm:$0xff] %vm511, %v1883
      %2811 = vrot.lane.b32.xlu0 %v2692, 32
      %v2812 = vpop.permute.xlu0 %2811
      %2813 = vrot.lane.b32.xlu0 %v2695, 32
      %v2814 = vpop.permute.xlu0 %2813
      %2815 = vrot.lane.b32.xlu0 %v2698, 32
      %v2816 = vpop.permute.xlu0 %2815
      %2817 = vrot.lane.b32.xlu0 %v2701, 32
      %v2818 = vpop.permute.xlu0 %2817
      %2819 = vrot.lane.b32.xlu0 %v2704, 32
      %v2820 = vpop.permute.xlu0 %2819
      %2821 = vrot.lane.b32.xlu0 %v2707, 32
      %v2822 = vpop.permute.xlu0 %2821
      %2823 = vrot.lane.b32.xlu0 %v2710, 32
      %v2824 = vpop.permute.xlu0 %2823
      %2825 = vrot.lane.b32.xlu0 %v2713, 32
      %v2826 = vpop.permute.xlu0 %2825
      %2827 = vrot.lane.b32.xlu0 %v2716, 32
      %v2828 = vpop.permute.xlu0 %2827
      %2829 = vrot.lane.b32.xlu0 %v2719, 32
      %v2830 = vpop.permute.xlu0 %2829
      %2831 = vrot.lane.b32.xlu0 %v2722, 32
      %v2832 = vpop.permute.xlu0 %2831
      %2833 = vrot.lane.b32.xlu0 %v2725, 32
      %v2834 = vpop.permute.xlu0 %2833
      %2835 = vrot.lane.b32.xlu0 %v2728, 32
      %v2836 = vpop.permute.xlu0 %2835
      %2837 = vrot.lane.b32.xlu0 %v2731, 32
      %v2838 = vpop.permute.xlu0 %2837
      %2839 = vrot.lane.b32.xlu0 %v2734, 32
      %v2840 = vpop.permute.xlu0 %2839
      %2841 = vrot.lane.b32.xlu0 %v2737, 32
      %v2842 = vpop.permute.xlu0 %2841
      %2843 = vrot.lane.b32.xlu0 %v2740, 32
      %v2844 = vpop.permute.xlu0 %2843
      %2845 = vrot.lane.b32.xlu0 %v2743, 32
      %v2846 = vpop.permute.xlu0 %2845
      %2847 = vrot.lane.b32.xlu0 %v2746, 32
      %v2848 = vpop.permute.xlu0 %2847
      %2849 = vrot.lane.b32.xlu0 %v2749, 32
      %v2850 = vpop.permute.xlu0 %2849
      %2851 = vrot.lane.b32.xlu0 %v2752, 32
      %v2852 = vpop.permute.xlu0 %2851
      %2853 = vrot.lane.b32.xlu0 %v2755, 32
      %v2854 = vpop.permute.xlu0 %2853
      %2855 = vrot.lane.b32.xlu0 %v2758, 32
      %v2856 = vpop.permute.xlu0 %2855
      %2857 = vrot.lane.b32.xlu0 %v2761, 32
      %v2858 = vpop.permute.xlu0 %2857
      %2883 = vst.msk [vmem:[#allocation2] sm:$0xff] %vm1647, %v2812
      %2884 = vst.msk [vmem:[#allocation2 + $0x8] sm:$0xff] %vm1647, %v2814
      %2885 = vst.msk [vmem:[#allocation2 + $0x10] sm:$0xff] %vm1647, %v2816
      %2886 = vst.msk [vmem:[#allocation2 + $0x18] sm:$0xff] %vm1647, %v2818
      %2887 = vst.msk [vmem:[#allocation2 + $0x20] sm:$0xff] %vm1647, %v2820
      %2888 = vst.msk [vmem:[#allocation2 + $0x28] sm:$0xff] %vm1647, %v2822
      %2889 = vst.msk [vmem:[#allocation2 + $0x30] sm:$0xff] %vm1647, %v2824
      %2890 = vst.msk [vmem:[#allocation2 + $0x38] sm:$0xff] %vm1647, %v2826
      %2891 = vst.msk [vmem:[#allocation2 + $0x40] sm:$0xff] %vm1647, %v2828
      %2892 = vst.msk [vmem:[#allocation2 + $0x48] sm:$0xff] %vm1647, %v2830
      %2893 = vst.msk [vmem:[#allocation2 + $0x50] sm:$0xff] %vm1647, %v2832
      %2894 = vst.msk [vmem:[#allocation2 + $0x58] sm:$0xff] %vm1647, %v2834
      %2895 = vst.msk [vmem:[#allocation2 + $0x60] sm:$0xff] %vm1647, %v2836
      %2896 = vst.msk [vmem:[#allocation2 + $0x68] sm:$0xff] %vm1647, %v2838
      %2897 = vst.msk [vmem:[#allocation2 + $0x70] sm:$0xff] %vm1647, %v2840
      %2898 = vst.msk [vmem:[#allocation2 + $0x78] sm:$0xff] %vm1647, %v2842
      %2899 = vst.msk [vmem:[#allocation2 + $0x80] sm:$0xff] %vm1647, %v2844
      %2900 = vst.msk [vmem:[#allocation2 + $0x88] sm:$0xff] %vm1647, %v2846
      %2901 = vst.msk [vmem:[#allocation2 + $0x90] sm:$0xff] %vm1647, %v2848
      %2902 = vst.msk [vmem:[#allocation2 + $0x98] sm:$0xff] %vm1647, %v2850
      %2903 = vst.msk [vmem:[#allocation2 + $0xa0] sm:$0xff] %vm1647, %v2852
      %2904 = vst.msk [vmem:[#allocation2 + $0xa8] sm:$0xff] %vm1647, %v2854
      %2905 = vst.msk [vmem:[#allocation2 + $0xb0] sm:$0xff] %vm1647, %v2856
      %2906 = vst.msk [vmem:[#allocation2 + $0xb8] sm:$0xff] %vm1647, %v2858
      %v2907 = vld [vmem:[#allocation2] sm:$0xff]
      %v2908 = vld [vmem:[#allocation2 + $0x8] sm:$0xff]
      %v2909 = vld [vmem:[#allocation2 + $0x10] sm:$0xff]
      %v2910 = vld [vmem:[#allocation2 + $0x18] sm:$0xff]
      %v2911 = vld [vmem:[#allocation2 + $0x20] sm:$0xff]
      %v2912 = vld [vmem:[#allocation2 + $0x28] sm:$0xff]
      %v2913 = vld [vmem:[#allocation2 + $0x30] sm:$0xff]
      %v2914 = vld [vmem:[#allocation2 + $0x38] sm:$0xff]
      %v2915 = vld [vmem:[#allocation2 + $0x40] sm:$0xff]
      %v2916 = vld [vmem:[#allocation2 + $0x48] sm:$0xff]
      %v2917 = vld [vmem:[#allocation2 + $0x50] sm:$0xff]
      %v2918 = vld [vmem:[#allocation2 + $0x58] sm:$0xff]
      %v2919 = vld [vmem:[#allocation2 + $0x60] sm:$0xff]
      %v2920 = vld [vmem:[#allocation2 + $0x68] sm:$0xff]
      %v2921 = vld [vmem:[#allocation2 + $0x70] sm:$0xff]
      %v2922 = vld [vmem:[#allocation2 + $0x78] sm:$0xff]
      %v2923 = vld [vmem:[#allocation2 + $0x80] sm:$0xff]
      %v2924 = vld [vmem:[#allocation2 + $0x88] sm:$0xff]
      %v2925 = vld [vmem:[#allocation2 + $0x90] sm:$0xff]
      %v2926 = vld [vmem:[#allocation2 + $0x98] sm:$0xff]
      %v2927 = vld [vmem:[#allocation2 + $0xa0] sm:$0xff]
      %v2928 = vld [vmem:[#allocation2 + $0xa8] sm:$0xff]
      %v2929 = vld [vmem:[#allocation2 + $0xb0] sm:$0xff]
      %v2930 = vld [vmem:[#allocation2 + $0xb8] sm:$0xff]
      %v2932 = vperm.slane %v1940, 0
      %v2935 = vsel %vm673, %v2907, 0
      %v2938 = vsel %vm673, %v2908, 0
      %v2941 = vsel %vm673, %v2909, 0
      %v2944 = vsel %vm673, %v2910, 0
      %v2947 = vsel %vm673, %v2911, 0
      %v2950 = vsel %vm673, %v2912, 0
      %v2953 = vsel %vm673, %v2913, 0
      %v2956 = vsel %vm673, %v2914, 0
      %v2959 = vsel %vm673, %v2915, 0
      %v2962 = vsel %vm673, %v2916, 0
      %v2965 = vsel %vm673, %v2917, 0
      %v2968 = vsel %vm673, %v2918, 0
      %v2971 = vsel %vm673, %v2919, 0
      %v2974 = vsel %vm673, %v2920, 0
      %v2977 = vsel %vm673, %v2921, 0
      %v2980 = vsel %vm673, %v2922, 0
      %v2983 = vsel %vm673, %v2923, 0
      %v2986 = vsel %vm673, %v2924, 0
      %v2989 = vsel %vm673, %v2925, 0
      %v2992 = vsel %vm673, %v2926, 0
      %v2995 = vsel %vm673, %v2927, 0
      %v2998 = vsel %vm673, %v2928, 0
      %v3001 = vsel %vm673, %v2929, 0
      %v3004 = vsel %vm673, %v2930, 0
      %3006 = vmatpush.msra.mxu0 0.0
      %3007 = vmatpush.msra.mxu0 0.0
      %3008 = vmatpush.msra.mxu0 0.0
      %3009 = vmatpush.msra.mxu0 0.0
      %3010 = vmatpush.msra.mxu0 0.0
      %3011 = vmatpush.msra.mxu0 0.0
      %3012 = vmatpush.msra.mxu0 0.0
      %3013 = vmatpush.msra.mxu0 0.0
      %3014 = vmatpush.msra.mxu0 %v1938
      %3015 = vmatpush.msra.mxu0 %v1937
      %3016 = vmatpush.msra.mxu0 %v1936
      %3017 = vmatpush.msra.mxu0 %v1935
      %3018 = vmatpush.msra.mxu0 %v1934
      %3019 = vmatpush.msra.mxu0 %v1933
      %3020 = vmatpush.msra.mxu0 %v1932
      %3021 = vmatpush.msra.mxu0 %v1931
      %3022 = vmatmul.f32.gmra.mxu0 %v2935
      %v3023 = vpop.f32.mrf.mxu0
      %v3024 = vadd.f32 %v2932, %v3023
      %3025 = vmatmul.f32.gmra.mxu0 %v2938
      %v3026 = vpop.f32.mrf.mxu0
      %v3027 = vadd.f32 %v2932, %v3026
      %3028 = vmatmul.f32.gmra.mxu0 %v2941
      %v3029 = vpop.f32.mrf.mxu0
      %v3030 = vadd.f32 %v2932, %v3029
      %3031 = vmatmul.f32.gmra.mxu0 %v2944
      %v3032 = vpop.f32.mrf.mxu0
      %v3033 = vadd.f32 %v2932, %v3032
      %3034 = vmatmul.f32.gmra.mxu0 %v2947
      %v3035 = vpop.f32.mrf.mxu0
      %v3036 = vadd.f32 %v2932, %v3035
      %3037 = vmatmul.f32.gmra.mxu0 %v2950
      %v3038 = vpop.f32.mrf.mxu0
      %v3039 = vadd.f32 %v2932, %v3038
      %3040 = vmatmul.f32.gmra.mxu0 %v2953
      %v3041 = vpop.f32.mrf.mxu0
      %v3042 = vadd.f32 %v2932, %v3041
      %3043 = vmatmul.f32.gmra.mxu0 %v2956
      %v3044 = vpop.f32.mrf.mxu0
      %v3045 = vadd.f32 %v2932, %v3044
      %3046 = vmatmul.f32.gmra.mxu0 %v2959
      %v3047 = vpop.f32.mrf.mxu0
      %v3048 = vadd.f32 %v2932, %v3047
      %3049 = vmatmul.f32.gmra.mxu0 %v2962
      %v3050 = vpop.f32.mrf.mxu0
      %v3051 = vadd.f32 %v2932, %v3050
      %3052 = vmatmul.f32.gmra.mxu0 %v2965
      %v3053 = vpop.f32.mrf.mxu0
      %v3054 = vadd.f32 %v2932, %v3053
      %3055 = vmatmul.f32.gmra.mxu0 %v2968
      %v3056 = vpop.f32.mrf.mxu0
      %v3057 = vadd.f32 %v2932, %v3056
      %3058 = vmatmul.f32.gmra.mxu0 %v2971
      %v3059 = vpop.f32.mrf.mxu0
      %v3060 = vadd.f32 %v2932, %v3059
      %3061 = vmatmul.f32.gmra.mxu0 %v2974
      %v3062 = vpop.f32.mrf.mxu0
      %v3063 = vadd.f32 %v2932, %v3062
      %3064 = vmatmul.f32.gmra.mxu0 %v2977
      %v3065 = vpop.f32.mrf.mxu0
      %v3066 = vadd.f32 %v2932, %v3065
      %3067 = vmatmul.f32.gmra.mxu0 %v2980
      %v3068 = vpop.f32.mrf.mxu0
      %v3069 = vadd.f32 %v2932, %v3068
      %3070 = vmatmul.f32.gmra.mxu0 %v2983
      %v3071 = vpop.f32.mrf.mxu0
      %v3072 = vadd.f32 %v2932, %v3071
      %3073 = vmatmul.f32.gmra.mxu0 %v2986
      %v3074 = vpop.f32.mrf.mxu0
      %v3075 = vadd.f32 %v2932, %v3074
      %3076 = vmatmul.f32.gmra.mxu0 %v2989
      %v3077 = vpop.f32.mrf.mxu0
      %v3078 = vadd.f32 %v2932, %v3077
      %3079 = vmatmul.f32.gmra.mxu0 %v2992
      %v3080 = vpop.f32.mrf.mxu0
      %v3081 = vadd.f32 %v2932, %v3080
      %3082 = vmatmul.f32.gmra.mxu0 %v2995
      %v3083 = vpop.f32.mrf.mxu0
      %v3084 = vadd.f32 %v2932, %v3083
      %3085 = vmatmul.f32.gmra.mxu0 %v2998
      %v3086 = vpop.f32.mrf.mxu0
      %v3087 = vadd.f32 %v2932, %v3086
      %3088 = vmatmul.f32.gmra.mxu0 %v3001
      %v3089 = vpop.f32.mrf.mxu0
      %v3090 = vadd.f32 %v2932, %v3089
      %3091 = vmatmul.f32.gmra.mxu0 %v3004
      %v3092 = vpop.f32.mrf.mxu0
      %v3093 = vadd.f32 %v2932, %v3092
      %3094 = vdwg.mxu0
      %v3095 = vmax.f32 %v3024, 0.0
      %v3096 = vmax.f32 %v3027, 0.0
      %v3097 = vmax.f32 %v3030, 0.0
      %v3098 = vmax.f32 %v3033, 0.0
      %v3099 = vmax.f32 %v3036, 0.0
      %v3100 = vmax.f32 %v3039, 0.0
      %v3101 = vmax.f32 %v3042, 0.0
      %v3102 = vmax.f32 %v3045, 0.0
      %v3103 = vmax.f32 %v3048, 0.0
      %v3104 = vmax.f32 %v3051, 0.0
      %v3105 = vmax.f32 %v3054, 0.0
      %v3106 = vmax.f32 %v3057, 0.0
      %v3107 = vmax.f32 %v3060, 0.0
      %v3108 = vmax.f32 %v3063, 0.0
      %v3109 = vmax.f32 %v3066, 0.0
      %v3110 = vmax.f32 %v3069, 0.0
      %v3111 = vmax.f32 %v3072, 0.0
      %v3112 = vmax.f32 %v3075, 0.0
      %v3113 = vmax.f32 %v3078, 0.0
      %v3114 = vmax.f32 %v3081, 0.0
      %v3115 = vmax.f32 %v3084, 0.0
      %v3116 = vmax.f32 %v3087, 0.0
      %v3117 = vmax.f32 %v3090, 0.0
      %v3118 = vmax.f32 %v3093, 0.0
      %s3119 = scalar_lea.vmem %s3, 64
      %v3120 = vld [vmem:[%s3119] sm:$0xff]
      %v3121 = vld [vmem:[%s3119 + $0x8] sm:$0xff]
      %v3122 = vld [vmem:[%s3119 + $0x10] sm:$0xff]
      %v3123 = vld [vmem:[%s3119 + $0x18] sm:$0xff]
      %s3124 = scalar_lea.vmem %s4, 640
      %v3125 = vld [vmem:[%s3124] sm:$0xff]
      %v3126 = vld [vmem:[%s3124 + $0x8] sm:$0xff]
      %v3127 = vld [vmem:[%s3124 + $0x10] sm:$0xff]
      %v3128 = vld [vmem:[%s3124 + $0x18] sm:$0xff]
      %v3129 = vld [vmem:[%s3124 + $0x20] sm:$0xff]
      %v3130 = vld [vmem:[%s3124 + $0x28] sm:$0xff]
      %v3131 = vld [vmem:[%s3124 + $0x30] sm:$0xff]
      %v3132 = vld [vmem:[%s3124 + $0x38] sm:$0xff]
      %v3133 = vld [vmem:[%s3124 + $0x40] sm:$0xff]
      %v3134 = vld [vmem:[%s3124 + $0x48] sm:$0xff]
      %v3135 = vld [vmem:[%s3124 + $0x50] sm:$0xff]
      %v3136 = vld [vmem:[%s3124 + $0x58] sm:$0xff]
      %v3137 = vld [vmem:[%s3124 + $0x60] sm:$0xff]
      %v3138 = vld [vmem:[%s3124 + $0x68] sm:$0xff]
      %v3139 = vld [vmem:[%s3124 + $0x70] sm:$0xff]
      %v3140 = vld [vmem:[%s3124 + $0x78] sm:$0xff]
      %v3141 = vld [vmem:[%s3124 + $0x80] sm:$0xff]
      %v3142 = vld [vmem:[%s3124 + $0x88] sm:$0xff]
      %v3143 = vld [vmem:[%s3124 + $0x90] sm:$0xff]
      %v3144 = vld [vmem:[%s3124 + $0x98] sm:$0xff]
      %v3145 = vld [vmem:[%s3124 + $0xa0] sm:$0xff]
      %v3146 = vld [vmem:[%s3124 + $0xa8] sm:$0xff]
      %v3147 = vld [vmem:[%s3124 + $0xb0] sm:$0xff]
      %v3148 = vld [vmem:[%s3124 + $0xb8] sm:$0xff]
      %v3149 = vld [vmem:[%s3124 + $0xc0] sm:$0xff]
      %v3150 = vld [vmem:[%s3124 + $0xc8] sm:$0xff]
      %v3151 = vld [vmem:[%s3124 + $0xd0] sm:$0xff]
      %v3152 = vld [vmem:[%s3124 + $0xd8] sm:$0xff]
      %v3153 = vld [vmem:[%s3124 + $0xe0] sm:$0xff]
      %v3154 = vld [vmem:[%s3124 + $0xe8] sm:$0xff]
      %v3155 = vld [vmem:[%s3124 + $0xf0] sm:$0xff]
      %v3156 = vld [vmem:[%s3124 + $0xf8] sm:$0xff]
      %v3157 = vld [vmem:[%s3124 + $0x100] sm:$0xff]
      %v3158 = vld [vmem:[%s3124 + $0x108] sm:$0xff]
      %v3159 = vld [vmem:[%s3124 + $0x110] sm:$0xff]
      %v3160 = vld [vmem:[%s3124 + $0x118] sm:$0xff]
      %v3161 = vld [vmem:[%s3124 + $0x120] sm:$0xff]
      %v3162 = vld [vmem:[%s3124 + $0x128] sm:$0xff]
      %v3163 = vld [vmem:[%s3124 + $0x130] sm:$0xff]
      %v3164 = vld [vmem:[%s3124 + $0x138] sm:$0xff]
      %s3165 = scalar_lea.vmem %s5, 128
      %v3166 = vld [vmem:[%s3165] sm:$0xff]
      %v3167 = vld [vmem:[%s3165 + $0x8] sm:$0xff]
      %v3168 = vld [vmem:[%s3165 + $0x10] sm:$0xff]
      %v3169 = vld [vmem:[%s3165 + $0x18] sm:$0xff]
      %v3170 = vld [vmem:[%s3165 + $0x20] sm:$0xff]
      %v3171 = vld [vmem:[%s3165 + $0x28] sm:$0xff]
      %v3172 = vld [vmem:[%s3165 + $0x30] sm:$0xff]
      %v3173 = vld [vmem:[%s3165 + $0x38] sm:$0xff]
      %s3174 = scalar_lea.vmem %s6, 2
      %v3175 = vld [vmem:[%s3174] sm:$0x1]
      %v3177 = vsel %vm511, %v3095, 0
      %v3180 = vsel %vm511, %v3096, 0
      %v3183 = vsel %vm511, %v3097, 0
      %v3186 = vsel %vm511, %v3098, 0
      %v3189 = vsel %vm511, %v3099, 0
      %v3192 = vsel %vm511, %v3100, 0
      %v3195 = vsel %vm511, %v3101, 0
      %v3198 = vsel %vm511, %v3102, 0
      %v3201 = vsel %vm511, %v3103, 0
      %v3204 = vsel %vm511, %v3104, 0
      %v3207 = vsel %vm511, %v3105, 0
      %v3210 = vsel %vm511, %v3106, 0
      %v3213 = vsel %vm511, %v3107, 0
      %v3216 = vsel %vm511, %v3108, 0
      %v3219 = vsel %vm511, %v3109, 0
      %v3222 = vsel %vm511, %v3110, 0
      %v3225 = vsel %vm511, %v3111, 0
      %v3228 = vsel %vm511, %v3112, 0
      %v3231 = vsel %vm511, %v3113, 0
      %v3234 = vsel %vm511, %v3114, 0
      %v3237 = vsel %vm511, %v3115, 0
      %v3240 = vsel %vm511, %v3116, 0
      %v3243 = vsel %vm511, %v3117, 0
      %v3246 = vsel %vm511, %v3118, 0
      %3248 = vmatpush.msra.mxu0 0.0
      %3249 = vmatpush.msra.mxu0 0.0
      %3250 = vmatpush.msra.mxu0 0.0
      %3251 = vmatpush.msra.mxu0 0.0
      %3252 = vmatpush.msra.mxu0 0.0
      %3253 = vmatpush.msra.mxu0 0.0
      %3254 = vmatpush.msra.mxu0 0.0
      %3255 = vmatpush.msra.mxu0 0.0
      %3256 = vmatpush.msra.mxu0 0.0
      %3257 = vmatpush.msra.mxu0 0.0
      %3258 = vmatpush.msra.mxu0 0.0
      %3259 = vmatpush.msra.mxu0 0.0
      %3260 = vmatpush.msra.mxu0 %v3123
      %3261 = vmatpush.msra.mxu0 %v3122
      %3262 = vmatpush.msra.mxu0 %v3121
      %3263 = vmatpush.msra.mxu0 %v3120
      %3264 = vmatmul.f32.gmra.mxu0 %v3177
      %v3265 = vpop.f32.mrf.mxu0
      %v3266 = vadd.f32 0.0, %v3265
      %3267 = vmatmul.f32.gmra.mxu0 %v3180
      %v3268 = vpop.f32.mrf.mxu0
      %v3269 = vadd.f32 0.0, %v3268
      %3270 = vmatmul.f32.gmra.mxu0 %v3183
      %v3271 = vpop.f32.mrf.mxu0
      %v3272 = vadd.f32 0.0, %v3271
      %3273 = vmatmul.f32.gmra.mxu0 %v3186
      %v3274 = vpop.f32.mrf.mxu0
      %v3275 = vadd.f32 0.0, %v3274
      %3276 = vmatmul.f32.gmra.mxu0 %v3189
      %v3277 = vpop.f32.mrf.mxu0
      %v3278 = vadd.f32 0.0, %v3277
      %3279 = vmatmul.f32.gmra.mxu0 %v3192
      %v3280 = vpop.f32.mrf.mxu0
      %v3281 = vadd.f32 0.0, %v3280
      %3282 = vmatmul.f32.gmra.mxu0 %v3195
      %v3283 = vpop.f32.mrf.mxu0
      %v3284 = vadd.f32 0.0, %v3283
      %3285 = vmatmul.f32.gmra.mxu0 %v3198
      %v3286 = vpop.f32.mrf.mxu0
      %v3287 = vadd.f32 0.0, %v3286
      %3288 = vmatmul.f32.gmra.mxu0 %v3201
      %v3289 = vpop.f32.mrf.mxu0
      %v3290 = vadd.f32 0.0, %v3289
      %3291 = vmatmul.f32.gmra.mxu0 %v3204
      %v3292 = vpop.f32.mrf.mxu0
      %v3293 = vadd.f32 0.0, %v3292
      %3294 = vmatmul.f32.gmra.mxu0 %v3207
      %v3295 = vpop.f32.mrf.mxu0
      %v3296 = vadd.f32 0.0, %v3295
      %3297 = vmatmul.f32.gmra.mxu0 %v3210
      %v3298 = vpop.f32.mrf.mxu0
      %v3299 = vadd.f32 0.0, %v3298
      %3300 = vmatmul.f32.gmra.mxu0 %v3213
      %v3301 = vpop.f32.mrf.mxu0
      %v3302 = vadd.f32 0.0, %v3301
      %3303 = vmatmul.f32.gmra.mxu0 %v3216
      %v3304 = vpop.f32.mrf.mxu0
      %v3305 = vadd.f32 0.0, %v3304
      %3306 = vmatmul.f32.gmra.mxu0 %v3219
      %v3307 = vpop.f32.mrf.mxu0
      %v3308 = vadd.f32 0.0, %v3307
      %3309 = vmatmul.f32.gmra.mxu0 %v3222
      %v3310 = vpop.f32.mrf.mxu0
      %v3311 = vadd.f32 0.0, %v3310
      %3312 = vmatmul.f32.gmra.mxu0 %v3225
      %v3313 = vpop.f32.mrf.mxu0
      %v3314 = vadd.f32 0.0, %v3313
      %3315 = vmatmul.f32.gmra.mxu0 %v3228
      %v3316 = vpop.f32.mrf.mxu0
      %v3317 = vadd.f32 0.0, %v3316
      %3318 = vmatmul.f32.gmra.mxu0 %v3231
      %v3319 = vpop.f32.mrf.mxu0
      %v3320 = vadd.f32 0.0, %v3319
      %3321 = vmatmul.f32.gmra.mxu0 %v3234
      %v3322 = vpop.f32.mrf.mxu0
      %v3323 = vadd.f32 0.0, %v3322
      %3324 = vmatmul.f32.gmra.mxu0 %v3237
      %v3325 = vpop.f32.mrf.mxu0
      %v3326 = vadd.f32 0.0, %v3325
      %3327 = vmatmul.f32.gmra.mxu0 %v3240
      %v3328 = vpop.f32.mrf.mxu0
      %v3329 = vadd.f32 0.0, %v3328
      %3330 = vmatmul.f32.gmra.mxu0 %v3243
      %v3331 = vpop.f32.mrf.mxu0
      %v3332 = vadd.f32 0.0, %v3331
      %3333 = vmatmul.f32.gmra.mxu0 %v3246
      %v3334 = vpop.f32.mrf.mxu0
      %v3335 = vadd.f32 0.0, %v3334
      %3336 = vdwg.mxu0
      %3337 = vmatpush.msra.mxu0 %v3311
      %3338 = vmatpush.msra.mxu0 %v3308
      %3339 = vmatpush.msra.mxu0 %v3305
      %3340 = vmatpush.msra.mxu0 %v3302
      %3341 = vmatpush.msra.mxu0 %v3299
      %3342 = vmatpush.msra.mxu0 %v3296
      %3343 = vmatpush.msra.mxu0 %v3293
      %3344 = vmatpush.msra.mxu0 %v3290
      %3345 = vmatpush.msra.mxu0 %v3287
      %3346 = vmatpush.msra.mxu0 %v3284
      %3347 = vmatpush.msra.mxu0 %v3281
      %3348 = vmatpush.msra.mxu0 %v3278
      %3349 = vmatpush.msra.mxu0 %v3275
      %3350 = vmatpush.msra.mxu0 %v3272
      %3351 = vmatpush.msra.mxu0 %v3269
      %3352 = vmatpush.msra.mxu0 %v3266
      %3353 = vmatmul.f32.gmra.mxu0 %v306
      %v3354 = vpop.f32.mrf.mxu0
      %v3355 = vadd.f32 %v3125, %v3354
      %3356 = vmatmul.f32.gmra.mxu0 %v308
      %v3357 = vpop.f32.mrf.mxu0
      %v3358 = vadd.f32 %v3126, %v3357
      %3359 = vmatmul.f32.gmra.mxu0 %v310
      %v3360 = vpop.f32.mrf.mxu0
      %v3361 = vadd.f32 %v3127, %v3360
      %3362 = vmatmul.f32.gmra.mxu0 %v312
      %v3363 = vpop.f32.mrf.mxu0
      %v3364 = vadd.f32 %v3128, %v3363
      %3365 = vmatmul.f32.gmra.mxu0 %v314
      %v3366 = vpop.f32.mrf.mxu0
      %v3367 = vadd.f32 %v3129, %v3366
      %3368 = vmatmul.f32.gmra.mxu0 %v316
      %v3369 = vpop.f32.mrf.mxu0
      %v3370 = vadd.f32 %v3130, %v3369
      %3371 = vmatmul.f32.gmra.mxu0 %v318
      %v3372 = vpop.f32.mrf.mxu0
      %v3373 = vadd.f32 %v3131, %v3372
      %3374 = vmatmul.f32.gmra.mxu0 %v320
      %v3375 = vpop.f32.mrf.mxu0
      %v3376 = vadd.f32 %v3132, %v3375
      %3377 = vmatmul.f32.gmra.mxu0 %v322
      %v3378 = vpop.f32.mrf.mxu0
      %v3379 = vadd.f32 %v3133, %v3378
      %3380 = vmatmul.f32.gmra.mxu0 %v324
      %v3381 = vpop.f32.mrf.mxu0
      %v3382 = vadd.f32 %v3134, %v3381
      %3383 = vmatmul.f32.gmra.mxu0 %v326
      %v3384 = vpop.f32.mrf.mxu0
      %v3385 = vadd.f32 %v3135, %v3384
      %3386 = vmatmul.f32.gmra.mxu0 %v328
      %v3387 = vpop.f32.mrf.mxu0
      %v3388 = vadd.f32 %v3136, %v3387
      %3389 = vmatmul.f32.gmra.mxu0 %v330
      %v3390 = vpop.f32.mrf.mxu0
      %v3391 = vadd.f32 %v3137, %v3390
      %3392 = vmatmul.f32.gmra.mxu0 %v332
      %v3393 = vpop.f32.mrf.mxu0
      %v3394 = vadd.f32 %v3138, %v3393
      %3395 = vmatmul.f32.gmra.mxu0 %v334
      %v3396 = vpop.f32.mrf.mxu0
      %v3397 = vadd.f32 %v3139, %v3396
      %3398 = vmatmul.f32.gmra.mxu0 %v336
      %v3399 = vpop.f32.mrf.mxu0
      %v3400 = vadd.f32 %v3140, %v3399
      %3401 = vmatmul.f32.gmra.mxu0 %v338
      %v3402 = vpop.f32.mrf.mxu0
      %v3403 = vadd.f32 %v3141, %v3402
      %3404 = vmatmul.f32.gmra.mxu0 %v340
      %v3405 = vpop.f32.mrf.mxu0
      %v3406 = vadd.f32 %v3142, %v3405
      %3407 = vmatmul.f32.gmra.mxu0 %v342
      %v3408 = vpop.f32.mrf.mxu0
      %v3409 = vadd.f32 %v3143, %v3408
      %3410 = vmatmul.f32.gmra.mxu0 %v344
      %v3411 = vpop.f32.mrf.mxu0
      %v3412 = vadd.f32 %v3144, %v3411
      %3413 = vmatmul.f32.gmra.mxu0 %v346
      %v3414 = vpop.f32.mrf.mxu0
      %v3415 = vadd.f32 %v3145, %v3414
      %3416 = vmatmul.f32.gmra.mxu0 %v348
      %v3417 = vpop.f32.mrf.mxu0
      %v3418 = vadd.f32 %v3146, %v3417
      %3419 = vmatmul.f32.gmra.mxu0 %v350
      %v3420 = vpop.f32.mrf.mxu0
      %v3421 = vadd.f32 %v3147, %v3420
      %3422 = vmatmul.f32.gmra.mxu0 %v352
      %v3423 = vpop.f32.mrf.mxu0
      %v3424 = vadd.f32 %v3148, %v3423
      %3425 = vmatmul.f32.gmra.mxu0 %v354
      %v3426 = vpop.f32.mrf.mxu0
      %v3427 = vadd.f32 %v3149, %v3426
      %3428 = vmatmul.f32.gmra.mxu0 %v356
      %v3429 = vpop.f32.mrf.mxu0
      %v3430 = vadd.f32 %v3150, %v3429
      %3431 = vmatmul.f32.gmra.mxu0 %v358
      %v3432 = vpop.f32.mrf.mxu0
      %v3433 = vadd.f32 %v3151, %v3432
      %3434 = vmatmul.f32.gmra.mxu0 %v360
      %v3435 = vpop.f32.mrf.mxu0
      %v3436 = vadd.f32 %v3152, %v3435
      %3437 = vmatmul.f32.gmra.mxu0 %v362
      %v3438 = vpop.f32.mrf.mxu0
      %v3439 = vadd.f32 %v3153, %v3438
      %3440 = vmatmul.f32.gmra.mxu0 %v364
      %v3441 = vpop.f32.mrf.mxu0
      %v3442 = vadd.f32 %v3154, %v3441
      %3443 = vmatmul.f32.gmra.mxu0 %v366
      %v3444 = vpop.f32.mrf.mxu0
      %v3445 = vadd.f32 %v3155, %v3444
      %3446 = vmatmul.f32.gmra.mxu0 %v368
      %v3447 = vpop.f32.mrf.mxu0
      %v3448 = vadd.f32 %v3156, %v3447
      %3449 = vmatmul.f32.gmra.mxu0 %v370
      %v3450 = vpop.f32.mrf.mxu0
      %v3451 = vadd.f32 %v3157, %v3450
      %3452 = vmatmul.f32.gmra.mxu0 %v372
      %v3453 = vpop.f32.mrf.mxu0
      %v3454 = vadd.f32 %v3158, %v3453
      %3455 = vmatmul.f32.gmra.mxu0 %v374
      %v3456 = vpop.f32.mrf.mxu0
      %v3457 = vadd.f32 %v3159, %v3456
      %3458 = vmatmul.f32.gmra.mxu0 %v376
      %v3459 = vpop.f32.mrf.mxu0
      %v3460 = vadd.f32 %v3160, %v3459
      %3461 = vmatmul.f32.gmra.mxu0 %v378
      %v3462 = vpop.f32.mrf.mxu0
      %v3463 = vadd.f32 %v3161, %v3462
      %3464 = vmatmul.f32.gmra.mxu0 %v380
      %v3465 = vpop.f32.mrf.mxu0
      %v3466 = vadd.f32 %v3162, %v3465
      %3467 = vmatmul.f32.gmra.mxu0 %v382
      %v3468 = vpop.f32.mrf.mxu0
      %v3469 = vadd.f32 %v3163, %v3468
      %3470 = vmatmul.f32.gmra.mxu0 %v384
      %v3471 = vpop.f32.mrf.mxu0
      %v3472 = vadd.f32 %v3164, %v3471
      %3473 = vdwg.mxu0
      %3474 = vmatpush.msra.mxu0 0.0
      %3475 = vmatpush.msra.mxu0 0.0
      %3476 = vmatpush.msra.mxu0 0.0
      %3477 = vmatpush.msra.mxu0 0.0
      %3478 = vmatpush.msra.mxu0 0.0
      %3479 = vmatpush.msra.mxu0 0.0
      %3480 = vmatpush.msra.mxu0 0.0
      %3481 = vmatpush.msra.mxu0 0.0
      %3482 = vmatpush.msra.mxu0 %v3335
      %3483 = vmatpush.msra.mxu0 %v3332
      %3484 = vmatpush.msra.mxu0 %v3329
      %3485 = vmatpush.msra.mxu0 %v3326
      %3486 = vmatpush.msra.mxu0 %v3323
      %3487 = vmatpush.msra.mxu0 %v3320
      %3488 = vmatpush.msra.mxu0 %v3317
      %3489 = vmatpush.msra.mxu0 %v3314
      %3490 = vmatmul.f32.gmra.mxu0 %v675
      %v3491 = vpop.f32.mrf.mxu0
      %v3492 = vadd.f32 %v3355, %v3491
      %3493 = vmatmul.f32.gmra.mxu0 %v678
      %v3494 = vpop.f32.mrf.mxu0
      %v3495 = vadd.f32 %v3358, %v3494
      %3496 = vmatmul.f32.gmra.mxu0 %v681
      %v3497 = vpop.f32.mrf.mxu0
      %v3498 = vadd.f32 %v3361, %v3497
      %3499 = vmatmul.f32.gmra.mxu0 %v684
      %v3500 = vpop.f32.mrf.mxu0
      %v3501 = vadd.f32 %v3364, %v3500
      %3502 = vmatmul.f32.gmra.mxu0 %v687
      %v3503 = vpop.f32.mrf.mxu0
      %v3504 = vadd.f32 %v3367, %v3503
      %3505 = vmatmul.f32.gmra.mxu0 %v690
      %v3506 = vpop.f32.mrf.mxu0
      %v3507 = vadd.f32 %v3370, %v3506
      %3508 = vmatmul.f32.gmra.mxu0 %v693
      %v3509 = vpop.f32.mrf.mxu0
      %v3510 = vadd.f32 %v3373, %v3509
      %3511 = vmatmul.f32.gmra.mxu0 %v696
      %v3512 = vpop.f32.mrf.mxu0
      %v3513 = vadd.f32 %v3376, %v3512
      %3514 = vmatmul.f32.gmra.mxu0 %v699
      %v3515 = vpop.f32.mrf.mxu0
      %v3516 = vadd.f32 %v3379, %v3515
      %3517 = vmatmul.f32.gmra.mxu0 %v702
      %v3518 = vpop.f32.mrf.mxu0
      %v3519 = vadd.f32 %v3382, %v3518
      %3520 = vmatmul.f32.gmra.mxu0 %v705
      %v3521 = vpop.f32.mrf.mxu0
      %v3522 = vadd.f32 %v3385, %v3521
      %3523 = vmatmul.f32.gmra.mxu0 %v708
      %v3524 = vpop.f32.mrf.mxu0
      %v3525 = vadd.f32 %v3388, %v3524
      %3526 = vmatmul.f32.gmra.mxu0 %v711
      %v3527 = vpop.f32.mrf.mxu0
      %v3528 = vadd.f32 %v3391, %v3527
      %3529 = vmatmul.f32.gmra.mxu0 %v714
      %v3530 = vpop.f32.mrf.mxu0
      %v3531 = vadd.f32 %v3394, %v3530
      %3532 = vmatmul.f32.gmra.mxu0 %v717
      %v3533 = vpop.f32.mrf.mxu0
      %v3534 = vadd.f32 %v3397, %v3533
      %3535 = vmatmul.f32.gmra.mxu0 %v720
      %v3536 = vpop.f32.mrf.mxu0
      %v3537 = vadd.f32 %v3400, %v3536
      %3538 = vmatmul.f32.gmra.mxu0 %v723
      %v3539 = vpop.f32.mrf.mxu0
      %v3540 = vadd.f32 %v3403, %v3539
      %3541 = vmatmul.f32.gmra.mxu0 %v726
      %v3542 = vpop.f32.mrf.mxu0
      %v3543 = vadd.f32 %v3406, %v3542
      %3544 = vmatmul.f32.gmra.mxu0 %v729
      %v3545 = vpop.f32.mrf.mxu0
      %v3546 = vadd.f32 %v3409, %v3545
      %3547 = vmatmul.f32.gmra.mxu0 %v732
      %v3548 = vpop.f32.mrf.mxu0
      %v3549 = vadd.f32 %v3412, %v3548
      %3550 = vmatmul.f32.gmra.mxu0 %v735
      %v3551 = vpop.f32.mrf.mxu0
      %v3552 = vadd.f32 %v3415, %v3551
      %3553 = vmatmul.f32.gmra.mxu0 %v738
      %v3554 = vpop.f32.mrf.mxu0
      %v3555 = vadd.f32 %v3418, %v3554
      %3556 = vmatmul.f32.gmra.mxu0 %v741
      %v3557 = vpop.f32.mrf.mxu0
      %v3558 = vadd.f32 %v3421, %v3557
      %3559 = vmatmul.f32.gmra.mxu0 %v744
      %v3560 = vpop.f32.mrf.mxu0
      %v3561 = vadd.f32 %v3424, %v3560
      %3562 = vmatmul.f32.gmra.mxu0 %v747
      %v3563 = vpop.f32.mrf.mxu0
      %v3564 = vadd.f32 %v3427, %v3563
      %3565 = vmatmul.f32.gmra.mxu0 %v750
      %v3566 = vpop.f32.mrf.mxu0
      %v3567 = vadd.f32 %v3430, %v3566
      %3568 = vmatmul.f32.gmra.mxu0 %v753
      %v3569 = vpop.f32.mrf.mxu0
      %v3570 = vadd.f32 %v3433, %v3569
      %3571 = vmatmul.f32.gmra.mxu0 %v756
      %v3572 = vpop.f32.mrf.mxu0
      %v3573 = vadd.f32 %v3436, %v3572
      %3574 = vmatmul.f32.gmra.mxu0 %v759
      %v3575 = vpop.f32.mrf.mxu0
      %v3576 = vadd.f32 %v3439, %v3575
      %3577 = vmatmul.f32.gmra.mxu0 %v762
      %v3578 = vpop.f32.mrf.mxu0
      %v3579 = vadd.f32 %v3442, %v3578
      %3580 = vmatmul.f32.gmra.mxu0 %v765
      %v3581 = vpop.f32.mrf.mxu0
      %v3582 = vadd.f32 %v3445, %v3581
      %3583 = vmatmul.f32.gmra.mxu0 %v768
      %v3584 = vpop.f32.mrf.mxu0
      %v3585 = vadd.f32 %v3448, %v3584
      %3586 = vmatmul.f32.gmra.mxu0 %v771
      %v3587 = vpop.f32.mrf.mxu0
      %v3588 = vadd.f32 %v3451, %v3587
      %3589 = vmatmul.f32.gmra.mxu0 %v774
      %v3590 = vpop.f32.mrf.mxu0
      %v3591 = vadd.f32 %v3454, %v3590
      %3592 = vmatmul.f32.gmra.mxu0 %v777
      %v3593 = vpop.f32.mrf.mxu0
      %v3594 = vadd.f32 %v3457, %v3593
      %3595 = vmatmul.f32.gmra.mxu0 %v780
      %v3596 = vpop.f32.mrf.mxu0
      %v3597 = vadd.f32 %v3460, %v3596
      %3598 = vmatmul.f32.gmra.mxu0 %v783
      %v3599 = vpop.f32.mrf.mxu0
      %v3600 = vadd.f32 %v3463, %v3599
      %3601 = vmatmul.f32.gmra.mxu0 %v786
      %v3602 = vpop.f32.mrf.mxu0
      %v3603 = vadd.f32 %v3466, %v3602
      %3604 = vmatmul.f32.gmra.mxu0 %v789
      %v3605 = vpop.f32.mrf.mxu0
      %v3606 = vadd.f32 %v3469, %v3605
      %3607 = vmatmul.f32.gmra.mxu0 %v792
      %v3608 = vpop.f32.mrf.mxu0
      %v3609 = vadd.f32 %v3472, %v3608
      %3610 = vdwg.mxu0
      %vm3611 = vcmp.ge.f32.partialorder %v3492, 0.0
      %vm3612 = vcmp.ge.f32.partialorder %v3495, 0.0
      %vm3613 = vcmp.ge.f32.partialorder %v3498, 0.0
      %vm3614 = vcmp.ge.f32.partialorder %v3501, 0.0
      %vm3615 = vcmp.ge.f32.partialorder %v3504, 0.0
      %vm3616 = vcmp.ge.f32.partialorder %v3507, 0.0
      %vm3617 = vcmp.ge.f32.partialorder %v3510, 0.0
      %vm3618 = vcmp.ge.f32.partialorder %v3513, 0.0
      %vm3619 = vcmp.ge.f32.partialorder %v3516, 0.0
      %vm3620 = vcmp.ge.f32.partialorder %v3519, 0.0
      %vm3621 = vcmp.ge.f32.partialorder %v3522, 0.0
      %vm3622 = vcmp.ge.f32.partialorder %v3525, 0.0
      %vm3623 = vcmp.ge.f32.partialorder %v3528, 0.0
      %vm3624 = vcmp.ge.f32.partialorder %v3531, 0.0
      %vm3625 = vcmp.ge.f32.partialorder %v3534, 0.0
      %vm3626 = vcmp.ge.f32.partialorder %v3537, 0.0
      %vm3627 = vcmp.ge.f32.partialorder %v3540, 0.0
      %vm3628 = vcmp.ge.f32.partialorder %v3543, 0.0
      %vm3629 = vcmp.ge.f32.partialorder %v3546, 0.0
      %vm3630 = vcmp.ge.f32.partialorder %v3549, 0.0
      %vm3631 = vcmp.ge.f32.partialorder %v3552, 0.0
      %vm3632 = vcmp.ge.f32.partialorder %v3555, 0.0
      %vm3633 = vcmp.ge.f32.partialorder %v3558, 0.0
      %vm3634 = vcmp.ge.f32.partialorder %v3561, 0.0
      %vm3635 = vcmp.ge.f32.partialorder %v3564, 0.0
      %vm3636 = vcmp.ge.f32.partialorder %v3567, 0.0
      %vm3637 = vcmp.ge.f32.partialorder %v3570, 0.0
      %vm3638 = vcmp.ge.f32.partialorder %v3573, 0.0
      %vm3639 = vcmp.ge.f32.partialorder %v3576, 0.0
      %vm3640 = vcmp.ge.f32.partialorder %v3579, 0.0
      %vm3641 = vcmp.ge.f32.partialorder %v3582, 0.0
      %vm3642 = vcmp.ge.f32.partialorder %v3585, 0.0
      %vm3643 = vcmp.ge.f32.partialorder %v3588, 0.0
      %vm3644 = vcmp.ge.f32.partialorder %v3591, 0.0
      %vm3645 = vcmp.ge.f32.partialorder %v3594, 0.0
      %vm3646 = vcmp.ge.f32.partialorder %v3597, 0.0
      %vm3647 = vcmp.ge.f32.partialorder %v3600, 0.0
      %vm3648 = vcmp.ge.f32.partialorder %v3603, 0.0
      %vm3649 = vcmp.ge.f32.partialorder %v3606, 0.0
      %vm3650 = vcmp.ge.f32.partialorder %v3609, 0.0
      %v3651 = vmul.f32 %v3492, 0.01
      %v3652 = vmul.f32 %v3495, 0.01
      %v3653 = vmul.f32 %v3498, 0.01
      %v3654 = vmul.f32 %v3501, 0.01
      %v3655 = vmul.f32 %v3504, 0.01
      %v3656 = vmul.f32 %v3507, 0.01
      %v3657 = vmul.f32 %v3510, 0.01
      %v3658 = vmul.f32 %v3513, 0.01
      %v3659 = vmul.f32 %v3516, 0.01
      %v3660 = vmul.f32 %v3519, 0.01
      %v3661 = vmul.f32 %v3522, 0.01
      %v3662 = vmul.f32 %v3525, 0.01
      %v3663 = vmul.f32 %v3528, 0.01
      %v3664 = vmul.f32 %v3531, 0.01
      %v3665 = vmul.f32 %v3534, 0.01
      %v3666 = vmul.f32 %v3537, 0.01
      %v3667 = vmul.f32 %v3540, 0.01
      %v3668 = vmul.f32 %v3543, 0.01
      %v3669 = vmul.f32 %v3546, 0.01
      %v3670 = vmul.f32 %v3549, 0.01
      %v3671 = vmul.f32 %v3552, 0.01
      %v3672 = vmul.f32 %v3555, 0.01
      %v3673 = vmul.f32 %v3558, 0.01
      %v3674 = vmul.f32 %v3561, 0.01
      %v3675 = vmul.f32 %v3564, 0.01
      %v3676 = vmul.f32 %v3567, 0.01
      %v3677 = vmul.f32 %v3570, 0.01
      %v3678 = vmul.f32 %v3573, 0.01
      %v3679 = vmul.f32 %v3576, 0.01
      %v3680 = vmul.f32 %v3579, 0.01
      %v3681 = vmul.f32 %v3582, 0.01
      %v3682 = vmul.f32 %v3585, 0.01
      %v3683 = vmul.f32 %v3588, 0.01
      %v3684 = vmul.f32 %v3591, 0.01
      %v3685 = vmul.f32 %v3594, 0.01
      %v3686 = vmul.f32 %v3597, 0.01
      %v3687 = vmul.f32 %v3600, 0.01
      %v3688 = vmul.f32 %v3603, 0.01
      %v3689 = vmul.f32 %v3606, 0.01
      %v3690 = vmul.f32 %v3609, 0.01
      %v3691 = vsel %vm3611, %v3492, %v3651
      %v3692 = vsel %vm3612, %v3495, %v3652
      %v3693 = vsel %vm3613, %v3498, %v3653
      %v3694 = vsel %vm3614, %v3501, %v3654
      %v3695 = vsel %vm3615, %v3504, %v3655
      %v3696 = vsel %vm3616, %v3507, %v3656
      %v3697 = vsel %vm3617, %v3510, %v3657
      %v3698 = vsel %vm3618, %v3513, %v3658
      %v3699 = vsel %vm3619, %v3516, %v3659
      %v3700 = vsel %vm3620, %v3519, %v3660
      %v3701 = vsel %vm3621, %v3522, %v3661
      %v3702 = vsel %vm3622, %v3525, %v3662
      %v3703 = vsel %vm3623, %v3528, %v3663
      %v3704 = vsel %vm3624, %v3531, %v3664
      %v3705 = vsel %vm3625, %v3534, %v3665
      %v3706 = vsel %vm3626, %v3537, %v3666
      %v3707 = vsel %vm3627, %v3540, %v3667
      %v3708 = vsel %vm3628, %v3543, %v3668
      %v3709 = vsel %vm3629, %v3546, %v3669
      %v3710 = vsel %vm3630, %v3549, %v3670
      %v3711 = vsel %vm3631, %v3552, %v3671
      %v3712 = vsel %vm3632, %v3555, %v3672
      %v3713 = vsel %vm3633, %v3558, %v3673
      %v3714 = vsel %vm3634, %v3561, %v3674
      %v3715 = vsel %vm3635, %v3564, %v3675
      %v3716 = vsel %vm3636, %v3567, %v3676
      %v3717 = vsel %vm3637, %v3570, %v3677
      %v3718 = vsel %vm3638, %v3573, %v3678
      %v3719 = vsel %vm3639, %v3576, %v3679
      %v3720 = vsel %vm3640, %v3579, %v3680
      %v3721 = vsel %vm3641, %v3582, %v3681
      %v3722 = vsel %vm3642, %v3585, %v3682
      %v3723 = vsel %vm3643, %v3588, %v3683
      %v3724 = vsel %vm3644, %v3591, %v3684
      %v3725 = vsel %vm3645, %v3594, %v3685
      %v3726 = vsel %vm3646, %v3597, %v3686
      %v3727 = vsel %vm3647, %v3600, %v3687
      %v3728 = vsel %vm3648, %v3603, %v3688
      %v3729 = vsel %vm3649, %v3606, %v3689
      %v3730 = vsel %vm3650, %v3609, %v3690
      %3731 = vmatpush.msra.mxu0 %v3706
      %3732 = vmatpush.msra.mxu0 %v3705
      %3733 = vmatpush.msra.mxu0 %v3704
      %3734 = vmatpush.msra.mxu0 %v3703
      %3735 = vmatpush.msra.mxu0 %v3702
      %3736 = vmatpush.msra.mxu0 %v3701
      %3737 = vmatpush.msra.mxu0 %v3700
      %3738 = vmatpush.msra.mxu0 %v3699
      %3739 = vmatpush.msra.mxu0 %v3698
      %3740 = vmatpush.msra.mxu0 %v3697
      %3741 = vmatpush.msra.mxu0 %v3696
      %3742 = vmatpush.msra.mxu0 %v3695
      %3743 = vmatpush.msra.mxu0 %v3694
      %3744 = vmatpush.msra.mxu0 %v3693
      %3745 = vmatpush.msra.mxu0 %v3692
      %3746 = vmatpush.msra.mxu0 %v3691
      %3747 = vmatmul.f32.gmra.mxu0 %v386
      %v3748 = vpop.f32.mrf.mxu0
      %v3749 = vadd.f32 0.0, %v3748
      %3750 = vmatmul.f32.gmra.mxu0 %v389
      %v3751 = vpop.f32.mrf.mxu0
      %v3752 = vadd.f32 0.0, %v3751
      %3753 = vmatmul.f32.gmra.mxu0 %v392
      %v3754 = vpop.f32.mrf.mxu0
      %v3755 = vadd.f32 0.0, %v3754
      %3756 = vmatmul.f32.gmra.mxu0 %v395
      %v3757 = vpop.f32.mrf.mxu0
      %v3758 = vadd.f32 0.0, %v3757
      %3759 = vmatmul.f32.gmra.mxu0 %v398
      %v3760 = vpop.f32.mrf.mxu0
      %v3761 = vadd.f32 0.0, %v3760
      %3762 = vmatmul.f32.gmra.mxu0 %v401
      %v3763 = vpop.f32.mrf.mxu0
      %v3764 = vadd.f32 0.0, %v3763
      %3765 = vmatmul.f32.gmra.mxu0 %v404
      %v3766 = vpop.f32.mrf.mxu0
      %v3767 = vadd.f32 0.0, %v3766
      %3768 = vmatmul.f32.gmra.mxu0 %v407
      %v3769 = vpop.f32.mrf.mxu0
      %v3770 = vadd.f32 0.0, %v3769
      %3771 = vmatmul.f32.gmra.mxu0 %v410
      %v3772 = vpop.f32.mrf.mxu0
      %v3773 = vadd.f32 0.0, %v3772
      %3774 = vmatmul.f32.gmra.mxu0 %v413
      %v3775 = vpop.f32.mrf.mxu0
      %v3776 = vadd.f32 0.0, %v3775
      %3777 = vmatmul.f32.gmra.mxu0 %v416
      %v3778 = vpop.f32.mrf.mxu0
      %v3779 = vadd.f32 0.0, %v3778
      %3780 = vmatmul.f32.gmra.mxu0 %v419
      %v3781 = vpop.f32.mrf.mxu0
      %v3782 = vadd.f32 0.0, %v3781
      %3783 = vmatmul.f32.gmra.mxu0 %v422
      %v3784 = vpop.f32.mrf.mxu0
      %v3785 = vadd.f32 0.0, %v3784
      %3786 = vmatmul.f32.gmra.mxu0 %v425
      %v3787 = vpop.f32.mrf.mxu0
      %v3788 = vadd.f32 0.0, %v3787
      %3789 = vmatmul.f32.gmra.mxu0 %v428
      %v3790 = vpop.f32.mrf.mxu0
      %v3791 = vadd.f32 0.0, %v3790
      %3792 = vmatmul.f32.gmra.mxu0 %v431
      %v3793 = vpop.f32.mrf.mxu0
      %v3794 = vadd.f32 0.0, %v3793
      %3795 = vmatmul.f32.gmra.mxu0 %v434
      %v3796 = vpop.f32.mrf.mxu0
      %v3797 = vadd.f32 0.0, %v3796
      %3798 = vmatmul.f32.gmra.mxu0 %v437
      %v3799 = vpop.f32.mrf.mxu0
      %v3800 = vadd.f32 0.0, %v3799
      %3801 = vmatmul.f32.gmra.mxu0 %v440
      %v3802 = vpop.f32.mrf.mxu0
      %v3803 = vadd.f32 0.0, %v3802
      %3804 = vmatmul.f32.gmra.mxu0 %v443
      %v3805 = vpop.f32.mrf.mxu0
      %v3806 = vadd.f32 0.0, %v3805
      %3807 = vmatmul.f32.gmra.mxu0 %v446
      %v3808 = vpop.f32.mrf.mxu0
      %v3809 = vadd.f32 0.0, %v3808
      %3810 = vmatmul.f32.gmra.mxu0 %v449
      %v3811 = vpop.f32.mrf.mxu0
      %v3812 = vadd.f32 0.0, %v3811
      %3813 = vmatmul.f32.gmra.mxu0 %v452
      %v3814 = vpop.f32.mrf.mxu0
      %v3815 = vadd.f32 0.0, %v3814
      %3816 = vmatmul.f32.gmra.mxu0 %v455
      %v3817 = vpop.f32.mrf.mxu0
      %v3818 = vadd.f32 0.0, %v3817
      %3819 = vdwg.mxu0
      %3820 = vmatpush.msra.mxu0 %v3722
      %3821 = vmatpush.msra.mxu0 %v3721
      %3822 = vmatpush.msra.mxu0 %v3720
      %3823 = vmatpush.msra.mxu0 %v3719
      %3824 = vmatpush.msra.mxu0 %v3718
      %3825 = vmatpush.msra.mxu0 %v3717
      %3826 = vmatpush.msra.mxu0 %v3716
      %3827 = vmatpush.msra.mxu0 %v3715
      %3828 = vmatpush.msra.mxu0 %v3714
      %3829 = vmatpush.msra.mxu0 %v3713
      %3830 = vmatpush.msra.mxu0 %v3712
      %3831 = vmatpush.msra.mxu0 %v3711
      %3832 = vmatpush.msra.mxu0 %v3710
      %3833 = vmatpush.msra.mxu0 %v3709
      %3834 = vmatpush.msra.mxu0 %v3708
      %3835 = vmatpush.msra.mxu0 %v3707
      %3836 = vmatmul.f32.gmra.mxu0 %v387
      %v3837 = vpop.f32.mrf.mxu0
      %v3838 = vadd.f32 %v3749, %v3837
      %3839 = vmatmul.f32.gmra.mxu0 %v390
      %v3840 = vpop.f32.mrf.mxu0
      %v3841 = vadd.f32 %v3752, %v3840
      %3842 = vmatmul.f32.gmra.mxu0 %v393
      %v3843 = vpop.f32.mrf.mxu0
      %v3844 = vadd.f32 %v3755, %v3843
      %3845 = vmatmul.f32.gmra.mxu0 %v396
      %v3846 = vpop.f32.mrf.mxu0
      %v3847 = vadd.f32 %v3758, %v3846
      %3848 = vmatmul.f32.gmra.mxu0 %v399
      %v3849 = vpop.f32.mrf.mxu0
      %v3850 = vadd.f32 %v3761, %v3849
      %3851 = vmatmul.f32.gmra.mxu0 %v402
      %v3852 = vpop.f32.mrf.mxu0
      %v3853 = vadd.f32 %v3764, %v3852
      %3854 = vmatmul.f32.gmra.mxu0 %v405
      %v3855 = vpop.f32.mrf.mxu0
      %v3856 = vadd.f32 %v3767, %v3855
      %3857 = vmatmul.f32.gmra.mxu0 %v408
      %v3858 = vpop.f32.mrf.mxu0
      %v3859 = vadd.f32 %v3770, %v3858
      %3860 = vmatmul.f32.gmra.mxu0 %v411
      %v3861 = vpop.f32.mrf.mxu0
      %v3862 = vadd.f32 %v3773, %v3861
      %3863 = vmatmul.f32.gmra.mxu0 %v414
      %v3864 = vpop.f32.mrf.mxu0
      %v3865 = vadd.f32 %v3776, %v3864
      %3866 = vmatmul.f32.gmra.mxu0 %v417
      %v3867 = vpop.f32.mrf.mxu0
      %v3868 = vadd.f32 %v3779, %v3867
      %3869 = vmatmul.f32.gmra.mxu0 %v420
      %v3870 = vpop.f32.mrf.mxu0
      %v3871 = vadd.f32 %v3782, %v3870
      %3872 = vmatmul.f32.gmra.mxu0 %v423
      %v3873 = vpop.f32.mrf.mxu0
      %v3874 = vadd.f32 %v3785, %v3873
      %3875 = vmatmul.f32.gmra.mxu0 %v426
      %v3876 = vpop.f32.mrf.mxu0
      %v3877 = vadd.f32 %v3788, %v3876
      %3878 = vmatmul.f32.gmra.mxu0 %v429
      %v3879 = vpop.f32.mrf.mxu0
      %v3880 = vadd.f32 %v3791, %v3879
      %3881 = vmatmul.f32.gmra.mxu0 %v432
      %v3882 = vpop.f32.mrf.mxu0
      %v3883 = vadd.f32 %v3794, %v3882
      %3884 = vmatmul.f32.gmra.mxu0 %v435
      %v3885 = vpop.f32.mrf.mxu0
      %v3886 = vadd.f32 %v3797, %v3885
      %3887 = vmatmul.f32.gmra.mxu0 %v438
      %v3888 = vpop.f32.mrf.mxu0
      %v3889 = vadd.f32 %v3800, %v3888
      %3890 = vmatmul.f32.gmra.mxu0 %v441
      %v3891 = vpop.f32.mrf.mxu0
      %v3892 = vadd.f32 %v3803, %v3891
      %3893 = vmatmul.f32.gmra.mxu0 %v444
      %v3894 = vpop.f32.mrf.mxu0
      %v3895 = vadd.f32 %v3806, %v3894
      %3896 = vmatmul.f32.gmra.mxu0 %v447
      %v3897 = vpop.f32.mrf.mxu0
      %v3898 = vadd.f32 %v3809, %v3897
      %3899 = vmatmul.f32.gmra.mxu0 %v450
      %v3900 = vpop.f32.mrf.mxu0
      %v3901 = vadd.f32 %v3812, %v3900
      %3902 = vmatmul.f32.gmra.mxu0 %v453
      %v3903 = vpop.f32.mrf.mxu0
      %v3904 = vadd.f32 %v3815, %v3903
      %3905 = vmatmul.f32.gmra.mxu0 %v456
      %v3906 = vpop.f32.mrf.mxu0
      %v3907 = vadd.f32 %v3818, %v3906
      %3908 = vdwg.mxu0
      %3909 = vmatpush.msra.mxu0 0.0
      %3910 = vmatpush.msra.mxu0 0.0
      %3911 = vmatpush.msra.mxu0 0.0
      %3912 = vmatpush.msra.mxu0 0.0
      %3913 = vmatpush.msra.mxu0 0.0
      %3914 = vmatpush.msra.mxu0 0.0
      %3915 = vmatpush.msra.mxu0 0.0
      %3916 = vmatpush.msra.mxu0 0.0
      %3917 = vmatpush.msra.mxu0 %v3730
      %3918 = vmatpush.msra.mxu0 %v3729
      %3919 = vmatpush.msra.mxu0 %v3728
      %3920 = vmatpush.msra.mxu0 %v3727
      %3921 = vmatpush.msra.mxu0 %v3726
      %3922 = vmatpush.msra.mxu0 %v3725
      %3923 = vmatpush.msra.mxu0 %v3724
      %3924 = vmatpush.msra.mxu0 %v3723
      %3925 = vmatmul.f32.gmra.mxu0 %v1189
      %v3926 = vpop.f32.mrf.mxu0
      %v3927 = vadd.f32 %v3838, %v3926
      %3928 = vmatmul.f32.gmra.mxu0 %v1192
      %v3929 = vpop.f32.mrf.mxu0
      %v3930 = vadd.f32 %v3841, %v3929
      %3931 = vmatmul.f32.gmra.mxu0 %v1195
      %v3932 = vpop.f32.mrf.mxu0
      %v3933 = vadd.f32 %v3844, %v3932
      %3934 = vmatmul.f32.gmra.mxu0 %v1198
      %v3935 = vpop.f32.mrf.mxu0
      %v3936 = vadd.f32 %v3847, %v3935
      %3937 = vmatmul.f32.gmra.mxu0 %v1201
      %v3938 = vpop.f32.mrf.mxu0
      %v3939 = vadd.f32 %v3850, %v3938
      %3940 = vmatmul.f32.gmra.mxu0 %v1204
      %v3941 = vpop.f32.mrf.mxu0
      %v3942 = vadd.f32 %v3853, %v3941
      %3943 = vmatmul.f32.gmra.mxu0 %v1207
      %v3944 = vpop.f32.mrf.mxu0
      %v3945 = vadd.f32 %v3856, %v3944
      %3946 = vmatmul.f32.gmra.mxu0 %v1210
      %v3947 = vpop.f32.mrf.mxu0
      %v3948 = vadd.f32 %v3859, %v3947
      %3949 = vmatmul.f32.gmra.mxu0 %v1213
      %v3950 = vpop.f32.mrf.mxu0
      %v3951 = vadd.f32 %v3862, %v3950
      %3952 = vmatmul.f32.gmra.mxu0 %v1216
      %v3953 = vpop.f32.mrf.mxu0
      %v3954 = vadd.f32 %v3865, %v3953
      %3955 = vmatmul.f32.gmra.mxu0 %v1219
      %v3956 = vpop.f32.mrf.mxu0
      %v3957 = vadd.f32 %v3868, %v3956
      %3958 = vmatmul.f32.gmra.mxu0 %v1222
      %v3959 = vpop.f32.mrf.mxu0
      %v3960 = vadd.f32 %v3871, %v3959
      %3961 = vmatmul.f32.gmra.mxu0 %v1225
      %v3962 = vpop.f32.mrf.mxu0
      %v3963 = vadd.f32 %v3874, %v3962
      %3964 = vmatmul.f32.gmra.mxu0 %v1228
      %v3965 = vpop.f32.mrf.mxu0
      %v3966 = vadd.f32 %v3877, %v3965
      %3967 = vmatmul.f32.gmra.mxu0 %v1231
      %v3968 = vpop.f32.mrf.mxu0
      %v3969 = vadd.f32 %v3880, %v3968
      %3970 = vmatmul.f32.gmra.mxu0 %v1234
      %v3971 = vpop.f32.mrf.mxu0
      %v3972 = vadd.f32 %v3883, %v3971
      %3973 = vmatmul.f32.gmra.mxu0 %v1237
      %v3974 = vpop.f32.mrf.mxu0
      %v3975 = vadd.f32 %v3886, %v3974
      %3976 = vmatmul.f32.gmra.mxu0 %v1240
      %v3977 = vpop.f32.mrf.mxu0
      %v3978 = vadd.f32 %v3889, %v3977
      %3979 = vmatmul.f32.gmra.mxu0 %v1243
      %v3980 = vpop.f32.mrf.mxu0
      %v3981 = vadd.f32 %v3892, %v3980
      %3982 = vmatmul.f32.gmra.mxu0 %v1246
      %v3983 = vpop.f32.mrf.mxu0
      %v3984 = vadd.f32 %v3895, %v3983
      %3985 = vmatmul.f32.gmra.mxu0 %v1249
      %v3986 = vpop.f32.mrf.mxu0
      %v3987 = vadd.f32 %v3898, %v3986
      %3988 = vmatmul.f32.gmra.mxu0 %v1252
      %v3989 = vpop.f32.mrf.mxu0
      %v3990 = vadd.f32 %v3901, %v3989
      %3991 = vmatmul.f32.gmra.mxu0 %v1255
      %v3992 = vpop.f32.mrf.mxu0
      %v3993 = vadd.f32 %v3904, %v3992
      %3994 = vmatmul.f32.gmra.mxu0 %v1258
      %v3995 = vpop.f32.mrf.mxu0
      %v3996 = vadd.f32 %v3907, %v3995
      %3997 = vdwg.mxu0
      %3998 = vst.msk [vmem:[#allocation2] sm:$0xff] %vm511, %v3095
      %3999 = vst.msk [vmem:[#allocation2 + $0x8] sm:$0xff] %vm511, %v3096
      %4000 = vst.msk [vmem:[#allocation2 + $0x10] sm:$0xff] %vm511, %v3097
      %4001 = vst.msk [vmem:[#allocation2 + $0x18] sm:$0xff] %vm511, %v3098
      %4002 = vst.msk [vmem:[#allocation2 + $0x20] sm:$0xff] %vm511, %v3099
      %4003 = vst.msk [vmem:[#allocation2 + $0x28] sm:$0xff] %vm511, %v3100
      %4004 = vst.msk [vmem:[#allocation2 + $0x30] sm:$0xff] %vm511, %v3101
      %4005 = vst.msk [vmem:[#allocation2 + $0x38] sm:$0xff] %vm511, %v3102
      %4006 = vst.msk [vmem:[#allocation2 + $0x40] sm:$0xff] %vm511, %v3103
      %4007 = vst.msk [vmem:[#allocation2 + $0x48] sm:$0xff] %vm511, %v3104
      %4008 = vst.msk [vmem:[#allocation2 + $0x50] sm:$0xff] %vm511, %v3105
      %4009 = vst.msk [vmem:[#allocation2 + $0x58] sm:$0xff] %vm511, %v3106
      %4010 = vst.msk [vmem:[#allocation2 + $0x60] sm:$0xff] %vm511, %v3107
      %4011 = vst.msk [vmem:[#allocation2 + $0x68] sm:$0xff] %vm511, %v3108
      %4012 = vst.msk [vmem:[#allocation2 + $0x70] sm:$0xff] %vm511, %v3109
      %4013 = vst.msk [vmem:[#allocation2 + $0x78] sm:$0xff] %vm511, %v3110
      %4014 = vst.msk [vmem:[#allocation2 + $0x80] sm:$0xff] %vm511, %v3111
      %4015 = vst.msk [vmem:[#allocation2 + $0x88] sm:$0xff] %vm511, %v3112
      %4016 = vst.msk [vmem:[#allocation2 + $0x90] sm:$0xff] %vm511, %v3113
      %4017 = vst.msk [vmem:[#allocation2 + $0x98] sm:$0xff] %vm511, %v3114
      %4018 = vst.msk [vmem:[#allocation2 + $0xa0] sm:$0xff] %vm511, %v3115
      %4019 = vst.msk [vmem:[#allocation2 + $0xa8] sm:$0xff] %vm511, %v3116
      %4020 = vst.msk [vmem:[#allocation2 + $0xb0] sm:$0xff] %vm511, %v3117
      %4021 = vst.msk [vmem:[#allocation2 + $0xb8] sm:$0xff] %vm511, %v3118
      %4046 = vrot.lane.b32.xlu0 %v3927, 32
      %v4047 = vpop.permute.xlu0 %4046
      %4048 = vrot.lane.b32.xlu0 %v3930, 32
      %v4049 = vpop.permute.xlu0 %4048
      %4050 = vrot.lane.b32.xlu0 %v3933, 32
      %v4051 = vpop.permute.xlu0 %4050
      %4052 = vrot.lane.b32.xlu0 %v3936, 32
      %v4053 = vpop.permute.xlu0 %4052
      %4054 = vrot.lane.b32.xlu0 %v3939, 32
      %v4055 = vpop.permute.xlu0 %4054
      %4056 = vrot.lane.b32.xlu0 %v3942, 32
      %v4057 = vpop.permute.xlu0 %4056
      %4058 = vrot.lane.b32.xlu0 %v3945, 32
      %v4059 = vpop.permute.xlu0 %4058
      %4060 = vrot.lane.b32.xlu0 %v3948, 32
      %v4061 = vpop.permute.xlu0 %4060
      %4062 = vrot.lane.b32.xlu0 %v3951, 32
      %v4063 = vpop.permute.xlu0 %4062
      %4064 = vrot.lane.b32.xlu0 %v3954, 32
      %v4065 = vpop.permute.xlu0 %4064
      %4066 = vrot.lane.b32.xlu0 %v3957, 32
      %v4067 = vpop.permute.xlu0 %4066
      %4068 = vrot.lane.b32.xlu0 %v3960, 32
      %v4069 = vpop.permute.xlu0 %4068
      %4070 = vrot.lane.b32.xlu0 %v3963, 32
      %v4071 = vpop.permute.xlu0 %4070
      %4072 = vrot.lane.b32.xlu0 %v3966, 32
      %v4073 = vpop.permute.xlu0 %4072
      %4074 = vrot.lane.b32.xlu0 %v3969, 32
      %v4075 = vpop.permute.xlu0 %4074
      %4076 = vrot.lane.b32.xlu0 %v3972, 32
      %v4077 = vpop.permute.xlu0 %4076
      %4078 = vrot.lane.b32.xlu0 %v3975, 32
      %v4079 = vpop.permute.xlu0 %4078
      %4080 = vrot.lane.b32.xlu0 %v3978, 32
      %v4081 = vpop.permute.xlu0 %4080
      %4082 = vrot.lane.b32.xlu0 %v3981, 32
      %v4083 = vpop.permute.xlu0 %4082
      %4084 = vrot.lane.b32.xlu0 %v3984, 32
      %v4085 = vpop.permute.xlu0 %4084
      %4086 = vrot.lane.b32.xlu0 %v3987, 32
      %v4087 = vpop.permute.xlu0 %4086
      %4088 = vrot.lane.b32.xlu0 %v3990, 32
      %v4089 = vpop.permute.xlu0 %4088
      %4090 = vrot.lane.b32.xlu0 %v3993, 32
      %v4091 = vpop.permute.xlu0 %4090
      %4092 = vrot.lane.b32.xlu0 %v3996, 32
      %v4093 = vpop.permute.xlu0 %4092
      %4118 = vst.msk [vmem:[#allocation2] sm:$0xff] %vm1647, %v4047
      %4119 = vst.msk [vmem:[#allocation2 + $0x8] sm:$0xff] %vm1647, %v4049
      %4120 = vst.msk [vmem:[#allocation2 + $0x10] sm:$0xff] %vm1647, %v4051
      %4121 = vst.msk [vmem:[#allocation2 + $0x18] sm:$0xff] %vm1647, %v4053
      %4122 = vst.msk [vmem:[#allocation2 + $0x20] sm:$0xff] %vm1647, %v4055
      %4123 = vst.msk [vmem:[#allocation2 + $0x28] sm:$0xff] %vm1647, %v4057
      %4124 = vst.msk [vmem:[#allocation2 + $0x30] sm:$0xff] %vm1647, %v4059
      %4125 = vst.msk [vmem:[#allocation2 + $0x38] sm:$0xff] %vm1647, %v4061
      %4126 = vst.msk [vmem:[#allocation2 + $0x40] sm:$0xff] %vm1647, %v4063
      %4127 = vst.msk [vmem:[#allocation2 + $0x48] sm:$0xff] %vm1647, %v4065
      %4128 = vst.msk [vmem:[#allocation2 + $0x50] sm:$0xff] %vm1647, %v4067
      %4129 = vst.msk [vmem:[#allocation2 + $0x58] sm:$0xff] %vm1647, %v4069
      %4130 = vst.msk [vmem:[#allocation2 + $0x60] sm:$0xff] %vm1647, %v4071
      %4131 = vst.msk [vmem:[#allocation2 + $0x68] sm:$0xff] %vm1647, %v4073
      %4132 = vst.msk [vmem:[#allocation2 + $0x70] sm:$0xff] %vm1647, %v4075
      %4133 = vst.msk [vmem:[#allocation2 + $0x78] sm:$0xff] %vm1647, %v4077
      %4134 = vst.msk [vmem:[#allocation2 + $0x80] sm:$0xff] %vm1647, %v4079
      %4135 = vst.msk [vmem:[#allocation2 + $0x88] sm:$0xff] %vm1647, %v4081
      %4136 = vst.msk [vmem:[#allocation2 + $0x90] sm:$0xff] %vm1647, %v4083
      %4137 = vst.msk [vmem:[#allocation2 + $0x98] sm:$0xff] %vm1647, %v4085
      %4138 = vst.msk [vmem:[#allocation2 + $0xa0] sm:$0xff] %vm1647, %v4087
      %4139 = vst.msk [vmem:[#allocation2 + $0xa8] sm:$0xff] %vm1647, %v4089
      %4140 = vst.msk [vmem:[#allocation2 + $0xb0] sm:$0xff] %vm1647, %v4091
      %4141 = vst.msk [vmem:[#allocation2 + $0xb8] sm:$0xff] %vm1647, %v4093
      %v4142 = vld [vmem:[#allocation2] sm:$0xff]
      %v4143 = vld [vmem:[#allocation2 + $0x8] sm:$0xff]
      %v4144 = vld [vmem:[#allocation2 + $0x10] sm:$0xff]
      %v4145 = vld [vmem:[#allocation2 + $0x18] sm:$0xff]
      %v4146 = vld [vmem:[#allocation2 + $0x20] sm:$0xff]
      %v4147 = vld [vmem:[#allocation2 + $0x28] sm:$0xff]
      %v4148 = vld [vmem:[#allocation2 + $0x30] sm:$0xff]
      %v4149 = vld [vmem:[#allocation2 + $0x38] sm:$0xff]
      %v4150 = vld [vmem:[#allocation2 + $0x40] sm:$0xff]
      %v4151 = vld [vmem:[#allocation2 + $0x48] sm:$0xff]
      %v4152 = vld [vmem:[#allocation2 + $0x50] sm:$0xff]
      %v4153 = vld [vmem:[#allocation2 + $0x58] sm:$0xff]
      %v4154 = vld [vmem:[#allocation2 + $0x60] sm:$0xff]
      %v4155 = vld [vmem:[#allocation2 + $0x68] sm:$0xff]
      %v4156 = vld [vmem:[#allocation2 + $0x70] sm:$0xff]
      %v4157 = vld [vmem:[#allocation2 + $0x78] sm:$0xff]
      %v4158 = vld [vmem:[#allocation2 + $0x80] sm:$0xff]
      %v4159 = vld [vmem:[#allocation2 + $0x88] sm:$0xff]
      %v4160 = vld [vmem:[#allocation2 + $0x90] sm:$0xff]
      %v4161 = vld [vmem:[#allocation2 + $0x98] sm:$0xff]
      %v4162 = vld [vmem:[#allocation2 + $0xa0] sm:$0xff]
      %v4163 = vld [vmem:[#allocation2 + $0xa8] sm:$0xff]
      %v4164 = vld [vmem:[#allocation2 + $0xb0] sm:$0xff]
      %v4165 = vld [vmem:[#allocation2 + $0xb8] sm:$0xff]
      %v4167 = vperm.slane %v3175, 0
      %v4170 = vsel %vm673, %v4142, 0
      %v4173 = vsel %vm673, %v4143, 0
      %v4176 = vsel %vm673, %v4144, 0
      %v4179 = vsel %vm673, %v4145, 0
      %v4182 = vsel %vm673, %v4146, 0
      %v4185 = vsel %vm673, %v4147, 0
      %v4188 = vsel %vm673, %v4148, 0
      %v4191 = vsel %vm673, %v4149, 0
      %v4194 = vsel %vm673, %v4150, 0
      %v4197 = vsel %vm673, %v4151, 0
      %v4200 = vsel %vm673, %v4152, 0
      %v4203 = vsel %vm673, %v4153, 0
      %v4206 = vsel %vm673, %v4154, 0
      %v4209 = vsel %vm673, %v4155, 0
      %v4212 = vsel %vm673, %v4156, 0
      %v4215 = vsel %vm673, %v4157, 0
      %v4218 = vsel %vm673, %v4158, 0
      %v4221 = vsel %vm673, %v4159, 0
      %v4224 = vsel %vm673, %v4160, 0
      %v4227 = vsel %vm673, %v4161, 0
      %v4230 = vsel %vm673, %v4162, 0
      %v4233 = vsel %vm673, %v4163, 0
      %v4236 = vsel %vm673, %v4164, 0
      %v4239 = vsel %vm673, %v4165, 0
      %4241 = vmatpush.msra.mxu0 0.0
      %4242 = vmatpush.msra.mxu0 0.0
      %4243 = vmatpush.msra.mxu0 0.0
      %4244 = vmatpush.msra.mxu0 0.0
      %4245 = vmatpush.msra.mxu0 0.0
      %4246 = vmatpush.msra.mxu0 0.0
      %4247 = vmatpush.msra.mxu0 0.0
      %4248 = vmatpush.msra.mxu0 0.0
      %4249 = vmatpush.msra.mxu0 %v3173
      %4250 = vmatpush.msra.mxu0 %v3172
      %4251 = vmatpush.msra.mxu0 %v3171
      %4252 = vmatpush.msra.mxu0 %v3170
      %4253 = vmatpush.msra.mxu0 %v3169
      %4254 = vmatpush.msra.mxu0 %v3168
      %4255 = vmatpush.msra.mxu0 %v3167
      %4256 = vmatpush.msra.mxu0 %v3166
      %4257 = vmatmul.f32.gmra.mxu0 %v4170
      %v4258 = vpop.f32.mrf.mxu0
      %v4259 = vadd.f32 %v4167, %v4258
      %4260 = vmatmul.f32.gmra.mxu0 %v4173
      %v4261 = vpop.f32.mrf.mxu0
      %v4262 = vadd.f32 %v4167, %v4261
      %4263 = vmatmul.f32.gmra.mxu0 %v4176
      %v4264 = vpop.f32.mrf.mxu0
      %v4265 = vadd.f32 %v4167, %v4264
      %4266 = vmatmul.f32.gmra.mxu0 %v4179
      %v4267 = vpop.f32.mrf.mxu0
      %v4268 = vadd.f32 %v4167, %v4267
      %4269 = vmatmul.f32.gmra.mxu0 %v4182
      %v4270 = vpop.f32.mrf.mxu0
      %v4271 = vadd.f32 %v4167, %v4270
      %4272 = vmatmul.f32.gmra.mxu0 %v4185
      %v4273 = vpop.f32.mrf.mxu0
      %v4274 = vadd.f32 %v4167, %v4273
      %4275 = vmatmul.f32.gmra.mxu0 %v4188
      %v4276 = vpop.f32.mrf.mxu0
      %v4277 = vadd.f32 %v4167, %v4276
      %4278 = vmatmul.f32.gmra.mxu0 %v4191
      %v4279 = vpop.f32.mrf.mxu0
      %v4280 = vadd.f32 %v4167, %v4279
      %4281 = vmatmul.f32.gmra.mxu0 %v4194
      %v4282 = vpop.f32.mrf.mxu0
      %v4283 = vadd.f32 %v4167, %v4282
      %4284 = vmatmul.f32.gmra.mxu0 %v4197
      %v4285 = vpop.f32.mrf.mxu0
      %v4286 = vadd.f32 %v4167, %v4285
      %4287 = vmatmul.f32.gmra.mxu0 %v4200
      %v4288 = vpop.f32.mrf.mxu0
      %v4289 = vadd.f32 %v4167, %v4288
      %4290 = vmatmul.f32.gmra.mxu0 %v4203
      %v4291 = vpop.f32.mrf.mxu0
      %v4292 = vadd.f32 %v4167, %v4291
      %4293 = vmatmul.f32.gmra.mxu0 %v4206
      %v4294 = vpop.f32.mrf.mxu0
      %v4295 = vadd.f32 %v4167, %v4294
      %4296 = vmatmul.f32.gmra.mxu0 %v4209
      %v4297 = vpop.f32.mrf.mxu0
      %v4298 = vadd.f32 %v4167, %v4297
      %4299 = vmatmul.f32.gmra.mxu0 %v4212
      %v4300 = vpop.f32.mrf.mxu0
      %v4301 = vadd.f32 %v4167, %v4300
      %4302 = vmatmul.f32.gmra.mxu0 %v4215
      %v4303 = vpop.f32.mrf.mxu0
      %v4304 = vadd.f32 %v4167, %v4303
      %4305 = vmatmul.f32.gmra.mxu0 %v4218
      %v4306 = vpop.f32.mrf.mxu0
      %v4307 = vadd.f32 %v4167, %v4306
      %4308 = vmatmul.f32.gmra.mxu0 %v4221
      %v4309 = vpop.f32.mrf.mxu0
      %v4310 = vadd.f32 %v4167, %v4309
      %4311 = vmatmul.f32.gmra.mxu0 %v4224
      %v4312 = vpop.f32.mrf.mxu0
      %v4313 = vadd.f32 %v4167, %v4312
      %4314 = vmatmul.f32.gmra.mxu0 %v4227
      %v4315 = vpop.f32.mrf.mxu0
      %v4316 = vadd.f32 %v4167, %v4315
      %4317 = vmatmul.f32.gmra.mxu0 %v4230
      %v4318 = vpop.f32.mrf.mxu0
      %v4319 = vadd.f32 %v4167, %v4318
      %4320 = vmatmul.f32.gmra.mxu0 %v4233
      %v4321 = vpop.f32.mrf.mxu0
      %v4322 = vadd.f32 %v4167, %v4321
      %4323 = vmatmul.f32.gmra.mxu0 %v4236
      %v4324 = vpop.f32.mrf.mxu0
      %v4325 = vadd.f32 %v4167, %v4324
      %4326 = vmatmul.f32.gmra.mxu0 %v4239
      %v4327 = vpop.f32.mrf.mxu0
      %v4328 = vadd.f32 %v4167, %v4327
      %4329 = vdwg.mxu0
      %v4330 = vmax.f32 %v4259, 0.0
      %v4331 = vmax.f32 %v4262, 0.0
      %v4332 = vmax.f32 %v4265, 0.0
      %v4333 = vmax.f32 %v4268, 0.0
      %v4334 = vmax.f32 %v4271, 0.0
      %v4335 = vmax.f32 %v4274, 0.0
      %v4336 = vmax.f32 %v4277, 0.0
      %v4337 = vmax.f32 %v4280, 0.0
      %v4338 = vmax.f32 %v4283, 0.0
      %v4339 = vmax.f32 %v4286, 0.0
      %v4340 = vmax.f32 %v4289, 0.0
      %v4341 = vmax.f32 %v4292, 0.0
      %v4342 = vmax.f32 %v4295, 0.0
      %v4343 = vmax.f32 %v4298, 0.0
      %v4344 = vmax.f32 %v4301, 0.0
      %v4345 = vmax.f32 %v4304, 0.0
      %v4346 = vmax.f32 %v4307, 0.0
      %v4347 = vmax.f32 %v4310, 0.0
      %v4348 = vmax.f32 %v4313, 0.0
      %v4349 = vmax.f32 %v4316, 0.0
      %v4350 = vmax.f32 %v4319, 0.0
      %v4351 = vmax.f32 %v4322, 0.0
      %v4352 = vmax.f32 %v4325, 0.0
      %v4353 = vmax.f32 %v4328, 0.0
      %s4354 = scalar_lea.vmem %s3, 96
      %v4355 = vld [vmem:[%s4354] sm:$0xff]
      %v4356 = vld [vmem:[%s4354 + $0x8] sm:$0xff]
      %v4357 = vld [vmem:[%s4354 + $0x10] sm:$0xff]
      %v4358 = vld [vmem:[%s4354 + $0x18] sm:$0xff]
      %s4359 = scalar_lea.vmem %s4, 960
      %v4360 = vld [vmem:[%s4359] sm:$0xff]
      %v4361 = vld [vmem:[%s4359 + $0x8] sm:$0xff]
      %v4362 = vld [vmem:[%s4359 + $0x10] sm:$0xff]
      %v4363 = vld [vmem:[%s4359 + $0x18] sm:$0xff]
      %v4364 = vld [vmem:[%s4359 + $0x20] sm:$0xff]
      %v4365 = vld [vmem:[%s4359 + $0x28] sm:$0xff]
      %v4366 = vld [vmem:[%s4359 + $0x30] sm:$0xff]
      %v4367 = vld [vmem:[%s4359 + $0x38] sm:$0xff]
      %v4368 = vld [vmem:[%s4359 + $0x40] sm:$0xff]
      %v4369 = vld [vmem:[%s4359 + $0x48] sm:$0xff]
      %v4370 = vld [vmem:[%s4359 + $0x50] sm:$0xff]
      %v4371 = vld [vmem:[%s4359 + $0x58] sm:$0xff]
      %v4372 = vld [vmem:[%s4359 + $0x60] sm:$0xff]
      %v4373 = vld [vmem:[%s4359 + $0x68] sm:$0xff]
      %v4374 = vld [vmem:[%s4359 + $0x70] sm:$0xff]
      %v4375 = vld [vmem:[%s4359 + $0x78] sm:$0xff]
      %v4376 = vld [vmem:[%s4359 + $0x80] sm:$0xff]
      %v4377 = vld [vmem:[%s4359 + $0x88] sm:$0xff]
      %v4378 = vld [vmem:[%s4359 + $0x90] sm:$0xff]
      %v4379 = vld [vmem:[%s4359 + $0x98] sm:$0xff]
      %v4380 = vld [vmem:[%s4359 + $0xa0] sm:$0xff]
      %v4381 = vld [vmem:[%s4359 + $0xa8] sm:$0xff]
      %v4382 = vld [vmem:[%s4359 + $0xb0] sm:$0xff]
      %v4383 = vld [vmem:[%s4359 + $0xb8] sm:$0xff]
      %v4384 = vld [vmem:[%s4359 + $0xc0] sm:$0xff]
      %v4385 = vld [vmem:[%s4359 + $0xc8] sm:$0xff]
      %v4386 = vld [vmem:[%s4359 + $0xd0] sm:$0xff]
      %v4387 = vld [vmem:[%s4359 + $0xd8] sm:$0xff]
      %v4388 = vld [vmem:[%s4359 + $0xe0] sm:$0xff]
      %v4389 = vld [vmem:[%s4359 + $0xe8] sm:$0xff]
      %v4390 = vld [vmem:[%s4359 + $0xf0] sm:$0xff]
      %v4391 = vld [vmem:[%s4359 + $0xf8] sm:$0xff]
      %v4392 = vld [vmem:[%s4359 + $0x100] sm:$0xff]
      %v4393 = vld [vmem:[%s4359 + $0x108] sm:$0xff]
      %v4394 = vld [vmem:[%s4359 + $0x110] sm:$0xff]
      %v4395 = vld [vmem:[%s4359 + $0x118] sm:$0xff]
      %v4396 = vld [vmem:[%s4359 + $0x120] sm:$0xff]
      %v4397 = vld [vmem:[%s4359 + $0x128] sm:$0xff]
      %v4398 = vld [vmem:[%s4359 + $0x130] sm:$0xff]
      %v4399 = vld [vmem:[%s4359 + $0x138] sm:$0xff]
      %s4400 = scalar_lea.vmem %s5, 192
      %v4401 = vld [vmem:[%s4400] sm:$0xff]
      %v4402 = vld [vmem:[%s4400 + $0x8] sm:$0xff]
      %v4403 = vld [vmem:[%s4400 + $0x10] sm:$0xff]
      %v4404 = vld [vmem:[%s4400 + $0x18] sm:$0xff]
      %v4405 = vld [vmem:[%s4400 + $0x20] sm:$0xff]
      %v4406 = vld [vmem:[%s4400 + $0x28] sm:$0xff]
      %v4407 = vld [vmem:[%s4400 + $0x30] sm:$0xff]
      %v4408 = vld [vmem:[%s4400 + $0x38] sm:$0xff]
      %s4409 = scalar_lea.vmem %s6, 3
      %v4410 = vld [vmem:[%s4409] sm:$0x1]
      %v4412 = vsel %vm511, %v4330, 0
      %v4415 = vsel %vm511, %v4331, 0
      %v4418 = vsel %vm511, %v4332, 0
      %v4421 = vsel %vm511, %v4333, 0
      %v4424 = vsel %vm511, %v4334, 0
      %v4427 = vsel %vm511, %v4335, 0
      %v4430 = vsel %vm511, %v4336, 0
      %v4433 = vsel %vm511, %v4337, 0
      %v4436 = vsel %vm511, %v4338, 0
      %v4439 = vsel %vm511, %v4339, 0
      %v4442 = vsel %vm511, %v4340, 0
      %v4445 = vsel %vm511, %v4341, 0
      %v4448 = vsel %vm511, %v4342, 0
      %v4451 = vsel %vm511, %v4343, 0
      %v4454 = vsel %vm511, %v4344, 0
      %v4457 = vsel %vm511, %v4345, 0
      %v4460 = vsel %vm511, %v4346, 0
      %v4463 = vsel %vm511, %v4347, 0
      %v4466 = vsel %vm511, %v4348, 0
      %v4469 = vsel %vm511, %v4349, 0
      %v4472 = vsel %vm511, %v4350, 0
      %v4475 = vsel %vm511, %v4351, 0
      %v4478 = vsel %vm511, %v4352, 0
      %v4481 = vsel %vm511, %v4353, 0
      %4483 = vmatpush.msra.mxu0 0.0
      %4484 = vmatpush.msra.mxu0 0.0
      %4485 = vmatpush.msra.mxu0 0.0
      %4486 = vmatpush.msra.mxu0 0.0
      %4487 = vmatpush.msra.mxu0 0.0
      %4488 = vmatpush.msra.mxu0 0.0
      %4489 = vmatpush.msra.mxu0 0.0
      %4490 = vmatpush.msra.mxu0 0.0
      %4491 = vmatpush.msra.mxu0 0.0
      %4492 = vmatpush.msra.mxu0 0.0
      %4493 = vmatpush.msra.mxu0 0.0
      %4494 = vmatpush.msra.mxu0 0.0
      %4495 = vmatpush.msra.mxu0 %v4358
      %4496 = vmatpush.msra.mxu0 %v4357
      %4497 = vmatpush.msra.mxu0 %v4356
      %4498 = vmatpush.msra.mxu0 %v4355
      %4499 = vmatmul.f32.gmra.mxu0 %v4412
      %v4500 = vpop.f32.mrf.mxu0
      %v4501 = vadd.f32 0.0, %v4500
      %4502 = vmatmul.f32.gmra.mxu0 %v4415
      %v4503 = vpop.f32.mrf.mxu0
      %v4504 = vadd.f32 0.0, %v4503
      %4505 = vmatmul.f32.gmra.mxu0 %v4418
      %v4506 = vpop.f32.mrf.mxu0
      %v4507 = vadd.f32 0.0, %v4506
      %4508 = vmatmul.f32.gmra.mxu0 %v4421
      %v4509 = vpop.f32.mrf.mxu0
      %v4510 = vadd.f32 0.0, %v4509
      %4511 = vmatmul.f32.gmra.mxu0 %v4424
      %v4512 = vpop.f32.mrf.mxu0
      %v4513 = vadd.f32 0.0, %v4512
      %4514 = vmatmul.f32.gmra.mxu0 %v4427
      %v4515 = vpop.f32.mrf.mxu0
      %v4516 = vadd.f32 0.0, %v4515
      %4517 = vmatmul.f32.gmra.mxu0 %v4430
      %v4518 = vpop.f32.mrf.mxu0
      %v4519 = vadd.f32 0.0, %v4518
      %4520 = vmatmul.f32.gmra.mxu0 %v4433
      %v4521 = vpop.f32.mrf.mxu0
      %v4522 = vadd.f32 0.0, %v4521
      %4523 = vmatmul.f32.gmra.mxu0 %v4436
      %v4524 = vpop.f32.mrf.mxu0
      %v4525 = vadd.f32 0.0, %v4524
      %4526 = vmatmul.f32.gmra.mxu0 %v4439
      %v4527 = vpop.f32.mrf.mxu0
      %v4528 = vadd.f32 0.0, %v4527
      %4529 = vmatmul.f32.gmra.mxu0 %v4442
      %v4530 = vpop.f32.mrf.mxu0
      %v4531 = vadd.f32 0.0, %v4530
      %4532 = vmatmul.f32.gmra.mxu0 %v4445
      %v4533 = vpop.f32.mrf.mxu0
      %v4534 = vadd.f32 0.0, %v4533
      %4535 = vmatmul.f32.gmra.mxu0 %v4448
      %v4536 = vpop.f32.mrf.mxu0
      %v4537 = vadd.f32 0.0, %v4536
      %4538 = vmatmul.f32.gmra.mxu0 %v4451
      %v4539 = vpop.f32.mrf.mxu0
      %v4540 = vadd.f32 0.0, %v4539
      %4541 = vmatmul.f32.gmra.mxu0 %v4454
      %v4542 = vpop.f32.mrf.mxu0
      %v4543 = vadd.f32 0.0, %v4542
      %4544 = vmatmul.f32.gmra.mxu0 %v4457
      %v4545 = vpop.f32.mrf.mxu0
      %v4546 = vadd.f32 0.0, %v4545
      %4547 = vmatmul.f32.gmra.mxu0 %v4460
      %v4548 = vpop.f32.mrf.mxu0
      %v4549 = vadd.f32 0.0, %v4548
      %4550 = vmatmul.f32.gmra.mxu0 %v4463
      %v4551 = vpop.f32.mrf.mxu0
      %v4552 = vadd.f32 0.0, %v4551
      %4553 = vmatmul.f32.gmra.mxu0 %v4466
      %v4554 = vpop.f32.mrf.mxu0
      %v4555 = vadd.f32 0.0, %v4554
      %4556 = vmatmul.f32.gmra.mxu0 %v4469
      %v4557 = vpop.f32.mrf.mxu0
      %v4558 = vadd.f32 0.0, %v4557
      %4559 = vmatmul.f32.gmra.mxu0 %v4472
      %v4560 = vpop.f32.mrf.mxu0
      %v4561 = vadd.f32 0.0, %v4560
      %4562 = vmatmul.f32.gmra.mxu0 %v4475
      %v4563 = vpop.f32.mrf.mxu0
      %v4564 = vadd.f32 0.0, %v4563
      %4565 = vmatmul.f32.gmra.mxu0 %v4478
      %v4566 = vpop.f32.mrf.mxu0
      %v4567 = vadd.f32 0.0, %v4566
      %4568 = vmatmul.f32.gmra.mxu0 %v4481
      %v4569 = vpop.f32.mrf.mxu0
      %v4570 = vadd.f32 0.0, %v4569
      %4571 = vdwg.mxu0
      %4572 = vmatpush.msra.mxu0 %v4546
      %4573 = vmatpush.msra.mxu0 %v4543
      %4574 = vmatpush.msra.mxu0 %v4540
      %4575 = vmatpush.msra.mxu0 %v4537
      %4576 = vmatpush.msra.mxu0 %v4534
      %4577 = vmatpush.msra.mxu0 %v4531
      %4578 = vmatpush.msra.mxu0 %v4528
      %4579 = vmatpush.msra.mxu0 %v4525
      %4580 = vmatpush.msra.mxu0 %v4522
      %4581 = vmatpush.msra.mxu0 %v4519
      %4582 = vmatpush.msra.mxu0 %v4516
      %4583 = vmatpush.msra.mxu0 %v4513
      %4584 = vmatpush.msra.mxu0 %v4510
      %4585 = vmatpush.msra.mxu0 %v4507
      %4586 = vmatpush.msra.mxu0 %v4504
      %4587 = vmatpush.msra.mxu0 %v4501
      %4588 = vmatmul.f32.gmra.mxu0 %v306
      %v4589 = vpop.f32.mrf.mxu0
      %v4590 = vadd.f32 %v4360, %v4589
      %4591 = vmatmul.f32.gmra.mxu0 %v308
      %v4592 = vpop.f32.mrf.mxu0
      %v4593 = vadd.f32 %v4361, %v4592
      %4594 = vmatmul.f32.gmra.mxu0 %v310
      %v4595 = vpop.f32.mrf.mxu0
      %v4596 = vadd.f32 %v4362, %v4595
      %4597 = vmatmul.f32.gmra.mxu0 %v312
      %v4598 = vpop.f32.mrf.mxu0
      %v4599 = vadd.f32 %v4363, %v4598
      %4600 = vmatmul.f32.gmra.mxu0 %v314
      %v4601 = vpop.f32.mrf.mxu0
      %v4602 = vadd.f32 %v4364, %v4601
      %4603 = vmatmul.f32.gmra.mxu0 %v316
      %v4604 = vpop.f32.mrf.mxu0
      %v4605 = vadd.f32 %v4365, %v4604
      %4606 = vmatmul.f32.gmra.mxu0 %v318
      %v4607 = vpop.f32.mrf.mxu0
      %v4608 = vadd.f32 %v4366, %v4607
      %4609 = vmatmul.f32.gmra.mxu0 %v320
      %v4610 = vpop.f32.mrf.mxu0
      %v4611 = vadd.f32 %v4367, %v4610
      %4612 = vmatmul.f32.gmra.mxu0 %v322
      %v4613 = vpop.f32.mrf.mxu0
      %v4614 = vadd.f32 %v4368, %v4613
      %4615 = vmatmul.f32.gmra.mxu0 %v324
      %v4616 = vpop.f32.mrf.mxu0
      %v4617 = vadd.f32 %v4369, %v4616
      %4618 = vmatmul.f32.gmra.mxu0 %v326
      %v4619 = vpop.f32.mrf.mxu0
      %v4620 = vadd.f32 %v4370, %v4619
      %4621 = vmatmul.f32.gmra.mxu0 %v328
      %v4622 = vpop.f32.mrf.mxu0
      %v4623 = vadd.f32 %v4371, %v4622
      %4624 = vmatmul.f32.gmra.mxu0 %v330
      %v4625 = vpop.f32.mrf.mxu0
      %v4626 = vadd.f32 %v4372, %v4625
      %4627 = vmatmul.f32.gmra.mxu0 %v332
      %v4628 = vpop.f32.mrf.mxu0
      %v4629 = vadd.f32 %v4373, %v4628
      %4630 = vmatmul.f32.gmra.mxu0 %v334
      %v4631 = vpop.f32.mrf.mxu0
      %v4632 = vadd.f32 %v4374, %v4631
      %4633 = vmatmul.f32.gmra.mxu0 %v336
      %v4634 = vpop.f32.mrf.mxu0
      %v4635 = vadd.f32 %v4375, %v4634
      %4636 = vmatmul.f32.gmra.mxu0 %v338
      %v4637 = vpop.f32.mrf.mxu0
      %v4638 = vadd.f32 %v4376, %v4637
      %4639 = vmatmul.f32.gmra.mxu0 %v340
      %v4640 = vpop.f32.mrf.mxu0
      %v4641 = vadd.f32 %v4377, %v4640
      %4642 = vmatmul.f32.gmra.mxu0 %v342
      %v4643 = vpop.f32.mrf.mxu0
      %v4644 = vadd.f32 %v4378, %v4643
      %4645 = vmatmul.f32.gmra.mxu0 %v344
      %v4646 = vpop.f32.mrf.mxu0
      %v4647 = vadd.f32 %v4379, %v4646
      %4648 = vmatmul.f32.gmra.mxu0 %v346
      %v4649 = vpop.f32.mrf.mxu0
      %v4650 = vadd.f32 %v4380, %v4649
      %4651 = vmatmul.f32.gmra.mxu0 %v348
      %v4652 = vpop.f32.mrf.mxu0
      %v4653 = vadd.f32 %v4381, %v4652
      %4654 = vmatmul.f32.gmra.mxu0 %v350
      %v4655 = vpop.f32.mrf.mxu0
      %v4656 = vadd.f32 %v4382, %v4655
      %4657 = vmatmul.f32.gmra.mxu0 %v352
      %v4658 = vpop.f32.mrf.mxu0
      %v4659 = vadd.f32 %v4383, %v4658
      %4660 = vmatmul.f32.gmra.mxu0 %v354
      %v4661 = vpop.f32.mrf.mxu0
      %v4662 = vadd.f32 %v4384, %v4661
      %4663 = vmatmul.f32.gmra.mxu0 %v356
      %v4664 = vpop.f32.mrf.mxu0
      %v4665 = vadd.f32 %v4385, %v4664
      %4666 = vmatmul.f32.gmra.mxu0 %v358
      %v4667 = vpop.f32.mrf.mxu0
      %v4668 = vadd.f32 %v4386, %v4667
      %4669 = vmatmul.f32.gmra.mxu0 %v360
      %v4670 = vpop.f32.mrf.mxu0
      %v4671 = vadd.f32 %v4387, %v4670
      %4672 = vmatmul.f32.gmra.mxu0 %v362
      %v4673 = vpop.f32.mrf.mxu0
      %v4674 = vadd.f32 %v4388, %v4673
      %4675 = vmatmul.f32.gmra.mxu0 %v364
      %v4676 = vpop.f32.mrf.mxu0
      %v4677 = vadd.f32 %v4389, %v4676
      %4678 = vmatmul.f32.gmra.mxu0 %v366
      %v4679 = vpop.f32.mrf.mxu0
      %v4680 = vadd.f32 %v4390, %v4679
      %4681 = vmatmul.f32.gmra.mxu0 %v368
      %v4682 = vpop.f32.mrf.mxu0
      %v4683 = vadd.f32 %v4391, %v4682
      %4684 = vmatmul.f32.gmra.mxu0 %v370
      %v4685 = vpop.f32.mrf.mxu0
      %v4686 = vadd.f32 %v4392, %v4685
      %4687 = vmatmul.f32.gmra.mxu0 %v372
      %v4688 = vpop.f32.mrf.mxu0
      %v4689 = vadd.f32 %v4393, %v4688
      %4690 = vmatmul.f32.gmra.mxu0 %v374
      %v4691 = vpop.f32.mrf.mxu0
      %v4692 = vadd.f32 %v4394, %v4691
      %4693 = vmatmul.f32.gmra.mxu0 %v376
      %v4694 = vpop.f32.mrf.mxu0
      %v4695 = vadd.f32 %v4395, %v4694
      %4696 = vmatmul.f32.gmra.mxu0 %v378
      %v4697 = vpop.f32.mrf.mxu0
      %v4698 = vadd.f32 %v4396, %v4697
      %4699 = vmatmul.f32.gmra.mxu0 %v380
      %v4700 = vpop.f32.mrf.mxu0
      %v4701 = vadd.f32 %v4397, %v4700
      %4702 = vmatmul.f32.gmra.mxu0 %v382
      %v4703 = vpop.f32.mrf.mxu0
      %v4704 = vadd.f32 %v4398, %v4703
      %4705 = vmatmul.f32.gmra.mxu0 %v384
      %v4706 = vpop.f32.mrf.mxu0
      %v4707 = vadd.f32 %v4399, %v4706
      %4708 = vdwg.mxu0
      %4709 = vmatpush.msra.mxu0 0.0
      %4710 = vmatpush.msra.mxu0 0.0
      %4711 = vmatpush.msra.mxu0 0.0
      %4712 = vmatpush.msra.mxu0 0.0
      %4713 = vmatpush.msra.mxu0 0.0
      %4714 = vmatpush.msra.mxu0 0.0
      %4715 = vmatpush.msra.mxu0 0.0
      %4716 = vmatpush.msra.mxu0 0.0
      %4717 = vmatpush.msra.mxu0 %v4570
      %4718 = vmatpush.msra.mxu0 %v4567
      %4719 = vmatpush.msra.mxu0 %v4564
      %4720 = vmatpush.msra.mxu0 %v4561
      %4721 = vmatpush.msra.mxu0 %v4558
      %4722 = vmatpush.msra.mxu0 %v4555
      %4723 = vmatpush.msra.mxu0 %v4552
      %4724 = vmatpush.msra.mxu0 %v4549
      %4725 = vmatmul.f32.gmra.mxu0 %v675
      %v4726 = vpop.f32.mrf.mxu0
      %v4727 = vadd.f32 %v4590, %v4726
      %4728 = vmatmul.f32.gmra.mxu0 %v678
      %v4729 = vpop.f32.mrf.mxu0
      %v4730 = vadd.f32 %v4593, %v4729
      %4731 = vmatmul.f32.gmra.mxu0 %v681
      %v4732 = vpop.f32.mrf.mxu0
      %v4733 = vadd.f32 %v4596, %v4732
      %4734 = vmatmul.f32.gmra.mxu0 %v684
      %v4735 = vpop.f32.mrf.mxu0
      %v4736 = vadd.f32 %v4599, %v4735
      %4737 = vmatmul.f32.gmra.mxu0 %v687
      %v4738 = vpop.f32.mrf.mxu0
      %v4739 = vadd.f32 %v4602, %v4738
      %4740 = vmatmul.f32.gmra.mxu0 %v690
      %v4741 = vpop.f32.mrf.mxu0
      %v4742 = vadd.f32 %v4605, %v4741
      %4743 = vmatmul.f32.gmra.mxu0 %v693
      %v4744 = vpop.f32.mrf.mxu0
      %v4745 = vadd.f32 %v4608, %v4744
      %4746 = vmatmul.f32.gmra.mxu0 %v696
      %v4747 = vpop.f32.mrf.mxu0
      %v4748 = vadd.f32 %v4611, %v4747
      %4749 = vmatmul.f32.gmra.mxu0 %v699
      %v4750 = vpop.f32.mrf.mxu0
      %v4751 = vadd.f32 %v4614, %v4750
      %4752 = vmatmul.f32.gmra.mxu0 %v702
      %v4753 = vpop.f32.mrf.mxu0
      %v4754 = vadd.f32 %v4617, %v4753
      %4755 = vmatmul.f32.gmra.mxu0 %v705
      %v4756 = vpop.f32.mrf.mxu0
      %v4757 = vadd.f32 %v4620, %v4756
      %4758 = vmatmul.f32.gmra.mxu0 %v708
      %v4759 = vpop.f32.mrf.mxu0
      %v4760 = vadd.f32 %v4623, %v4759
      %4761 = vmatmul.f32.gmra.mxu0 %v711
      %v4762 = vpop.f32.mrf.mxu0
      %v4763 = vadd.f32 %v4626, %v4762
      %4764 = vmatmul.f32.gmra.mxu0 %v714
      %v4765 = vpop.f32.mrf.mxu0
      %v4766 = vadd.f32 %v4629, %v4765
      %4767 = vmatmul.f32.gmra.mxu0 %v717
      %v4768 = vpop.f32.mrf.mxu0
      %v4769 = vadd.f32 %v4632, %v4768
      %4770 = vmatmul.f32.gmra.mxu0 %v720
      %v4771 = vpop.f32.mrf.mxu0
      %v4772 = vadd.f32 %v4635, %v4771
      %4773 = vmatmul.f32.gmra.mxu0 %v723
      %v4774 = vpop.f32.mrf.mxu0
      %v4775 = vadd.f32 %v4638, %v4774
      %4776 = vmatmul.f32.gmra.mxu0 %v726
      %v4777 = vpop.f32.mrf.mxu0
      %v4778 = vadd.f32 %v4641, %v4777
      %4779 = vmatmul.f32.gmra.mxu0 %v729
      %v4780 = vpop.f32.mrf.mxu0
      %v4781 = vadd.f32 %v4644, %v4780
      %4782 = vmatmul.f32.gmra.mxu0 %v732
      %v4783 = vpop.f32.mrf.mxu0
      %v4784 = vadd.f32 %v4647, %v4783
      %4785 = vmatmul.f32.gmra.mxu0 %v735
      %v4786 = vpop.f32.mrf.mxu0
      %v4787 = vadd.f32 %v4650, %v4786
      %4788 = vmatmul.f32.gmra.mxu0 %v738
      %v4789 = vpop.f32.mrf.mxu0
      %v4790 = vadd.f32 %v4653, %v4789
      %4791 = vmatmul.f32.gmra.mxu0 %v741
      %v4792 = vpop.f32.mrf.mxu0
      %v4793 = vadd.f32 %v4656, %v4792
      %4794 = vmatmul.f32.gmra.mxu0 %v744
      %v4795 = vpop.f32.mrf.mxu0
      %v4796 = vadd.f32 %v4659, %v4795
      %4797 = vmatmul.f32.gmra.mxu0 %v747
      %v4798 = vpop.f32.mrf.mxu0
      %v4799 = vadd.f32 %v4662, %v4798
      %4800 = vmatmul.f32.gmra.mxu0 %v750
      %v4801 = vpop.f32.mrf.mxu0
      %v4802 = vadd.f32 %v4665, %v4801
      %4803 = vmatmul.f32.gmra.mxu0 %v753
      %v4804 = vpop.f32.mrf.mxu0
      %v4805 = vadd.f32 %v4668, %v4804
      %4806 = vmatmul.f32.gmra.mxu0 %v756
      %v4807 = vpop.f32.mrf.mxu0
      %v4808 = vadd.f32 %v4671, %v4807
      %4809 = vmatmul.f32.gmra.mxu0 %v759
      %v4810 = vpop.f32.mrf.mxu0
      %v4811 = vadd.f32 %v4674, %v4810
      %4812 = vmatmul.f32.gmra.mxu0 %v762
      %v4813 = vpop.f32.mrf.mxu0
      %v4814 = vadd.f32 %v4677, %v4813
      %4815 = vmatmul.f32.gmra.mxu0 %v765
      %v4816 = vpop.f32.mrf.mxu0
      %v4817 = vadd.f32 %v4680, %v4816
      %4818 = vmatmul.f32.gmra.mxu0 %v768
      %v4819 = vpop.f32.mrf.mxu0
      %v4820 = vadd.f32 %v4683, %v4819
      %4821 = vmatmul.f32.gmra.mxu0 %v771
      %v4822 = vpop.f32.mrf.mxu0
      %v4823 = vadd.f32 %v4686, %v4822
      %4824 = vmatmul.f32.gmra.mxu0 %v774
      %v4825 = vpop.f32.mrf.mxu0
      %v4826 = vadd.f32 %v4689, %v4825
      %4827 = vmatmul.f32.gmra.mxu0 %v777
      %v4828 = vpop.f32.mrf.mxu0
      %v4829 = vadd.f32 %v4692, %v4828
      %4830 = vmatmul.f32.gmra.mxu0 %v780
      %v4831 = vpop.f32.mrf.mxu0
      %v4832 = vadd.f32 %v4695, %v4831
      %4833 = vmatmul.f32.gmra.mxu0 %v783
      %v4834 = vpop.f32.mrf.mxu0
      %v4835 = vadd.f32 %v4698, %v4834
      %4836 = vmatmul.f32.gmra.mxu0 %v786
      %v4837 = vpop.f32.mrf.mxu0
      %v4838 = vadd.f32 %v4701, %v4837
      %4839 = vmatmul.f32.gmra.mxu0 %v789
      %v4840 = vpop.f32.mrf.mxu0
      %v4841 = vadd.f32 %v4704, %v4840
      %4842 = vmatmul.f32.gmra.mxu0 %v792
      %v4843 = vpop.f32.mrf.mxu0
      %v4844 = vadd.f32 %v4707, %v4843
      %4845 = vdwg.mxu0
      %vm4846 = vcmp.ge.f32.partialorder %v4727, 0.0
      %vm4847 = vcmp.ge.f32.partialorder %v4730, 0.0
      %vm4848 = vcmp.ge.f32.partialorder %v4733, 0.0
      %vm4849 = vcmp.ge.f32.partialorder %v4736, 0.0
      %vm4850 = vcmp.ge.f32.partialorder %v4739, 0.0
      %vm4851 = vcmp.ge.f32.partialorder %v4742, 0.0
      %vm4852 = vcmp.ge.f32.partialorder %v4745, 0.0
      %vm4853 = vcmp.ge.f32.partialorder %v4748, 0.0
      %vm4854 = vcmp.ge.f32.partialorder %v4751, 0.0
      %vm4855 = vcmp.ge.f32.partialorder %v4754, 0.0
      %vm4856 = vcmp.ge.f32.partialorder %v4757, 0.0
      %vm4857 = vcmp.ge.f32.partialorder %v4760, 0.0
      %vm4858 = vcmp.ge.f32.partialorder %v4763, 0.0
      %vm4859 = vcmp.ge.f32.partialorder %v4766, 0.0
      %vm4860 = vcmp.ge.f32.partialorder %v4769, 0.0
      %vm4861 = vcmp.ge.f32.partialorder %v4772, 0.0
      %vm4862 = vcmp.ge.f32.partialorder %v4775, 0.0
      %vm4863 = vcmp.ge.f32.partialorder %v4778, 0.0
      %vm4864 = vcmp.ge.f32.partialorder %v4781, 0.0
      %vm4865 = vcmp.ge.f32.partialorder %v4784, 0.0
      %vm4866 = vcmp.ge.f32.partialorder %v4787, 0.0
      %vm4867 = vcmp.ge.f32.partialorder %v4790, 0.0
      %vm4868 = vcmp.ge.f32.partialorder %v4793, 0.0
      %vm4869 = vcmp.ge.f32.partialorder %v4796, 0.0
      %vm4870 = vcmp.ge.f32.partialorder %v4799, 0.0
      %vm4871 = vcmp.ge.f32.partialorder %v4802, 0.0
      %vm4872 = vcmp.ge.f32.partialorder %v4805, 0.0
      %vm4873 = vcmp.ge.f32.partialorder %v4808, 0.0
      %vm4874 = vcmp.ge.f32.partialorder %v4811, 0.0
      %vm4875 = vcmp.ge.f32.partialorder %v4814, 0.0
      %vm4876 = vcmp.ge.f32.partialorder %v4817, 0.0
      %vm4877 = vcmp.ge.f32.partialorder %v4820, 0.0
      %vm4878 = vcmp.ge.f32.partialorder %v4823, 0.0
      %vm4879 = vcmp.ge.f32.partialorder %v4826, 0.0
      %vm4880 = vcmp.ge.f32.partialorder %v4829, 0.0
      %vm4881 = vcmp.ge.f32.partialorder %v4832, 0.0
      %vm4882 = vcmp.ge.f32.partialorder %v4835, 0.0
      %vm4883 = vcmp.ge.f32.partialorder %v4838, 0.0
      %vm4884 = vcmp.ge.f32.partialorder %v4841, 0.0
      %vm4885 = vcmp.ge.f32.partialorder %v4844, 0.0
      %v4886 = vmul.f32 %v4727, 0.01
      %v4887 = vmul.f32 %v4730, 0.01
      %v4888 = vmul.f32 %v4733, 0.01
      %v4889 = vmul.f32 %v4736, 0.01
      %v4890 = vmul.f32 %v4739, 0.01
      %v4891 = vmul.f32 %v4742, 0.01
      %v4892 = vmul.f32 %v4745, 0.01
      %v4893 = vmul.f32 %v4748, 0.01
      %v4894 = vmul.f32 %v4751, 0.01
      %v4895 = vmul.f32 %v4754, 0.01
      %v4896 = vmul.f32 %v4757, 0.01
      %v4897 = vmul.f32 %v4760, 0.01
      %v4898 = vmul.f32 %v4763, 0.01
      %v4899 = vmul.f32 %v4766, 0.01
      %v4900 = vmul.f32 %v4769, 0.01
      %v4901 = vmul.f32 %v4772, 0.01
      %v4902 = vmul.f32 %v4775, 0.01
      %v4903 = vmul.f32 %v4778, 0.01
      %v4904 = vmul.f32 %v4781, 0.01
      %v4905 = vmul.f32 %v4784, 0.01
      %v4906 = vmul.f32 %v4787, 0.01
      %v4907 = vmul.f32 %v4790, 0.01
      %v4908 = vmul.f32 %v4793, 0.01
      %v4909 = vmul.f32 %v4796, 0.01
      %v4910 = vmul.f32 %v4799, 0.01
      %v4911 = vmul.f32 %v4802, 0.01
      %v4912 = vmul.f32 %v4805, 0.01
      %v4913 = vmul.f32 %v4808, 0.01
      %v4914 = vmul.f32 %v4811, 0.01
      %v4915 = vmul.f32 %v4814, 0.01
      %v4916 = vmul.f32 %v4817, 0.01
      %v4917 = vmul.f32 %v4820, 0.01
      %v4918 = vmul.f32 %v4823, 0.01
      %v4919 = vmul.f32 %v4826, 0.01
      %v4920 = vmul.f32 %v4829, 0.01
      %v4921 = vmul.f32 %v4832, 0.01
      %v4922 = vmul.f32 %v4835, 0.01
      %v4923 = vmul.f32 %v4838, 0.01
      %v4924 = vmul.f32 %v4841, 0.01
      %v4925 = vmul.f32 %v4844, 0.01
      %v4926 = vsel %vm4846, %v4727, %v4886
      %v4927 = vsel %vm4847, %v4730, %v4887
      %v4928 = vsel %vm4848, %v4733, %v4888
      %v4929 = vsel %vm4849, %v4736, %v4889
      %v4930 = vsel %vm4850, %v4739, %v4890
      %v4931 = vsel %vm4851, %v4742, %v4891
      %v4932 = vsel %vm4852, %v4745, %v4892
      %v4933 = vsel %vm4853, %v4748, %v4893
      %v4934 = vsel %vm4854, %v4751, %v4894
      %v4935 = vsel %vm4855, %v4754, %v4895
      %v4936 = vsel %vm4856, %v4757, %v4896
      %v4937 = vsel %vm4857, %v4760, %v4897
      %v4938 = vsel %vm4858, %v4763, %v4898
      %v4939 = vsel %vm4859, %v4766, %v4899
      %v4940 = vsel %vm4860, %v4769, %v4900
      %v4941 = vsel %vm4861, %v4772, %v4901
      %v4942 = vsel %vm4862, %v4775, %v4902
      %v4943 = vsel %vm4863, %v4778, %v4903
      %v4944 = vsel %vm4864, %v4781, %v4904
      %v4945 = vsel %vm4865, %v4784, %v4905
      %v4946 = vsel %vm4866, %v4787, %v4906
      %v4947 = vsel %vm4867, %v4790, %v4907
      %v4948 = vsel %vm4868, %v4793, %v4908
      %v4949 = vsel %vm4869, %v4796, %v4909
      %v4950 = vsel %vm4870, %v4799, %v4910
      %v4951 = vsel %vm4871, %v4802, %v4911
      %v4952 = vsel %vm4872, %v4805, %v4912
      %v4953 = vsel %vm4873, %v4808, %v4913
      %v4954 = vsel %vm4874, %v4811, %v4914
      %v4955 = vsel %vm4875, %v4814, %v4915
      %v4956 = vsel %vm4876, %v4817, %v4916
      %v4957 = vsel %vm4877, %v4820, %v4917
      %v4958 = vsel %vm4878, %v4823, %v4918
      %v4959 = vsel %vm4879, %v4826, %v4919
      %v4960 = vsel %vm4880, %v4829, %v4920
      %v4961 = vsel %vm4881, %v4832, %v4921
      %v4962 = vsel %vm4882, %v4835, %v4922
      %v4963 = vsel %vm4883, %v4838, %v4923
      %v4964 = vsel %vm4884, %v4841, %v4924
      %v4965 = vsel %vm4885, %v4844, %v4925
      %4966 = vmatpush.msra.mxu0 %v4941
      %4967 = vmatpush.msra.mxu0 %v4940
      %4968 = vmatpush.msra.mxu0 %v4939
      %4969 = vmatpush.msra.mxu0 %v4938
      %4970 = vmatpush.msra.mxu0 %v4937
      %4971 = vmatpush.msra.mxu0 %v4936
      %4972 = vmatpush.msra.mxu0 %v4935
      %4973 = vmatpush.msra.mxu0 %v4934
      %4974 = vmatpush.msra.mxu0 %v4933
      %4975 = vmatpush.msra.mxu0 %v4932
      %4976 = vmatpush.msra.mxu0 %v4931
      %4977 = vmatpush.msra.mxu0 %v4930
      %4978 = vmatpush.msra.mxu0 %v4929
      %4979 = vmatpush.msra.mxu0 %v4928
      %4980 = vmatpush.msra.mxu0 %v4927
      %4981 = vmatpush.msra.mxu0 %v4926
      %4982 = vmatmul.f32.gmra.mxu0 %v386
      %v4983 = vpop.f32.mrf.mxu0
      %v4984 = vadd.f32 0.0, %v4983
      %4985 = vmatmul.f32.gmra.mxu0 %v389
      %v4986 = vpop.f32.mrf.mxu0
      %v4987 = vadd.f32 0.0, %v4986
      %4988 = vmatmul.f32.gmra.mxu0 %v392
      %v4989 = vpop.f32.mrf.mxu0
      %v4990 = vadd.f32 0.0, %v4989
      %4991 = vmatmul.f32.gmra.mxu0 %v395
      %v4992 = vpop.f32.mrf.mxu0
      %v4993 = vadd.f32 0.0, %v4992
      %4994 = vmatmul.f32.gmra.mxu0 %v398
      %v4995 = vpop.f32.mrf.mxu0
      %v4996 = vadd.f32 0.0, %v4995
      %4997 = vmatmul.f32.gmra.mxu0 %v401
      %v4998 = vpop.f32.mrf.mxu0
      %v4999 = vadd.f32 0.0, %v4998
      %5000 = vmatmul.f32.gmra.mxu0 %v404
      %v5001 = vpop.f32.mrf.mxu0
      %v5002 = vadd.f32 0.0, %v5001
      %5003 = vmatmul.f32.gmra.mxu0 %v407
      %v5004 = vpop.f32.mrf.mxu0
      %v5005 = vadd.f32 0.0, %v5004
      %5006 = vmatmul.f32.gmra.mxu0 %v410
      %v5007 = vpop.f32.mrf.mxu0
      %v5008 = vadd.f32 0.0, %v5007
      %5009 = vmatmul.f32.gmra.mxu0 %v413
      %v5010 = vpop.f32.mrf.mxu0
      %v5011 = vadd.f32 0.0, %v5010
      %5012 = vmatmul.f32.gmra.mxu0 %v416
      %v5013 = vpop.f32.mrf.mxu0
      %v5014 = vadd.f32 0.0, %v5013
      %5015 = vmatmul.f32.gmra.mxu0 %v419
      %v5016 = vpop.f32.mrf.mxu0
      %v5017 = vadd.f32 0.0, %v5016
      %5018 = vmatmul.f32.gmra.mxu0 %v422
      %v5019 = vpop.f32.mrf.mxu0
      %v5020 = vadd.f32 0.0, %v5019
      %5021 = vmatmul.f32.gmra.mxu0 %v425
      %v5022 = vpop.f32.mrf.mxu0
      %v5023 = vadd.f32 0.0, %v5022
      %5024 = vmatmul.f32.gmra.mxu0 %v428
      %v5025 = vpop.f32.mrf.mxu0
      %v5026 = vadd.f32 0.0, %v5025
      %5027 = vmatmul.f32.gmra.mxu0 %v431
      %v5028 = vpop.f32.mrf.mxu0
      %v5029 = vadd.f32 0.0, %v5028
      %5030 = vmatmul.f32.gmra.mxu0 %v434
      %v5031 = vpop.f32.mrf.mxu0
      %v5032 = vadd.f32 0.0, %v5031
      %5033 = vmatmul.f32.gmra.mxu0 %v437
      %v5034 = vpop.f32.mrf.mxu0
      %v5035 = vadd.f32 0.0, %v5034
      %5036 = vmatmul.f32.gmra.mxu0 %v440
      %v5037 = vpop.f32.mrf.mxu0
      %v5038 = vadd.f32 0.0, %v5037
      %5039 = vmatmul.f32.gmra.mxu0 %v443
      %v5040 = vpop.f32.mrf.mxu0
      %v5041 = vadd.f32 0.0, %v5040
      %5042 = vmatmul.f32.gmra.mxu0 %v446
      %v5043 = vpop.f32.mrf.mxu0
      %v5044 = vadd.f32 0.0, %v5043
      %5045 = vmatmul.f32.gmra.mxu0 %v449
      %v5046 = vpop.f32.mrf.mxu0
      %v5047 = vadd.f32 0.0, %v5046
      %5048 = vmatmul.f32.gmra.mxu0 %v452
      %v5049 = vpop.f32.mrf.mxu0
      %v5050 = vadd.f32 0.0, %v5049
      %5051 = vmatmul.f32.gmra.mxu0 %v455
      %v5052 = vpop.f32.mrf.mxu0
      %v5053 = vadd.f32 0.0, %v5052
      %5054 = vdwg.mxu0
      %5055 = vmatpush.msra.mxu0 %v4957
      %5056 = vmatpush.msra.mxu0 %v4956
      %5057 = vmatpush.msra.mxu0 %v4955
      %5058 = vmatpush.msra.mxu0 %v4954
      %5059 = vmatpush.msra.mxu0 %v4953
      %5060 = vmatpush.msra.mxu0 %v4952
      %5061 = vmatpush.msra.mxu0 %v4951
      %5062 = vmatpush.msra.mxu0 %v4950
      %5063 = vmatpush.msra.mxu0 %v4949
      %5064 = vmatpush.msra.mxu0 %v4948
      %5065 = vmatpush.msra.mxu0 %v4947
      %5066 = vmatpush.msra.mxu0 %v4946
      %5067 = vmatpush.msra.mxu0 %v4945
      %5068 = vmatpush.msra.mxu0 %v4944
      %5069 = vmatpush.msra.mxu0 %v4943
      %5070 = vmatpush.msra.mxu0 %v4942
      %5071 = vmatmul.f32.gmra.mxu0 %v387
      %v5072 = vpop.f32.mrf.mxu0
      %v5073 = vadd.f32 %v4984, %v5072
      %5074 = vmatmul.f32.gmra.mxu0 %v390
      %v5075 = vpop.f32.mrf.mxu0
      %v5076 = vadd.f32 %v4987, %v5075
      %5077 = vmatmul.f32.gmra.mxu0 %v393
      %v5078 = vpop.f32.mrf.mxu0
      %v5079 = vadd.f32 %v4990, %v5078
      %5080 = vmatmul.f32.gmra.mxu0 %v396
      %v5081 = vpop.f32.mrf.mxu0
      %v5082 = vadd.f32 %v4993, %v5081
      %5083 = vmatmul.f32.gmra.mxu0 %v399
      %v5084 = vpop.f32.mrf.mxu0
      %v5085 = vadd.f32 %v4996, %v5084
      %5086 = vmatmul.f32.gmra.mxu0 %v402
      %v5087 = vpop.f32.mrf.mxu0
      %v5088 = vadd.f32 %v4999, %v5087
      %5089 = vmatmul.f32.gmra.mxu0 %v405
      %v5090 = vpop.f32.mrf.mxu0
      %v5091 = vadd.f32 %v5002, %v5090
      %5092 = vmatmul.f32.gmra.mxu0 %v408
      %v5093 = vpop.f32.mrf.mxu0
      %v5094 = vadd.f32 %v5005, %v5093
      %5095 = vmatmul.f32.gmra.mxu0 %v411
      %v5096 = vpop.f32.mrf.mxu0
      %v5097 = vadd.f32 %v5008, %v5096
      %5098 = vmatmul.f32.gmra.mxu0 %v414
      %v5099 = vpop.f32.mrf.mxu0
      %v5100 = vadd.f32 %v5011, %v5099
      %5101 = vmatmul.f32.gmra.mxu0 %v417
      %v5102 = vpop.f32.mrf.mxu0
      %v5103 = vadd.f32 %v5014, %v5102
      %5104 = vmatmul.f32.gmra.mxu0 %v420
      %v5105 = vpop.f32.mrf.mxu0
      %v5106 = vadd.f32 %v5017, %v5105
      %5107 = vmatmul.f32.gmra.mxu0 %v423
      %v5108 = vpop.f32.mrf.mxu0
      %v5109 = vadd.f32 %v5020, %v5108
      %5110 = vmatmul.f32.gmra.mxu0 %v426
      %v5111 = vpop.f32.mrf.mxu0
      %v5112 = vadd.f32 %v5023, %v5111
      %5113 = vmatmul.f32.gmra.mxu0 %v429
      %v5114 = vpop.f32.mrf.mxu0
      %v5115 = vadd.f32 %v5026, %v5114
      %5116 = vmatmul.f32.gmra.mxu0 %v432
      %v5117 = vpop.f32.mrf.mxu0
      %v5118 = vadd.f32 %v5029, %v5117
      %5119 = vmatmul.f32.gmra.mxu0 %v435
      %v5120 = vpop.f32.mrf.mxu0
      %v5121 = vadd.f32 %v5032, %v5120
      %5122 = vmatmul.f32.gmra.mxu0 %v438
      %v5123 = vpop.f32.mrf.mxu0
      %v5124 = vadd.f32 %v5035, %v5123
      %5125 = vmatmul.f32.gmra.mxu0 %v441
      %v5126 = vpop.f32.mrf.mxu0
      %v5127 = vadd.f32 %v5038, %v5126
      %5128 = vmatmul.f32.gmra.mxu0 %v444
      %v5129 = vpop.f32.mrf.mxu0
      %v5130 = vadd.f32 %v5041, %v5129
      %5131 = vmatmul.f32.gmra.mxu0 %v447
      %v5132 = vpop.f32.mrf.mxu0
      %v5133 = vadd.f32 %v5044, %v5132
      %5134 = vmatmul.f32.gmra.mxu0 %v450
      %v5135 = vpop.f32.mrf.mxu0
      %v5136 = vadd.f32 %v5047, %v5135
      %5137 = vmatmul.f32.gmra.mxu0 %v453
      %v5138 = vpop.f32.mrf.mxu0
      %v5139 = vadd.f32 %v5050, %v5138
      %5140 = vmatmul.f32.gmra.mxu0 %v456
      %v5141 = vpop.f32.mrf.mxu0
      %v5142 = vadd.f32 %v5053, %v5141
      %5143 = vdwg.mxu0
      %5144 = vmatpush.msra.mxu0 0.0
      %5145 = vmatpush.msra.mxu0 0.0
      %5146 = vmatpush.msra.mxu0 0.0
      %5147 = vmatpush.msra.mxu0 0.0
      %5148 = vmatpush.msra.mxu0 0.0
      %5149 = vmatpush.msra.mxu0 0.0
      %5150 = vmatpush.msra.mxu0 0.0
      %5151 = vmatpush.msra.mxu0 0.0
      %5152 = vmatpush.msra.mxu0 %v4965
      %5153 = vmatpush.msra.mxu0 %v4964
      %5154 = vmatpush.msra.mxu0 %v4963
      %5155 = vmatpush.msra.mxu0 %v4962
      %5156 = vmatpush.msra.mxu0 %v4961
      %5157 = vmatpush.msra.mxu0 %v4960
      %5158 = vmatpush.msra.mxu0 %v4959
      %5159 = vmatpush.msra.mxu0 %v4958
      %5160 = vmatmul.f32.gmra.mxu0 %v1189
      %v5161 = vpop.f32.mrf.mxu0
      %v5162 = vadd.f32 %v5073, %v5161
      %5163 = vmatmul.f32.gmra.mxu0 %v1192
      %v5164 = vpop.f32.mrf.mxu0
      %v5165 = vadd.f32 %v5076, %v5164
      %5166 = vmatmul.f32.gmra.mxu0 %v1195
      %v5167 = vpop.f32.mrf.mxu0
      %v5168 = vadd.f32 %v5079, %v5167
      %5169 = vmatmul.f32.gmra.mxu0 %v1198
      %v5170 = vpop.f32.mrf.mxu0
      %v5171 = vadd.f32 %v5082, %v5170
      %5172 = vmatmul.f32.gmra.mxu0 %v1201
      %v5173 = vpop.f32.mrf.mxu0
      %v5174 = vadd.f32 %v5085, %v5173
      %5175 = vmatmul.f32.gmra.mxu0 %v1204
      %v5176 = vpop.f32.mrf.mxu0
      %v5177 = vadd.f32 %v5088, %v5176
      %5178 = vmatmul.f32.gmra.mxu0 %v1207
      %v5179 = vpop.f32.mrf.mxu0
      %v5180 = vadd.f32 %v5091, %v5179
      %5181 = vmatmul.f32.gmra.mxu0 %v1210
      %v5182 = vpop.f32.mrf.mxu0
      %v5183 = vadd.f32 %v5094, %v5182
      %5184 = vmatmul.f32.gmra.mxu0 %v1213
      %v5185 = vpop.f32.mrf.mxu0
      %v5186 = vadd.f32 %v5097, %v5185
      %5187 = vmatmul.f32.gmra.mxu0 %v1216
      %v5188 = vpop.f32.mrf.mxu0
      %v5189 = vadd.f32 %v5100, %v5188
      %5190 = vmatmul.f32.gmra.mxu0 %v1219
      %v5191 = vpop.f32.mrf.mxu0
      %v5192 = vadd.f32 %v5103, %v5191
      %5193 = vmatmul.f32.gmra.mxu0 %v1222
      %v5194 = vpop.f32.mrf.mxu0
      %v5195 = vadd.f32 %v5106, %v5194
      %5196 = vmatmul.f32.gmra.mxu0 %v1225
      %v5197 = vpop.f32.mrf.mxu0
      %v5198 = vadd.f32 %v5109, %v5197
      %5199 = vmatmul.f32.gmra.mxu0 %v1228
      %v5200 = vpop.f32.mrf.mxu0
      %v5201 = vadd.f32 %v5112, %v5200
      %5202 = vmatmul.f32.gmra.mxu0 %v1231
      %v5203 = vpop.f32.mrf.mxu0
      %v5204 = vadd.f32 %v5115, %v5203
      %5205 = vmatmul.f32.gmra.mxu0 %v1234
      %v5206 = vpop.f32.mrf.mxu0
      %v5207 = vadd.f32 %v5118, %v5206
      %5208 = vmatmul.f32.gmra.mxu0 %v1237
      %v5209 = vpop.f32.mrf.mxu0
      %v5210 = vadd.f32 %v5121, %v5209
      %5211 = vmatmul.f32.gmra.mxu0 %v1240
      %v5212 = vpop.f32.mrf.mxu0
      %v5213 = vadd.f32 %v5124, %v5212
      %5214 = vmatmul.f32.gmra.mxu0 %v1243
      %v5215 = vpop.f32.mrf.mxu0
      %v5216 = vadd.f32 %v5127, %v5215
      %5217 = vmatmul.f32.gmra.mxu0 %v1246
      %v5218 = vpop.f32.mrf.mxu0
      %v5219 = vadd.f32 %v5130, %v5218
      %5220 = vmatmul.f32.gmra.mxu0 %v1249
      %v5221 = vpop.f32.mrf.mxu0
      %v5222 = vadd.f32 %v5133, %v5221
      %5223 = vmatmul.f32.gmra.mxu0 %v1252
      %v5224 = vpop.f32.mrf.mxu0
      %v5225 = vadd.f32 %v5136, %v5224
      %5226 = vmatmul.f32.gmra.mxu0 %v1255
      %v5227 = vpop.f32.mrf.mxu0
      %v5228 = vadd.f32 %v5139, %v5227
      %5229 = vmatmul.f32.gmra.mxu0 %v1258
      %v5230 = vpop.f32.mrf.mxu0
      %v5231 = vadd.f32 %v5142, %v5230
      %5232 = vdwg.mxu0
      %5233 = vst.msk [vmem:[#allocation2] sm:$0xff] %vm511, %v4330
      %5234 = vst.msk [vmem:[#allocation2 + $0x8] sm:$0xff] %vm511, %v4331
      %5235 = vst.msk [vmem:[#allocation2 + $0x10] sm:$0xff] %vm511, %v4332
      %5236 = vst.msk [vmem:[#allocation2 + $0x18] sm:$0xff] %vm511, %v4333
      %5237 = vst.msk [vmem:[#allocation2 + $0x20] sm:$0xff] %vm511, %v4334
      %5238 = vst.msk [vmem:[#allocation2 + $0x28] sm:$0xff] %vm511, %v4335
      %5239 = vst.msk [vmem:[#allocation2 + $0x30] sm:$0xff] %vm511, %v4336
      %5240 = vst.msk [vmem:[#allocation2 + $0x38] sm:$0xff] %vm511, %v4337
      %5241 = vst.msk [vmem:[#allocation2 + $0x40] sm:$0xff] %vm511, %v4338
      %5242 = vst.msk [vmem:[#allocation2 + $0x48] sm:$0xff] %vm511, %v4339
      %5243 = vst.msk [vmem:[#allocation2 + $0x50] sm:$0xff] %vm511, %v4340
      %5244 = vst.msk [vmem:[#allocation2 + $0x58] sm:$0xff] %vm511, %v4341
      %5245 = vst.msk [vmem:[#allocation2 + $0x60] sm:$0xff] %vm511, %v4342
      %5246 = vst.msk [vmem:[#allocation2 + $0x68] sm:$0xff] %vm511, %v4343
      %5247 = vst.msk [vmem:[#allocation2 + $0x70] sm:$0xff] %vm511, %v4344
      %5248 = vst.msk [vmem:[#allocation2 + $0x78] sm:$0xff] %vm511, %v4345
      %5249 = vst.msk [vmem:[#allocation2 + $0x80] sm:$0xff] %vm511, %v4346
      %5250 = vst.msk [vmem:[#allocation2 + $0x88] sm:$0xff] %vm511, %v4347
      %5251 = vst.msk [vmem:[#allocation2 + $0x90] sm:$0xff] %vm511, %v4348
      %5252 = vst.msk [vmem:[#allocation2 + $0x98] sm:$0xff] %vm511, %v4349
      %5253 = vst.msk [vmem:[#allocation2 + $0xa0] sm:$0xff] %vm511, %v4350
      %5254 = vst.msk [vmem:[#allocation2 + $0xa8] sm:$0xff] %vm511, %v4351
      %5255 = vst.msk [vmem:[#allocation2 + $0xb0] sm:$0xff] %vm511, %v4352
      %5256 = vst.msk [vmem:[#allocation2 + $0xb8] sm:$0xff] %vm511, %v4353
      %5281 = vrot.lane.b32.xlu0 %v5162, 32
      %v5282 = vpop.permute.xlu0 %5281
      %5283 = vrot.lane.b32.xlu0 %v5165, 32
      %v5284 = vpop.permute.xlu0 %5283
      %5285 = vrot.lane.b32.xlu0 %v5168, 32
      %v5286 = vpop.permute.xlu0 %5285
      %5287 = vrot.lane.b32.xlu0 %v5171, 32
      %v5288 = vpop.permute.xlu0 %5287
      %5289 = vrot.lane.b32.xlu0 %v5174, 32
      %v5290 = vpop.permute.xlu0 %5289
      %5291 = vrot.lane.b32.xlu0 %v5177, 32
      %v5292 = vpop.permute.xlu0 %5291
      %5293 = vrot.lane.b32.xlu0 %v5180, 32
      %v5294 = vpop.permute.xlu0 %5293
      %5295 = vrot.lane.b32.xlu0 %v5183, 32
      %v5296 = vpop.permute.xlu0 %5295
      %5297 = vrot.lane.b32.xlu0 %v5186, 32
      %v5298 = vpop.permute.xlu0 %5297
      %5299 = vrot.lane.b32.xlu0 %v5189, 32
      %v5300 = vpop.permute.xlu0 %5299
      %5301 = vrot.lane.b32.xlu0 %v5192, 32
      %v5302 = vpop.permute.xlu0 %5301
      %5303 = vrot.lane.b32.xlu0 %v5195, 32
      %v5304 = vpop.permute.xlu0 %5303
      %5305 = vrot.lane.b32.xlu0 %v5198, 32
      %v5306 = vpop.permute.xlu0 %5305
      %5307 = vrot.lane.b32.xlu0 %v5201, 32
      %v5308 = vpop.permute.xlu0 %5307
      %5309 = vrot.lane.b32.xlu0 %v5204, 32
      %v5310 = vpop.permute.xlu0 %5309
      %5311 = vrot.lane.b32.xlu0 %v5207, 32
      %v5312 = vpop.permute.xlu0 %5311
      %5313 = vrot.lane.b32.xlu0 %v5210, 32
      %v5314 = vpop.permute.xlu0 %5313
      %5315 = vrot.lane.b32.xlu0 %v5213, 32
      %v5316 = vpop.permute.xlu0 %5315
      %5317 = vrot.lane.b32.xlu0 %v5216, 32
      %v5318 = vpop.permute.xlu0 %5317
      %5319 = vrot.lane.b32.xlu0 %v5219, 32
      %v5320 = vpop.permute.xlu0 %5319
      %5321 = vrot.lane.b32.xlu0 %v5222, 32
      %v5322 = vpop.permute.xlu0 %5321
      %5323 = vrot.lane.b32.xlu0 %v5225, 32
      %v5324 = vpop.permute.xlu0 %5323
      %5325 = vrot.lane.b32.xlu0 %v5228, 32
      %v5326 = vpop.permute.xlu0 %5325
      %5327 = vrot.lane.b32.xlu0 %v5231, 32
      %v5328 = vpop.permute.xlu0 %5327
      %5353 = vst.msk [vmem:[#allocation2] sm:$0xff] %vm1647, %v5282
      %5354 = vst.msk [vmem:[#allocation2 + $0x8] sm:$0xff] %vm1647, %v5284
      %5355 = vst.msk [vmem:[#allocation2 + $0x10] sm:$0xff] %vm1647, %v5286
      %5356 = vst.msk [vmem:[#allocation2 + $0x18] sm:$0xff] %vm1647, %v5288
      %5357 = vst.msk [vmem:[#allocation2 + $0x20] sm:$0xff] %vm1647, %v5290
      %5358 = vst.msk [vmem:[#allocation2 + $0x28] sm:$0xff] %vm1647, %v5292
      %5359 = vst.msk [vmem:[#allocation2 + $0x30] sm:$0xff] %vm1647, %v5294
      %5360 = vst.msk [vmem:[#allocation2 + $0x38] sm:$0xff] %vm1647, %v5296
      %5361 = vst.msk [vmem:[#allocation2 + $0x40] sm:$0xff] %vm1647, %v5298
      %5362 = vst.msk [vmem:[#allocation2 + $0x48] sm:$0xff] %vm1647, %v5300
      %5363 = vst.msk [vmem:[#allocation2 + $0x50] sm:$0xff] %vm1647, %v5302
      %5364 = vst.msk [vmem:[#allocation2 + $0x58] sm:$0xff] %vm1647, %v5304
      %5365 = vst.msk [vmem:[#allocation2 + $0x60] sm:$0xff] %vm1647, %v5306
      %5366 = vst.msk [vmem:[#allocation2 + $0x68] sm:$0xff] %vm1647, %v5308
      %5367 = vst.msk [vmem:[#allocation2 + $0x70] sm:$0xff] %vm1647, %v5310
      %5368 = vst.msk [vmem:[#allocation2 + $0x78] sm:$0xff] %vm1647, %v5312
      %5369 = vst.msk [vmem:[#allocation2 + $0x80] sm:$0xff] %vm1647, %v5314
      %5370 = vst.msk [vmem:[#allocation2 + $0x88] sm:$0xff] %vm1647, %v5316
      %5371 = vst.msk [vmem:[#allocation2 + $0x90] sm:$0xff] %vm1647, %v5318
      %5372 = vst.msk [vmem:[#allocation2 + $0x98] sm:$0xff] %vm1647, %v5320
      %5373 = vst.msk [vmem:[#allocation2 + $0xa0] sm:$0xff] %vm1647, %v5322
      %5374 = vst.msk [vmem:[#allocation2 + $0xa8] sm:$0xff] %vm1647, %v5324
      %5375 = vst.msk [vmem:[#allocation2 + $0xb0] sm:$0xff] %vm1647, %v5326
      %5376 = vst.msk [vmem:[#allocation2 + $0xb8] sm:$0xff] %vm1647, %v5328
      %v5377 = vld [vmem:[#allocation2] sm:$0xff]
      %v5378 = vld [vmem:[#allocation2 + $0x8] sm:$0xff]
      %v5379 = vld [vmem:[#allocation2 + $0x10] sm:$0xff]
      %v5380 = vld [vmem:[#allocation2 + $0x18] sm:$0xff]
      %v5381 = vld [vmem:[#allocation2 + $0x20] sm:$0xff]
      %v5382 = vld [vmem:[#allocation2 + $0x28] sm:$0xff]
      %v5383 = vld [vmem:[#allocation2 + $0x30] sm:$0xff]
      %v5384 = vld [vmem:[#allocation2 + $0x38] sm:$0xff]
      %v5385 = vld [vmem:[#allocation2 + $0x40] sm:$0xff]
      %v5386 = vld [vmem:[#allocation2 + $0x48] sm:$0xff]
      %v5387 = vld [vmem:[#allocation2 + $0x50] sm:$0xff]
      %v5388 = vld [vmem:[#allocation2 + $0x58] sm:$0xff]
      %v5389 = vld [vmem:[#allocation2 + $0x60] sm:$0xff]
      %v5390 = vld [vmem:[#allocation2 + $0x68] sm:$0xff]
      %v5391 = vld [vmem:[#allocation2 + $0x70] sm:$0xff]
      %v5392 = vld [vmem:[#allocation2 + $0x78] sm:$0xff]
      %v5393 = vld [vmem:[#allocation2 + $0x80] sm:$0xff]
      %v5394 = vld [vmem:[#allocation2 + $0x88] sm:$0xff]
      %v5395 = vld [vmem:[#allocation2 + $0x90] sm:$0xff]
      %v5396 = vld [vmem:[#allocation2 + $0x98] sm:$0xff]
      %v5397 = vld [vmem:[#allocation2 + $0xa0] sm:$0xff]
      %v5398 = vld [vmem:[#allocation2 + $0xa8] sm:$0xff]
      %v5399 = vld [vmem:[#allocation2 + $0xb0] sm:$0xff]
      %v5400 = vld [vmem:[#allocation2 + $0xb8] sm:$0xff]
      %v5402 = vperm.slane %v4410, 0
      %v5405 = vsel %vm673, %v5377, 0
      %v5408 = vsel %vm673, %v5378, 0
      %v5411 = vsel %vm673, %v5379, 0
      %v5414 = vsel %vm673, %v5380, 0
      %v5417 = vsel %vm673, %v5381, 0
      %v5420 = vsel %vm673, %v5382, 0
      %v5423 = vsel %vm673, %v5383, 0
      %v5426 = vsel %vm673, %v5384, 0
      %v5429 = vsel %vm673, %v5385, 0
      %v5432 = vsel %vm673, %v5386, 0
      %v5435 = vsel %vm673, %v5387, 0
      %v5438 = vsel %vm673, %v5388, 0
      %v5441 = vsel %vm673, %v5389, 0
      %v5444 = vsel %vm673, %v5390, 0
      %v5447 = vsel %vm673, %v5391, 0
      %v5450 = vsel %vm673, %v5392, 0
      %v5453 = vsel %vm673, %v5393, 0
      %v5456 = vsel %vm673, %v5394, 0
      %v5459 = vsel %vm673, %v5395, 0
      %v5462 = vsel %vm673, %v5396, 0
      %v5465 = vsel %vm673, %v5397, 0
      %v5468 = vsel %vm673, %v5398, 0
      %v5471 = vsel %vm673, %v5399, 0
      %v5474 = vsel %vm673, %v5400, 0
      %5476 = vmatpush.msra.mxu0 0.0
      %5477 = vmatpush.msra.mxu0 0.0
      %5478 = vmatpush.msra.mxu0 0.0
      %5479 = vmatpush.msra.mxu0 0.0
      %5480 = vmatpush.msra.mxu0 0.0
      %5481 = vmatpush.msra.mxu0 0.0
      %5482 = vmatpush.msra.mxu0 0.0
      %5483 = vmatpush.msra.mxu0 0.0
      %5484 = vmatpush.msra.mxu0 %v4408
      %5485 = vmatpush.msra.mxu0 %v4407
      %5486 = vmatpush.msra.mxu0 %v4406
      %5487 = vmatpush.msra.mxu0 %v4405
      %5488 = vmatpush.msra.mxu0 %v4404
      %5489 = vmatpush.msra.mxu0 %v4403
      %5490 = vmatpush.msra.mxu0 %v4402
      %5491 = vmatpush.msra.mxu0 %v4401
      %5492 = vmatmul.f32.gmra.mxu0 %v5405
      %v5493 = vpop.f32.mrf.mxu0
      %v5494 = vadd.f32 %v5402, %v5493
      %5495 = vmatmul.f32.gmra.mxu0 %v5408
      %v5496 = vpop.f32.mrf.mxu0
      %v5497 = vadd.f32 %v5402, %v5496
      %5498 = vmatmul.f32.gmra.mxu0 %v5411
      %v5499 = vpop.f32.mrf.mxu0
      %v5500 = vadd.f32 %v5402, %v5499
      %5501 = vmatmul.f32.gmra.mxu0 %v5414
      %v5502 = vpop.f32.mrf.mxu0
      %v5503 = vadd.f32 %v5402, %v5502
      %5504 = vmatmul.f32.gmra.mxu0 %v5417
      %v5505 = vpop.f32.mrf.mxu0
      %v5506 = vadd.f32 %v5402, %v5505
      %5507 = vmatmul.f32.gmra.mxu0 %v5420
      %v5508 = vpop.f32.mrf.mxu0
      %v5509 = vadd.f32 %v5402, %v5508
      %5510 = vmatmul.f32.gmra.mxu0 %v5423
      %v5511 = vpop.f32.mrf.mxu0
      %v5512 = vadd.f32 %v5402, %v5511
      %5513 = vmatmul.f32.gmra.mxu0 %v5426
      %v5514 = vpop.f32.mrf.mxu0
      %v5515 = vadd.f32 %v5402, %v5514
      %5516 = vmatmul.f32.gmra.mxu0 %v5429
      %v5517 = vpop.f32.mrf.mxu0
      %v5518 = vadd.f32 %v5402, %v5517
      %5519 = vmatmul.f32.gmra.mxu0 %v5432
      %v5520 = vpop.f32.mrf.mxu0
      %v5521 = vadd.f32 %v5402, %v5520
      %5522 = vmatmul.f32.gmra.mxu0 %v5435
      %v5523 = vpop.f32.mrf.mxu0
      %v5524 = vadd.f32 %v5402, %v5523
      %5525 = vmatmul.f32.gmra.mxu0 %v5438
      %v5526 = vpop.f32.mrf.mxu0
      %v5527 = vadd.f32 %v5402, %v5526
      %5528 = vmatmul.f32.gmra.mxu0 %v5441
      %v5529 = vpop.f32.mrf.mxu0
      %v5530 = vadd.f32 %v5402, %v5529
      %5531 = vmatmul.f32.gmra.mxu0 %v5444
      %v5532 = vpop.f32.mrf.mxu0
      %v5533 = vadd.f32 %v5402, %v5532
      %5534 = vmatmul.f32.gmra.mxu0 %v5447
      %v5535 = vpop.f32.mrf.mxu0
      %v5536 = vadd.f32 %v5402, %v5535
      %5537 = vmatmul.f32.gmra.mxu0 %v5450
      %v5538 = vpop.f32.mrf.mxu0
      %v5539 = vadd.f32 %v5402, %v5538
      %5540 = vmatmul.f32.gmra.mxu0 %v5453
      %v5541 = vpop.f32.mrf.mxu0
      %v5542 = vadd.f32 %v5402, %v5541
      %5543 = vmatmul.f32.gmra.mxu0 %v5456
      %v5544 = vpop.f32.mrf.mxu0
      %v5545 = vadd.f32 %v5402, %v5544
      %5546 = vmatmul.f32.gmra.mxu0 %v5459
      %v5547 = vpop.f32.mrf.mxu0
      %v5548 = vadd.f32 %v5402, %v5547
      %5549 = vmatmul.f32.gmra.mxu0 %v5462
      %v5550 = vpop.f32.mrf.mxu0
      %v5551 = vadd.f32 %v5402, %v5550
      %5552 = vmatmul.f32.gmra.mxu0 %v5465
      %v5553 = vpop.f32.mrf.mxu0
      %v5554 = vadd.f32 %v5402, %v5553
      %5555 = vmatmul.f32.gmra.mxu0 %v5468
      %v5556 = vpop.f32.mrf.mxu0
      %v5557 = vadd.f32 %v5402, %v5556
      %5558 = vmatmul.f32.gmra.mxu0 %v5471
      %v5559 = vpop.f32.mrf.mxu0
      %v5560 = vadd.f32 %v5402, %v5559
      %5561 = vmatmul.f32.gmra.mxu0 %v5474
      %v5562 = vpop.f32.mrf.mxu0
      %v5563 = vadd.f32 %v5402, %v5562
      %5564 = vdwg.mxu0
      %v5565 = vmax.f32 %v5494, 0.0
      %v5566 = vmax.f32 %v5497, 0.0
      %v5567 = vmax.f32 %v5500, 0.0
      %v5568 = vmax.f32 %v5503, 0.0
      %v5569 = vmax.f32 %v5506, 0.0
      %v5570 = vmax.f32 %v5509, 0.0
      %v5571 = vmax.f32 %v5512, 0.0
      %v5572 = vmax.f32 %v5515, 0.0
      %v5573 = vmax.f32 %v5518, 0.0
      %v5574 = vmax.f32 %v5521, 0.0
      %v5575 = vmax.f32 %v5524, 0.0
      %v5576 = vmax.f32 %v5527, 0.0
      %v5577 = vmax.f32 %v5530, 0.0
      %v5578 = vmax.f32 %v5533, 0.0
      %v5579 = vmax.f32 %v5536, 0.0
      %v5580 = vmax.f32 %v5539, 0.0
      %v5581 = vmax.f32 %v5542, 0.0
      %v5582 = vmax.f32 %v5545, 0.0
      %v5583 = vmax.f32 %v5548, 0.0
      %v5584 = vmax.f32 %v5551, 0.0
      %v5585 = vmax.f32 %v5554, 0.0
      %v5586 = vmax.f32 %v5557, 0.0
      %v5587 = vmax.f32 %v5560, 0.0
      %v5588 = vmax.f32 %v5563, 0.0
      %s5589 = scalar_lea.vmem %s3, 128
      %v5590 = vld [vmem:[%s5589] sm:$0xff]
      %v5591 = vld [vmem:[%s5589 + $0x8] sm:$0xff]
      %v5592 = vld [vmem:[%s5589 + $0x10] sm:$0xff]
      %v5593 = vld [vmem:[%s5589 + $0x18] sm:$0xff]
      %s5594 = scalar_lea.vmem %s4, 1280
      %v5595 = vld [vmem:[%s5594] sm:$0xff]
      %v5596 = vld [vmem:[%s5594 + $0x8] sm:$0xff]
      %v5597 = vld [vmem:[%s5594 + $0x10] sm:$0xff]
      %v5598 = vld [vmem:[%s5594 + $0x18] sm:$0xff]
      %v5599 = vld [vmem:[%s5594 + $0x20] sm:$0xff]
      %v5600 = vld [vmem:[%s5594 + $0x28] sm:$0xff]
      %v5601 = vld [vmem:[%s5594 + $0x30] sm:$0xff]
      %v5602 = vld [vmem:[%s5594 + $0x38] sm:$0xff]
      %v5603 = vld [vmem:[%s5594 + $0x40] sm:$0xff]
      %v5604 = vld [vmem:[%s5594 + $0x48] sm:$0xff]
      %v5605 = vld [vmem:[%s5594 + $0x50] sm:$0xff]
      %v5606 = vld [vmem:[%s5594 + $0x58] sm:$0xff]
      %v5607 = vld [vmem:[%s5594 + $0x60] sm:$0xff]
      %v5608 = vld [vmem:[%s5594 + $0x68] sm:$0xff]
      %v5609 = vld [vmem:[%s5594 + $0x70] sm:$0xff]
      %v5610 = vld [vmem:[%s5594 + $0x78] sm:$0xff]
      %v5611 = vld [vmem:[%s5594 + $0x80] sm:$0xff]
      %v5612 = vld [vmem:[%s5594 + $0x88] sm:$0xff]
      %v5613 = vld [vmem:[%s5594 + $0x90] sm:$0xff]
      %v5614 = vld [vmem:[%s5594 + $0x98] sm:$0xff]
      %v5615 = vld [vmem:[%s5594 + $0xa0] sm:$0xff]
      %v5616 = vld [vmem:[%s5594 + $0xa8] sm:$0xff]
      %v5617 = vld [vmem:[%s5594 + $0xb0] sm:$0xff]
      %v5618 = vld [vmem:[%s5594 + $0xb8] sm:$0xff]
      %v5619 = vld [vmem:[%s5594 + $0xc0] sm:$0xff]
      %v5620 = vld [vmem:[%s5594 + $0xc8] sm:$0xff]
      %v5621 = vld [vmem:[%s5594 + $0xd0] sm:$0xff]
      %v5622 = vld [vmem:[%s5594 + $0xd8] sm:$0xff]
      %v5623 = vld [vmem:[%s5594 + $0xe0] sm:$0xff]
      %v5624 = vld [vmem:[%s5594 + $0xe8] sm:$0xff]
      %v5625 = vld [vmem:[%s5594 + $0xf0] sm:$0xff]
      %v5626 = vld [vmem:[%s5594 + $0xf8] sm:$0xff]
      %v5627 = vld [vmem:[%s5594 + $0x100] sm:$0xff]
      %v5628 = vld [vmem:[%s5594 + $0x108] sm:$0xff]
      %v5629 = vld [vmem:[%s5594 + $0x110] sm:$0xff]
      %v5630 = vld [vmem:[%s5594 + $0x118] sm:$0xff]
      %v5631 = vld [vmem:[%s5594 + $0x120] sm:$0xff]
      %v5632 = vld [vmem:[%s5594 + $0x128] sm:$0xff]
      %v5633 = vld [vmem:[%s5594 + $0x130] sm:$0xff]
      %v5634 = vld [vmem:[%s5594 + $0x138] sm:$0xff]
      %s5635 = scalar_lea.vmem %s5, 256
      %v5636 = vld [vmem:[%s5635] sm:$0xff]
      %v5637 = vld [vmem:[%s5635 + $0x8] sm:$0xff]
      %v5638 = vld [vmem:[%s5635 + $0x10] sm:$0xff]
      %v5639 = vld [vmem:[%s5635 + $0x18] sm:$0xff]
      %v5640 = vld [vmem:[%s5635 + $0x20] sm:$0xff]
      %v5641 = vld [vmem:[%s5635 + $0x28] sm:$0xff]
      %v5642 = vld [vmem:[%s5635 + $0x30] sm:$0xff]
      %v5643 = vld [vmem:[%s5635 + $0x38] sm:$0xff]
      %s5644 = scalar_lea.vmem %s6, 4
      %v5645 = vld [vmem:[%s5644] sm:$0x1]
      %v5647 = vsel %vm511, %v5565, 0
      %v5650 = vsel %vm511, %v5566, 0
      %v5653 = vsel %vm511, %v5567, 0
      %v5656 = vsel %vm511, %v5568, 0
      %v5659 = vsel %vm511, %v5569, 0
      %v5662 = vsel %vm511, %v5570, 0
      %v5665 = vsel %vm511, %v5571, 0
      %v5668 = vsel %vm511, %v5572, 0
      %v5671 = vsel %vm511, %v5573, 0
      %v5674 = vsel %vm511, %v5574, 0
      %v5677 = vsel %vm511, %v5575, 0
      %v5680 = vsel %vm511, %v5576, 0
      %v5683 = vsel %vm511, %v5577, 0
      %v5686 = vsel %vm511, %v5578, 0
      %v5689 = vsel %vm511, %v5579, 0
      %v5692 = vsel %vm511, %v5580, 0
      %v5695 = vsel %vm511, %v5581, 0
      %v5698 = vsel %vm511, %v5582, 0
      %v5701 = vsel %vm511, %v5583, 0
      %v5704 = vsel %vm511, %v5584, 0
      %v5707 = vsel %vm511, %v5585, 0
      %v5710 = vsel %vm511, %v5586, 0
      %v5713 = vsel %vm511, %v5587, 0
      %v5716 = vsel %vm511, %v5588, 0
      %5718 = vmatpush.msra.mxu0 0.0
      %5719 = vmatpush.msra.mxu0 0.0
      %5720 = vmatpush.msra.mxu0 0.0
      %5721 = vmatpush.msra.mxu0 0.0
      %5722 = vmatpush.msra.mxu0 0.0
      %5723 = vmatpush.msra.mxu0 0.0
      %5724 = vmatpush.msra.mxu0 0.0
      %5725 = vmatpush.msra.mxu0 0.0
      %5726 = vmatpush.msra.mxu0 0.0
      %5727 = vmatpush.msra.mxu0 0.0
      %5728 = vmatpush.msra.mxu0 0.0
      %5729 = vmatpush.msra.mxu0 0.0
      %5730 = vmatpush.msra.mxu0 %v5593
      %5731 = vmatpush.msra.mxu0 %v5592
      %5732 = vmatpush.msra.mxu0 %v5591
      %5733 = vmatpush.msra.mxu0 %v5590
      %5734 = vmatmul.f32.gmra.mxu0 %v5647
      %v5735 = vpop.f32.mrf.mxu0
      %v5736 = vadd.f32 0.0, %v5735
      %5737 = vmatmul.f32.gmra.mxu0 %v5650
      %v5738 = vpop.f32.mrf.mxu0
      %v5739 = vadd.f32 0.0, %v5738
      %5740 = vmatmul.f32.gmra.mxu0 %v5653
      %v5741 = vpop.f32.mrf.mxu0
      %v5742 = vadd.f32 0.0, %v5741
      %5743 = vmatmul.f32.gmra.mxu0 %v5656
      %v5744 = vpop.f32.mrf.mxu0
      %v5745 = vadd.f32 0.0, %v5744
      %5746 = vmatmul.f32.gmra.mxu0 %v5659
      %v5747 = vpop.f32.mrf.mxu0
      %v5748 = vadd.f32 0.0, %v5747
      %5749 = vmatmul.f32.gmra.mxu0 %v5662
      %v5750 = vpop.f32.mrf.mxu0
      %v5751 = vadd.f32 0.0, %v5750
      %5752 = vmatmul.f32.gmra.mxu0 %v5665
      %v5753 = vpop.f32.mrf.mxu0
      %v5754 = vadd.f32 0.0, %v5753
      %5755 = vmatmul.f32.gmra.mxu0 %v5668
      %v5756 = vpop.f32.mrf.mxu0
      %v5757 = vadd.f32 0.0, %v5756
      %5758 = vmatmul.f32.gmra.mxu0 %v5671
      %v5759 = vpop.f32.mrf.mxu0
      %v5760 = vadd.f32 0.0, %v5759
      %5761 = vmatmul.f32.gmra.mxu0 %v5674
      %v5762 = vpop.f32.mrf.mxu0
      %v5763 = vadd.f32 0.0, %v5762
      %5764 = vmatmul.f32.gmra.mxu0 %v5677
      %v5765 = vpop.f32.mrf.mxu0
      %v5766 = vadd.f32 0.0, %v5765
      %5767 = vmatmul.f32.gmra.mxu0 %v5680
      %v5768 = vpop.f32.mrf.mxu0
      %v5769 = vadd.f32 0.0, %v5768
      %5770 = vmatmul.f32.gmra.mxu0 %v5683
      %v5771 = vpop.f32.mrf.mxu0
      %v5772 = vadd.f32 0.0, %v5771
      %5773 = vmatmul.f32.gmra.mxu0 %v5686
      %v5774 = vpop.f32.mrf.mxu0
      %v5775 = vadd.f32 0.0, %v5774
      %5776 = vmatmul.f32.gmra.mxu0 %v5689
      %v5777 = vpop.f32.mrf.mxu0
      %v5778 = vadd.f32 0.0, %v5777
      %5779 = vmatmul.f32.gmra.mxu0 %v5692
      %v5780 = vpop.f32.mrf.mxu0
      %v5781 = vadd.f32 0.0, %v5780
      %5782 = vmatmul.f32.gmra.mxu0 %v5695
      %v5783 = vpop.f32.mrf.mxu0
      %v5784 = vadd.f32 0.0, %v5783
      %5785 = vmatmul.f32.gmra.mxu0 %v5698
      %v5786 = vpop.f32.mrf.mxu0
      %v5787 = vadd.f32 0.0, %v5786
      %5788 = vmatmul.f32.gmra.mxu0 %v5701
      %v5789 = vpop.f32.mrf.mxu0
      %v5790 = vadd.f32 0.0, %v5789
      %5791 = vmatmul.f32.gmra.mxu0 %v5704
      %v5792 = vpop.f32.mrf.mxu0
      %v5793 = vadd.f32 0.0, %v5792
      %5794 = vmatmul.f32.gmra.mxu0 %v5707
      %v5795 = vpop.f32.mrf.mxu0
      %v5796 = vadd.f32 0.0, %v5795
      %5797 = vmatmul.f32.gmra.mxu0 %v5710
      %v5798 = vpop.f32.mrf.mxu0
      %v5799 = vadd.f32 0.0, %v5798
      %5800 = vmatmul.f32.gmra.mxu0 %v5713
      %v5801 = vpop.f32.mrf.mxu0
      %v5802 = vadd.f32 0.0, %v5801
      %5803 = vmatmul.f32.gmra.mxu0 %v5716
      %v5804 = vpop.f32.mrf.mxu0
      %v5805 = vadd.f32 0.0, %v5804
      %5806 = vdwg.mxu0
      %5807 = vmatpush.msra.mxu0 %v5781
      %5808 = vmatpush.msra.mxu0 %v5778
      %5809 = vmatpush.msra.mxu0 %v5775
      %5810 = vmatpush.msra.mxu0 %v5772
      %5811 = vmatpush.msra.mxu0 %v5769
      %5812 = vmatpush.msra.mxu0 %v5766
      %5813 = vmatpush.msra.mxu0 %v5763
      %5814 = vmatpush.msra.mxu0 %v5760
      %5815 = vmatpush.msra.mxu0 %v5757
      %5816 = vmatpush.msra.mxu0 %v5754
      %5817 = vmatpush.msra.mxu0 %v5751
      %5818 = vmatpush.msra.mxu0 %v5748
      %5819 = vmatpush.msra.mxu0 %v5745
      %5820 = vmatpush.msra.mxu0 %v5742
      %5821 = vmatpush.msra.mxu0 %v5739
      %5822 = vmatpush.msra.mxu0 %v5736
      %5823 = vmatmul.f32.gmra.mxu0 %v306
      %v5824 = vpop.f32.mrf.mxu0
      %v5825 = vadd.f32 %v5595, %v5824
      %5826 = vmatmul.f32.gmra.mxu0 %v308
      %v5827 = vpop.f32.mrf.mxu0
      %v5828 = vadd.f32 %v5596, %v5827
      %5829 = vmatmul.f32.gmra.mxu0 %v310
      %v5830 = vpop.f32.mrf.mxu0
      %v5831 = vadd.f32 %v5597, %v5830
      %5832 = vmatmul.f32.gmra.mxu0 %v312
      %v5833 = vpop.f32.mrf.mxu0
      %v5834 = vadd.f32 %v5598, %v5833
      %5835 = vmatmul.f32.gmra.mxu0 %v314
      %v5836 = vpop.f32.mrf.mxu0
      %v5837 = vadd.f32 %v5599, %v5836
      %5838 = vmatmul.f32.gmra.mxu0 %v316
      %v5839 = vpop.f32.mrf.mxu0
      %v5840 = vadd.f32 %v5600, %v5839
      %5841 = vmatmul.f32.gmra.mxu0 %v318
      %v5842 = vpop.f32.mrf.mxu0
      %v5843 = vadd.f32 %v5601, %v5842
      %5844 = vmatmul.f32.gmra.mxu0 %v320
      %v5845 = vpop.f32.mrf.mxu0
      %v5846 = vadd.f32 %v5602, %v5845
      %5847 = vmatmul.f32.gmra.mxu0 %v322
      %v5848 = vpop.f32.mrf.mxu0
      %v5849 = vadd.f32 %v5603, %v5848
      %5850 = vmatmul.f32.gmra.mxu0 %v324
      %v5851 = vpop.f32.mrf.mxu0
      %v5852 = vadd.f32 %v5604, %v5851
      %5853 = vmatmul.f32.gmra.mxu0 %v326
      %v5854 = vpop.f32.mrf.mxu0
      %v5855 = vadd.f32 %v5605, %v5854
      %5856 = vmatmul.f32.gmra.mxu0 %v328
      %v5857 = vpop.f32.mrf.mxu0
      %v5858 = vadd.f32 %v5606, %v5857
      %5859 = vmatmul.f32.gmra.mxu0 %v330
      %v5860 = vpop.f32.mrf.mxu0
      %v5861 = vadd.f32 %v5607, %v5860
      %5862 = vmatmul.f32.gmra.mxu0 %v332
      %v5863 = vpop.f32.mrf.mxu0
      %v5864 = vadd.f32 %v5608, %v5863
      %5865 = vmatmul.f32.gmra.mxu0 %v334
      %v5866 = vpop.f32.mrf.mxu0
      %v5867 = vadd.f32 %v5609, %v5866
      %5868 = vmatmul.f32.gmra.mxu0 %v336
      %v5869 = vpop.f32.mrf.mxu0
      %v5870 = vadd.f32 %v5610, %v5869
      %5871 = vmatmul.f32.gmra.mxu0 %v338
      %v5872 = vpop.f32.mrf.mxu0
      %v5873 = vadd.f32 %v5611, %v5872
      %5874 = vmatmul.f32.gmra.mxu0 %v340
      %v5875 = vpop.f32.mrf.mxu0
      %v5876 = vadd.f32 %v5612, %v5875
      %5877 = vmatmul.f32.gmra.mxu0 %v342
      %v5878 = vpop.f32.mrf.mxu0
      %v5879 = vadd.f32 %v5613, %v5878
      %5880 = vmatmul.f32.gmra.mxu0 %v344
      %v5881 = vpop.f32.mrf.mxu0
      %v5882 = vadd.f32 %v5614, %v5881
      %5883 = vmatmul.f32.gmra.mxu0 %v346
      %v5884 = vpop.f32.mrf.mxu0
      %v5885 = vadd.f32 %v5615, %v5884
      %5886 = vmatmul.f32.gmra.mxu0 %v348
      %v5887 = vpop.f32.mrf.mxu0
      %v5888 = vadd.f32 %v5616, %v5887
      %5889 = vmatmul.f32.gmra.mxu0 %v350
      %v5890 = vpop.f32.mrf.mxu0
      %v5891 = vadd.f32 %v5617, %v5890
      %5892 = vmatmul.f32.gmra.mxu0 %v352
      %v5893 = vpop.f32.mrf.mxu0
      %v5894 = vadd.f32 %v5618, %v5893
      %5895 = vmatmul.f32.gmra.mxu0 %v354
      %v5896 = vpop.f32.mrf.mxu0
      %v5897 = vadd.f32 %v5619, %v5896
      %5898 = vmatmul.f32.gmra.mxu0 %v356
      %v5899 = vpop.f32.mrf.mxu0
      %v5900 = vadd.f32 %v5620, %v5899
      %5901 = vmatmul.f32.gmra.mxu0 %v358
      %v5902 = vpop.f32.mrf.mxu0
      %v5903 = vadd.f32 %v5621, %v5902
      %5904 = vmatmul.f32.gmra.mxu0 %v360
      %v5905 = vpop.f32.mrf.mxu0
      %v5906 = vadd.f32 %v5622, %v5905
      %5907 = vmatmul.f32.gmra.mxu0 %v362
      %v5908 = vpop.f32.mrf.mxu0
      %v5909 = vadd.f32 %v5623, %v5908
      %5910 = vmatmul.f32.gmra.mxu0 %v364
      %v5911 = vpop.f32.mrf.mxu0
      %v5912 = vadd.f32 %v5624, %v5911
      %5913 = vmatmul.f32.gmra.mxu0 %v366
      %v5914 = vpop.f32.mrf.mxu0
      %v5915 = vadd.f32 %v5625, %v5914
      %5916 = vmatmul.f32.gmra.mxu0 %v368
      %v5917 = vpop.f32.mrf.mxu0
      %v5918 = vadd.f32 %v5626, %v5917
      %5919 = vmatmul.f32.gmra.mxu0 %v370
      %v5920 = vpop.f32.mrf.mxu0
      %v5921 = vadd.f32 %v5627, %v5920
      %5922 = vmatmul.f32.gmra.mxu0 %v372
      %v5923 = vpop.f32.mrf.mxu0
      %v5924 = vadd.f32 %v5628, %v5923
      %5925 = vmatmul.f32.gmra.mxu0 %v374
      %v5926 = vpop.f32.mrf.mxu0
      %v5927 = vadd.f32 %v5629, %v5926
      %5928 = vmatmul.f32.gmra.mxu0 %v376
      %v5929 = vpop.f32.mrf.mxu0
      %v5930 = vadd.f32 %v5630, %v5929
      %5931 = vmatmul.f32.gmra.mxu0 %v378
      %v5932 = vpop.f32.mrf.mxu0
      %v5933 = vadd.f32 %v5631, %v5932
      %5934 = vmatmul.f32.gmra.mxu0 %v380
      %v5935 = vpop.f32.mrf.mxu0
      %v5936 = vadd.f32 %v5632, %v5935
      %5937 = vmatmul.f32.gmra.mxu0 %v382
      %v5938 = vpop.f32.mrf.mxu0
      %v5939 = vadd.f32 %v5633, %v5938
      %5940 = vmatmul.f32.gmra.mxu0 %v384
      %v5941 = vpop.f32.mrf.mxu0
      %v5942 = vadd.f32 %v5634, %v5941
      %5943 = vdwg.mxu0
      %5944 = vmatpush.msra.mxu0 0.0
      %5945 = vmatpush.msra.mxu0 0.0
      %5946 = vmatpush.msra.mxu0 0.0
      %5947 = vmatpush.msra.mxu0 0.0
      %5948 = vmatpush.msra.mxu0 0.0
      %5949 = vmatpush.msra.mxu0 0.0
      %5950 = vmatpush.msra.mxu0 0.0
      %5951 = vmatpush.msra.mxu0 0.0
      %5952 = vmatpush.msra.mxu0 %v5805
      %5953 = vmatpush.msra.mxu0 %v5802
      %5954 = vmatpush.msra.mxu0 %v5799
      %5955 = vmatpush.msra.mxu0 %v5796
      %5956 = vmatpush.msra.mxu0 %v5793
      %5957 = vmatpush.msra.mxu0 %v5790
      %5958 = vmatpush.msra.mxu0 %v5787
      %5959 = vmatpush.msra.mxu0 %v5784
      %5960 = vmatmul.f32.gmra.mxu0 %v675
      %v5961 = vpop.f32.mrf.mxu0
      %v5962 = vadd.f32 %v5825, %v5961
      %5963 = vmatmul.f32.gmra.mxu0 %v678
      %v5964 = vpop.f32.mrf.mxu0
      %v5965 = vadd.f32 %v5828, %v5964
      %5966 = vmatmul.f32.gmra.mxu0 %v681
      %v5967 = vpop.f32.mrf.mxu0
      %v5968 = vadd.f32 %v5831, %v5967
      %5969 = vmatmul.f32.gmra.mxu0 %v684
      %v5970 = vpop.f32.mrf.mxu0
      %v5971 = vadd.f32 %v5834, %v5970
      %5972 = vmatmul.f32.gmra.mxu0 %v687
      %v5973 = vpop.f32.mrf.mxu0
      %v5974 = vadd.f32 %v5837, %v5973
      %5975 = vmatmul.f32.gmra.mxu0 %v690
      %v5976 = vpop.f32.mrf.mxu0
      %v5977 = vadd.f32 %v5840, %v5976
      %5978 = vmatmul.f32.gmra.mxu0 %v693
      %v5979 = vpop.f32.mrf.mxu0
      %v5980 = vadd.f32 %v5843, %v5979
      %5981 = vmatmul.f32.gmra.mxu0 %v696
      %v5982 = vpop.f32.mrf.mxu0
      %v5983 = vadd.f32 %v5846, %v5982
      %5984 = vmatmul.f32.gmra.mxu0 %v699
      %v5985 = vpop.f32.mrf.mxu0
      %v5986 = vadd.f32 %v5849, %v5985
      %5987 = vmatmul.f32.gmra.mxu0 %v702
      %v5988 = vpop.f32.mrf.mxu0
      %v5989 = vadd.f32 %v5852, %v5988
      %5990 = vmatmul.f32.gmra.mxu0 %v705
      %v5991 = vpop.f32.mrf.mxu0
      %v5992 = vadd.f32 %v5855, %v5991
      %5993 = vmatmul.f32.gmra.mxu0 %v708
      %v5994 = vpop.f32.mrf.mxu0
      %v5995 = vadd.f32 %v5858, %v5994
      %5996 = vmatmul.f32.gmra.mxu0 %v711
      %v5997 = vpop.f32.mrf.mxu0
      %v5998 = vadd.f32 %v5861, %v5997
      %5999 = vmatmul.f32.gmra.mxu0 %v714
      %v6000 = vpop.f32.mrf.mxu0
      %v6001 = vadd.f32 %v5864, %v6000
      %6002 = vmatmul.f32.gmra.mxu0 %v717
      %v6003 = vpop.f32.mrf.mxu0
      %v6004 = vadd.f32 %v5867, %v6003
      %6005 = vmatmul.f32.gmra.mxu0 %v720
      %v6006 = vpop.f32.mrf.mxu0
      %v6007 = vadd.f32 %v5870, %v6006
      %6008 = vmatmul.f32.gmra.mxu0 %v723
      %v6009 = vpop.f32.mrf.mxu0
      %v6010 = vadd.f32 %v5873, %v6009
      %6011 = vmatmul.f32.gmra.mxu0 %v726
      %v6012 = vpop.f32.mrf.mxu0
      %v6013 = vadd.f32 %v5876, %v6012
      %6014 = vmatmul.f32.gmra.mxu0 %v729
      %v6015 = vpop.f32.mrf.mxu0
      %v6016 = vadd.f32 %v5879, %v6015
      %6017 = vmatmul.f32.gmra.mxu0 %v732
      %v6018 = vpop.f32.mrf.mxu0
      %v6019 = vadd.f32 %v5882, %v6018
      %6020 = vmatmul.f32.gmra.mxu0 %v735
      %v6021 = vpop.f32.mrf.mxu0
      %v6022 = vadd.f32 %v5885, %v6021
      %6023 = vmatmul.f32.gmra.mxu0 %v738
      %v6024 = vpop.f32.mrf.mxu0
      %v6025 = vadd.f32 %v5888, %v6024
      %6026 = vmatmul.f32.gmra.mxu0 %v741
      %v6027 = vpop.f32.mrf.mxu0
      %v6028 = vadd.f32 %v5891, %v6027
      %6029 = vmatmul.f32.gmra.mxu0 %v744
      %v6030 = vpop.f32.mrf.mxu0
      %v6031 = vadd.f32 %v5894, %v6030
      %6032 = vmatmul.f32.gmra.mxu0 %v747
      %v6033 = vpop.f32.mrf.mxu0
      %v6034 = vadd.f32 %v5897, %v6033
      %6035 = vmatmul.f32.gmra.mxu0 %v750
      %v6036 = vpop.f32.mrf.mxu0
      %v6037 = vadd.f32 %v5900, %v6036
      %6038 = vmatmul.f32.gmra.mxu0 %v753
      %v6039 = vpop.f32.mrf.mxu0
      %v6040 = vadd.f32 %v5903, %v6039
      %6041 = vmatmul.f32.gmra.mxu0 %v756
      %v6042 = vpop.f32.mrf.mxu0
      %v6043 = vadd.f32 %v5906, %v6042
      %6044 = vmatmul.f32.gmra.mxu0 %v759
      %v6045 = vpop.f32.mrf.mxu0
      %v6046 = vadd.f32 %v5909, %v6045
      %6047 = vmatmul.f32.gmra.mxu0 %v762
      %v6048 = vpop.f32.mrf.mxu0
      %v6049 = vadd.f32 %v5912, %v6048
      %6050 = vmatmul.f32.gmra.mxu0 %v765
      %v6051 = vpop.f32.mrf.mxu0
      %v6052 = vadd.f32 %v5915, %v6051
      %6053 = vmatmul.f32.gmra.mxu0 %v768
      %v6054 = vpop.f32.mrf.mxu0
      %v6055 = vadd.f32 %v5918, %v6054
      %6056 = vmatmul.f32.gmra.mxu0 %v771
      %v6057 = vpop.f32.mrf.mxu0
      %v6058 = vadd.f32 %v5921, %v6057
      %6059 = vmatmul.f32.gmra.mxu0 %v774
      %v6060 = vpop.f32.mrf.mxu0
      %v6061 = vadd.f32 %v5924, %v6060
      %6062 = vmatmul.f32.gmra.mxu0 %v777
      %v6063 = vpop.f32.mrf.mxu0
      %v6064 = vadd.f32 %v5927, %v6063
      %6065 = vmatmul.f32.gmra.mxu0 %v780
      %v6066 = vpop.f32.mrf.mxu0
      %v6067 = vadd.f32 %v5930, %v6066
      %6068 = vmatmul.f32.gmra.mxu0 %v783
      %v6069 = vpop.f32.mrf.mxu0
      %v6070 = vadd.f32 %v5933, %v6069
      %6071 = vmatmul.f32.gmra.mxu0 %v786
      %v6072 = vpop.f32.mrf.mxu0
      %v6073 = vadd.f32 %v5936, %v6072
      %6074 = vmatmul.f32.gmra.mxu0 %v789
      %v6075 = vpop.f32.mrf.mxu0
      %v6076 = vadd.f32 %v5939, %v6075
      %6077 = vmatmul.f32.gmra.mxu0 %v792
      %v6078 = vpop.f32.mrf.mxu0
      %v6079 = vadd.f32 %v5942, %v6078
      %6080 = vdwg.mxu0
      %vm6081 = vcmp.ge.f32.partialorder %v5962, 0.0
      %vm6082 = vcmp.ge.f32.partialorder %v5965, 0.0
      %vm6083 = vcmp.ge.f32.partialorder %v5968, 0.0
      %vm6084 = vcmp.ge.f32.partialorder %v5971, 0.0
      %vm6085 = vcmp.ge.f32.partialorder %v5974, 0.0
      %vm6086 = vcmp.ge.f32.partialorder %v5977, 0.0
      %vm6087 = vcmp.ge.f32.partialorder %v5980, 0.0
      %vm6088 = vcmp.ge.f32.partialorder %v5983, 0.0
      %vm6089 = vcmp.ge.f32.partialorder %v5986, 0.0
      %vm6090 = vcmp.ge.f32.partialorder %v5989, 0.0
      %vm6091 = vcmp.ge.f32.partialorder %v5992, 0.0
      %vm6092 = vcmp.ge.f32.partialorder %v5995, 0.0
      %vm6093 = vcmp.ge.f32.partialorder %v5998, 0.0
      %vm6094 = vcmp.ge.f32.partialorder %v6001, 0.0
      %vm6095 = vcmp.ge.f32.partialorder %v6004, 0.0
      %vm6096 = vcmp.ge.f32.partialorder %v6007, 0.0
      %vm6097 = vcmp.ge.f32.partialorder %v6010, 0.0
      %vm6098 = vcmp.ge.f32.partialorder %v6013, 0.0
      %vm6099 = vcmp.ge.f32.partialorder %v6016, 0.0
      %vm6100 = vcmp.ge.f32.partialorder %v6019, 0.0
      %vm6101 = vcmp.ge.f32.partialorder %v6022, 0.0
      %vm6102 = vcmp.ge.f32.partialorder %v6025, 0.0
      %vm6103 = vcmp.ge.f32.partialorder %v6028, 0.0
      %vm6104 = vcmp.ge.f32.partialorder %v6031, 0.0
      %vm6105 = vcmp.ge.f32.partialorder %v6034, 0.0
      %vm6106 = vcmp.ge.f32.partialorder %v6037, 0.0
      %vm6107 = vcmp.ge.f32.partialorder %v6040, 0.0
      %vm6108 = vcmp.ge.f32.partialorder %v6043, 0.0
      %vm6109 = vcmp.ge.f32.partialorder %v6046, 0.0
      %vm6110 = vcmp.ge.f32.partialorder %v6049, 0.0
      %vm6111 = vcmp.ge.f32.partialorder %v6052, 0.0
      %vm6112 = vcmp.ge.f32.partialorder %v6055, 0.0
      %vm6113 = vcmp.ge.f32.partialorder %v6058, 0.0
      %vm6114 = vcmp.ge.f32.partialorder %v6061, 0.0
      %vm6115 = vcmp.ge.f32.partialorder %v6064, 0.0
      %vm6116 = vcmp.ge.f32.partialorder %v6067, 0.0
      %vm6117 = vcmp.ge.f32.partialorder %v6070, 0.0
      %vm6118 = vcmp.ge.f32.partialorder %v6073, 0.0
      %vm6119 = vcmp.ge.f32.partialorder %v6076, 0.0
      %vm6120 = vcmp.ge.f32.partialorder %v6079, 0.0
      %v6121 = vmul.f32 %v5962, 0.01
      %v6122 = vmul.f32 %v5965, 0.01
      %v6123 = vmul.f32 %v5968, 0.01
      %v6124 = vmul.f32 %v5971, 0.01
      %v6125 = vmul.f32 %v5974, 0.01
      %v6126 = vmul.f32 %v5977, 0.01
      %v6127 = vmul.f32 %v5980, 0.01
      %v6128 = vmul.f32 %v5983, 0.01
      %v6129 = vmul.f32 %v5986, 0.01
      %v6130 = vmul.f32 %v5989, 0.01
      %v6131 = vmul.f32 %v5992, 0.01
      %v6132 = vmul.f32 %v5995, 0.01
      %v6133 = vmul.f32 %v5998, 0.01
      %v6134 = vmul.f32 %v6001, 0.01
      %v6135 = vmul.f32 %v6004, 0.01
      %v6136 = vmul.f32 %v6007, 0.01
      %v6137 = vmul.f32 %v6010, 0.01
      %v6138 = vmul.f32 %v6013, 0.01
      %v6139 = vmul.f32 %v6016, 0.01
      %v6140 = vmul.f32 %v6019, 0.01
      %v6141 = vmul.f32 %v6022, 0.01
      %v6142 = vmul.f32 %v6025, 0.01
      %v6143 = vmul.f32 %v6028, 0.01
      %v6144 = vmul.f32 %v6031, 0.01
      %v6145 = vmul.f32 %v6034, 0.01
      %v6146 = vmul.f32 %v6037, 0.01
      %v6147 = vmul.f32 %v6040, 0.01
      %v6148 = vmul.f32 %v6043, 0.01
      %v6149 = vmul.f32 %v6046, 0.01
      %v6150 = vmul.f32 %v6049, 0.01
      %v6151 = vmul.f32 %v6052, 0.01
      %v6152 = vmul.f32 %v6055, 0.01
      %v6153 = vmul.f32 %v6058, 0.01
      %v6154 = vmul.f32 %v6061, 0.01
      %v6155 = vmul.f32 %v6064, 0.01
      %v6156 = vmul.f32 %v6067, 0.01
      %v6157 = vmul.f32 %v6070, 0.01
      %v6158 = vmul.f32 %v6073, 0.01
      %v6159 = vmul.f32 %v6076, 0.01
      %v6160 = vmul.f32 %v6079, 0.01
      %v6161 = vsel %vm6081, %v5962, %v6121
      %v6162 = vsel %vm6082, %v5965, %v6122
      %v6163 = vsel %vm6083, %v5968, %v6123
      %v6164 = vsel %vm6084, %v5971, %v6124
      %v6165 = vsel %vm6085, %v5974, %v6125
      %v6166 = vsel %vm6086, %v5977, %v6126
      %v6167 = vsel %vm6087, %v5980, %v6127
      %v6168 = vsel %vm6088, %v5983, %v6128
      %v6169 = vsel %vm6089, %v5986, %v6129
      %v6170 = vsel %vm6090, %v5989, %v6130
      %v6171 = vsel %vm6091, %v5992, %v6131
      %v6172 = vsel %vm6092, %v5995, %v6132
      %v6173 = vsel %vm6093, %v5998, %v6133
      %v6174 = vsel %vm6094, %v6001, %v6134
      %v6175 = vsel %vm6095, %v6004, %v6135
      %v6176 = vsel %vm6096, %v6007, %v6136
      %v6177 = vsel %vm6097, %v6010, %v6137
      %v6178 = vsel %vm6098, %v6013, %v6138
      %v6179 = vsel %vm6099, %v6016, %v6139
      %v6180 = vsel %vm6100, %v6019, %v6140
      %v6181 = vsel %vm6101, %v6022, %v6141
      %v6182 = vsel %vm6102, %v6025, %v6142
      %v6183 = vsel %vm6103, %v6028, %v6143
      %v6184 = vsel %vm6104, %v6031, %v6144
      %v6185 = vsel %vm6105, %v6034, %v6145
      %v6186 = vsel %vm6106, %v6037, %v6146
      %v6187 = vsel %vm6107, %v6040, %v6147
      %v6188 = vsel %vm6108, %v6043, %v6148
      %v6189 = vsel %vm6109, %v6046, %v6149
      %v6190 = vsel %vm6110, %v6049, %v6150
      %v6191 = vsel %vm6111, %v6052, %v6151
      %v6192 = vsel %vm6112, %v6055, %v6152
      %v6193 = vsel %vm6113, %v6058, %v6153
      %v6194 = vsel %vm6114, %v6061, %v6154
      %v6195 = vsel %vm6115, %v6064, %v6155
      %v6196 = vsel %vm6116, %v6067, %v6156
      %v6197 = vsel %vm6117, %v6070, %v6157
      %v6198 = vsel %vm6118, %v6073, %v6158
      %v6199 = vsel %vm6119, %v6076, %v6159
      %v6200 = vsel %vm6120, %v6079, %v6160
      %6201 = vmatpush.msra.mxu0 %v6176
      %6202 = vmatpush.msra.mxu0 %v6175
      %6203 = vmatpush.msra.mxu0 %v6174
      %6204 = vmatpush.msra.mxu0 %v6173
      %6205 = vmatpush.msra.mxu0 %v6172
      %6206 = vmatpush.msra.mxu0 %v6171
      %6207 = vmatpush.msra.mxu0 %v6170
      %6208 = vmatpush.msra.mxu0 %v6169
      %6209 = vmatpush.msra.mxu0 %v6168
      %6210 = vmatpush.msra.mxu0 %v6167
      %6211 = vmatpush.msra.mxu0 %v6166
      %6212 = vmatpush.msra.mxu0 %v6165
      %6213 = vmatpush.msra.mxu0 %v6164
      %6214 = vmatpush.msra.mxu0 %v6163
      %6215 = vmatpush.msra.mxu0 %v6162
      %6216 = vmatpush.msra.mxu0 %v6161
      %6217 = vmatmul.f32.gmra.mxu0 %v386
      %v6218 = vpop.f32.mrf.mxu0
      %v6219 = vadd.f32 0.0, %v6218
      %6220 = vmatmul.f32.gmra.mxu0 %v389
      %v6221 = vpop.f32.mrf.mxu0
      %v6222 = vadd.f32 0.0, %v6221
      %6223 = vmatmul.f32.gmra.mxu0 %v392
      %v6224 = vpop.f32.mrf.mxu0
      %v6225 = vadd.f32 0.0, %v6224
      %6226 = vmatmul.f32.gmra.mxu0 %v395
      %v6227 = vpop.f32.mrf.mxu0
      %v6228 = vadd.f32 0.0, %v6227
      %6229 = vmatmul.f32.gmra.mxu0 %v398
      %v6230 = vpop.f32.mrf.mxu0
      %v6231 = vadd.f32 0.0, %v6230
      %6232 = vmatmul.f32.gmra.mxu0 %v401
      %v6233 = vpop.f32.mrf.mxu0
      %v6234 = vadd.f32 0.0, %v6233
      %6235 = vmatmul.f32.gmra.mxu0 %v404
      %v6236 = vpop.f32.mrf.mxu0
      %v6237 = vadd.f32 0.0, %v6236
      %6238 = vmatmul.f32.gmra.mxu0 %v407
      %v6239 = vpop.f32.mrf.mxu0
      %v6240 = vadd.f32 0.0, %v6239
      %6241 = vmatmul.f32.gmra.mxu0 %v410
      %v6242 = vpop.f32.mrf.mxu0
      %v6243 = vadd.f32 0.0, %v6242
      %6244 = vmatmul.f32.gmra.mxu0 %v413
      %v6245 = vpop.f32.mrf.mxu0
      %v6246 = vadd.f32 0.0, %v6245
      %6247 = vmatmul.f32.gmra.mxu0 %v416
      %v6248 = vpop.f32.mrf.mxu0
      %v6249 = vadd.f32 0.0, %v6248
      %6250 = vmatmul.f32.gmra.mxu0 %v419
      %v6251 = vpop.f32.mrf.mxu0
      %v6252 = vadd.f32 0.0, %v6251
      %6253 = vmatmul.f32.gmra.mxu0 %v422
      %v6254 = vpop.f32.mrf.mxu0
      %v6255 = vadd.f32 0.0, %v6254
      %6256 = vmatmul.f32.gmra.mxu0 %v425
      %v6257 = vpop.f32.mrf.mxu0
      %v6258 = vadd.f32 0.0, %v6257
      %6259 = vmatmul.f32.gmra.mxu0 %v428
      %v6260 = vpop.f32.mrf.mxu0
      %v6261 = vadd.f32 0.0, %v6260
      %6262 = vmatmul.f32.gmra.mxu0 %v431
      %v6263 = vpop.f32.mrf.mxu0
      %v6264 = vadd.f32 0.0, %v6263
      %6265 = vmatmul.f32.gmra.mxu0 %v434
      %v6266 = vpop.f32.mrf.mxu0
      %v6267 = vadd.f32 0.0, %v6266
      %6268 = vmatmul.f32.gmra.mxu0 %v437
      %v6269 = vpop.f32.mrf.mxu0
      %v6270 = vadd.f32 0.0, %v6269
      %6271 = vmatmul.f32.gmra.mxu0 %v440
      %v6272 = vpop.f32.mrf.mxu0
      %v6273 = vadd.f32 0.0, %v6272
      %6274 = vmatmul.f32.gmra.mxu0 %v443
      %v6275 = vpop.f32.mrf.mxu0
      %v6276 = vadd.f32 0.0, %v6275
      %6277 = vmatmul.f32.gmra.mxu0 %v446
      %v6278 = vpop.f32.mrf.mxu0
      %v6279 = vadd.f32 0.0, %v6278
      %6280 = vmatmul.f32.gmra.mxu0 %v449
      %v6281 = vpop.f32.mrf.mxu0
      %v6282 = vadd.f32 0.0, %v6281
      %6283 = vmatmul.f32.gmra.mxu0 %v452
      %v6284 = vpop.f32.mrf.mxu0
      %v6285 = vadd.f32 0.0, %v6284
      %6286 = vmatmul.f32.gmra.mxu0 %v455
      %v6287 = vpop.f32.mrf.mxu0
      %v6288 = vadd.f32 0.0, %v6287
      %6289 = vdwg.mxu0
      %6290 = vmatpush.msra.mxu0 %v6192
      %6291 = vmatpush.msra.mxu0 %v6191
      %6292 = vmatpush.msra.mxu0 %v6190
      %6293 = vmatpush.msra.mxu0 %v6189
      %6294 = vmatpush.msra.mxu0 %v6188
      %6295 = vmatpush.msra.mxu0 %v6187
      %6296 = vmatpush.msra.mxu0 %v6186
      %6297 = vmatpush.msra.mxu0 %v6185
      %6298 = vmatpush.msra.mxu0 %v6184
      %6299 = vmatpush.msra.mxu0 %v6183
      %6300 = vmatpush.msra.mxu0 %v6182
      %6301 = vmatpush.msra.mxu0 %v6181
      %6302 = vmatpush.msra.mxu0 %v6180
      %6303 = vmatpush.msra.mxu0 %v6179
      %6304 = vmatpush.msra.mxu0 %v6178
      %6305 = vmatpush.msra.mxu0 %v6177
      %6306 = vmatmul.f32.gmra.mxu0 %v387
      %v6307 = vpop.f32.mrf.mxu0
      %v6308 = vadd.f32 %v6219, %v6307
      %6309 = vmatmul.f32.gmra.mxu0 %v390
      %v6310 = vpop.f32.mrf.mxu0
      %v6311 = vadd.f32 %v6222, %v6310
      %6312 = vmatmul.f32.gmra.mxu0 %v393
      %v6313 = vpop.f32.mrf.mxu0
      %v6314 = vadd.f32 %v6225, %v6313
      %6315 = vmatmul.f32.gmra.mxu0 %v396
      %v6316 = vpop.f32.mrf.mxu0
      %v6317 = vadd.f32 %v6228, %v6316
      %6318 = vmatmul.f32.gmra.mxu0 %v399
      %v6319 = vpop.f32.mrf.mxu0
      %v6320 = vadd.f32 %v6231, %v6319
      %6321 = vmatmul.f32.gmra.mxu0 %v402
      %v6322 = vpop.f32.mrf.mxu0
      %v6323 = vadd.f32 %v6234, %v6322
      %6324 = vmatmul.f32.gmra.mxu0 %v405
      %v6325 = vpop.f32.mrf.mxu0
      %v6326 = vadd.f32 %v6237, %v6325
      %6327 = vmatmul.f32.gmra.mxu0 %v408
      %v6328 = vpop.f32.mrf.mxu0
      %v6329 = vadd.f32 %v6240, %v6328
      %6330 = vmatmul.f32.gmra.mxu0 %v411
      %v6331 = vpop.f32.mrf.mxu0
      %v6332 = vadd.f32 %v6243, %v6331
      %6333 = vmatmul.f32.gmra.mxu0 %v414
      %v6334 = vpop.f32.mrf.mxu0
      %v6335 = vadd.f32 %v6246, %v6334
      %6336 = vmatmul.f32.gmra.mxu0 %v417
      %v6337 = vpop.f32.mrf.mxu0
      %v6338 = vadd.f32 %v6249, %v6337
      %6339 = vmatmul.f32.gmra.mxu0 %v420
      %v6340 = vpop.f32.mrf.mxu0
      %v6341 = vadd.f32 %v6252, %v6340
      %6342 = vmatmul.f32.gmra.mxu0 %v423
      %v6343 = vpop.f32.mrf.mxu0
      %v6344 = vadd.f32 %v6255, %v6343
      %6345 = vmatmul.f32.gmra.mxu0 %v426
      %v6346 = vpop.f32.mrf.mxu0
      %v6347 = vadd.f32 %v6258, %v6346
      %6348 = vmatmul.f32.gmra.mxu0 %v429
      %v6349 = vpop.f32.mrf.mxu0
      %v6350 = vadd.f32 %v6261, %v6349
      %6351 = vmatmul.f32.gmra.mxu0 %v432
      %v6352 = vpop.f32.mrf.mxu0
      %v6353 = vadd.f32 %v6264, %v6352
      %6354 = vmatmul.f32.gmra.mxu0 %v435
      %v6355 = vpop.f32.mrf.mxu0
      %v6356 = vadd.f32 %v6267, %v6355
      %6357 = vmatmul.f32.gmra.mxu0 %v438
      %v6358 = vpop.f32.mrf.mxu0
      %v6359 = vadd.f32 %v6270, %v6358
      %6360 = vmatmul.f32.gmra.mxu0 %v441
      %v6361 = vpop.f32.mrf.mxu0
      %v6362 = vadd.f32 %v6273, %v6361
      %6363 = vmatmul.f32.gmra.mxu0 %v444
      %v6364 = vpop.f32.mrf.mxu0
      %v6365 = vadd.f32 %v6276, %v6364
      %6366 = vmatmul.f32.gmra.mxu0 %v447
      %v6367 = vpop.f32.mrf.mxu0
      %v6368 = vadd.f32 %v6279, %v6367
      %6369 = vmatmul.f32.gmra.mxu0 %v450
      %v6370 = vpop.f32.mrf.mxu0
      %v6371 = vadd.f32 %v6282, %v6370
      %6372 = vmatmul.f32.gmra.mxu0 %v453
      %v6373 = vpop.f32.mrf.mxu0
      %v6374 = vadd.f32 %v6285, %v6373
      %6375 = vmatmul.f32.gmra.mxu0 %v456
      %v6376 = vpop.f32.mrf.mxu0
      %v6377 = vadd.f32 %v6288, %v6376
      %6378 = vdwg.mxu0
      %6379 = vmatpush.msra.mxu0 0.0
      %6380 = vmatpush.msra.mxu0 0.0
      %6381 = vmatpush.msra.mxu0 0.0
      %6382 = vmatpush.msra.mxu0 0.0
      %6383 = vmatpush.msra.mxu0 0.0
      %6384 = vmatpush.msra.mxu0 0.0
      %6385 = vmatpush.msra.mxu0 0.0
      %6386 = vmatpush.msra.mxu0 0.0
      %6387 = vmatpush.msra.mxu0 %v6200
      %6388 = vmatpush.msra.mxu0 %v6199
      %6389 = vmatpush.msra.mxu0 %v6198
      %6390 = vmatpush.msra.mxu0 %v6197
      %6391 = vmatpush.msra.mxu0 %v6196
      %6392 = vmatpush.msra.mxu0 %v6195
      %6393 = vmatpush.msra.mxu0 %v6194
      %6394 = vmatpush.msra.mxu0 %v6193
      %6395 = vmatmul.f32.gmra.mxu0 %v1189
      %v6396 = vpop.f32.mrf.mxu0
      %v6397 = vadd.f32 %v6308, %v6396
      %6398 = vmatmul.f32.gmra.mxu0 %v1192
      %v6399 = vpop.f32.mrf.mxu0
      %v6400 = vadd.f32 %v6311, %v6399
      %6401 = vmatmul.f32.gmra.mxu0 %v1195
      %v6402 = vpop.f32.mrf.mxu0
      %v6403 = vadd.f32 %v6314, %v6402
      %6404 = vmatmul.f32.gmra.mxu0 %v1198
      %v6405 = vpop.f32.mrf.mxu0
      %v6406 = vadd.f32 %v6317, %v6405
      %6407 = vmatmul.f32.gmra.mxu0 %v1201
      %v6408 = vpop.f32.mrf.mxu0
      %v6409 = vadd.f32 %v6320, %v6408
      %6410 = vmatmul.f32.gmra.mxu0 %v1204
      %v6411 = vpop.f32.mrf.mxu0
      %v6412 = vadd.f32 %v6323, %v6411
      %6413 = vmatmul.f32.gmra.mxu0 %v1207
      %v6414 = vpop.f32.mrf.mxu0
      %v6415 = vadd.f32 %v6326, %v6414
      %6416 = vmatmul.f32.gmra.mxu0 %v1210
      %v6417 = vpop.f32.mrf.mxu0
      %v6418 = vadd.f32 %v6329, %v6417
      %6419 = vmatmul.f32.gmra.mxu0 %v1213
      %v6420 = vpop.f32.mrf.mxu0
      %v6421 = vadd.f32 %v6332, %v6420
      %6422 = vmatmul.f32.gmra.mxu0 %v1216
      %v6423 = vpop.f32.mrf.mxu0
      %v6424 = vadd.f32 %v6335, %v6423
      %6425 = vmatmul.f32.gmra.mxu0 %v1219
      %v6426 = vpop.f32.mrf.mxu0
      %v6427 = vadd.f32 %v6338, %v6426
      %6428 = vmatmul.f32.gmra.mxu0 %v1222
      %v6429 = vpop.f32.mrf.mxu0
      %v6430 = vadd.f32 %v6341, %v6429
      %6431 = vmatmul.f32.gmra.mxu0 %v1225
      %v6432 = vpop.f32.mrf.mxu0
      %v6433 = vadd.f32 %v6344, %v6432
      %6434 = vmatmul.f32.gmra.mxu0 %v1228
      %v6435 = vpop.f32.mrf.mxu0
      %v6436 = vadd.f32 %v6347, %v6435
      %6437 = vmatmul.f32.gmra.mxu0 %v1231
      %v6438 = vpop.f32.mrf.mxu0
      %v6439 = vadd.f32 %v6350, %v6438
      %6440 = vmatmul.f32.gmra.mxu0 %v1234
      %v6441 = vpop.f32.mrf.mxu0
      %v6442 = vadd.f32 %v6353, %v6441
      %6443 = vmatmul.f32.gmra.mxu0 %v1237
      %v6444 = vpop.f32.mrf.mxu0
      %v6445 = vadd.f32 %v6356, %v6444
      %6446 = vmatmul.f32.gmra.mxu0 %v1240
      %v6447 = vpop.f32.mrf.mxu0
      %v6448 = vadd.f32 %v6359, %v6447
      %6449 = vmatmul.f32.gmra.mxu0 %v1243
      %v6450 = vpop.f32.mrf.mxu0
      %v6451 = vadd.f32 %v6362, %v6450
      %6452 = vmatmul.f32.gmra.mxu0 %v1246
      %v6453 = vpop.f32.mrf.mxu0
      %v6454 = vadd.f32 %v6365, %v6453
      %6455 = vmatmul.f32.gmra.mxu0 %v1249
      %v6456 = vpop.f32.mrf.mxu0
      %v6457 = vadd.f32 %v6368, %v6456
      %6458 = vmatmul.f32.gmra.mxu0 %v1252
      %v6459 = vpop.f32.mrf.mxu0
      %v6460 = vadd.f32 %v6371, %v6459
      %6461 = vmatmul.f32.gmra.mxu0 %v1255
      %v6462 = vpop.f32.mrf.mxu0
      %v6463 = vadd.f32 %v6374, %v6462
      %6464 = vmatmul.f32.gmra.mxu0 %v1258
      %v6465 = vpop.f32.mrf.mxu0
      %v6466 = vadd.f32 %v6377, %v6465
      %6467 = vdwg.mxu0
      %6468 = vst.msk [vmem:[#allocation2] sm:$0xff] %vm511, %v5565
      %6469 = vst.msk [vmem:[#allocation2 + $0x8] sm:$0xff] %vm511, %v5566
      %6470 = vst.msk [vmem:[#allocation2 + $0x10] sm:$0xff] %vm511, %v5567
      %6471 = vst.msk [vmem:[#allocation2 + $0x18] sm:$0xff] %vm511, %v5568
      %6472 = vst.msk [vmem:[#allocation2 + $0x20] sm:$0xff] %vm511, %v5569
      %6473 = vst.msk [vmem:[#allocation2 + $0x28] sm:$0xff] %vm511, %v5570
      %6474 = vst.msk [vmem:[#allocation2 + $0x30] sm:$0xff] %vm511, %v5571
      %6475 = vst.msk [vmem:[#allocation2 + $0x38] sm:$0xff] %vm511, %v5572
      %6476 = vst.msk [vmem:[#allocation2 + $0x40] sm:$0xff] %vm511, %v5573
      %6477 = vst.msk [vmem:[#allocation2 + $0x48] sm:$0xff] %vm511, %v5574
      %6478 = vst.msk [vmem:[#allocation2 + $0x50] sm:$0xff] %vm511, %v5575
      %6479 = vst.msk [vmem:[#allocation2 + $0x58] sm:$0xff] %vm511, %v5576
      %6480 = vst.msk [vmem:[#allocation2 + $0x60] sm:$0xff] %vm511, %v5577
      %6481 = vst.msk [vmem:[#allocation2 + $0x68] sm:$0xff] %vm511, %v5578
      %6482 = vst.msk [vmem:[#allocation2 + $0x70] sm:$0xff] %vm511, %v5579
      %6483 = vst.msk [vmem:[#allocation2 + $0x78] sm:$0xff] %vm511, %v5580
      %6484 = vst.msk [vmem:[#allocation2 + $0x80] sm:$0xff] %vm511, %v5581
      %6485 = vst.msk [vmem:[#allocation2 + $0x88] sm:$0xff] %vm511, %v5582
      %6486 = vst.msk [vmem:[#allocation2 + $0x90] sm:$0xff] %vm511, %v5583
      %6487 = vst.msk [vmem:[#allocation2 + $0x98] sm:$0xff] %vm511, %v5584
      %6488 = vst.msk [vmem:[#allocation2 + $0xa0] sm:$0xff] %vm511, %v5585
      %6489 = vst.msk [vmem:[#allocation2 + $0xa8] sm:$0xff] %vm511, %v5586
      %6490 = vst.msk [vmem:[#allocation2 + $0xb0] sm:$0xff] %vm511, %v5587
      %6491 = vst.msk [vmem:[#allocation2 + $0xb8] sm:$0xff] %vm511, %v5588
      %6516 = vrot.lane.b32.xlu0 %v6397, 32
      %v6517 = vpop.permute.xlu0 %6516
      %6518 = vrot.lane.b32.xlu0 %v6400, 32
      %v6519 = vpop.permute.xlu0 %6518
      %6520 = vrot.lane.b32.xlu0 %v6403, 32
      %v6521 = vpop.permute.xlu0 %6520
      %6522 = vrot.lane.b32.xlu0 %v6406, 32
      %v6523 = vpop.permute.xlu0 %6522
      %6524 = vrot.lane.b32.xlu0 %v6409, 32
      %v6525 = vpop.permute.xlu0 %6524
      %6526 = vrot.lane.b32.xlu0 %v6412, 32
      %v6527 = vpop.permute.xlu0 %6526
      %6528 = vrot.lane.b32.xlu0 %v6415, 32
      %v6529 = vpop.permute.xlu0 %6528
      %6530 = vrot.lane.b32.xlu0 %v6418, 32
      %v6531 = vpop.permute.xlu0 %6530
      %6532 = vrot.lane.b32.xlu0 %v6421, 32
      %v6533 = vpop.permute.xlu0 %6532
      %6534 = vrot.lane.b32.xlu0 %v6424, 32
      %v6535 = vpop.permute.xlu0 %6534
      %6536 = vrot.lane.b32.xlu0 %v6427, 32
      %v6537 = vpop.permute.xlu0 %6536
      %6538 = vrot.lane.b32.xlu0 %v6430, 32
      %v6539 = vpop.permute.xlu0 %6538
      %6540 = vrot.lane.b32.xlu0 %v6433, 32
      %v6541 = vpop.permute.xlu0 %6540
      %6542 = vrot.lane.b32.xlu0 %v6436, 32
      %v6543 = vpop.permute.xlu0 %6542
      %6544 = vrot.lane.b32.xlu0 %v6439, 32
      %v6545 = vpop.permute.xlu0 %6544
      %6546 = vrot.lane.b32.xlu0 %v6442, 32
      %v6547 = vpop.permute.xlu0 %6546
      %6548 = vrot.lane.b32.xlu0 %v6445, 32
      %v6549 = vpop.permute.xlu0 %6548
      %6550 = vrot.lane.b32.xlu0 %v6448, 32
      %v6551 = vpop.permute.xlu0 %6550
      %6552 = vrot.lane.b32.xlu0 %v6451, 32
      %v6553 = vpop.permute.xlu0 %6552
      %6554 = vrot.lane.b32.xlu0 %v6454, 32
      %v6555 = vpop.permute.xlu0 %6554
      %6556 = vrot.lane.b32.xlu0 %v6457, 32
      %v6557 = vpop.permute.xlu0 %6556
      %6558 = vrot.lane.b32.xlu0 %v6460, 32
      %v6559 = vpop.permute.xlu0 %6558
      %6560 = vrot.lane.b32.xlu0 %v6463, 32
      %v6561 = vpop.permute.xlu0 %6560
      %6562 = vrot.lane.b32.xlu0 %v6466, 32
      %v6563 = vpop.permute.xlu0 %6562
      %6588 = vst.msk [vmem:[#allocation2] sm:$0xff] %vm1647, %v6517
      %6589 = vst.msk [vmem:[#allocation2 + $0x8] sm:$0xff] %vm1647, %v6519
      %6590 = vst.msk [vmem:[#allocation2 + $0x10] sm:$0xff] %vm1647, %v6521
      %6591 = vst.msk [vmem:[#allocation2 + $0x18] sm:$0xff] %vm1647, %v6523
      %6592 = vst.msk [vmem:[#allocation2 + $0x20] sm:$0xff] %vm1647, %v6525
      %6593 = vst.msk [vmem:[#allocation2 + $0x28] sm:$0xff] %vm1647, %v6527
      %6594 = vst.msk [vmem:[#allocation2 + $0x30] sm:$0xff] %vm1647, %v6529
      %6595 = vst.msk [vmem:[#allocation2 + $0x38] sm:$0xff] %vm1647, %v6531
      %6596 = vst.msk [vmem:[#allocation2 + $0x40] sm:$0xff] %vm1647, %v6533
      %6597 = vst.msk [vmem:[#allocation2 + $0x48] sm:$0xff] %vm1647, %v6535
      %6598 = vst.msk [vmem:[#allocation2 + $0x50] sm:$0xff] %vm1647, %v6537
      %6599 = vst.msk [vmem:[#allocation2 + $0x58] sm:$0xff] %vm1647, %v6539
      %6600 = vst.msk [vmem:[#allocation2 + $0x60] sm:$0xff] %vm1647, %v6541
      %6601 = vst.msk [vmem:[#allocation2 + $0x68] sm:$0xff] %vm1647, %v6543
      %6602 = vst.msk [vmem:[#allocation2 + $0x70] sm:$0xff] %vm1647, %v6545
      %6603 = vst.msk [vmem:[#allocation2 + $0x78] sm:$0xff] %vm1647, %v6547
      %6604 = vst.msk [vmem:[#allocation2 + $0x80] sm:$0xff] %vm1647, %v6549
      %6605 = vst.msk [vmem:[#allocation2 + $0x88] sm:$0xff] %vm1647, %v6551
      %6606 = vst.msk [vmem:[#allocation2 + $0x90] sm:$0xff] %vm1647, %v6553
      %6607 = vst.msk [vmem:[#allocation2 + $0x98] sm:$0xff] %vm1647, %v6555
      %6608 = vst.msk [vmem:[#allocation2 + $0xa0] sm:$0xff] %vm1647, %v6557
      %6609 = vst.msk [vmem:[#allocation2 + $0xa8] sm:$0xff] %vm1647, %v6559
      %6610 = vst.msk [vmem:[#allocation2 + $0xb0] sm:$0xff] %vm1647, %v6561
      %6611 = vst.msk [vmem:[#allocation2 + $0xb8] sm:$0xff] %vm1647, %v6563
      %v6612 = vld [vmem:[#allocation2] sm:$0xff]
      %v6613 = vld [vmem:[#allocation2 + $0x8] sm:$0xff]
      %v6614 = vld [vmem:[#allocation2 + $0x10] sm:$0xff]
      %v6615 = vld [vmem:[#allocation2 + $0x18] sm:$0xff]
      %v6616 = vld [vmem:[#allocation2 + $0x20] sm:$0xff]
      %v6617 = vld [vmem:[#allocation2 + $0x28] sm:$0xff]
      %v6618 = vld [vmem:[#allocation2 + $0x30] sm:$0xff]
      %v6619 = vld [vmem:[#allocation2 + $0x38] sm:$0xff]
      %v6620 = vld [vmem:[#allocation2 + $0x40] sm:$0xff]
      %v6621 = vld [vmem:[#allocation2 + $0x48] sm:$0xff]
      %v6622 = vld [vmem:[#allocation2 + $0x50] sm:$0xff]
      %v6623 = vld [vmem:[#allocation2 + $0x58] sm:$0xff]
      %v6624 = vld [vmem:[#allocation2 + $0x60] sm:$0xff]
      %v6625 = vld [vmem:[#allocation2 + $0x68] sm:$0xff]
      %v6626 = vld [vmem:[#allocation2 + $0x70] sm:$0xff]
      %v6627 = vld [vmem:[#allocation2 + $0x78] sm:$0xff]
      %v6628 = vld [vmem:[#allocation2 + $0x80] sm:$0xff]
      %v6629 = vld [vmem:[#allocation2 + $0x88] sm:$0xff]
      %v6630 = vld [vmem:[#allocation2 + $0x90] sm:$0xff]
      %v6631 = vld [vmem:[#allocation2 + $0x98] sm:$0xff]
      %v6632 = vld [vmem:[#allocation2 + $0xa0] sm:$0xff]
      %v6633 = vld [vmem:[#allocation2 + $0xa8] sm:$0xff]
      %v6634 = vld [vmem:[#allocation2 + $0xb0] sm:$0xff]
      %v6635 = vld [vmem:[#allocation2 + $0xb8] sm:$0xff]
      %v6637 = vperm.slane %v5645, 0
      %v6640 = vsel %vm673, %v6612, 0
      %v6643 = vsel %vm673, %v6613, 0
      %v6646 = vsel %vm673, %v6614, 0
      %v6649 = vsel %vm673, %v6615, 0
      %v6652 = vsel %vm673, %v6616, 0
      %v6655 = vsel %vm673, %v6617, 0
      %v6658 = vsel %vm673, %v6618, 0
      %v6661 = vsel %vm673, %v6619, 0
      %v6664 = vsel %vm673, %v6620, 0
      %v6667 = vsel %vm673, %v6621, 0
      %v6670 = vsel %vm673, %v6622, 0
      %v6673 = vsel %vm673, %v6623, 0
      %v6676 = vsel %vm673, %v6624, 0
      %v6679 = vsel %vm673, %v6625, 0
      %v6682 = vsel %vm673, %v6626, 0
      %v6685 = vsel %vm673, %v6627, 0
      %v6688 = vsel %vm673, %v6628, 0
      %v6691 = vsel %vm673, %v6629, 0
      %v6694 = vsel %vm673, %v6630, 0
      %v6697 = vsel %vm673, %v6631, 0
      %v6700 = vsel %vm673, %v6632, 0
      %v6703 = vsel %vm673, %v6633, 0
      %v6706 = vsel %vm673, %v6634, 0
      %v6709 = vsel %vm673, %v6635, 0
      %6711 = vmatpush.msra.mxu0 0.0
      %6712 = vmatpush.msra.mxu0 0.0
      %6713 = vmatpush.msra.mxu0 0.0
      %6714 = vmatpush.msra.mxu0 0.0
      %6715 = vmatpush.msra.mxu0 0.0
      %6716 = vmatpush.msra.mxu0 0.0
      %6717 = vmatpush.msra.mxu0 0.0
      %6718 = vmatpush.msra.mxu0 0.0
      %6719 = vmatpush.msra.mxu0 %v5643
      %6720 = vmatpush.msra.mxu0 %v5642
      %6721 = vmatpush.msra.mxu0 %v5641
      %6722 = vmatpush.msra.mxu0 %v5640
      %6723 = vmatpush.msra.mxu0 %v5639
      %6724 = vmatpush.msra.mxu0 %v5638
      %6725 = vmatpush.msra.mxu0 %v5637
      %6726 = vmatpush.msra.mxu0 %v5636
      %6727 = vmatmul.f32.gmra.mxu0 %v6640
      %v6728 = vpop.f32.mrf.mxu0
      %v6729 = vadd.f32 %v6637, %v6728
      %6730 = vmatmul.f32.gmra.mxu0 %v6643
      %v6731 = vpop.f32.mrf.mxu0
      %v6732 = vadd.f32 %v6637, %v6731
      %6733 = vmatmul.f32.gmra.mxu0 %v6646
      %v6734 = vpop.f32.mrf.mxu0
      %v6735 = vadd.f32 %v6637, %v6734
      %6736 = vmatmul.f32.gmra.mxu0 %v6649
      %v6737 = vpop.f32.mrf.mxu0
      %v6738 = vadd.f32 %v6637, %v6737
      %6739 = vmatmul.f32.gmra.mxu0 %v6652
      %v6740 = vpop.f32.mrf.mxu0
      %v6741 = vadd.f32 %v6637, %v6740
      %6742 = vmatmul.f32.gmra.mxu0 %v6655
      %v6743 = vpop.f32.mrf.mxu0
      %v6744 = vadd.f32 %v6637, %v6743
      %6745 = vmatmul.f32.gmra.mxu0 %v6658
      %v6746 = vpop.f32.mrf.mxu0
      %v6747 = vadd.f32 %v6637, %v6746
      %6748 = vmatmul.f32.gmra.mxu0 %v6661
      %v6749 = vpop.f32.mrf.mxu0
      %v6750 = vadd.f32 %v6637, %v6749
      %6751 = vmatmul.f32.gmra.mxu0 %v6664
      %v6752 = vpop.f32.mrf.mxu0
      %v6753 = vadd.f32 %v6637, %v6752
      %6754 = vmatmul.f32.gmra.mxu0 %v6667
      %v6755 = vpop.f32.mrf.mxu0
      %v6756 = vadd.f32 %v6637, %v6755
      %6757 = vmatmul.f32.gmra.mxu0 %v6670
      %v6758 = vpop.f32.mrf.mxu0
      %v6759 = vadd.f32 %v6637, %v6758
      %6760 = vmatmul.f32.gmra.mxu0 %v6673
      %v6761 = vpop.f32.mrf.mxu0
      %v6762 = vadd.f32 %v6637, %v6761
      %6763 = vmatmul.f32.gmra.mxu0 %v6676
      %v6764 = vpop.f32.mrf.mxu0
      %v6765 = vadd.f32 %v6637, %v6764
      %6766 = vmatmul.f32.gmra.mxu0 %v6679
      %v6767 = vpop.f32.mrf.mxu0
      %v6768 = vadd.f32 %v6637, %v6767
      %6769 = vmatmul.f32.gmra.mxu0 %v6682
      %v6770 = vpop.f32.mrf.mxu0
      %v6771 = vadd.f32 %v6637, %v6770
      %6772 = vmatmul.f32.gmra.mxu0 %v6685
      %v6773 = vpop.f32.mrf.mxu0
      %v6774 = vadd.f32 %v6637, %v6773
      %6775 = vmatmul.f32.gmra.mxu0 %v6688
      %v6776 = vpop.f32.mrf.mxu0
      %v6777 = vadd.f32 %v6637, %v6776
      %6778 = vmatmul.f32.gmra.mxu0 %v6691
      %v6779 = vpop.f32.mrf.mxu0
      %v6780 = vadd.f32 %v6637, %v6779
      %6781 = vmatmul.f32.gmra.mxu0 %v6694
      %v6782 = vpop.f32.mrf.mxu0
      %v6783 = vadd.f32 %v6637, %v6782
      %6784 = vmatmul.f32.gmra.mxu0 %v6697
      %v6785 = vpop.f32.mrf.mxu0
      %v6786 = vadd.f32 %v6637, %v6785
      %6787 = vmatmul.f32.gmra.mxu0 %v6700
      %v6788 = vpop.f32.mrf.mxu0
      %v6789 = vadd.f32 %v6637, %v6788
      %6790 = vmatmul.f32.gmra.mxu0 %v6703
      %v6791 = vpop.f32.mrf.mxu0
      %v6792 = vadd.f32 %v6637, %v6791
      %6793 = vmatmul.f32.gmra.mxu0 %v6706
      %v6794 = vpop.f32.mrf.mxu0
      %v6795 = vadd.f32 %v6637, %v6794
      %6796 = vmatmul.f32.gmra.mxu0 %v6709
      %v6797 = vpop.f32.mrf.mxu0
      %v6798 = vadd.f32 %v6637, %v6797
      %6799 = vdwg.mxu0
      %6800 = vst.msk [vmem:[%s280] sm:$0xff] %vm511, %v6729
      %6801 = vst.msk [vmem:[%s280 + $0x8] sm:$0xff] %vm511, %v6732
      %6802 = vst.msk [vmem:[%s280 + $0x10] sm:$0xff] %vm511, %v6735
      %6803 = vst.msk [vmem:[%s280 + $0x18] sm:$0xff] %vm511, %v6738
      %6804 = vst.msk [vmem:[%s280 + $0x20] sm:$0xff] %vm511, %v6741
      %6805 = vst.msk [vmem:[%s280 + $0x28] sm:$0xff] %vm511, %v6744
      %6806 = vst.msk [vmem:[%s280 + $0x30] sm:$0xff] %vm511, %v6747
      %6807 = vst.msk [vmem:[%s280 + $0x38] sm:$0xff] %vm511, %v6750
      %6808 = vst.msk [vmem:[%s280 + $0x40] sm:$0xff] %vm511, %v6753
      %6809 = vst.msk [vmem:[%s280 + $0x48] sm:$0xff] %vm511, %v6756
      %6810 = vst.msk [vmem:[%s280 + $0x50] sm:$0xff] %vm511, %v6759
      %6811 = vst.msk [vmem:[%s280 + $0x58] sm:$0xff] %vm511, %v6762
      %6812 = vst.msk [vmem:[%s280 + $0x60] sm:$0xff] %vm511, %v6765
      %6813 = vst.msk [vmem:[%s280 + $0x68] sm:$0xff] %vm511, %v6768
      %6814 = vst.msk [vmem:[%s280 + $0x70] sm:$0xff] %vm511, %v6771
      %6815 = vst.msk [vmem:[%s280 + $0x78] sm:$0xff] %vm511, %v6774
      %6816 = vst.msk [vmem:[%s280 + $0x80] sm:$0xff] %vm511, %v6777
      %6817 = vst.msk [vmem:[%s280 + $0x88] sm:$0xff] %vm511, %v6780
      %6818 = vst.msk [vmem:[%s280 + $0x90] sm:$0xff] %vm511, %v6783
      %6819 = vst.msk [vmem:[%s280 + $0x98] sm:$0xff] %vm511, %v6786
      %6820 = vst.msk [vmem:[%s280 + $0xa0] sm:$0xff] %vm511, %v6789
      %6821 = vst.msk [vmem:[%s280 + $0xa8] sm:$0xff] %vm511, %v6792
      %6822 = vst.msk [vmem:[%s280 + $0xb0] sm:$0xff] %vm511, %v6795
      %6823 = vst.msk [vmem:[%s280 + $0xb8] sm:$0xff] %vm511, %v6798
      %s6824 = smul.u32 24, %s18
      %p6825 = scmp.lt.s32.totalorder %s6824, 95
      %s6826 = scalar_select %p6825, %s6824, 95
      %s6827 = smul.addr %s6826, 8
      %s6828 = scalar_lea.vmem %s7, %s6827
      // Predicated region
      $region49: #{tpu_custom_call.1} parent=47 // pred_check
        %p6829 = pneg %p188
      $region50: #{tpu_custom_call.1} parent=47 // pred_check_branch
        %6831 = sbr.rel (%p6829) target = $region52
      $region51: #{tpu_custom_call.1} parent=47 // pred_region
        %s6832 = smul.u32 24, %s18
      $region52: #{tpu_custom_call.1} parent=47 // pred_fallthru
        _
    $region48: #{tpu_custom_call.1} parent=5 // pred_fallthru
      _
    %p6833 = scmp.le.s32.totalorder 2, %s13
    // Predicated region
    $region53: #{tpu_custom_call.1} parent=5 // pred_check
      %p6834 = pneg %p6833
    $region54: #{tpu_custom_call.1} parent=5 // pred_check_branch
      %6836 = sbr.rel (%p6834) target = $region56
    $region55: #{tpu_custom_call.1} parent=5 // pred_region
      %s6837 = ssub.s32 %s13, 2
      // Predicated region
      $region57: #{tpu_custom_call.1} parent=55 // pred_check
        %p6838 = pneg %p194
      $region58: #{tpu_custom_call.1} parent=55 // pred_check_branch
        %6840 = sbr.rel (%p6838) target = $region60
      $region59: #{tpu_custom_call.1} parent=55 // pred_region
        %s6841 = smul.u32 24, %s19
        %p6842 = scmp.lt.s32.totalorder %s6841, 95
        %s6843 = scalar_select %p6842, %s6841, 95
        %s6844 = smul.addr %s6843, 8
        %s6845 = scalar_lea.vmem %s7, %s6844
      $region60: #{tpu_custom_call.1} parent=55 // pred_fallthru
        _
    $region56: #{tpu_custom_call.1} parent=5 // pred_fallthru
      _
  $region6: #{tpu_custom_call.1} parent=0 // loop_footer
    %s17 = sadd.s32 1, %s13
  $region7: #{tpu_custom_call.1} parent=0 // loop_footer_branch
    %12 = sbr.rel target = $region3
  $region8: #{tpu_custom_call.1} parent=0 // loop_exit
    _

</llo_original>
